<compile_context>
chip_gen: v5e
topology: v5e:2x2
jax: 0.10.0
libtpu: 0.0.40
codegen_flags: <defaults>
</compile_context>

<pallas_src>
import functools

import jax
import jax.numpy as jnp
from jax.experimental import pallas as pl
from jax.experimental.pallas import tpu as pltpu


_VMEM_LIMIT = 32 * 1024 * 1024  # keep per-TC working set <= 32 MiB (v7x: 2 TCs)


def _compiler_params():
    return pltpu.CompilerParams(
        dimension_semantics=("parallel",),
        vmem_limit_bytes=_VMEM_LIMIT,
    )


# ---------------------------------------------------------------------------
# Kernel 1: conv1 GEMM (im2col patches) + bias + PReLU + MaxPool2x2, per image
# ---------------------------------------------------------------------------
def _conv1_kernel(x_ref, w_ref, b_ref, o_ref, s1, s2, *, alpha):
    # x_ref: (1, 576, 25) bf16 patches of one image (rows = oh*24 + ow)
    # w_ref: (25, 32) bf16   b_ref: (1, 32) f32
    # o_ref: (1, 12, 12, 32) bf16 pooled NHWC output
    # GEMM + bias + PReLU in 192-row chunks (keeps live vregs small).
    for c in range(3):
        xc = x_ref[0, pl.ds(c * 192, 192), :]                       # (192, 25) bf16
        acc = jnp.dot(xc, w_ref[...], preferred_element_type=jnp.float32)
        acc = acc + b_ref[...]
        acc = jnp.where(acc >= 0.0, acc, alpha * acc)               # PReLU (alpha baked in)
        s1[pl.ds(c * 192, 192), :] = acc

    # MaxPool2d(2,2) fused epilogue.
    # Stage A: pool along OW -> adjacent rows of s1 (strided ref loads).
    ta = jnp.maximum(s1[pl.ds(0, 288, 2), :], s1[pl.ds(1, 288, 2), :])  # (288, 32)
    s2[...] = ta
    # Stage B: pool along OH -> contiguous 12-row blocks, 12 apart.
    for oh in range(12):
        a = s2[pl.ds((2 * oh) * 12, 12), :]
        b = s2[pl.ds((2 * oh + 1) * 12, 12), :]
        o_ref[0, oh, :, :] = jnp.maximum(a, b).astype(o_ref.dtype)


def conv1_prelu_pool(patches, w, b, alpha):
    B = patches.shape[0]
    return pl.pallas_call(
        functools.partial(_conv1_kernel, alpha=float(alpha)),
        out_shape=jax.ShapeDtypeStruct((B, 12, 12, 32), jnp.bfloat16),
        grid=(B,),
        in_specs=[
            pl.BlockSpec((1, 576, 25), lambda i: (i, 0, 0)),
            pl.BlockSpec((25, 32), lambda i: (0, 0)),      # weights stay resident
            pl.BlockSpec((1, 32), lambda i: (0, 0)),
        ],
        out_specs=pl.BlockSpec((1, 12, 12, 32), lambda i: (i, 0, 0, 0)),
        scratch_shapes=[
            pltpu.VMEM((576, 32), jnp.float32),
            pltpu.VMEM((288, 32), jnp.float32),
        ],
        compiler_params=_compiler_params(),
    )(patches, w, b)


# ---------------------------------------------------------------------------
# Kernel 2: conv2 as 25 shifted matmuls (no im2col) + bias + PReLU + MaxPool
# ---------------------------------------------------------------------------
def _conv2_kernel(x_ref, w_ref, b_ref, o_ref, s1, s2, *, alpha):
    # x_ref: (1, 12, 12, 32) bf16   w_ref: (25, 32, 64) bf16   b_ref: (1, 64) f32
    # o_ref: (1, 16, 64) bf16  (rows = pooled h*4+w, lanes = channels)
    acc = jnp.zeros((64, 64), jnp.float32)
    for idx in range(25):
        i, j = idx // 5, idx % 5
        slab = x_ref[0, i:i + 8, j:j + 8, :].reshape(64, 32)        # (oh*8+ow, cin)
        acc = acc + jnp.dot(slab, w_ref[idx], preferred_element_type=jnp.float32)
    acc = acc + b_ref[...]
    acc = jnp.where(acc >= 0.0, acc, alpha * acc)                   # PReLU
    s1[...] = acc

    # MaxPool2d(2,2): stage A along OW (strided), stage B along OH (contiguous).
    ta = jnp.maximum(s1[pl.ds(0, 32, 2), :], s1[pl.ds(1, 32, 2), :])    # (32, 64)
    s2[...] = ta
    for oh in range(4):
        a = s2[pl.ds((2 * oh) * 4, 4), :]
        b = s2[pl.ds((2 * oh + 1) * 4, 4), :]
        o_ref[0, pl.ds(oh * 4, 4), :] = jnp.maximum(a, b).astype(o_ref.dtype)


def conv2_prelu_pool(act, w, b, alpha):
    B = act.shape[0]
    return pl.pallas_call(
        functools.partial(_conv2_kernel, alpha=float(alpha)),
        out_shape=jax.ShapeDtypeStruct((B, 16, 64), jnp.bfloat16),
        grid=(B,),
        in_specs=[
            pl.BlockSpec((1, 12, 12, 32), lambda i: (i, 0, 0, 0)),
            pl.BlockSpec((25, 32, 64), lambda i: (0, 0, 0)),   # weights resident
            pl.BlockSpec((1, 64), lambda i: (0, 0)),
        ],
        out_specs=pl.BlockSpec((1, 16, 64), lambda i: (i, 0, 0)),
        scratch_shapes=[
            pltpu.VMEM((64, 64), jnp.float32),
            pltpu.VMEM((32, 64), jnp.float32),
        ],
        compiler_params=_compiler_params(),
    )(act, w, b)


# ---------------------------------------------------------------------------
# Kernel 3: fused Linear(1024,512) + PReLU + Linear(512,emb), M-tiled grid
# ---------------------------------------------------------------------------
def _fc_kernel(x_ref, w1_ref, b1_ref, w2_ref, b2_ref, o_ref, *, alpha):
    h = jnp.dot(x_ref[...], w1_ref[...], preferred_element_type=jnp.float32)
    h = h + b1_ref[...]
    h = jnp.where(h >= 0.0, h, alpha * h)                           # PReLU
    y = jnp.dot(h.astype(w2_ref.dtype), w2_ref[...],
                preferred_element_type=jnp.float32)
    o_ref[...] = y + b2_ref[...]


def fc_fused(x, w1, b1, w2, b2, alpha, tile_m=256):
    B, K = x.shape
    N1 = w1.shape[1]
    N2 = w2.shape[1]
    tm = min(tile_m, B)
    mp = pl.cdiv(B, tm) * tm
    if mp != B:
        x = jnp.pad(x, ((0, mp - B), (0, 0)))
    out = pl.pallas_call(
        functools.partial(_fc_kernel, alpha=float(alpha)),
        out_shape=jax.ShapeDtypeStruct((mp, N2), jnp.float32),
        grid=(mp // tm,),
        in_specs=[
            pl.BlockSpec((tm, K), lambda m: (m, 0)),
            pl.BlockSpec((K, N1), lambda m: (0, 0)),          # both weights resident
            pl.BlockSpec((1, N1), lambda m: (0, 0)),
            pl.BlockSpec((N1, N2), lambda m: (0, 0)),
            pl.BlockSpec((1, N2), lambda m: (0, 0)),
        ],
        out_specs=pl.BlockSpec((tm, N2), lambda m: (m, 0)),   # lane-dense (N2=128)
        compiler_params=_compiler_params(),
    )(x, w1, b1, w2, b2)
    return out[:B]


# ---------------------------------------------------------------------------
# Glue (im2col for conv1, weight re-layouts) in plain JAX
# ---------------------------------------------------------------------------
def _conv1_im2col(x_nchw):
    """(B,1,28,28) -> patches (B, 576, 25), K ordered (kh, kw)."""
    img = x_nchw[:, 0, :, :]
    cols = [img[:, i:i + 24, j:j + 24] for i in range(5) for j in range(5)]
    patches = jnp.stack(cols, axis=-1)                      # (B, 24, 24, 25)
    return patches.reshape(x_nchw.shape[0], 576, 25)


def init_params(emb_dim=128):
    key = jax.random.PRNGKey(0)
    ks = jax.random.split(key, 8)
    return {
        # Conv2d(1, 32, 5)
        "w1": 0.10 * jax.random.normal(ks[0], (32, 1, 5, 5), jnp.float32),
        "b1": 0.01 * jax.random.normal(ks[1], (32,), jnp.float32),
        "a1": 0.25,  # nn.PReLU() default init (single shared slope)
        # Conv2d(32, 64, 5)
        "w2": 0.05 * jax.random.normal(ks[2], (64, 32, 5, 5), jnp.float32),
        "b2": 0.01 * jax.random.normal(ks[3], (64,), jnp.float32),
        "a2": 0.25,
        # Linear(64*4*4, 512)  (torch layout: (out, in), in = c*16 + h*4 + w)
        "wfc1": 0.05 * jax.random.normal(ks[4], (512, 64 * 4 * 4), jnp.float32),
        "bfc1": 0.01 * jax.random.normal(ks[5], (512,), jnp.float32),
        "a3": 0.25,
        # Linear(512, emb_dim)
        "wfc2": 0.05 * jax.random.normal(ks[6], (emb_dim, 512), jnp.float32),
        "bfc2": 0.01 * jax.random.normal(ks[7], (emb_dim,), jnp.float32),
    }


def network_forward(params, x_nchw):
    """x_nchw: (B, 1, 28, 28) float32, same convention as the PyTorch module."""
    B = x_nchw.shape[0]

    # Conv2d(1,32,5) + PReLU + MaxPool2d(2,2)   (fused kernel, bf16 operands)
    patches = _conv1_im2col(x_nchw).astype(jnp.bfloat16)          # (B, 576, 25)
    w1 = params["w1"].reshape(32, 25).T.astype(jnp.bfloat16)      # (25, 32)
    b1 = params["b1"].reshape(1, 32).astype(jnp.float32)
    act1 = conv1_prelu_pool(patches, w1, b1, params["a1"])        # (B,12,12,32) bf16
    # TODO(synk): nn.Dropout(0.3) is an eval-mode identity here.

    # Conv2d(32,64,5) + PReLU + MaxPool2d(2,2)  (shifted-matmul kernel, no im2col)
    w2 = jnp.transpose(params["w2"], (2, 3, 1, 0)).reshape(25, 32, 64)
    w2 = w2.astype(jnp.bfloat16)                                  # [kh*kw, cin, cout]
    b2 = params["b2"].reshape(1, 64).astype(jnp.float32)
    act2 = conv2_prelu_pool(act1, w2, b2, params["a2"])           # (B, 16, 64) bf16
    # TODO(synk): second nn.Dropout(0.3) is also an eval-mode identity.

    # Flatten in (hw, c) order; permute FC1 weight columns once on the host so
    # it matches torch's NCHW x.view(-1, 64*4*4) -- no activation transpose.
    feat = act2.reshape(B, 16 * 64)                               # (B, 1024) bf16
    wfc1 = params["wfc1"].reshape(512, 64, 16).transpose(0, 2, 1).reshape(512, 1024)
    wfc1 = wfc1.T.astype(jnp.bfloat16)                            # (1024, 512)
    bfc1 = params["bfc1"].reshape(1, 512).astype(jnp.float32)
    wfc2 = params["wfc2"].T.astype(jnp.bfloat16)                  # (512, emb)
    bfc2 = params["bfc2"].reshape(1, -1).astype(jnp.float32)

    # Linear(1024,512) + PReLU + Linear(512,emb)  (single fused kernel)
    return fc_fused(feat, wfc1, bfc1, wfc2, bfc2, params["a3"])


if __name__ == "__main__":
    key = jax.random.PRNGKey(0)
    # 28x28 input (the only spatial size consistent with the 64*4*4 flatten).
    x = jax.random.normal(key, (2, 1, 28, 28), jnp.float32)
    params = init_params(emb_dim=128)

    fwd = jax.jit(functools.partial(network_forward, params))
    out = jax.block_until_ready(fwd(x))

    assert out.shape == (2, 128), out.shape
    assert bool(jnp.all(jnp.isfinite(out)))
    print("KERNEL_OK")
</pallas_src>

<mosaic_0001>
module attributes {stable_mosaic.version = 11 : i64} {
  func.func @_conv1_kernel(%arg0: i32, %arg1: memref<1x576x25xbf16, #tpu.memory_space<vmem>>, %arg2: memref<25x32xbf16, #tpu.memory_space<vmem>>, %arg3: memref<1x32xf32, #tpu.memory_space<vmem>>, %arg4: memref<1x12x12x32xbf16, #tpu.memory_space<vmem>>, %arg5: memref<576x32xf32, #tpu.memory_space<vmem>>, %arg6: memref<288x32xf32, #tpu.memory_space<vmem>>) attributes {dimension_semantics = [#tpu.dimension_semantics<parallel>], iteration_bounds = array<i64: 2>, scalar_prefetch = 0 : i64, scratch_operands = 2 : i64, tpu.core_type = #tpu.core_type<tc>, window_params = [{transform_indices = @transform_0, window_bounds = array<i64: 1, 576, 25>}, {pipeline_mode = #tpu.pipeline_mode<synchronous>, transform_indices = @transform_1, window_bounds = array<i64: 25, 32>}, {pipeline_mode = #tpu.pipeline_mode<synchronous>, transform_indices = @transform_2, window_bounds = array<i64: 1, 32>}, {transform_indices = @transform_3, window_bounds = array<i64: 1, 12, 12, 32>}]} {
    %c0 = arith.constant 0 : index
    %c0_0 = arith.constant 0 : index
    %c0_1 = arith.constant 0 : index
    %0 = vector.load %arg1[%c0, %c0_0, %c0_1] : memref<1x576x25xbf16, #tpu.memory_space<vmem>>, vector<1x192x25xbf16>
    %1 = vector.shape_cast %0 : vector<1x192x25xbf16> to vector<192x25xbf16>
    %c0_2 = arith.constant 0 : index
    %c0_3 = arith.constant 0 : index
    %2 = vector.load %arg2[%c0_2, %c0_3] : memref<25x32xbf16, #tpu.memory_space<vmem>>, vector<25x32xbf16>
    %cst = arith.constant dense<0.000000e+00> : vector<192x32xf32>
    %3 = tpu.matmul %1, %2, %cst {dimension_numbers = #tpu.dot_dimension_numbers<[1], [0], [0], [1], [0, 0, 1, 1], [], []>} : vector<192x25xbf16>, vector<25x32xbf16>, vector<192x32xf32> -> vector<192x32xf32>
    %c0_4 = arith.constant 0 : index
    %c0_5 = arith.constant 0 : index
    %4 = vector.load %arg3[%c0_4, %c0_5] : memref<1x32xf32, #tpu.memory_space<vmem>>, vector<1x32xf32>
    %5 = vector.broadcast %4 : vector<1x32xf32> to vector<192x32xf32>
    %6 = arith.addf %3, %5 : vector<192x32xf32>
    %cst_6 = arith.constant 0.000000e+00 : f32
    %7 = vector.broadcast %cst_6 : f32 to vector<192x32xf32>
    %8 = arith.cmpf oge, %6, %7 : vector<192x32xf32>
    %cst_7 = arith.constant 2.500000e-01 : f32
    %9 = vector.broadcast %cst_7 : f32 to vector<192x32xf32>
    %10 = arith.mulf %9, %6 : vector<192x32xf32>
    %11 = arith.select %8, %6, %10 : vector<192x32xi1>, vector<192x32xf32>
    %c0_8 = arith.constant 0 : index
    %c0_9 = arith.constant 0 : index
    %12 = vector.load %arg5[%c0_8, %c0_9] : memref<576x32xf32, #tpu.memory_space<vmem>>, vector<192x32xf32>
    tpu.vector_store %arg5[%c0_8, %c0_9], %11 {strides = array<i32>} : memref<576x32xf32, #tpu.memory_space<vmem>>, vector<192x32xf32>,
    %c0_10 = arith.constant 0 : index
    %c192 = arith.constant 192 : index
    %c0_11 = arith.constant 0 : index
    %13 = vector.load %arg1[%c0_10, %c192, %c0_11] : memref<1x576x25xbf16, #tpu.memory_space<vmem>>, vector<1x192x25xbf16>
    %14 = vector.shape_cast %13 : vector<1x192x25xbf16> to vector<192x25xbf16>
    %c0_12 = arith.constant 0 : index
    %c0_13 = arith.constant 0 : index
    %15 = vector.load %arg2[%c0_12, %c0_13] : memref<25x32xbf16, #tpu.memory_space<vmem>>, vector<25x32xbf16>
    %cst_14 = arith.constant dense<0.000000e+00> : vector<192x32xf32>
    %16 = tpu.matmul %14, %15, %cst_14 {dimension_numbers = #tpu.dot_dimension_numbers<[1], [0], [0], [1], [0, 0, 1, 1], [], []>} : vector<192x25xbf16>, vector<25x32xbf16>, vector<192x32xf32> -> vector<192x32xf32>
    %c0_15 = arith.constant 0 : index
    %c0_16 = arith.constant 0 : index
    %17 = vector.load %arg3[%c0_15, %c0_16] : memref<1x32xf32, #tpu.memory_space<vmem>>, vector<1x32xf32>
    %18 = vector.broadcast %17 : vector<1x32xf32> to vector<192x32xf32>
    %19 = arith.addf %16, %18 : vector<192x32xf32>
    %cst_17 = arith.constant 0.000000e+00 : f32
    %20 = vector.broadcast %cst_17 : f32 to vector<192x32xf32>
    %21 = arith.cmpf oge, %19, %20 : vector<192x32xf32>
    %cst_18 = arith.constant 2.500000e-01 : f32
    %22 = vector.broadcast %cst_18 : f32 to vector<192x32xf32>
    %23 = arith.mulf %22, %19 : vector<192x32xf32>
    %24 = arith.select %21, %19, %23 : vector<192x32xi1>, vector<192x32xf32>
    %c192_19 = arith.constant 192 : index
    %c0_20 = arith.constant 0 : index
    %25 = vector.load %arg5[%c192_19, %c0_20] : memref<576x32xf32, #tpu.memory_space<vmem>>, vector<192x32xf32>
    tpu.vector_store %arg5[%c192_19, %c0_20], %24 {strides = array<i32>} : memref<576x32xf32, #tpu.memory_space<vmem>>, vector<192x32xf32>,
    %c0_21 = arith.constant 0 : index
    %c384 = arith.constant 384 : index
    %c0_22 = arith.constant 0 : index
    %26 = vector.load %arg1[%c0_21, %c384, %c0_22] : memref<1x576x25xbf16, #tpu.memory_space<vmem>>, vector<1x192x25xbf16>
    %27 = vector.shape_cast %26 : vector<1x192x25xbf16> to vector<192x25xbf16>
    %c0_23 = arith.constant 0 : index
    %c0_24 = arith.constant 0 : index
    %28 = vector.load %arg2[%c0_23, %c0_24] : memref<25x32xbf16, #tpu.memory_space<vmem>>, vector<25x32xbf16>
    %cst_25 = arith.constant dense<0.000000e+00> : vector<192x32xf32>
    %29 = tpu.matmul %27, %28, %cst_25 {dimension_numbers = #tpu.dot_dimension_numbers<[1], [0], [0], [1], [0, 0, 1, 1], [], []>} : vector<192x25xbf16>, vector<25x32xbf16>, vector<192x32xf32> -> vector<192x32xf32>
    %c0_26 = arith.constant 0 : index
    %c0_27 = arith.constant 0 : index
    %30 = vector.load %arg3[%c0_26, %c0_27] : memref<1x32xf32, #tpu.memory_space<vmem>>, vector<1x32xf32>
    %31 = vector.broadcast %30 : vector<1x32xf32> to vector<192x32xf32>
    %32 = arith.addf %29, %31 : vector<192x32xf32>
    %cst_28 = arith.constant 0.000000e+00 : f32
    %33 = vector.broadcast %cst_28 : f32 to vector<192x32xf32>
    %34 = arith.cmpf oge, %32, %33 : vector<192x32xf32>
    %cst_29 = arith.constant 2.500000e-01 : f32
    %35 = vector.broadcast %cst_29 : f32 to vector<192x32xf32>
    %36 = arith.mulf %35, %32 : vector<192x32xf32>
    %37 = arith.select %34, %32, %36 : vector<192x32xi1>, vector<192x32xf32>
    %c384_30 = arith.constant 384 : index
    %c0_31 = arith.constant 0 : index
    %38 = vector.load %arg5[%c384_30, %c0_31] : memref<576x32xf32, #tpu.memory_space<vmem>>, vector<192x32xf32>
    tpu.vector_store %arg5[%c384_30, %c0_31], %37 {strides = array<i32>} : memref<576x32xf32, #tpu.memory_space<vmem>>, vector<192x32xf32>,
    %c0_32 = arith.constant 0 : index
    %c0_33 = arith.constant 0 : index
    %39 = tpu.strided_load %arg5[%c0_32, %c0_33] {strides = array<i32: 2, 1>} : memref<576x32xf32, #tpu.memory_space<vmem>>, vector<288x32xf32>
    %c1 = arith.constant 1 : index
    %c0_34 = arith.constant 0 : index
    %40 = tpu.strided_load %arg5[%c1, %c0_34] {strides = array<i32: 2, 1>} : memref<576x32xf32, #tpu.memory_space<vmem>>, vector<288x32xf32>
    %41 = arith.maximumf %39, %40 : vector<288x32xf32>
    %c0_35 = arith.constant 0 : index
    %c0_36 = arith.constant 0 : index
    %42 = vector.load %arg6[%c0_35, %c0_36] : memref<288x32xf32, #tpu.memory_space<vmem>>, vector<288x32xf32>
    tpu.vector_store %arg6[%c0_35, %c0_36], %41 {strides = array<i32>} : memref<288x32xf32, #tpu.memory_space<vmem>>, vector<288x32xf32>,
    %c0_37 = arith.constant 0 : index
    %c0_38 = arith.constant 0 : index
    %43 = vector.load %arg6[%c0_37, %c0_38] : memref<288x32xf32, #tpu.memory_space<vmem>>, vector<12x32xf32>
    %c12 = arith.constant 12 : index
    %c0_39 = arith.constant 0 : index
    %44 = vector.load %arg6[%c12, %c0_39] : memref<288x32xf32, #tpu.memory_space<vmem>>, vector<12x32xf32>
    %45 = arith.maximumf %43, %44 : vector<12x32xf32>
    %46 = arith.truncf %45 : vector<12x32xf32> to vector<12x32xbf16>
    %c0_40 = arith.constant 0 : index
    %c0_41 = arith.constant 0 : index
    %c0_42 = arith.constant 0 : index
    %c0_43 = arith.constant 0 : index
    %47 = vector.load %arg4[%c0_40, %c0_41, %c0_42, %c0_43] : memref<1x12x12x32xbf16, #tpu.memory_space<vmem>>, vector<1x1x12x32xbf16>
    %48 = vector.shape_cast %47 : vector<1x1x12x32xbf16> to vector<12x32xbf16>
    %49 = vector.shape_cast %46 : vector<12x32xbf16> to vector<1x1x12x32xbf16>
    tpu.vector_store %arg4[%c0_40, %c0_41, %c0_42, %c0_43], %49 {strides = array<i32>} : memref<1x12x12x32xbf16, #tpu.memory_space<vmem>>, vector<1x1x12x32xbf16>,
    %c24 = arith.constant 24 : index
    %c0_44 = arith.constant 0 : index
    %50 = vector.load %arg6[%c24, %c0_44] : memref<288x32xf32, #tpu.memory_space<vmem>>, vector<12x32xf32>
    %c36 = arith.constant 36 : index
    %c0_45 = arith.constant 0 : index
    %51 = vector.load %arg6[%c36, %c0_45] : memref<288x32xf32, #tpu.memory_space<vmem>>, vector<12x32xf32>
    %52 = arith.maximumf %50, %51 : vector<12x32xf32>
    %53 = arith.truncf %52 : vector<12x32xf32> to vector<12x32xbf16>
    %c0_46 = arith.constant 0 : index
    %c1_47 = arith.constant 1 : index
    %c0_48 = arith.constant 0 : index
    %c0_49 = arith.constant 0 : index
    %54 = vector.load %arg4[%c0_46, %c1_47, %c0_48, %c0_49] : memref<1x12x12x32xbf16, #tpu.memory_space<vmem>>, vector<1x1x12x32xbf16>
    %55 = vector.shape_cast %54 : vector<1x1x12x32xbf16> to vector<12x32xbf16>
    %56 = vector.shape_cast %53 : vector<12x32xbf16> to vector<1x1x12x32xbf16>
    tpu.vector_store %arg4[%c0_46, %c1_47, %c0_48, %c0_49], %56 {strides = array<i32>} : memref<1x12x12x32xbf16, #tpu.memory_space<vmem>>, vector<1x1x12x32xbf16>,
    %c48 = arith.constant 48 : index
    %c0_50 = arith.constant 0 : index
    %57 = vector.load %arg6[%c48, %c0_50] : memref<288x32xf32, #tpu.memory_space<vmem>>, vector<12x32xf32>
    %c60 = arith.constant 60 : index
    %c0_51 = arith.constant 0 : index
    %58 = vector.load %arg6[%c60, %c0_51] : memref<288x32xf32, #tpu.memory_space<vmem>>, vector<12x32xf32>
    %59 = arith.maximumf %57, %58 : vector<12x32xf32>
    %60 = arith.truncf %59 : vector<12x32xf32> to vector<12x32xbf16>
    %c0_52 = arith.constant 0 : index
    %c2 = arith.constant 2 : index
    %c0_53 = arith.constant 0 : index
    %c0_54 = arith.constant 0 : index
    %61 = vector.load %arg4[%c0_52, %c2, %c0_53, %c0_54] : memref<1x12x12x32xbf16, #tpu.memory_space<vmem>>, vector<1x1x12x32xbf16>
    %62 = vector.shape_cast %61 : vector<1x1x12x32xbf16> to vector<12x32xbf16>
    %63 = vector.shape_cast %60 : vector<12x32xbf16> to vector<1x1x12x32xbf16>
    tpu.vector_store %arg4[%c0_52, %c2, %c0_53, %c0_54], %63 {strides = array<i32>} : memref<1x12x12x32xbf16, #tpu.memory_space<vmem>>, vector<1x1x12x32xbf16>,
    %c72 = arith.constant 72 : index
    %c0_55 = arith.constant 0 : index
    %64 = vector.load %arg6[%c72, %c0_55] : memref<288x32xf32, #tpu.memory_space<vmem>>, vector<12x32xf32>
    %c84 = arith.constant 84 : index
    %c0_56 = arith.constant 0 : index
    %65 = vector.load %arg6[%c84, %c0_56] : memref<288x32xf32, #tpu.memory_space<vmem>>, vector<12x32xf32>
    %66 = arith.maximumf %64, %65 : vector<12x32xf32>
    %67 = arith.truncf %66 : vector<12x32xf32> to vector<12x32xbf16>
    %c0_57 = arith.constant 0 : index
    %c3 = arith.constant 3 : index
    %c0_58 = arith.constant 0 : index
    %c0_59 = arith.constant 0 : index
    %68 = vector.load %arg4[%c0_57, %c3, %c0_58, %c0_59] : memref<1x12x12x32xbf16, #tpu.memory_space<vmem>>, vector<1x1x12x32xbf16>
    %69 = vector.shape_cast %68 : vector<1x1x12x32xbf16> to vector<12x32xbf16>
    %70 = vector.shape_cast %67 : vector<12x32xbf16> to vector<1x1x12x32xbf16>
    tpu.vector_store %arg4[%c0_57, %c3, %c0_58, %c0_59], %70 {strides = array<i32>} : memref<1x12x12x32xbf16, #tpu.memory_space<vmem>>, vector<1x1x12x32xbf16>,
    %c96 = arith.constant 96 : index
    %c0_60 = arith.constant 0 : index
    %71 = vector.load %arg6[%c96, %c0_60] : memref<288x32xf32, #tpu.memory_space<vmem>>, vector<12x32xf32>
    %c108 = arith.constant 108 : index
    %c0_61 = arith.constant 0 : index
    %72 = vector.load %arg6[%c108, %c0_61] : memref<288x32xf32, #tpu.memory_space<vmem>>, vector<12x32xf32>
    %73 = arith.maximumf %71, %72 : vector<12x32xf32>
    %74 = arith.truncf %73 : vector<12x32xf32> to vector<12x32xbf16>
    %c0_62 = arith.constant 0 : index
    %c4 = arith.constant 4 : index
    %c0_63 = arith.constant 0 : index
    %c0_64 = arith.constant 0 : index
    %75 = vector.load %arg4[%c0_62, %c4, %c0_63, %c0_64] : memref<1x12x12x32xbf16, #tpu.memory_space<vmem>>, vector<1x1x12x32xbf16>
    %76 = vector.shape_cast %75 : vector<1x1x12x32xbf16> to vector<12x32xbf16>
    %77 = vector.shape_cast %74 : vector<12x32xbf16> to vector<1x1x12x32xbf16>
    tpu.vector_store %arg4[%c0_62, %c4, %c0_63, %c0_64], %77 {strides = array<i32>} : memref<1x12x12x32xbf16, #tpu.memory_space<vmem>>, vector<1x1x12x32xbf16>,
    %c120 = arith.constant 120 : index
    %c0_65 = arith.constant 0 : index
    %78 = vector.load %arg6[%c120, %c0_65] : memref<288x32xf32, #tpu.memory_space<vmem>>, vector<12x32xf32>
    %c132 = arith.constant 132 : index
    %c0_66 = arith.constant 0 : index
    %79 = vector.load %arg6[%c132, %c0_66] : memref<288x32xf32, #tpu.memory_space<vmem>>, vector<12x32xf32>
    %80 = arith.maximumf %78, %79 : vector<12x32xf32>
    %81 = arith.truncf %80 : vector<12x32xf32> to vector<12x32xbf16>
    %c0_67 = arith.constant 0 : index
    %c5 = arith.constant 5 : index
    %c0_68 = arith.constant 0 : index
    %c0_69 = arith.constant 0 : index
    %82 = vector.load %arg4[%c0_67, %c5, %c0_68, %c0_69] : memref<1x12x12x32xbf16, #tpu.memory_space<vmem>>, vector<1x1x12x32xbf16>
    %83 = vector.shape_cast %82 : vector<1x1x12x32xbf16> to vector<12x32xbf16>
    %84 = vector.shape_cast %81 : vector<12x32xbf16> to vector<1x1x12x32xbf16>
    tpu.vector_store %arg4[%c0_67, %c5, %c0_68, %c0_69], %84 {strides = array<i32>} : memref<1x12x12x32xbf16, #tpu.memory_space<vmem>>, vector<1x1x12x32xbf16>,
    %c144 = arith.constant 144 : index
    %c0_70 = arith.constant 0 : index
    %85 = vector.load %arg6[%c144, %c0_70] : memref<288x32xf32, #tpu.memory_space<vmem>>, vector<12x32xf32>
    %c156 = arith.constant 156 : index
    %c0_71 = arith.constant 0 : index
    %86 = vector.load %arg6[%c156, %c0_71] : memref<288x32xf32, #tpu.memory_space<vmem>>, vector<12x32xf32>
    %87 = arith.maximumf %85, %86 : vector<12x32xf32>
    %88 = arith.truncf %87 : vector<12x32xf32> to vector<12x32xbf16>
    %c0_72 = arith.constant 0 : index
    %c6 = arith.constant 6 : index
    %c0_73 = arith.constant 0 : index
    %c0_74 = arith.constant 0 : index
    %89 = vector.load %arg4[%c0_72, %c6, %c0_73, %c0_74] : memref<1x12x12x32xbf16, #tpu.memory_space<vmem>>, vector<1x1x12x32xbf16>
    %90 = vector.shape_cast %89 : vector<1x1x12x32xbf16> to vector<12x32xbf16>
    %91 = vector.shape_cast %88 : vector<12x32xbf16> to vector<1x1x12x32xbf16>
    tpu.vector_store %arg4[%c0_72, %c6, %c0_73, %c0_74], %91 {strides = array<i32>} : memref<1x12x12x32xbf16, #tpu.memory_space<vmem>>, vector<1x1x12x32xbf16>,
    %c168 = arith.constant 168 : index
    %c0_75 = arith.constant 0 : index
    %92 = vector.load %arg6[%c168, %c0_75] : memref<288x32xf32, #tpu.memory_space<vmem>>, vector<12x32xf32>
    %c180 = arith.constant 180 : index
    %c0_76 = arith.constant 0 : index
    %93 = vector.load %arg6[%c180, %c0_76] : memref<288x32xf32, #tpu.memory_space<vmem>>, vector<12x32xf32>
    %94 = arith.maximumf %92, %93 : vector<12x32xf32>
    %95 = arith.truncf %94 : vector<12x32xf32> to vector<12x32xbf16>
    %c0_77 = arith.constant 0 : index
    %c7 = arith.constant 7 : index
    %c0_78 = arith.constant 0 : index
    %c0_79 = arith.constant 0 : index
    %96 = vector.load %arg4[%c0_77, %c7, %c0_78, %c0_79] : memref<1x12x12x32xbf16, #tpu.memory_space<vmem>>, vector<1x1x12x32xbf16>
    %97 = vector.shape_cast %96 : vector<1x1x12x32xbf16> to vector<12x32xbf16>
    %98 = vector.shape_cast %95 : vector<12x32xbf16> to vector<1x1x12x32xbf16>
    tpu.vector_store %arg4[%c0_77, %c7, %c0_78, %c0_79], %98 {strides = array<i32>} : memref<1x12x12x32xbf16, #tpu.memory_space<vmem>>, vector<1x1x12x32xbf16>,
    %c192_80 = arith.constant 192 : index
    %c0_81 = arith.constant 0 : index
    %99 = vector.load %arg6[%c192_80, %c0_81] : memref<288x32xf32, #tpu.memory_space<vmem>>, vector<12x32xf32>
    %c204 = arith.constant 204 : index
    %c0_82 = arith.constant 0 : index
    %100 = vector.load %arg6[%c204, %c0_82] : memref<288x32xf32, #tpu.memory_space<vmem>>, vector<12x32xf32>
    %101 = arith.maximumf %99, %100 : vector<12x32xf32>
    %102 = arith.truncf %101 : vector<12x32xf32> to vector<12x32xbf16>
    %c0_83 = arith.constant 0 : index
    %c8 = arith.constant 8 : index
    %c0_84 = arith.constant 0 : index
    %c0_85 = arith.constant 0 : index
    %103 = vector.load %arg4[%c0_83, %c8, %c0_84, %c0_85] : memref<1x12x12x32xbf16, #tpu.memory_space<vmem>>, vector<1x1x12x32xbf16>
    %104 = vector.shape_cast %103 : vector<1x1x12x32xbf16> to vector<12x32xbf16>
    %105 = vector.shape_cast %102 : vector<12x32xbf16> to vector<1x1x12x32xbf16>
    tpu.vector_store %arg4[%c0_83, %c8, %c0_84, %c0_85], %105 {strides = array<i32>} : memref<1x12x12x32xbf16, #tpu.memory_space<vmem>>, vector<1x1x12x32xbf16>,
    %c216 = arith.constant 216 : index
    %c0_86 = arith.constant 0 : index
    %106 = vector.load %arg6[%c216, %c0_86] : memref<288x32xf32, #tpu.memory_space<vmem>>, vector<12x32xf32>
    %c228 = arith.constant 228 : index
    %c0_87 = arith.constant 0 : index
    %107 = vector.load %arg6[%c228, %c0_87] : memref<288x32xf32, #tpu.memory_space<vmem>>, vector<12x32xf32>
    %108 = arith.maximumf %106, %107 : vector<12x32xf32>
    %109 = arith.truncf %108 : vector<12x32xf32> to vector<12x32xbf16>
    %c0_88 = arith.constant 0 : index
    %c9 = arith.constant 9 : index
    %c0_89 = arith.constant 0 : index
    %c0_90 = arith.constant 0 : index
    %110 = vector.load %arg4[%c0_88, %c9, %c0_89, %c0_90] : memref<1x12x12x32xbf16, #tpu.memory_space<vmem>>, vector<1x1x12x32xbf16>
    %111 = vector.shape_cast %110 : vector<1x1x12x32xbf16> to vector<12x32xbf16>
    %112 = vector.shape_cast %109 : vector<12x32xbf16> to vector<1x1x12x32xbf16>
    tpu.vector_store %arg4[%c0_88, %c9, %c0_89, %c0_90], %112 {strides = array<i32>} : memref<1x12x12x32xbf16, #tpu.memory_space<vmem>>, vector<1x1x12x32xbf16>,
    %c240 = arith.constant 240 : index
    %c0_91 = arith.constant 0 : index
    %113 = vector.load %arg6[%c240, %c0_91] : memref<288x32xf32, #tpu.memory_space<vmem>>, vector<12x32xf32>
    %c252 = arith.constant 252 : index
    %c0_92 = arith.constant 0 : index
    %114 = vector.load %arg6[%c252, %c0_92] : memref<288x32xf32, #tpu.memory_space<vmem>>, vector<12x32xf32>
    %115 = arith.maximumf %113, %114 : vector<12x32xf32>
    %116 = arith.truncf %115 : vector<12x32xf32> to vector<12x32xbf16>
    %c0_93 = arith.constant 0 : index
    %c10 = arith.constant 10 : index
    %c0_94 = arith.constant 0 : index
    %c0_95 = arith.constant 0 : index
    %117 = vector.load %arg4[%c0_93, %c10, %c0_94, %c0_95] : memref<1x12x12x32xbf16, #tpu.memory_space<vmem>>, vector<1x1x12x32xbf16>
    %118 = vector.shape_cast %117 : vector<1x1x12x32xbf16> to vector<12x32xbf16>
    %119 = vector.shape_cast %116 : vector<12x32xbf16> to vector<1x1x12x32xbf16>
    tpu.vector_store %arg4[%c0_93, %c10, %c0_94, %c0_95], %119 {strides = array<i32>} : memref<1x12x12x32xbf16, #tpu.memory_space<vmem>>, vector<1x1x12x32xbf16>,
    %c264 = arith.constant 264 : index
    %c0_96 = arith.constant 0 : index
    %120 = vector.load %arg6[%c264, %c0_96] : memref<288x32xf32, #tpu.memory_space<vmem>>, vector<12x32xf32>
    %c276 = arith.constant 276 : index
    %c0_97 = arith.constant 0 : index
    %121 = vector.load %arg6[%c276, %c0_97] : memref<288x32xf32, #tpu.memory_space<vmem>>, vector<12x32xf32>
    %122 = arith.maximumf %120, %121 : vector<12x32xf32>
    %123 = arith.truncf %122 : vector<12x32xf32> to vector<12x32xbf16>
    %c0_98 = arith.constant 0 : index
    %c11 = arith.constant 11 : index
    %c0_99 = arith.constant 0 : index
    %c0_100 = arith.constant 0 : index
    %124 = vector.load %arg4[%c0_98, %c11, %c0_99, %c0_100] : memref<1x12x12x32xbf16, #tpu.memory_space<vmem>>, vector<1x1x12x32xbf16>
    %125 = vector.shape_cast %124 : vector<1x1x12x32xbf16> to vector<12x32xbf16>
    %126 = vector.shape_cast %123 : vector<12x32xbf16> to vector<1x1x12x32xbf16>
    tpu.vector_store %arg4[%c0_98, %c11, %c0_99, %c0_100], %126 {strides = array<i32>} : memref<1x12x12x32xbf16, #tpu.memory_space<vmem>>, vector<1x1x12x32xbf16>,
    return
  }
  func.func @transform_0(%arg0: i32) -> (i32, i32, i32) {
    %c0_i32 = arith.constant 0 : i32
    %c0_i32_0 = arith.constant 0 : i32
    %c0_i32_1 = arith.constant 0 : i32
    return %arg0, %c0_i32, %c0_i32_0 : i32, i32, i32
  }
  func.func @transform_1(%arg0: i32) -> (i32, i32) {
    %c0_i32 = arith.constant 0 : i32
    %c0_i32_0 = arith.constant 0 : i32
    %c0_i32_1 = arith.constant 0 : i32
    return %c0_i32, %c0_i32_0 : i32, i32
  }
  func.func @transform_2(%arg0: i32) -> (i32, i32) {
    %c0_i32 = arith.constant 0 : i32
    %c0_i32_0 = arith.constant 0 : i32
    %c0_i32_1 = arith.constant 0 : i32
    return %c0_i32, %c0_i32_0 : i32, i32
  }
  func.func @transform_3(%arg0: i32) -> (i32, i32, i32, i32) {
    %c0_i32 = arith.constant 0 : i32
    %c0_i32_0 = arith.constant 0 : i32
    %c0_i32_1 = arith.constant 0 : i32
    %c0_i32_2 = arith.constant 0 : i32
    return %arg0, %c0_i32, %c0_i32_0, %c0_i32_1 : i32, i32, i32, i32
  }
}

module attributes {stable_mosaic.version = 11 : i64} {
  func.func @_conv2_kernel(%arg0: i32, %arg1: memref<1x12x12x32xbf16, #tpu.memory_space<vmem>>, %arg2: memref<25x32x64xbf16, #tpu.memory_space<vmem>>, %arg3: memref<1x64xf32, #tpu.memory_space<vmem>>, %arg4: memref<1x16x64xbf16, #tpu.memory_space<vmem>>, %arg5: memref<64x64xf32, #tpu.memory_space<vmem>>, %arg6: memref<32x64xf32, #tpu.memory_space<vmem>>) attributes {dimension_semantics = [#tpu.dimension_semantics<parallel>], iteration_bounds = array<i64: 2>, scalar_prefetch = 0 : i64, scratch_operands = 2 : i64, tpu.core_type = #tpu.core_type<tc>, window_params = [{transform_indices = @transform_0, window_bounds = array<i64: 1, 12, 12, 32>}, {pipeline_mode = #tpu.pipeline_mode<synchronous>, transform_indices = @transform_1, window_bounds = array<i64: 25, 32, 64>}, {pipeline_mode = #tpu.pipeline_mode<synchronous>, transform_indices = @transform_2, window_bounds = array<i64: 1, 64>}, {transform_indices = @transform_3, window_bounds = array<i64: 1, 16, 64>}]} {
    %cst = arith.constant 0.000000e+00 : f32
    %0 = vector.broadcast %cst : f32 to vector<64x64xf32>
    %c0 = arith.constant 0 : index
    %c0_0 = arith.constant 0 : index
    %c0_1 = arith.constant 0 : index
    %c0_2 = arith.constant 0 : index
    %1 = vector.load %arg1[%c0, %c0_0, %c0_1, %c0_2] : memref<1x12x12x32xbf16, #tpu.memory_space<vmem>>, vector<1x8x8x32xbf16>
    %2 = vector.shape_cast %1 : vector<1x8x8x32xbf16> to vector<8x8x32xbf16>
    %3 = vector.shape_cast %2 : vector<8x8x32xbf16> to vector<64x32xbf16>
    %c0_3 = arith.constant 0 : index
    %c0_4 = arith.constant 0 : index
    %c0_5 = arith.constant 0 : index
    %4 = vector.load %arg2[%c0_3, %c0_4, %c0_5] : memref<25x32x64xbf16, #tpu.memory_space<vmem>>, vector<1x32x64xbf16>
    %5 = vector.shape_cast %4 : vector<1x32x64xbf16> to vector<32x64xbf16>
    %cst_6 = arith.constant dense<0.000000e+00> : vector<64x64xf32>
    %6 = tpu.matmul %3, %5, %cst_6 {dimension_numbers = #tpu.dot_dimension_numbers<[1], [0], [0], [1], [0, 0, 1, 1], [], []>} : vector<64x32xbf16>, vector<32x64xbf16>, vector<64x64xf32> -> vector<64x64xf32>
    %7 = arith.addf %0, %6 : vector<64x64xf32>
    %c0_7 = arith.constant 0 : index
    %c0_8 = arith.constant 0 : index
    %c1 = arith.constant 1 : index
    %c0_9 = arith.constant 0 : index
    %8 = vector.load %arg1[%c0_7, %c0_8, %c1, %c0_9] : memref<1x12x12x32xbf16, #tpu.memory_space<vmem>>, vector<1x8x8x32xbf16>
    %9 = vector.shape_cast %8 : vector<1x8x8x32xbf16> to vector<8x8x32xbf16>
    %10 = vector.shape_cast %9 : vector<8x8x32xbf16> to vector<64x32xbf16>
    %c1_10 = arith.constant 1 : index
    %c0_11 = arith.constant 0 : index
    %c0_12 = arith.constant 0 : index
    %11 = vector.load %arg2[%c1_10, %c0_11, %c0_12] : memref<25x32x64xbf16, #tpu.memory_space<vmem>>, vector<1x32x64xbf16>
    %12 = vector.shape_cast %11 : vector<1x32x64xbf16> to vector<32x64xbf16>
    %cst_13 = arith.constant dense<0.000000e+00> : vector<64x64xf32>
    %13 = tpu.matmul %10, %12, %cst_13 {dimension_numbers = #tpu.dot_dimension_numbers<[1], [0], [0], [1], [0, 0, 1, 1], [], []>} : vector<64x32xbf16>, vector<32x64xbf16>, vector<64x64xf32> -> vector<64x64xf32>
    %14 = arith.addf %7, %13 : vector<64x64xf32>
    %c0_14 = arith.constant 0 : index
    %c0_15 = arith.constant 0 : index
    %c2 = arith.constant 2 : index
    %c0_16 = arith.constant 0 : index
    %15 = vector.load %arg1[%c0_14, %c0_15, %c2, %c0_16] : memref<1x12x12x32xbf16, #tpu.memory_space<vmem>>, vector<1x8x8x32xbf16>
    %16 = vector.shape_cast %15 : vector<1x8x8x32xbf16> to vector<8x8x32xbf16>
    %17 = vector.shape_cast %16 : vector<8x8x32xbf16> to vector<64x32xbf16>
    %c2_17 = arith.constant 2 : index
    %c0_18 = arith.constant 0 : index
    %c0_19 = arith.constant 0 : index
    %18 = vector.load %arg2[%c2_17, %c0_18, %c0_19] : memref<25x32x64xbf16, #tpu.memory_space<vmem>>, vector<1x32x64xbf16>
    %19 = vector.shape_cast %18 : vector<1x32x64xbf16> to vector<32x64xbf16>
    %cst_20 = arith.constant dense<0.000000e+00> : vector<64x64xf32>
    %20 = tpu.matmul %17, %19, %cst_20 {dimension_numbers = #tpu.dot_dimension_numbers<[1], [0], [0], [1], [0, 0, 1, 1], [], []>} : vector<64x32xbf16>, vector<32x64xbf16>, vector<64x64xf32> -> vector<64x64xf32>
    %21 = arith.addf %14, %20 : vector<64x64xf32>
    %c0_21 = arith.constant 0 : index
    %c0_22 = arith.constant 0 : index
    %c3 = arith.constant 3 : index
    %c0_23 = arith.constant 0 : index
    %22 = vector.load %arg1[%c0_21, %c0_22, %c3, %c0_23] : memref<1x12x12x32xbf16, #tpu.memory_space<vmem>>, vector<1x8x8x32xbf16>
    %23 = vector.shape_cast %22 : vector<1x8x8x32xbf16> to vector<8x8x32xbf16>
    %24 = vector.shape_cast %23 : vector<8x8x32xbf16> to vector<64x32xbf16>
    %c3_24 = arith.constant 3 : index
    %c0_25 = arith.constant 0 : index
    %c0_26 = arith.constant 0 : index
    %25 = vector.load %arg2[%c3_24, %c0_25, %c0_26] : memref<25x32x64xbf16, #tpu.memory_space<vmem>>, vector<1x32x64xbf16>
    %26 = vector.shape_cast %25 : vector<1x32x64xbf16> to vector<32x64xbf16>
    %cst_27 = arith.constant dense<0.000000e+00> : vector<64x64xf32>
    %27 = tpu.matmul %24, %26, %cst_27 {dimension_numbers = #tpu.dot_dimension_numbers<[1], [0], [0], [1], [0, 0, 1, 1], [], []>} : vector<64x32xbf16>, vector<32x64xbf16>, vector<64x64xf32> -> vector<64x64xf32>
    %28 = arith.addf %21, %27 : vector<64x64xf32>
    %c0_28 = arith.constant 0 : index
    %c0_29 = arith.constant 0 : index
    %c4 = arith.constant 4 : index
    %c0_30 = arith.constant 0 : index
    %29 = vector.load %arg1[%c0_28, %c0_29, %c4, %c0_30] : memref<1x12x12x32xbf16, #tpu.memory_space<vmem>>, vector<1x8x8x32xbf16>
    %30 = vector.shape_cast %29 : vector<1x8x8x32xbf16> to vector<8x8x32xbf16>
    %31 = vector.shape_cast %30 : vector<8x8x32xbf16> to vector<64x32xbf16>
    %c4_31 = arith.constant 4 : index
    %c0_32 = arith.constant 0 : index
    %c0_33 = arith.constant 0 : index
    %32 = vector.load %arg2[%c4_31, %c0_32, %c0_33] : memref<25x32x64xbf16, #tpu.memory_space<vmem>>, vector<1x32x64xbf16>
    %33 = vector.shape_cast %32 : vector<1x32x64xbf16> to vector<32x64xbf16>
    %cst_34 = arith.constant dense<0.000000e+00> : vector<64x64xf32>
    %34 = tpu.matmul %31, %33, %cst_34 {dimension_numbers = #tpu.dot_dimension_numbers<[1], [0], [0], [1], [0, 0, 1, 1], [], []>} : vector<64x32xbf16>, vector<32x64xbf16>, vector<64x64xf32> -> vector<64x64xf32>
    %35 = arith.addf %28, %34 : vector<64x64xf32>
    %c0_35 = arith.constant 0 : index
    %c1_36 = arith.constant 1 : index
    %c0_37 = arith.constant 0 : index
    %c0_38 = arith.constant 0 : index
    %36 = vector.load %arg1[%c0_35, %c1_36, %c0_37, %c0_38] : memref<1x12x12x32xbf16, #tpu.memory_space<vmem>>, vector<1x8x8x32xbf16>
    %37 = vector.shape_cast %36 : vector<1x8x8x32xbf16> to vector<8x8x32xbf16>
    %38 = vector.shape_cast %37 : vector<8x8x32xbf16> to vector<64x32xbf16>
    %c5 = arith.constant 5 : index
    %c0_39 = arith.constant 0 : index
    %c0_40 = arith.constant 0 : index
    %39 = vector.load %arg2[%c5, %c0_39, %c0_40] : memref<25x32x64xbf16, #tpu.memory_space<vmem>>, vector<1x32x64xbf16>
    %40 = vector.shape_cast %39 : vector<1x32x64xbf16> to vector<32x64xbf16>
    %cst_41 = arith.constant dense<0.000000e+00> : vector<64x64xf32>
    %41 = tpu.matmul %38, %40, %cst_41 {dimension_numbers = #tpu.dot_dimension_numbers<[1], [0], [0], [1], [0, 0, 1, 1], [], []>} : vector<64x32xbf16>, vector<32x64xbf16>, vector<64x64xf32> -> vector<64x64xf32>
    %42 = arith.addf %35, %41 : vector<64x64xf32>
    %c0_42 = arith.constant 0 : index
    %c1_43 = arith.constant 1 : index
    %c1_44 = arith.constant 1 : index
    %c0_45 = arith.constant 0 : index
    %43 = vector.load %arg1[%c0_42, %c1_43, %c1_44, %c0_45] : memref<1x12x12x32xbf16, #tpu.memory_space<vmem>>, vector<1x8x8x32xbf16>
    %44 = vector.shape_cast %43 : vector<1x8x8x32xbf16> to vector<8x8x32xbf16>
    %45 = vector.shape_cast %44 : vector<8x8x32xbf16> to vector<64x32xbf16>
    %c6 = arith.constant 6 : index
    %c0_46 = arith.constant 0 : index
    %c0_47 = arith.constant 0 : index
    %46 = vector.load %arg2[%c6, %c0_46, %c0_47] : memref<25x32x64xbf16, #tpu.memory_space<vmem>>, vector<1x32x64xbf16>
    %47 = vector.shape_cast %46 : vector<1x32x64xbf16> to vector<32x64xbf16>
    %cst_48 = arith.constant dense<0.000000e+00> : vector<64x64xf32>
    %48 = tpu.matmul %45, %47, %cst_48 {dimension_numbers = #tpu.dot_dimension_numbers<[1], [0], [0], [1], [0, 0, 1, 1], [], []>} : vector<64x32xbf16>, vector<32x64xbf16>, vector<64x64xf32> -> vector<64x64xf32>
    %49 = arith.addf %42, %48 : vector<64x64xf32>
    %c0_49 = arith.constant 0 : index
    %c1_50 = arith.constant 1 : index
    %c2_51 = arith.constant 2 : index
    %c0_52 = arith.constant 0 : index
    %50 = vector.load %arg1[%c0_49, %c1_50, %c2_51, %c0_52] : memref<1x12x12x32xbf16, #tpu.memory_space<vmem>>, vector<1x8x8x32xbf16>
    %51 = vector.shape_cast %50 : vector<1x8x8x32xbf16> to vector<8x8x32xbf16>
    %52 = vector.shape_cast %51 : vector<8x8x32xbf16> to vector<64x32xbf16>
    %c7 = arith.constant 7 : index
    %c0_53 = arith.constant 0 : index
    %c0_54 = arith.constant 0 : index
    %53 = vector.load %arg2[%c7, %c0_53, %c0_54] : memref<25x32x64xbf16, #tpu.memory_space<vmem>>, vector<1x32x64xbf16>
    %54 = vector.shape_cast %53 : vector<1x32x64xbf16> to vector<32x64xbf16>
    %cst_55 = arith.constant dense<0.000000e+00> : vector<64x64xf32>
    %55 = tpu.matmul %52, %54, %cst_55 {dimension_numbers = #tpu.dot_dimension_numbers<[1], [0], [0], [1], [0, 0, 1, 1], [], []>} : vector<64x32xbf16>, vector<32x64xbf16>, vector<64x64xf32> -> vector<64x64xf32>
    %56 = arith.addf %49, %55 : vector<64x64xf32>
    %c0_56 = arith.constant 0 : index
    %c1_57 = arith.constant 1 : index
    %c3_58 = arith.constant 3 : index
    %c0_59 = arith.constant 0 : index
    %57 = vector.load %arg1[%c0_56, %c1_57, %c3_58, %c0_59] : memref<1x12x12x32xbf16, #tpu.memory_space<vmem>>, vector<1x8x8x32xbf16>
    %58 = vector.shape_cast %57 : vector<1x8x8x32xbf16> to vector<8x8x32xbf16>
    %59 = vector.shape_cast %58 : vector<8x8x32xbf16> to vector<64x32xbf16>
    %c8 = arith.constant 8 : index
    %c0_60 = arith.constant 0 : index
    %c0_61 = arith.constant 0 : index
    %60 = vector.load %arg2[%c8, %c0_60, %c0_61] : memref<25x32x64xbf16, #tpu.memory_space<vmem>>, vector<1x32x64xbf16>
    %61 = vector.shape_cast %60 : vector<1x32x64xbf16> to vector<32x64xbf16>
    %cst_62 = arith.constant dense<0.000000e+00> : vector<64x64xf32>
    %62 = tpu.matmul %59, %61, %cst_62 {dimension_numbers = #tpu.dot_dimension_numbers<[1], [0], [0], [1], [0, 0, 1, 1], [], []>} : vector<64x32xbf16>, vector<32x64xbf16>, vector<64x64xf32> -> vector<64x64xf32>
    %63 = arith.addf %56, %62 : vector<64x64xf32>
    %c0_63 = arith.constant 0 : index
    %c1_64 = arith.constant 1 : index
    %c4_65 = arith.constant 4 : index
    %c0_66 = arith.constant 0 : index
    %64 = vector.load %arg1[%c0_63, %c1_64, %c4_65, %c0_66] : memref<1x12x12x32xbf16, #tpu.memory_space<vmem>>, vector<1x8x8x32xbf16>
    %65 = vector.shape_cast %64 : vector<1x8x8x32xbf16> to vector<8x8x32xbf16>
    %66 = vector.shape_cast %65 : vector<8x8x32xbf16> to vector<64x32xbf16>
    %c9 = arith.constant 9 : index
    %c0_67 = arith.constant 0 : index
    %c0_68 = arith.constant 0 : index
    %67 = vector.load %arg2[%c9, %c0_67, %c0_68] : memref<25x32x64xbf16, #tpu.memory_space<vmem>>, vector<1x32x64xbf16>
    %68 = vector.shape_cast %67 : vector<1x32x64xbf16> to vector<32x64xbf16>
    %cst_69 = arith.constant dense<0.000000e+00> : vector<64x64xf32>
    %69 = tpu.matmul %66, %68, %cst_69 {dimension_numbers = #tpu.dot_dimension_numbers<[1], [0], [0], [1], [0, 0, 1, 1], [], []>} : vector<64x32xbf16>, vector<32x64xbf16>, vector<64x64xf32> -> vector<64x64xf32>
    %70 = arith.addf %63, %69 : vector<64x64xf32>
    %c0_70 = arith.constant 0 : index
    %c2_71 = arith.constant 2 : index
    %c0_72 = arith.constant 0 : index
    %c0_73 = arith.constant 0 : index
    %71 = vector.load %arg1[%c0_70, %c2_71, %c0_72, %c0_73] : memref<1x12x12x32xbf16, #tpu.memory_space<vmem>>, vector<1x8x8x32xbf16>
    %72 = vector.shape_cast %71 : vector<1x8x8x32xbf16> to vector<8x8x32xbf16>
    %73 = vector.shape_cast %72 : vector<8x8x32xbf16> to vector<64x32xbf16>
    %c10 = arith.constant 10 : index
    %c0_74 = arith.constant 0 : index
    %c0_75 = arith.constant 0 : index
    %74 = vector.load %arg2[%c10, %c0_74, %c0_75] : memref<25x32x64xbf16, #tpu.memory_space<vmem>>, vector<1x32x64xbf16>
    %75 = vector.shape_cast %74 : vector<1x32x64xbf16> to vector<32x64xbf16>
    %cst_76 = arith.constant dense<0.000000e+00> : vector<64x64xf32>
    %76 = tpu.matmul %73, %75, %cst_76 {dimension_numbers = #tpu.dot_dimension_numbers<[1], [0], [0], [1], [0, 0, 1, 1], [], []>} : vector<64x32xbf16>, vector<32x64xbf16>, vector<64x64xf32> -> vector<64x64xf32>
    %77 = arith.addf %70, %76 : vector<64x64xf32>
    %c0_77 = arith.constant 0 : index
    %c2_78 = arith.constant 2 : index
    %c1_79 = arith.constant 1 : index
    %c0_80 = arith.constant 0 : index
    %78 = vector.load %arg1[%c0_77, %c2_78, %c1_79, %c0_80] : memref<1x12x12x32xbf16, #tpu.memory_space<vmem>>, vector<1x8x8x32xbf16>
    %79 = vector.shape_cast %78 : vector<1x8x8x32xbf16> to vector<8x8x32xbf16>
    %80 = vector.shape_cast %79 : vector<8x8x32xbf16> to vector<64x32xbf16>
    %c11 = arith.constant 11 : index
    %c0_81 = arith.constant 0 : index
    %c0_82 = arith.constant 0 : index
    %81 = vector.load %arg2[%c11, %c0_81, %c0_82] : memref<25x32x64xbf16, #tpu.memory_space<vmem>>, vector<1x32x64xbf16>
    %82 = vector.shape_cast %81 : vector<1x32x64xbf16> to vector<32x64xbf16>
    %cst_83 = arith.constant dense<0.000000e+00> : vector<64x64xf32>
    %83 = tpu.matmul %80, %82, %cst_83 {dimension_numbers = #tpu.dot_dimension_numbers<[1], [0], [0], [1], [0, 0, 1, 1], [], []>} : vector<64x32xbf16>, vector<32x64xbf16>, vector<64x64xf32> -> vector<64x64xf32>
    %84 = arith.addf %77, %83 : vector<64x64xf32>
    %c0_84 = arith.constant 0 : index
    %c2_85 = arith.constant 2 : index
    %c2_86 = arith.constant 2 : index
    %c0_87 = arith.constant 0 : index
    %85 = vector.load %arg1[%c0_84, %c2_85, %c2_86, %c0_87] : memref<1x12x12x32xbf16, #tpu.memory_space<vmem>>, vector<1x8x8x32xbf16>
    %86 = vector.shape_cast %85 : vector<1x8x8x32xbf16> to vector<8x8x32xbf16>
    %87 = vector.shape_cast %86 : vector<8x8x32xbf16> to vector<64x32xbf16>
    %c12 = arith.constant 12 : index
    %c0_88 = arith.constant 0 : index
    %c0_89 = arith.constant 0 : index
    %88 = vector.load %arg2[%c12, %c0_88, %c0_89] : memref<25x32x64xbf16, #tpu.memory_space<vmem>>, vector<1x32x64xbf16>
    %89 = vector.shape_cast %88 : vector<1x32x64xbf16> to vector<32x64xbf16>
    %cst_90 = arith.constant dense<0.000000e+00> : vector<64x64xf32>
    %90 = tpu.matmul %87, %89, %cst_90 {dimension_numbers = #tpu.dot_dimension_numbers<[1], [0], [0], [1], [0, 0, 1, 1], [], []>} : vector<64x32xbf16>, vector<32x64xbf16>, vector<64x64xf32> -> vector<64x64xf32>
    %91 = arith.addf %84, %90 : vector<64x64xf32>
    %c0_91 = arith.constant 0 : index
    %c2_92 = arith.constant 2 : index
    %c3_93 = arith.constant 3 : index
    %c0_94 = arith.constant 0 : index
    %92 = vector.load %arg1[%c0_91, %c2_92, %c3_93, %c0_94] : memref<1x12x12x32xbf16, #tpu.memory_space<vmem>>, vector<1x8x8x32xbf16>
    %93 = vector.shape_cast %92 : vector<1x8x8x32xbf16> to vector<8x8x32xbf16>
    %94 = vector.shape_cast %93 : vector<8x8x32xbf16> to vector<64x32xbf16>
    %c13 = arith.constant 13 : index
    %c0_95 = arith.constant 0 : index
    %c0_96 = arith.constant 0 : index
    %95 = vector.load %arg2[%c13, %c0_95, %c0_96] : memref<25x32x64xbf16, #tpu.memory_space<vmem>>, vector<1x32x64xbf16>
    %96 = vector.shape_cast %95 : vector<1x32x64xbf16> to vector<32x64xbf16>
    %cst_97 = arith.constant dense<0.000000e+00> : vector<64x64xf32>
    %97 = tpu.matmul %94, %96, %cst_97 {dimension_numbers = #tpu.dot_dimension_numbers<[1], [0], [0], [1], [0, 0, 1, 1], [], []>} : vector<64x32xbf16>, vector<32x64xbf16>, vector<64x64xf32> -> vector<64x64xf32>
    %98 = arith.addf %91, %97 : vector<64x64xf32>
    %c0_98 = arith.constant 0 : index
    %c2_99 = arith.constant 2 : index
    %c4_100 = arith.constant 4 : index
    %c0_101 = arith.constant 0 : index
    %99 = vector.load %arg1[%c0_98, %c2_99, %c4_100, %c0_101] : memref<1x12x12x32xbf16, #tpu.memory_space<vmem>>, vector<1x8x8x32xbf16>
    %100 = vector.shape_cast %99 : vector<1x8x8x32xbf16> to vector<8x8x32xbf16>
    %101 = vector.shape_cast %100 : vector<8x8x32xbf16> to vector<64x32xbf16>
    %c14 = arith.constant 14 : index
    %c0_102 = arith.constant 0 : index
    %c0_103 = arith.constant 0 : index
    %102 = vector.load %arg2[%c14, %c0_102, %c0_103] : memref<25x32x64xbf16, #tpu.memory_space<vmem>>, vector<1x32x64xbf16>
    %103 = vector.shape_cast %102 : vector<1x32x64xbf16> to vector<32x64xbf16>
    %cst_104 = arith.constant dense<0.000000e+00> : vector<64x64xf32>
    %104 = tpu.matmul %101, %103, %cst_104 {dimension_numbers = #tpu.dot_dimension_numbers<[1], [0], [0], [1], [0, 0, 1, 1], [], []>} : vector<64x32xbf16>, vector<32x64xbf16>, vector<64x64xf32> -> vector<64x64xf32>
    %105 = arith.addf %98, %104 : vector<64x64xf32>
    %c0_105 = arith.constant 0 : index
    %c3_106 = arith.constant 3 : index
    %c0_107 = arith.constant 0 : index
    %c0_108 = arith.constant 0 : index
    %106 = vector.load %arg1[%c0_105, %c3_106, %c0_107, %c0_108] : memref<1x12x12x32xbf16, #tpu.memory_space<vmem>>, vector<1x8x8x32xbf16>
    %107 = vector.shape_cast %106 : vector<1x8x8x32xbf16> to vector<8x8x32xbf16>
    %108 = vector.shape_cast %107 : vector<8x8x32xbf16> to vector<64x32xbf16>
    %c15 = arith.constant 15 : index
    %c0_109 = arith.constant 0 : index
    %c0_110 = arith.constant 0 : index
    %109 = vector.load %arg2[%c15, %c0_109, %c0_110] : memref<25x32x64xbf16, #tpu.memory_space<vmem>>, vector<1x32x64xbf16>
    %110 = vector.shape_cast %109 : vector<1x32x64xbf16> to vector<32x64xbf16>
    %cst_111 = arith.constant dense<0.000000e+00> : vector<64x64xf32>
    %111 = tpu.matmul %108, %110, %cst_111 {dimension_numbers = #tpu.dot_dimension_numbers<[1], [0], [0], [1], [0, 0, 1, 1], [], []>} : vector<64x32xbf16>, vector<32x64xbf16>, vector<64x64xf32> -> vector<64x64xf32>
    %112 = arith.addf %105, %111 : vector<64x64xf32>
    %c0_112 = arith.constant 0 : index
    %c3_113 = arith.constant 3 : index
    %c1_114 = arith.constant 1 : index
    %c0_115 = arith.constant 0 : index
    %113 = vector.load %arg1[%c0_112, %c3_113, %c1_114, %c0_115] : memref<1x12x12x32xbf16, #tpu.memory_space<vmem>>, vector<1x8x8x32xbf16>
    %114 = vector.shape_cast %113 : vector<1x8x8x32xbf16> to vector<8x8x32xbf16>
    %115 = vector.shape_cast %114 : vector<8x8x32xbf16> to vector<64x32xbf16>
    %c16 = arith.constant 16 : index
    %c0_116 = arith.constant 0 : index
    %c0_117 = arith.constant 0 : index
    %116 = vector.load %arg2[%c16, %c0_116, %c0_117] : memref<25x32x64xbf16, #tpu.memory_space<vmem>>, vector<1x32x64xbf16>
    %117 = vector.shape_cast %116 : vector<1x32x64xbf16> to vector<32x64xbf16>
    %cst_118 = arith.constant dense<0.000000e+00> : vector<64x64xf32>
    %118 = tpu.matmul %115, %117, %cst_118 {dimension_numbers = #tpu.dot_dimension_numbers<[1], [0], [0], [1], [0, 0, 1, 1], [], []>} : vector<64x32xbf16>, vector<32x64xbf16>, vector<64x64xf32> -> vector<64x64xf32>
    %119 = arith.addf %112, %118 : vector<64x64xf32>
    %c0_119 = arith.constant 0 : index
    %c3_120 = arith.constant 3 : index
    %c2_121 = arith.constant 2 : index
    %c0_122 = arith.constant 0 : index
    %120 = vector.load %arg1[%c0_119, %c3_120, %c2_121, %c0_122] : memref<1x12x12x32xbf16, #tpu.memory_space<vmem>>, vector<1x8x8x32xbf16>
    %121 = vector.shape_cast %120 : vector<1x8x8x32xbf16> to vector<8x8x32xbf16>
    %122 = vector.shape_cast %121 : vector<8x8x32xbf16> to vector<64x32xbf16>
    %c17 = arith.constant 17 : index
    %c0_123 = arith.constant 0 : index
    %c0_124 = arith.constant 0 : index
    %123 = vector.load %arg2[%c17, %c0_123, %c0_124] : memref<25x32x64xbf16, #tpu.memory_space<vmem>>, vector<1x32x64xbf16>
    %124 = vector.shape_cast %123 : vector<1x32x64xbf16> to vector<32x64xbf16>
    %cst_125 = arith.constant dense<0.000000e+00> : vector<64x64xf32>
    %125 = tpu.matmul %122, %124, %cst_125 {dimension_numbers = #tpu.dot_dimension_numbers<[1], [0], [0], [1], [0, 0, 1, 1], [], []>} : vector<64x32xbf16>, vector<32x64xbf16>, vector<64x64xf32> -> vector<64x64xf32>
    %126 = arith.addf %119, %125 : vector<64x64xf32>
    %c0_126 = arith.constant 0 : index
    %c3_127 = arith.constant 3 : index
    %c3_128 = arith.constant 3 : index
    %c0_129 = arith.constant 0 : index
    %127 = vector.load %arg1[%c0_126, %c3_127, %c3_128, %c0_129] : memref<1x12x12x32xbf16, #tpu.memory_space<vmem>>, vector<1x8x8x32xbf16>
    %128 = vector.shape_cast %127 : vector<1x8x8x32xbf16> to vector<8x8x32xbf16>
    %129 = vector.shape_cast %128 : vector<8x8x32xbf16> to vector<64x32xbf16>
    %c18 = arith.constant 18 : index
    %c0_130 = arith.constant 0 : index
    %c0_131 = arith.constant 0 : index
    %130 = vector.load %arg2[%c18, %c0_130, %c0_131] : memref<25x32x64xbf16, #tpu.memory_space<vmem>>, vector<1x32x64xbf16>
    %131 = vector.shape_cast %130 : vector<1x32x64xbf16> to vector<32x64xbf16>
    %cst_132 = arith.constant dense<0.000000e+00> : vector<64x64xf32>
    %132 = tpu.matmul %129, %131, %cst_132 {dimension_numbers = #tpu.dot_dimension_numbers<[1], [0], [0], [1], [0, 0, 1, 1], [], []>} : vector<64x32xbf16>, vector<32x64xbf16>, vector<64x64xf32> -> vector<64x64xf32>
    %133 = arith.addf %126, %132 : vector<64x64xf32>
    %c0_133 = arith.constant 0 : index
    %c3_134 = arith.constant 3 : index
    %c4_135 = arith.constant 4 : index
    %c0_136 = arith.constant 0 : index
    %134 = vector.load %arg1[%c0_133, %c3_134, %c4_135, %c0_136] : memref<1x12x12x32xbf16, #tpu.memory_space<vmem>>, vector<1x8x8x32xbf16>
    %135 = vector.shape_cast %134 : vector<1x8x8x32xbf16> to vector<8x8x32xbf16>
    %136 = vector.shape_cast %135 : vector<8x8x32xbf16> to vector<64x32xbf16>
    %c19 = arith.constant 19 : index
    %c0_137 = arith.constant 0 : index
    %c0_138 = arith.constant 0 : index
    %137 = vector.load %arg2[%c19, %c0_137, %c0_138] : memref<25x32x64xbf16, #tpu.memory_space<vmem>>, vector<1x32x64xbf16>
    %138 = vector.shape_cast %137 : vector<1x32x64xbf16> to vector<32x64xbf16>
    %cst_139 = arith.constant dense<0.000000e+00> : vector<64x64xf32>
    %139 = tpu.matmul %136, %138, %cst_139 {dimension_numbers = #tpu.dot_dimension_numbers<[1], [0], [0], [1], [0, 0, 1, 1], [], []>} : vector<64x32xbf16>, vector<32x64xbf16>, vector<64x64xf32> -> vector<64x64xf32>
    %140 = arith.addf %133, %139 : vector<64x64xf32>
    %c0_140 = arith.constant 0 : index
    %c4_141 = arith.constant 4 : index
    %c0_142 = arith.constant 0 : index
    %c0_143 = arith.constant 0 : index
    %141 = vector.load %arg1[%c0_140, %c4_141, %c0_142, %c0_143] : memref<1x12x12x32xbf16, #tpu.memory_space<vmem>>, vector<1x8x8x32xbf16>
    %142 = vector.shape_cast %141 : vector<1x8x8x32xbf16> to vector<8x8x32xbf16>
    %143 = vector.shape_cast %142 : vector<8x8x32xbf16> to vector<64x32xbf16>
    %c20 = arith.constant 20 : index
    %c0_144 = arith.constant 0 : index
    %c0_145 = arith.constant 0 : index
    %144 = vector.load %arg2[%c20, %c0_144, %c0_145] : memref<25x32x64xbf16, #tpu.memory_space<vmem>>, vector<1x32x64xbf16>
    %145 = vector.shape_cast %144 : vector<1x32x64xbf16> to vector<32x64xbf16>
    %cst_146 = arith.constant dense<0.000000e+00> : vector<64x64xf32>
    %146 = tpu.matmul %143, %145, %cst_146 {dimension_numbers = #tpu.dot_dimension_numbers<[1], [0], [0], [1], [0, 0, 1, 1], [], []>} : vector<64x32xbf16>, vector<32x64xbf16>, vector<64x64xf32> -> vector<64x64xf32>
    %147 = arith.addf %140, %146 : vector<64x64xf32>
    %c0_147 = arith.constant 0 : index
    %c4_148 = arith.constant 4 : index
    %c1_149 = arith.constant 1 : index
    %c0_150 = arith.constant 0 : index
    %148 = vector.load %arg1[%c0_147, %c4_148, %c1_149, %c0_150] : memref<1x12x12x32xbf16, #tpu.memory_space<vmem>>, vector<1x8x8x32xbf16>
    %149 = vector.shape_cast %148 : vector<1x8x8x32xbf16> to vector<8x8x32xbf16>
    %150 = vector.shape_cast %149 : vector<8x8x32xbf16> to vector<64x32xbf16>
    %c21 = arith.constant 21 : index
    %c0_151 = arith.constant 0 : index
    %c0_152 = arith.constant 0 : index
    %151 = vector.load %arg2[%c21, %c0_151, %c0_152] : memref<25x32x64xbf16, #tpu.memory_space<vmem>>, vector<1x32x64xbf16>
    %152 = vector.shape_cast %151 : vector<1x32x64xbf16> to vector<32x64xbf16>
    %cst_153 = arith.constant dense<0.000000e+00> : vector<64x64xf32>
    %153 = tpu.matmul %150, %152, %cst_153 {dimension_numbers = #tpu.dot_dimension_numbers<[1], [0], [0], [1], [0, 0, 1, 1], [], []>} : vector<64x32xbf16>, vector<32x64xbf16>, vector<64x64xf32> -> vector<64x64xf32>
    %154 = arith.addf %147, %153 : vector<64x64xf32>
    %c0_154 = arith.constant 0 : index
    %c4_155 = arith.constant 4 : index
    %c2_156 = arith.constant 2 : index
    %c0_157 = arith.constant 0 : index
    %155 = vector.load %arg1[%c0_154, %c4_155, %c2_156, %c0_157] : memref<1x12x12x32xbf16, #tpu.memory_space<vmem>>, vector<1x8x8x32xbf16>
    %156 = vector.shape_cast %155 : vector<1x8x8x32xbf16> to vector<8x8x32xbf16>
    %157 = vector.shape_cast %156 : vector<8x8x32xbf16> to vector<64x32xbf16>
    %c22 = arith.constant 22 : index
    %c0_158 = arith.constant 0 : index
    %c0_159 = arith.constant 0 : index
    %158 = vector.load %arg2[%c22, %c0_158, %c0_159] : memref<25x32x64xbf16, #tpu.memory_space<vmem>>, vector<1x32x64xbf16>
    %159 = vector.shape_cast %158 : vector<1x32x64xbf16> to vector<32x64xbf16>
    %cst_160 = arith.constant dense<0.000000e+00> : vector<64x64xf32>
    %160 = tpu.matmul %157, %159, %cst_160 {dimension_numbers = #tpu.dot_dimension_numbers<[1], [0], [0], [1], [0, 0, 1, 1], [], []>} : vector<64x32xbf16>, vector<32x64xbf16>, vector<64x64xf32> -> vector<64x64xf32>
    %161 = arith.addf %154, %160 : vector<64x64xf32>
    %c0_161 = arith.constant 0 : index
    %c4_162 = arith.constant 4 : index
    %c3_163 = arith.constant 3 : index
    %c0_164 = arith.constant 0 : index
    %162 = vector.load %arg1[%c0_161, %c4_162, %c3_163, %c0_164] : memref<1x12x12x32xbf16, #tpu.memory_space<vmem>>, vector<1x8x8x32xbf16>
    %163 = vector.shape_cast %162 : vector<1x8x8x32xbf16> to vector<8x8x32xbf16>
    %164 = vector.shape_cast %163 : vector<8x8x32xbf16> to vector<64x32xbf16>
    %c23 = arith.constant 23 : index
    %c0_165 = arith.constant 0 : index
    %c0_166 = arith.constant 0 : index
    %165 = vector.load %arg2[%c23, %c0_165, %c0_166] : memref<25x32x64xbf16, #tpu.memory_space<vmem>>, vector<1x32x64xbf16>
    %166 = vector.shape_cast %165 : vector<1x32x64xbf16> to vector<32x64xbf16>
    %cst_167 = arith.constant dense<0.000000e+00> : vector<64x64xf32>
    %167 = tpu.matmul %164, %166, %cst_167 {dimension_numbers = #tpu.dot_dimension_numbers<[1], [0], [0], [1], [0, 0, 1, 1], [], []>} : vector<64x32xbf16>, vector<32x64xbf16>, vector<64x64xf32> -> vector<64x64xf32>
    %168 = arith.addf %161, %167 : vector<64x64xf32>
    %c0_168 = arith.constant 0 : index
    %c4_169 = arith.constant 4 : index
    %c4_170 = arith.constant 4 : index
    %c0_171 = arith.constant 0 : index
    %169 = vector.load %arg1[%c0_168, %c4_169, %c4_170, %c0_171] : memref<1x12x12x32xbf16, #tpu.memory_space<vmem>>, vector<1x8x8x32xbf16>
    %170 = vector.shape_cast %169 : vector<1x8x8x32xbf16> to vector<8x8x32xbf16>
    %171 = vector.shape_cast %170 : vector<8x8x32xbf16> to vector<64x32xbf16>
    %c24 = arith.constant 24 : index
    %c0_172 = arith.constant 0 : index
    %c0_173 = arith.constant 0 : index
    %172 = vector.load %arg2[%c24, %c0_172, %c0_173] : memref<25x32x64xbf16, #tpu.memory_space<vmem>>, vector<1x32x64xbf16>
    %173 = vector.shape_cast %172 : vector<1x32x64xbf16> to vector<32x64xbf16>
    %cst_174 = arith.constant dense<0.000000e+00> : vector<64x64xf32>
    %174 = tpu.matmul %171, %173, %cst_174 {dimension_numbers = #tpu.dot_dimension_numbers<[1], [0], [0], [1], [0, 0, 1, 1], [], []>} : vector<64x32xbf16>, vector<32x64xbf16>, vector<64x64xf32> -> vector<64x64xf32>
    %175 = arith.addf %168, %174 : vector<64x64xf32>
    %c0_175 = arith.constant 0 : index
    %c0_176 = arith.constant 0 : index
    %176 = vector.load %arg3[%c0_175, %c0_176] : memref<1x64xf32, #tpu.memory_space<vmem>>, vector<1x64xf32>
    %177 = vector.broadcast %176 : vector<1x64xf32> to vector<64x64xf32>
    %178 = arith.addf %175, %177 : vector<64x64xf32>
    %cst_177 = arith.constant 0.000000e+00 : f32
    %179 = vector.broadcast %cst_177 : f32 to vector<64x64xf32>
    %180 = arith.cmpf oge, %178, %179 : vector<64x64xf32>
    %cst_178 = arith.constant 2.500000e-01 : f32
    %181 = vector.broadcast %cst_178 : f32 to vector<64x64xf32>
    %182 = arith.mulf %181, %178 : vector<64x64xf32>
    %183 = arith.select %180, %178, %182 : vector<64x64xi1>, vector<64x64xf32>
    %c0_179 = arith.constant 0 : index
    %c0_180 = arith.constant 0 : index
    %184 = vector.load %arg5[%c0_179, %c0_180] : memref<64x64xf32, #tpu.memory_space<vmem>>, vector<64x64xf32>
    tpu.vector_store %arg5[%c0_179, %c0_180], %183 {strides = array<i32>} : memref<64x64xf32, #tpu.memory_space<vmem>>, vector<64x64xf32>,
    %c0_181 = arith.constant 0 : index
    %c0_182 = arith.constant 0 : index
    %185 = tpu.strided_load %arg5[%c0_181, %c0_182] {strides = array<i32: 2, 1>} : memref<64x64xf32, #tpu.memory_space<vmem>>, vector<32x64xf32>
    %c1_183 = arith.constant 1 : index
    %c0_184 = arith.constant 0 : index
    %186 = tpu.strided_load %arg5[%c1_183, %c0_184] {strides = array<i32: 2, 1>} : memref<64x64xf32, #tpu.memory_space<vmem>>, vector<32x64xf32>
    %187 = arith.maximumf %185, %186 : vector<32x64xf32>
    %c0_185 = arith.constant 0 : index
    %c0_186 = arith.constant 0 : index
    %188 = vector.load %arg6[%c0_185, %c0_186] : memref<32x64xf32, #tpu.memory_space<vmem>>, vector<32x64xf32>
    tpu.vector_store %arg6[%c0_185, %c0_186], %187 {strides = array<i32>} : memref<32x64xf32, #tpu.memory_space<vmem>>, vector<32x64xf32>,
    %c0_187 = arith.constant 0 : index
    %c0_188 = arith.constant 0 : index
    %189 = vector.load %arg6[%c0_187, %c0_188] : memref<32x64xf32, #tpu.memory_space<vmem>>, vector<4x64xf32>
    %c4_189 = arith.constant 4 : index
    %c0_190 = arith.constant 0 : index
    %190 = vector.load %arg6[%c4_189, %c0_190] : memref<32x64xf32, #tpu.memory_space<vmem>>, vector<4x64xf32>
    %191 = arith.maximumf %189, %190 : vector<4x64xf32>
    %192 = arith.truncf %191 : vector<4x64xf32> to vector<4x64xbf16>
    %c0_191 = arith.constant 0 : index
    %c0_192 = arith.constant 0 : index
    %c0_193 = arith.constant 0 : index
    %193 = vector.load %arg4[%c0_191, %c0_192, %c0_193] : memref<1x16x64xbf16, #tpu.memory_space<vmem>>, vector<1x4x64xbf16>
    %194 = vector.shape_cast %193 : vector<1x4x64xbf16> to vector<4x64xbf16>
    %195 = vector.shape_cast %192 : vector<4x64xbf16> to vector<1x4x64xbf16>
    tpu.vector_store %arg4[%c0_191, %c0_192, %c0_193], %195 {strides = array<i32>} : memref<1x16x64xbf16, #tpu.memory_space<vmem>>, vector<1x4x64xbf16>,
    %c8_194 = arith.constant 8 : index
    %c0_195 = arith.constant 0 : index
    %196 = vector.load %arg6[%c8_194, %c0_195] : memref<32x64xf32, #tpu.memory_space<vmem>>, vector<4x64xf32>
    %c12_196 = arith.constant 12 : index
    %c0_197 = arith.constant 0 : index
    %197 = vector.load %arg6[%c12_196, %c0_197] : memref<32x64xf32, #tpu.memory_space<vmem>>, vector<4x64xf32>
    %198 = arith.maximumf %196, %197 : vector<4x64xf32>
    %199 = arith.truncf %198 : vector<4x64xf32> to vector<4x64xbf16>
    %c0_198 = arith.constant 0 : index
    %c4_199 = arith.constant 4 : index
    %c0_200 = arith.constant 0 : index
    %200 = vector.load %arg4[%c0_198, %c4_199, %c0_200] : memref<1x16x64xbf16, #tpu.memory_space<vmem>>, vector<1x4x64xbf16>
    %201 = vector.shape_cast %200 : vector<1x4x64xbf16> to vector<4x64xbf16>
    %202 = vector.shape_cast %199 : vector<4x64xbf16> to vector<1x4x64xbf16>
    tpu.vector_store %arg4[%c0_198, %c4_199, %c0_200], %202 {strides = array<i32>} : memref<1x16x64xbf16, #tpu.memory_space<vmem>>, vector<1x4x64xbf16>,
    %c16_201 = arith.constant 16 : index
    %c0_202 = arith.constant 0 : index
    %203 = vector.load %arg6[%c16_201, %c0_202] : memref<32x64xf32, #tpu.memory_space<vmem>>, vector<4x64xf32>
    %c20_203 = arith.constant 20 : index
    %c0_204 = arith.constant 0 : index
    %204 = vector.load %arg6[%c20_203, %c0_204] : memref<32x64xf32, #tpu.memory_space<vmem>>, vector<4x64xf32>
    %205 = arith.maximumf %203, %204 : vector<4x64xf32>
    %206 = arith.truncf %205 : vector<4x64xf32> to vector<4x64xbf16>
    %c0_205 = arith.constant 0 : index
    %c8_206 = arith.constant 8 : index
    %c0_207 = arith.constant 0 : index
    %207 = vector.load %arg4[%c0_205, %c8_206, %c0_207] : memref<1x16x64xbf16, #tpu.memory_space<vmem>>, vector<1x4x64xbf16>
    %208 = vector.shape_cast %207 : vector<1x4x64xbf16> to vector<4x64xbf16>
    %209 = vector.shape_cast %206 : vector<4x64xbf16> to vector<1x4x64xbf16>
    tpu.vector_store %arg4[%c0_205, %c8_206, %c0_207], %209 {strides = array<i32>} : memref<1x16x64xbf16, #tpu.memory_space<vmem>>, vector<1x4x64xbf16>,
    %c24_208 = arith.constant 24 : index
    %c0_209 = arith.constant 0 : index
    %210 = vector.load %arg6[%c24_208, %c0_209] : memref<32x64xf32, #tpu.memory_space<vmem>>, vector<4x64xf32>
    %c28 = arith.constant 28 : index
    %c0_210 = arith.constant 0 : index
    %211 = vector.load %arg6[%c28, %c0_210] : memref<32x64xf32, #tpu.memory_space<vmem>>, vector<4x64xf32>
    %212 = arith.maximumf %210, %211 : vector<4x64xf32>
    %213 = arith.truncf %212 : vector<4x64xf32> to vector<4x64xbf16>
    %c0_211 = arith.constant 0 : index
    %c12_212 = arith.constant 12 : index
    %c0_213 = arith.constant 0 : index
    %214 = vector.load %arg4[%c0_211, %c12_212, %c0_213] : memref<1x16x64xbf16, #tpu.memory_space<vmem>>, vector<1x4x64xbf16>
    %215 = vector.shape_cast %214 : vector<1x4x64xbf16> to vector<4x64xbf16>
    %216 = vector.shape_cast %213 : vector<4x64xbf16> to vector<1x4x64xbf16>
    tpu.vector_store %arg4[%c0_211, %c12_212, %c0_213], %216 {strides = array<i32>} : memref<1x16x64xbf16, #tpu.memory_space<vmem>>, vector<1x4x64xbf16>,
    return
  }
  func.func @transform_0(%arg0: i32) -> (i32, i32, i32, i32) {
    %c0_i32 = arith.constant 0 : i32
    %c0_i32_0 = arith.constant 0 : i32
    %c0_i32_1 = arith.constant 0 : i32
    %c0_i32_2 = arith.constant 0 : i32
    return %arg0, %c0_i32, %c0_i32_0, %c0_i32_1 : i32, i32, i32, i32
  }
  func.func @transform_1(%arg0: i32) -> (i32, i32, i32) {
    %c0_i32 = arith.constant 0 : i32
    %c0_i32_0 = arith.constant 0 : i32
    %c0_i32_1 = arith.constant 0 : i32
    %c0_i32_2 = arith.constant 0 : i32
    return %c0_i32, %c0_i32_0, %c0_i32_1 : i32, i32, i32
  }
  func.func @transform_2(%arg0: i32) -> (i32, i32) {
    %c0_i32 = arith.constant 0 : i32
    %c0_i32_0 = arith.constant 0 : i32
    %c0_i32_1 = arith.constant 0 : i32
    return %c0_i32, %c0_i32_0 : i32, i32
  }
  func.func @transform_3(%arg0: i32) -> (i32, i32, i32) {
    %c0_i32 = arith.constant 0 : i32
    %c0_i32_0 = arith.constant 0 : i32
    %c0_i32_1 = arith.constant 0 : i32
    return %arg0, %c0_i32, %c0_i32_0 : i32, i32, i32
  }
}

module attributes {stable_mosaic.version = 11 : i64} {
  func.func @_fc_kernel(%arg0: i32, %arg1: memref<2x1024xbf16, #tpu.memory_space<vmem>>, %arg2: memref<1024x512xbf16, #tpu.memory_space<vmem>>, %arg3: memref<1x512xf32, #tpu.memory_space<vmem>>, %arg4: memref<512x128xbf16, #tpu.memory_space<vmem>>, %arg5: memref<1x128xf32, #tpu.memory_space<vmem>>, %arg6: memref<2x128xf32, #tpu.memory_space<vmem>>) attributes {dimension_semantics = [#tpu.dimension_semantics<parallel>], iteration_bounds = array<i64: 1>, scalar_prefetch = 0 : i64, scratch_operands = 0 : i64, tpu.core_type = #tpu.core_type<tc>, window_params = [{transform_indices = @transform_0, window_bounds = array<i64: 2, 1024>}, {pipeline_mode = #tpu.pipeline_mode<synchronous>, transform_indices = @transform_1, window_bounds = array<i64: 1024, 512>}, {pipeline_mode = #tpu.pipeline_mode<synchronous>, transform_indices = @transform_2, window_bounds = array<i64: 1, 512>}, {pipeline_mode = #tpu.pipeline_mode<synchronous>, transform_indices = @transform_3, window_bounds = array<i64: 512, 128>}, {pipeline_mode = #tpu.pipeline_mode<synchronous>, transform_indices = @transform_4, window_bounds = array<i64: 1, 128>}, {transform_indices = @transform_5, window_bounds = array<i64: 2, 128>}]} {
    %c0 = arith.constant 0 : index
    %c0_0 = arith.constant 0 : index
    %0 = vector.load %arg1[%c0, %c0_0] : memref<2x1024xbf16, #tpu.memory_space<vmem>>, vector<2x1024xbf16>
    %c0_1 = arith.constant 0 : index
    %c0_2 = arith.constant 0 : index
    %1 = vector.load %arg2[%c0_1, %c0_2] : memref<1024x512xbf16, #tpu.memory_space<vmem>>, vector<1024x512xbf16>
    %cst = arith.constant dense<0.000000e+00> : vector<2x512xf32>
    %2 = tpu.matmul %0, %1, %cst {dimension_numbers = #tpu.dot_dimension_numbers<[1], [0], [0], [1], [0, 0, 1, 1], [], []>} : vector<2x1024xbf16>, vector<1024x512xbf16>, vector<2x512xf32> -> vector<2x512xf32>
    %c0_3 = arith.constant 0 : index
    %c0_4 = arith.constant 0 : index
    %3 = vector.load %arg3[%c0_3, %c0_4] : memref<1x512xf32, #tpu.memory_space<vmem>>, vector<1x512xf32>
    %4 = vector.broadcast %3 : vector<1x512xf32> to vector<2x512xf32>
    %5 = arith.addf %2, %4 : vector<2x512xf32>
    %cst_5 = arith.constant 0.000000e+00 : f32
    %6 = vector.broadcast %cst_5 : f32 to vector<2x512xf32>
    %7 = arith.cmpf oge, %5, %6 : vector<2x512xf32>
    %cst_6 = arith.constant 2.500000e-01 : f32
    %8 = vector.broadcast %cst_6 : f32 to vector<2x512xf32>
    %9 = arith.mulf %8, %5 : vector<2x512xf32>
    %10 = arith.select %7, %5, %9 : vector<2x512xi1>, vector<2x512xf32>
    %11 = arith.truncf %10 : vector<2x512xf32> to vector<2x512xbf16>
    %c0_7 = arith.constant 0 : index
    %c0_8 = arith.constant 0 : index
    %12 = vector.load %arg4[%c0_7, %c0_8] : memref<512x128xbf16, #tpu.memory_space<vmem>>, vector<512x128xbf16>
    %cst_9 = arith.constant dense<0.000000e+00> : vector<2x128xf32>
    %13 = tpu.matmul %11, %12, %cst_9 {dimension_numbers = #tpu.dot_dimension_numbers<[1], [0], [0], [1], [0, 0, 1, 1], [], []>} : vector<2x512xbf16>, vector<512x128xbf16>, vector<2x128xf32> -> vector<2x128xf32>
    %c0_10 = arith.constant 0 : index
    %c0_11 = arith.constant 0 : index
    %14 = vector.load %arg5[%c0_10, %c0_11] : memref<1x128xf32, #tpu.memory_space<vmem>>, vector<1x128xf32>
    %15 = vector.broadcast %14 : vector<1x128xf32> to vector<2x128xf32>
    %16 = arith.addf %13, %15 : vector<2x128xf32>
    %c0_12 = arith.constant 0 : index
    %c0_13 = arith.constant 0 : index
    %17 = vector.load %arg6[%c0_12, %c0_13] : memref<2x128xf32, #tpu.memory_space<vmem>>, vector<2x128xf32>
    tpu.vector_store %arg6[%c0_12, %c0_13], %16 {strides = array<i32>} : memref<2x128xf32, #tpu.memory_space<vmem>>, vector<2x128xf32>,
    return
  }
  func.func @transform_0(%arg0: i32) -> (i32, i32) {
    %c0_i32 = arith.constant 0 : i32
    %c0_i32_0 = arith.constant 0 : i32
    return %arg0, %c0_i32 : i32, i32
  }
  func.func @transform_1(%arg0: i32) -> (i32, i32) {
    %c0_i32 = arith.constant 0 : i32
    %c0_i32_0 = arith.constant 0 : i32
    %c0_i32_1 = arith.constant 0 : i32
    return %c0_i32, %c0_i32_0 : i32, i32
  }
  func.func @transform_2(%arg0: i32) -> (i32, i32) {
    %c0_i32 = arith.constant 0 : i32
    %c0_i32_0 = arith.constant 0 : i32
    %c0_i32_1 = arith.constant 0 : i32
    return %c0_i32, %c0_i32_0 : i32, i32
  }
  func.func @transform_3(%arg0: i32) -> (i32, i32) {
    %c0_i32 = arith.constant 0 : i32
    %c0_i32_0 = arith.constant 0 : i32
    %c0_i32_1 = arith.constant 0 : i32
    return %c0_i32, %c0_i32_0 : i32, i32
  }
  func.func @transform_4(%arg0: i32) -> (i32, i32) {
    %c0_i32 = arith.constant 0 : i32
    %c0_i32_0 = arith.constant 0 : i32
    %c0_i32_1 = arith.constant 0 : i32
    return %c0_i32, %c0_i32_0 : i32, i32
  }
  func.func @transform_5(%arg0: i32) -> (i32, i32) {
    %c0_i32 = arith.constant 0 : i32
    %c0_i32_0 = arith.constant 0 : i32
    return %arg0, %c0_i32 : i32, i32
  }
}

</mosaic_0001>

<llo_original>
// kernel: network_forward.3
$region0: #{network_forward.3}
  #allocation0 [shape = 'u32[]', space=smem, size = 0x4, offset = 0x4, fixed_abs, tag = 'smem constant byte address 0x4 - core index']
  #allocation1 [shape = 'u32[72,128]{1,0:T(1,128)}', space=vmem, size = 0x9000, scoped, tag = 'internal scratch']
  #allocation2 [shape = 'f32[576,32]{1,0:T(8,128)}', space=vmem, size = 0x48000, scoped, tag = 'scratch operand']
  #allocation3 [shape = 'f32[288,32]{1,0:T(8,128)}', space=vmem, size = 0x24000, scoped, tag = 'scratch operand']
  %s0 = inlined_call_operand.vmem [shape: bf16[2,576,25], index: 0, kind: input, shape index: {}]
  %s1 = inlined_call_operand.vmem [shape: bf16[25,32], index: 1, kind: input, shape index: {}]
  %s2 = inlined_call_operand.vmem [shape: f32[1,32], index: 2, kind: input, shape index: {}]
  %s3 = inlined_call_operand.vmem [shape: bf16[2,12,12,32], index: 3, kind: output, shape index: {}]
  %s4 = sld [smem:[#allocation0]]
  $region45: #{network_forward.3} parent=0
    _
  %s6 = ssub.s32 1, %s4
  %s7 = scalar_select 0, %s6, %s4
  loop: start=0, step=1, limit=4
  $region2: #{network_forward.3} parent=0 // loop_pre_header
    _
  $region3: #{network_forward.3} parent=0 // loop_header
    %s9 = sphi 0, %s13
    %p10 = scmp.ge.s32.totalorder %s9, 4
    %s19 = sphi 0, %s21
    %s22 = sphi 0, %s19
    %s23 = sphi 0, %s22
    %s39 = sphi 0, %s23
    %s43 = sphi 0, %s43
    %s45 = sphi 0, %s43
    %s46 = sphi 0, %s45
    %s60 = sphi 0, %s46
    %s64 = sphi 0, %s64
    %s66 = sphi 0, %s64
    %s67 = sphi 0, %s66
    %s81 = sphi 0, %s67
    %s87 = sphi 0, %s89
    %s90 = sphi 0, %s87
    %s91 = sphi 0, %s90
    %s107 = sphi 0, %s91
  $region4: #{network_forward.3} parent=0 // loop_header_branch
    %12 = sbr.rel (%p10) target = $region8
  $region5: #{network_forward.3} parent=0 // loop_body
    %s14 = ssub.s32 %s9, 1
    %s15 = ssub.s32 %s9, 2
    %s16 = sadd.s32 %s9, 1
    %s17 = ssub.s32 %s9, %s16
    %p18 = scmp.eq.s32.totalorder %s17, 0
    %s20 = sadd.s32 %s19, 1
    %s21 = scalar_select %p18, %s19, %s20
    %p24 = pneg %p18
    %p25 = scmp.eq.s32.totalorder %s9, 1
    %p26 = por %p24, %p25
    %p27 = scmp.ne.s32.totalorder %s19, %s22
    %p28 = scmp.eq.s32.totalorder %s9, 0
    %p29 = por %p27, %p28
    %p30 = scmp.ne.s32.totalorder %s19, %s22
    %p31 = scmp.eq.s32.totalorder %s14, 1
    %p32 = por %p30, %p31
    %p33 = scmp.ne.s32.totalorder %s22, %s23
    %p34 = scmp.eq.s32.totalorder %s14, 0
    %p35 = por %p33, %p34
    %p36 = scmp.ne.s32.totalorder %s22, %s23
    %p37 = scmp.eq.s32.totalorder %s15, 1
    %p38 = por %p36, %p37
    %p40 = scmp.ne.s32.totalorder %s23, %s39
    %p41 = scmp.eq.s32.totalorder %s15, 0
    %p42 = por %p40, %p41
    %s44 = sadd.s32 %s43, 1
    %p47 = scmp.eq.s32.totalorder %s9, 1
    %p48 = scmp.ne.s32.totalorder %s43, %s45
    %p49 = scmp.eq.s32.totalorder %s9, 0
    %p50 = por %p48, %p49
    %p51 = scmp.ne.s32.totalorder %s43, %s45
    %p52 = scmp.eq.s32.totalorder %s14, 1
    %p53 = por %p51, %p52
    %p54 = scmp.ne.s32.totalorder %s45, %s46
    %p55 = scmp.eq.s32.totalorder %s14, 0
    %p56 = por %p54, %p55
    %p57 = scmp.ne.s32.totalorder %s45, %s46
    %p58 = scmp.eq.s32.totalorder %s15, 1
    %p59 = por %p57, %p58
    %p61 = scmp.ne.s32.totalorder %s46, %s60
    %p62 = scmp.eq.s32.totalorder %s15, 0
    %p63 = por %p61, %p62
    %s65 = sadd.s32 %s64, 1
    %p68 = scmp.eq.s32.totalorder %s9, 1
    %p69 = scmp.ne.s32.totalorder %s64, %s66
    %p70 = scmp.eq.s32.totalorder %s9, 0
    %p71 = por %p69, %p70
    %p72 = scmp.ne.s32.totalorder %s64, %s66
    %p73 = scmp.eq.s32.totalorder %s14, 1
    %p74 = por %p72, %p73
    %p75 = scmp.ne.s32.totalorder %s66, %s67
    %p76 = scmp.eq.s32.totalorder %s14, 0
    %p77 = por %p75, %p76
    %p78 = scmp.ne.s32.totalorder %s66, %s67
    %p79 = scmp.eq.s32.totalorder %s15, 1
    %p80 = por %p78, %p79
    %p82 = scmp.ne.s32.totalorder %s67, %s81
    %p83 = scmp.eq.s32.totalorder %s15, 0
    %p84 = por %p82, %p83
    %s85 = ssub.s32 %s9, %s16
    %p86 = scmp.eq.s32.totalorder %s85, 0
    %s88 = sadd.s32 %s87, 1
    %s89 = scalar_select %p86, %s87, %s88
    %p92 = pneg %p86
    %p93 = scmp.eq.s32.totalorder %s9, 1
    %p94 = por %p92, %p93
    %p95 = scmp.ne.s32.totalorder %s87, %s90
    %p96 = scmp.eq.s32.totalorder %s9, 0
    %p97 = por %p95, %p96
    %p98 = scmp.ne.s32.totalorder %s87, %s90
    %p99 = scmp.eq.s32.totalorder %s14, 1
    %p100 = por %p98, %p99
    %p101 = scmp.ne.s32.totalorder %s90, %s91
    %p102 = scmp.eq.s32.totalorder %s14, 0
    %p103 = por %p101, %p102
    %p104 = scmp.ne.s32.totalorder %s90, %s91
    %p105 = scmp.eq.s32.totalorder %s15, 1
    %p106 = por %p104, %p105
    %p108 = scmp.ne.s32.totalorder %s91, %s107
    %p109 = scmp.eq.s32.totalorder %s15, 0
    %p110 = por %p108, %p109
    %p111 = scmp.le.s32.totalorder 1, %s9
    %p112 = scmp.lt.s32.totalorder %s9, 3
    %p113 = pnand %p111, %p112
    %p114 = pneg %p113
    // Predicated region
    $region9: #{network_forward.3} parent=5 // pred_check
      _
    $region10: #{network_forward.3} parent=5 // pred_check_branch
      %116 = sbr.rel (%p113) target = $region12
    $region11: #{network_forward.3} parent=5 // pred_region
      %s117 = ssub.s32 %s9, 1
      // Predicated region
      $region13: #{network_forward.3} parent=11 // pred_check
        %p118 = pneg %p56
      $region14: #{network_forward.3} parent=11 // pred_check_branch
        %120 = sbr.rel (%p118) target = $region16
      $region15: #{network_forward.3} parent=11 // pred_region
        _
      $region16: #{network_forward.3} parent=11 // pred_fallthru
        _
      // Predicated region
      $region17: #{network_forward.3} parent=11 // pred_check
        %p121 = pneg %p77
      $region18: #{network_forward.3} parent=11 // pred_check_branch
        %123 = sbr.rel (%p121) target = $region20
      $region19: #{network_forward.3} parent=11 // pred_region
        _
      $region20: #{network_forward.3} parent=11 // pred_fallthru
        _
    $region12: #{network_forward.3} parent=5 // pred_fallthru
      _
    %p124 = scmp.lt.s32.totalorder %s9, 2
    // Predicated region
    $region21: #{network_forward.3} parent=5 // pred_check
      %p125 = pneg %p124
    $region22: #{network_forward.3} parent=5 // pred_check_branch
      %127 = sbr.rel (%p125) target = $region24
    $region23: #{network_forward.3} parent=5 // pred_region
      // Predicated region
      $region25: #{network_forward.3} parent=23 // pred_check
        %p128 = pneg %p29
      $region26: #{network_forward.3} parent=23 // pred_check_branch
        %130 = sbr.rel (%p128) target = $region28
      $region27: #{network_forward.3} parent=23 // pred_region
        %p131 = scmp.lt.s32.totalorder %s9, 1
        %s132 = scalar_select %p131, %s9, 1
        %s133 = smul.addr %s132, 72
        %s134 = smul.addr %s133, 4
        %s135 = scalar_lea.vmem %s0, %s134
      $region28: #{network_forward.3} parent=23 // pred_fallthru
        _
    $region24: #{network_forward.3} parent=5 // pred_fallthru
      _
    %p136 = scmp.le.s32.totalorder 1, %s9
    %p137 = scmp.lt.s32.totalorder %s9, 3
    %p138 = pnand %p136, %p137
    %p139 = pneg %p138
    // Predicated region
    $region29: #{network_forward.3} parent=5 // pred_check
      _
    $region30: #{network_forward.3} parent=5 // pred_check_branch
      %141 = sbr.rel (%p138) target = $region32
    $region31: #{network_forward.3} parent=5 // pred_region
      %s142 = ssub.s32 %s9, 1
      %p143 = scmp.lt.s32.totalorder %s14, 1
      %s144 = scalar_select %p143, %s14, 1
      %s145 = smul.addr %s144, 72
      %s146 = smul.addr %s145, 4
      %s147 = scalar_lea.vmem %s0, %s146
      %p148 = pneg %p35
      %p149 = pneg %p32
      %p150 = pneg %p56
      %p151 = pneg %p53
      %p152 = pneg %p77
      %p153 = pneg %p74
      %p154 = pneg %p103
      %p155 = pneg %p100
      %p156 = scmp.lt.s32.totalorder %s14, 1
      %s157 = scalar_select %p156, %s14, 1
      %s158 = smul.addr %s157, 24
      %s159 = smul.addr %s158, 4
      %s160 = scalar_lea.vmem %s3, %s159
      %p161 = scmp.lt.s32.totalorder %s14, 1
      %s162 = scalar_select %p161, %s14, 1
      %s163 = smul.addr %s162, 72
      %s164 = smul.addr %s163, 4
      %s165 = scalar_lea.vmem %s0, %s164
      %p166 = scmp.lt.s32.totalorder %s14, 1
      %s167 = scalar_select %p166, %s14, 1
      %s168 = smul.addr %s167, 24
      %s169 = smul.addr %s168, 4
      %s170 = scalar_lea.vmem %s3, %s169
      %v172 = vld [vmem:[%s165] sm:$0xf]
      %v173 = vld [vmem:[%s165 + $0x4] sm:$0xf]
      %v174 = vld [vmem:[%s165 + $0x8] sm:$0xf]
      %v175 = vld [vmem:[%s165 + $0xc] sm:$0xf]
      %v176 = vld [vmem:[%s165 + $0x10] sm:$0xf]
      %v177 = vld [vmem:[%s165 + $0x14] sm:$0xf]
      %v178 = vld [vmem:[%s165 + $0x18] sm:$0xf]
      %v179 = vld [vmem:[%s165 + $0x1c] sm:$0xf]
      %v180 = vld [vmem:[%s165 + $0x20] sm:$0xf]
      %v181 = vld [vmem:[%s165 + $0x24] sm:$0xf]
      %v182 = vld [vmem:[%s165 + $0x28] sm:$0xf]
      %v183 = vld [vmem:[%s165 + $0x2c] sm:$0xf]
      %v184 = vld [vmem:[%s165 + $0x30] sm:$0xf]
      %v185 = vld [vmem:[%s165 + $0x34] sm:$0xf]
      %v186 = vld [vmem:[%s165 + $0x38] sm:$0xf]
      %v187 = vld [vmem:[%s165 + $0x3c] sm:$0xf]
      %v188 = vld [vmem:[%s165 + $0x40] sm:$0xf]
      %v189 = vld [vmem:[%s165 + $0x44] sm:$0xf]
      %v190 = vld [vmem:[%s165 + $0x48] sm:$0xf]
      %v191 = vld [vmem:[%s165 + $0x4c] sm:$0xf]
      %v192 = vld [vmem:[%s165 + $0x50] sm:$0xf]
      %v193 = vld [vmem:[%s165 + $0x54] sm:$0xf]
      %v194 = vld [vmem:[%s165 + $0x58] sm:$0xf]
      %v195 = vld [vmem:[%s165 + $0x5c] sm:$0xf]
      %v196 = vld [vmem:[%s1] sm:$0xf]
      %v197 = vld [vmem:[%s1 + $0x4] sm:$0xf]
      %v198 = vld [vmem:[%s1 + $0x8] sm:$0xf]
      %v199 = vld [vmem:[%s1 + $0xc] sm:$0x1]
      %v200 = vld [vmem:[%s2] sm:$0x1]
      %v202 = vperm.slane %v200, 0
      %v228 = vunpack.c.l.b16 %v172
      %v229 = vunpack.c.l.b16 %v173
      %v230 = vunpack.c.l.b16 %v174
      %v231 = vunpack.c.l.b16 %v175
      %v232 = vunpack.c.l.b16 %v176
      %v233 = vunpack.c.l.b16 %v177
      %v234 = vunpack.c.l.b16 %v178
      %v235 = vunpack.c.l.b16 %v179
      %v236 = vunpack.c.l.b16 %v180
      %v237 = vunpack.c.l.b16 %v181
      %v238 = vunpack.c.l.b16 %v182
      %v239 = vunpack.c.l.b16 %v183
      %v240 = vunpack.c.l.b16 %v184
      %v241 = vunpack.c.l.b16 %v185
      %v242 = vunpack.c.l.b16 %v186
      %v243 = vunpack.c.l.b16 %v187
      %v244 = vunpack.c.l.b16 %v188
      %v245 = vunpack.c.l.b16 %v189
      %v246 = vunpack.c.l.b16 %v190
      %v247 = vunpack.c.l.b16 %v191
      %v248 = vunpack.c.l.b16 %v192
      %v249 = vunpack.c.l.b16 %v193
      %v250 = vunpack.c.l.b16 %v194
      %v251 = vunpack.c.l.b16 %v195
      %v252 = vpack.c.b16 %v229, %v228
      %v253 = vpack.c.b16 %v231, %v230
      %v254 = vpack.c.b16 %v233, %v232
      %v255 = vpack.c.b16 %v235, %v234
      %v256 = vpack.c.b16 %v237, %v236
      %v257 = vpack.c.b16 %v239, %v238
      %v258 = vpack.c.b16 %v241, %v240
      %v259 = vpack.c.b16 %v243, %v242
      %v260 = vpack.c.b16 %v245, %v244
      %v261 = vpack.c.b16 %v247, %v246
      %v262 = vpack.c.b16 %v249, %v248
      %v263 = vpack.c.b16 %v251, %v250
      %v268 = vunpack.c.l.b16 %v196
      %v269 = vunpack.c.l.b16 %v197
      %v270 = vunpack.c.l.b16 %v198
      %v271 = vunpack.c.l.b16 %v199
      %v272 = vpack.c.b16 %v269, %v268
      %v273 = vpack.c.b16 %v271, %v270
      %vm275 = vcmask 203776
      %v277 = vsel %vm275, %v252, 0
      %v280 = vsel %vm275, %v253, 0
      %v283 = vsel %vm275, %v254, 0
      %v286 = vsel %vm275, %v255, 0
      %v289 = vsel %vm275, %v256, 0
      %v292 = vsel %vm275, %v257, 0
      %v295 = vsel %vm275, %v258, 0
      %v298 = vsel %vm275, %v259, 0
      %v301 = vsel %vm275, %v260, 0
      %v304 = vsel %vm275, %v261, 0
      %v307 = vsel %vm275, %v262, 0
      %v310 = vsel %vm275, %v263, 0
      %vm312 = vcmask 1043456
      %vm313 = vcmask 1044480
      %v314 = vsel %vm312, 4294967295, 65535
      %v315 = vsel %vm313, %v314, 0
      %v317 = vand.u32 %v273, %v315
      %319 = vmatpush.bf16.msra.mxu0 0
      %320 = vmatpush.bf16.msra.mxu0 0
      %321 = vmatpush.bf16.msra.mxu0 0
      %322 = vmatpush.bf16.msra.mxu0 0
      %323 = vmatpush.bf16.msra.mxu0 0
      %324 = vmatpush.bf16.msra.mxu0 0
      %325 = vmatpush.bf16.msra.mxu0 %v317
      %326 = vmatpush.bf16.msra.mxu0 %v272
      %327 = vmatmul.bf16.gmra.mxu0 %v277
      %v328 = vpop.f32.mrf.mxu0
      %v329 = vadd.f32 %v202, %v328
      %v330 = vpop.f32.mrf.mxu0
      %v331 = vadd.f32 %v202, %v330
      %332 = vmatmul.bf16.gmra.mxu0 %v280
      %v333 = vpop.f32.mrf.mxu0
      %v334 = vadd.f32 %v202, %v333
      %v335 = vpop.f32.mrf.mxu0
      %v336 = vadd.f32 %v202, %v335
      %337 = vmatmul.bf16.gmra.mxu0 %v283
      %v338 = vpop.f32.mrf.mxu0
      %v339 = vadd.f32 %v202, %v338
      %v340 = vpop.f32.mrf.mxu0
      %v341 = vadd.f32 %v202, %v340
      %342 = vmatmul.bf16.gmra.mxu0 %v286
      %v343 = vpop.f32.mrf.mxu0
      %v344 = vadd.f32 %v202, %v343
      %v345 = vpop.f32.mrf.mxu0
      %v346 = vadd.f32 %v202, %v345
      %347 = vmatmul.bf16.gmra.mxu0 %v289
      %v348 = vpop.f32.mrf.mxu0
      %v349 = vadd.f32 %v202, %v348
      %v350 = vpop.f32.mrf.mxu0
      %v351 = vadd.f32 %v202, %v350
      %352 = vmatmul.bf16.gmra.mxu0 %v292
      %v353 = vpop.f32.mrf.mxu0
      %v354 = vadd.f32 %v202, %v353
      %v355 = vpop.f32.mrf.mxu0
      %v356 = vadd.f32 %v202, %v355
      %357 = vmatmul.bf16.gmra.mxu0 %v295
      %v358 = vpop.f32.mrf.mxu0
      %v359 = vadd.f32 %v202, %v358
      %v360 = vpop.f32.mrf.mxu0
      %v361 = vadd.f32 %v202, %v360
      %362 = vmatmul.bf16.gmra.mxu0 %v298
      %v363 = vpop.f32.mrf.mxu0
      %v364 = vadd.f32 %v202, %v363
      %v365 = vpop.f32.mrf.mxu0
      %v366 = vadd.f32 %v202, %v365
      %367 = vmatmul.bf16.gmra.mxu0 %v301
      %v368 = vpop.f32.mrf.mxu0
      %v369 = vadd.f32 %v202, %v368
      %v370 = vpop.f32.mrf.mxu0
      %v371 = vadd.f32 %v202, %v370
      %372 = vmatmul.bf16.gmra.mxu0 %v304
      %v373 = vpop.f32.mrf.mxu0
      %v374 = vadd.f32 %v202, %v373
      %v375 = vpop.f32.mrf.mxu0
      %v376 = vadd.f32 %v202, %v375
      %377 = vmatmul.bf16.gmra.mxu0 %v307
      %v378 = vpop.f32.mrf.mxu0
      %v379 = vadd.f32 %v202, %v378
      %v380 = vpop.f32.mrf.mxu0
      %v381 = vadd.f32 %v202, %v380
      %382 = vmatmul.bf16.gmra.mxu0 %v310
      %v383 = vpop.f32.mrf.mxu0
      %v384 = vadd.f32 %v202, %v383
      %v385 = vpop.f32.mrf.mxu0
      %v386 = vadd.f32 %v202, %v385
      %387 = vdwg.mxu0
      %vm388 = vcmp.ge.f32.partialorder %v329, 0.0
      %vm389 = vcmp.ge.f32.partialorder %v331, 0.0
      %vm390 = vcmp.ge.f32.partialorder %v334, 0.0
      %vm391 = vcmp.ge.f32.partialorder %v336, 0.0
      %vm392 = vcmp.ge.f32.partialorder %v339, 0.0
      %vm393 = vcmp.ge.f32.partialorder %v341, 0.0
      %vm394 = vcmp.ge.f32.partialorder %v344, 0.0
      %vm395 = vcmp.ge.f32.partialorder %v346, 0.0
      %vm396 = vcmp.ge.f32.partialorder %v349, 0.0
      %vm397 = vcmp.ge.f32.partialorder %v351, 0.0
      %vm398 = vcmp.ge.f32.partialorder %v354, 0.0
      %vm399 = vcmp.ge.f32.partialorder %v356, 0.0
      %vm400 = vcmp.ge.f32.partialorder %v359, 0.0
      %vm401 = vcmp.ge.f32.partialorder %v361, 0.0
      %vm402 = vcmp.ge.f32.partialorder %v364, 0.0
      %vm403 = vcmp.ge.f32.partialorder %v366, 0.0
      %vm404 = vcmp.ge.f32.partialorder %v369, 0.0
      %vm405 = vcmp.ge.f32.partialorder %v371, 0.0
      %vm406 = vcmp.ge.f32.partialorder %v374, 0.0
      %vm407 = vcmp.ge.f32.partialorder %v376, 0.0
      %vm408 = vcmp.ge.f32.partialorder %v379, 0.0
      %vm409 = vcmp.ge.f32.partialorder %v381, 0.0
      %vm410 = vcmp.ge.f32.partialorder %v384, 0.0
      %vm411 = vcmp.ge.f32.partialorder %v386, 0.0
      %v412 = vmul.f32 %v329, 0.25
      %v413 = vmul.f32 %v331, 0.25
      %v414 = vmul.f32 %v334, 0.25
      %v415 = vmul.f32 %v336, 0.25
      %v416 = vmul.f32 %v339, 0.25
      %v417 = vmul.f32 %v341, 0.25
      %v418 = vmul.f32 %v344, 0.25
      %v419 = vmul.f32 %v346, 0.25
      %v420 = vmul.f32 %v349, 0.25
      %v421 = vmul.f32 %v351, 0.25
      %v422 = vmul.f32 %v354, 0.25
      %v423 = vmul.f32 %v356, 0.25
      %v424 = vmul.f32 %v359, 0.25
      %v425 = vmul.f32 %v361, 0.25
      %v426 = vmul.f32 %v364, 0.25
      %v427 = vmul.f32 %v366, 0.25
      %v428 = vmul.f32 %v369, 0.25
      %v429 = vmul.f32 %v371, 0.25
      %v430 = vmul.f32 %v374, 0.25
      %v431 = vmul.f32 %v376, 0.25
      %v432 = vmul.f32 %v379, 0.25
      %v433 = vmul.f32 %v381, 0.25
      %v434 = vmul.f32 %v384, 0.25
      %v435 = vmul.f32 %v386, 0.25
      %v436 = vsel %vm388, %v329, %v412
      %v437 = vsel %vm389, %v331, %v413
      %v438 = vsel %vm390, %v334, %v414
      %v439 = vsel %vm391, %v336, %v415
      %v440 = vsel %vm392, %v339, %v416
      %v441 = vsel %vm393, %v341, %v417
      %v442 = vsel %vm394, %v344, %v418
      %v443 = vsel %vm395, %v346, %v419
      %v444 = vsel %vm396, %v349, %v420
      %v445 = vsel %vm397, %v351, %v421
      %v446 = vsel %vm398, %v354, %v422
      %v447 = vsel %vm399, %v356, %v423
      %v448 = vsel %vm400, %v359, %v424
      %v449 = vsel %vm401, %v361, %v425
      %v450 = vsel %vm402, %v364, %v426
      %v451 = vsel %vm403, %v366, %v427
      %v452 = vsel %vm404, %v369, %v428
      %v453 = vsel %vm405, %v371, %v429
      %v454 = vsel %vm406, %v374, %v430
      %v455 = vsel %vm407, %v376, %v431
      %v456 = vsel %vm408, %v379, %v432
      %v457 = vsel %vm409, %v381, %v433
      %v458 = vsel %vm410, %v384, %v434
      %v459 = vsel %vm411, %v386, %v435
      %vm460 = vcmask 261120
      %461 = vst.msk [vmem:[#allocation2] sm:$0xff] %vm460, %v436
      %462 = vst.msk [vmem:[#allocation2 + $0x8] sm:$0xff] %vm460, %v437
      %463 = vst.msk [vmem:[#allocation2 + $0x10] sm:$0xff] %vm460, %v438
      %464 = vst.msk [vmem:[#allocation2 + $0x18] sm:$0xff] %vm460, %v439
      %465 = vst.msk [vmem:[#allocation2 + $0x20] sm:$0xff] %vm460, %v440
      %466 = vst.msk [vmem:[#allocation2 + $0x28] sm:$0xff] %vm460, %v441
      %467 = vst.msk [vmem:[#allocation2 + $0x30] sm:$0xff] %vm460, %v442
      %468 = vst.msk [vmem:[#allocation2 + $0x38] sm:$0xff] %vm460, %v443
      %469 = vst.msk [vmem:[#allocation2 + $0x40] sm:$0xff] %vm460, %v444
      %470 = vst.msk [vmem:[#allocation2 + $0x48] sm:$0xff] %vm460, %v445
      %471 = vst.msk [vmem:[#allocation2 + $0x50] sm:$0xff] %vm460, %v446
      %472 = vst.msk [vmem:[#allocation2 + $0x58] sm:$0xff] %vm460, %v447
      %473 = vst.msk [vmem:[#allocation2 + $0x60] sm:$0xff] %vm460, %v448
      %474 = vst.msk [vmem:[#allocation2 + $0x68] sm:$0xff] %vm460, %v449
      %475 = vst.msk [vmem:[#allocation2 + $0x70] sm:$0xff] %vm460, %v450
      %476 = vst.msk [vmem:[#allocation2 + $0x78] sm:$0xff] %vm460, %v451
      %477 = vst.msk [vmem:[#allocation2 + $0x80] sm:$0xff] %vm460, %v452
      %478 = vst.msk [vmem:[#allocation2 + $0x88] sm:$0xff] %vm460, %v453
      %479 = vst.msk [vmem:[#allocation2 + $0x90] sm:$0xff] %vm460, %v454
      %480 = vst.msk [vmem:[#allocation2 + $0x98] sm:$0xff] %vm460, %v455
      %481 = vst.msk [vmem:[#allocation2 + $0xa0] sm:$0xff] %vm460, %v456
      %482 = vst.msk [vmem:[#allocation2 + $0xa8] sm:$0xff] %vm460, %v457
      %483 = vst.msk [vmem:[#allocation2 + $0xb0] sm:$0xff] %vm460, %v458
      %484 = vst.msk [vmem:[#allocation2 + $0xb8] sm:$0xff] %vm460, %v459
      %v485 = vld [vmem:[%s165 + $0x60] sm:$0xf]
      %v486 = vld [vmem:[%s165 + $0x64] sm:$0xf]
      %v487 = vld [vmem:[%s165 + $0x68] sm:$0xf]
      %v488 = vld [vmem:[%s165 + $0x6c] sm:$0xf]
      %v489 = vld [vmem:[%s165 + $0x70] sm:$0xf]
      %v490 = vld [vmem:[%s165 + $0x74] sm:$0xf]
      %v491 = vld [vmem:[%s165 + $0x78] sm:$0xf]
      %v492 = vld [vmem:[%s165 + $0x7c] sm:$0xf]
      %v493 = vld [vmem:[%s165 + $0x80] sm:$0xf]
      %v494 = vld [vmem:[%s165 + $0x84] sm:$0xf]
      %v495 = vld [vmem:[%s165 + $0x88] sm:$0xf]
      %v496 = vld [vmem:[%s165 + $0x8c] sm:$0xf]
      %v497 = vld [vmem:[%s165 + $0x90] sm:$0xf]
      %v498 = vld [vmem:[%s165 + $0x94] sm:$0xf]
      %v499 = vld [vmem:[%s165 + $0x98] sm:$0xf]
      %v500 = vld [vmem:[%s165 + $0x9c] sm:$0xf]
      %v501 = vld [vmem:[%s165 + $0xa0] sm:$0xf]
      %v502 = vld [vmem:[%s165 + $0xa4] sm:$0xf]
      %v503 = vld [vmem:[%s165 + $0xa8] sm:$0xf]
      %v504 = vld [vmem:[%s165 + $0xac] sm:$0xf]
      %v505 = vld [vmem:[%s165 + $0xb0] sm:$0xf]
      %v506 = vld [vmem:[%s165 + $0xb4] sm:$0xf]
      %v507 = vld [vmem:[%s165 + $0xb8] sm:$0xf]
      %v508 = vld [vmem:[%s165 + $0xbc] sm:$0xf]
      %v509 = vld [vmem:[%s1] sm:$0xf]
      %v510 = vld [vmem:[%s1 + $0x4] sm:$0xf]
      %v511 = vld [vmem:[%s1 + $0x8] sm:$0xf]
      %v512 = vld [vmem:[%s1 + $0xc] sm:$0x1]
      %v513 = vld [vmem:[%s2] sm:$0x1]
      %v515 = vperm.slane %v513, 0
      %v541 = vunpack.c.l.b16 %v485
      %v542 = vunpack.c.l.b16 %v486
      %v543 = vunpack.c.l.b16 %v487
      %v544 = vunpack.c.l.b16 %v488
      %v545 = vunpack.c.l.b16 %v489
      %v546 = vunpack.c.l.b16 %v490
      %v547 = vunpack.c.l.b16 %v491
      %v548 = vunpack.c.l.b16 %v492
      %v549 = vunpack.c.l.b16 %v493
      %v550 = vunpack.c.l.b16 %v494
      %v551 = vunpack.c.l.b16 %v495
      %v552 = vunpack.c.l.b16 %v496
      %v553 = vunpack.c.l.b16 %v497
      %v554 = vunpack.c.l.b16 %v498
      %v555 = vunpack.c.l.b16 %v499
      %v556 = vunpack.c.l.b16 %v500
      %v557 = vunpack.c.l.b16 %v501
      %v558 = vunpack.c.l.b16 %v502
      %v559 = vunpack.c.l.b16 %v503
      %v560 = vunpack.c.l.b16 %v504
      %v561 = vunpack.c.l.b16 %v505
      %v562 = vunpack.c.l.b16 %v506
      %v563 = vunpack.c.l.b16 %v507
      %v564 = vunpack.c.l.b16 %v508
      %v565 = vpack.c.b16 %v542, %v541
      %v566 = vpack.c.b16 %v544, %v543
      %v567 = vpack.c.b16 %v546, %v545
      %v568 = vpack.c.b16 %v548, %v547
      %v569 = vpack.c.b16 %v550, %v549
      %v570 = vpack.c.b16 %v552, %v551
      %v571 = vpack.c.b16 %v554, %v553
      %v572 = vpack.c.b16 %v556, %v555
      %v573 = vpack.c.b16 %v558, %v557
      %v574 = vpack.c.b16 %v560, %v559
      %v575 = vpack.c.b16 %v562, %v561
      %v576 = vpack.c.b16 %v564, %v563
      %v581 = vunpack.c.l.b16 %v509
      %v582 = vunpack.c.l.b16 %v510
      %v583 = vunpack.c.l.b16 %v511
      %v584 = vunpack.c.l.b16 %v512
      %v585 = vpack.c.b16 %v582, %v581
      %v586 = vpack.c.b16 %v584, %v583
      %v589 = vsel %vm275, %v565, 0
      %v592 = vsel %vm275, %v566, 0
      %v595 = vsel %vm275, %v567, 0
      %v598 = vsel %vm275, %v568, 0
      %v601 = vsel %vm275, %v569, 0
      %v604 = vsel %vm275, %v570, 0
      %v607 = vsel %vm275, %v571, 0
      %v610 = vsel %vm275, %v572, 0
      %v613 = vsel %vm275, %v573, 0
      %v616 = vsel %vm275, %v574, 0
      %v619 = vsel %vm275, %v575, 0
      %v622 = vsel %vm275, %v576, 0
      %v625 = vand.u32 %v586, %v315
      %627 = vmatpush.bf16.msra.mxu0 0
      %628 = vmatpush.bf16.msra.mxu0 0
      %629 = vmatpush.bf16.msra.mxu0 0
      %630 = vmatpush.bf16.msra.mxu0 0
      %631 = vmatpush.bf16.msra.mxu0 0
      %632 = vmatpush.bf16.msra.mxu0 0
      %633 = vmatpush.bf16.msra.mxu0 %v625
      %634 = vmatpush.bf16.msra.mxu0 %v585
      %635 = vmatmul.bf16.gmra.mxu0 %v589
      %v636 = vpop.f32.mrf.mxu0
      %v637 = vadd.f32 %v515, %v636
      %v638 = vpop.f32.mrf.mxu0
      %v639 = vadd.f32 %v515, %v638
      %640 = vmatmul.bf16.gmra.mxu0 %v592
      %v641 = vpop.f32.mrf.mxu0
      %v642 = vadd.f32 %v515, %v641
      %v643 = vpop.f32.mrf.mxu0
      %v644 = vadd.f32 %v515, %v643
      %645 = vmatmul.bf16.gmra.mxu0 %v595
      %v646 = vpop.f32.mrf.mxu0
      %v647 = vadd.f32 %v515, %v646
      %v648 = vpop.f32.mrf.mxu0
      %v649 = vadd.f32 %v515, %v648
      %650 = vmatmul.bf16.gmra.mxu0 %v598
      %v651 = vpop.f32.mrf.mxu0
      %v652 = vadd.f32 %v515, %v651
      %v653 = vpop.f32.mrf.mxu0
      %v654 = vadd.f32 %v515, %v653
      %655 = vmatmul.bf16.gmra.mxu0 %v601
      %v656 = vpop.f32.mrf.mxu0
      %v657 = vadd.f32 %v515, %v656
      %v658 = vpop.f32.mrf.mxu0
      %v659 = vadd.f32 %v515, %v658
      %660 = vmatmul.bf16.gmra.mxu0 %v604
      %v661 = vpop.f32.mrf.mxu0
      %v662 = vadd.f32 %v515, %v661
      %v663 = vpop.f32.mrf.mxu0
      %v664 = vadd.f32 %v515, %v663
      %665 = vmatmul.bf16.gmra.mxu0 %v607
      %v666 = vpop.f32.mrf.mxu0
      %v667 = vadd.f32 %v515, %v666
      %v668 = vpop.f32.mrf.mxu0
      %v669 = vadd.f32 %v515, %v668
      %670 = vmatmul.bf16.gmra.mxu0 %v610
      %v671 = vpop.f32.mrf.mxu0
      %v672 = vadd.f32 %v515, %v671
      %v673 = vpop.f32.mrf.mxu0
      %v674 = vadd.f32 %v515, %v673
      %675 = vmatmul.bf16.gmra.mxu0 %v613
      %v676 = vpop.f32.mrf.mxu0
      %v677 = vadd.f32 %v515, %v676
      %v678 = vpop.f32.mrf.mxu0
      %v679 = vadd.f32 %v515, %v678
      %680 = vmatmul.bf16.gmra.mxu0 %v616
      %v681 = vpop.f32.mrf.mxu0
      %v682 = vadd.f32 %v515, %v681
      %v683 = vpop.f32.mrf.mxu0
      %v684 = vadd.f32 %v515, %v683
      %685 = vmatmul.bf16.gmra.mxu0 %v619
      %v686 = vpop.f32.mrf.mxu0
      %v687 = vadd.f32 %v515, %v686
      %v688 = vpop.f32.mrf.mxu0
      %v689 = vadd.f32 %v515, %v688
      %690 = vmatmul.bf16.gmra.mxu0 %v622
      %v691 = vpop.f32.mrf.mxu0
      %v692 = vadd.f32 %v515, %v691
      %v693 = vpop.f32.mrf.mxu0
      %v694 = vadd.f32 %v515, %v693
      %695 = vdwg.mxu0
      %vm696 = vcmp.ge.f32.partialorder %v637, 0.0
      %vm697 = vcmp.ge.f32.partialorder %v639, 0.0
      %vm698 = vcmp.ge.f32.partialorder %v642, 0.0
      %vm699 = vcmp.ge.f32.partialorder %v644, 0.0
      %vm700 = vcmp.ge.f32.partialorder %v647, 0.0
      %vm701 = vcmp.ge.f32.partialorder %v649, 0.0
      %vm702 = vcmp.ge.f32.partialorder %v652, 0.0
      %vm703 = vcmp.ge.f32.partialorder %v654, 0.0
      %vm704 = vcmp.ge.f32.partialorder %v657, 0.0
      %vm705 = vcmp.ge.f32.partialorder %v659, 0.0
      %vm706 = vcmp.ge.f32.partialorder %v662, 0.0
      %vm707 = vcmp.ge.f32.partialorder %v664, 0.0
      %vm708 = vcmp.ge.f32.partialorder %v667, 0.0
      %vm709 = vcmp.ge.f32.partialorder %v669, 0.0
      %vm710 = vcmp.ge.f32.partialorder %v672, 0.0
      %vm711 = vcmp.ge.f32.partialorder %v674, 0.0
      %vm712 = vcmp.ge.f32.partialorder %v677, 0.0
      %vm713 = vcmp.ge.f32.partialorder %v679, 0.0
      %vm714 = vcmp.ge.f32.partialorder %v682, 0.0
      %vm715 = vcmp.ge.f32.partialorder %v684, 0.0
      %vm716 = vcmp.ge.f32.partialorder %v687, 0.0
      %vm717 = vcmp.ge.f32.partialorder %v689, 0.0
      %vm718 = vcmp.ge.f32.partialorder %v692, 0.0
      %vm719 = vcmp.ge.f32.partialorder %v694, 0.0
      %v720 = vmul.f32 %v637, 0.25
      %v721 = vmul.f32 %v639, 0.25
      %v722 = vmul.f32 %v642, 0.25
      %v723 = vmul.f32 %v644, 0.25
      %v724 = vmul.f32 %v647, 0.25
      %v725 = vmul.f32 %v649, 0.25
      %v726 = vmul.f32 %v652, 0.25
      %v727 = vmul.f32 %v654, 0.25
      %v728 = vmul.f32 %v657, 0.25
      %v729 = vmul.f32 %v659, 0.25
      %v730 = vmul.f32 %v662, 0.25
      %v731 = vmul.f32 %v664, 0.25
      %v732 = vmul.f32 %v667, 0.25
      %v733 = vmul.f32 %v669, 0.25
      %v734 = vmul.f32 %v672, 0.25
      %v735 = vmul.f32 %v674, 0.25
      %v736 = vmul.f32 %v677, 0.25
      %v737 = vmul.f32 %v679, 0.25
      %v738 = vmul.f32 %v682, 0.25
      %v739 = vmul.f32 %v684, 0.25
      %v740 = vmul.f32 %v687, 0.25
      %v741 = vmul.f32 %v689, 0.25
      %v742 = vmul.f32 %v692, 0.25
      %v743 = vmul.f32 %v694, 0.25
      %v744 = vsel %vm696, %v637, %v720
      %v745 = vsel %vm697, %v639, %v721
      %v746 = vsel %vm698, %v642, %v722
      %v747 = vsel %vm699, %v644, %v723
      %v748 = vsel %vm700, %v647, %v724
      %v749 = vsel %vm701, %v649, %v725
      %v750 = vsel %vm702, %v652, %v726
      %v751 = vsel %vm703, %v654, %v727
      %v752 = vsel %vm704, %v657, %v728
      %v753 = vsel %vm705, %v659, %v729
      %v754 = vsel %vm706, %v662, %v730
      %v755 = vsel %vm707, %v664, %v731
      %v756 = vsel %vm708, %v667, %v732
      %v757 = vsel %vm709, %v669, %v733
      %v758 = vsel %vm710, %v672, %v734
      %v759 = vsel %vm711, %v674, %v735
      %v760 = vsel %vm712, %v677, %v736
      %v761 = vsel %vm713, %v679, %v737
      %v762 = vsel %vm714, %v682, %v738
      %v763 = vsel %vm715, %v684, %v739
      %v764 = vsel %vm716, %v687, %v740
      %v765 = vsel %vm717, %v689, %v741
      %v766 = vsel %vm718, %v692, %v742
      %v767 = vsel %vm719, %v694, %v743
      %768 = vst.msk [vmem:[#allocation2 + $0xc0] sm:$0xff] %vm460, %v744
      %769 = vst.msk [vmem:[#allocation2 + $0xc8] sm:$0xff] %vm460, %v745
      %770 = vst.msk [vmem:[#allocation2 + $0xd0] sm:$0xff] %vm460, %v746
      %771 = vst.msk [vmem:[#allocation2 + $0xd8] sm:$0xff] %vm460, %v747
      %772 = vst.msk [vmem:[#allocation2 + $0xe0] sm:$0xff] %vm460, %v748
      %773 = vst.msk [vmem:[#allocation2 + $0xe8] sm:$0xff] %vm460, %v749
      %774 = vst.msk [vmem:[#allocation2 + $0xf0] sm:$0xff] %vm460, %v750
      %775 = vst.msk [vmem:[#allocation2 + $0xf8] sm:$0xff] %vm460, %v751
      %776 = vst.msk [vmem:[#allocation2 + $0x100] sm:$0xff] %vm460, %v752
      %777 = vst.msk [vmem:[#allocation2 + $0x108] sm:$0xff] %vm460, %v753
      %778 = vst.msk [vmem:[#allocation2 + $0x110] sm:$0xff] %vm460, %v754
      %779 = vst.msk [vmem:[#allocation2 + $0x118] sm:$0xff] %vm460, %v755
      %780 = vst.msk [vmem:[#allocation2 + $0x120] sm:$0xff] %vm460, %v756
      %781 = vst.msk [vmem:[#allocation2 + $0x128] sm:$0xff] %vm460, %v757
      %782 = vst.msk [vmem:[#allocation2 + $0x130] sm:$0xff] %vm460, %v758
      %783 = vst.msk [vmem:[#allocation2 + $0x138] sm:$0xff] %vm460, %v759
      %784 = vst.msk [vmem:[#allocation2 + $0x140] sm:$0xff] %vm460, %v760
      %785 = vst.msk [vmem:[#allocation2 + $0x148] sm:$0xff] %vm460, %v761
      %786 = vst.msk [vmem:[#allocation2 + $0x150] sm:$0xff] %vm460, %v762
      %787 = vst.msk [vmem:[#allocation2 + $0x158] sm:$0xff] %vm460, %v763
      %788 = vst.msk [vmem:[#allocation2 + $0x160] sm:$0xff] %vm460, %v764
      %789 = vst.msk [vmem:[#allocation2 + $0x168] sm:$0xff] %vm460, %v765
      %790 = vst.msk [vmem:[#allocation2 + $0x170] sm:$0xff] %vm460, %v766
      %791 = vst.msk [vmem:[#allocation2 + $0x178] sm:$0xff] %vm460, %v767
      %v792 = vld [vmem:[%s165 + $0xc0] sm:$0xf]
      %v793 = vld [vmem:[%s165 + $0xc4] sm:$0xf]
      %v794 = vld [vmem:[%s165 + $0xc8] sm:$0xf]
      %v795 = vld [vmem:[%s165 + $0xcc] sm:$0xf]
      %v796 = vld [vmem:[%s165 + $0xd0] sm:$0xf]
      %v797 = vld [vmem:[%s165 + $0xd4] sm:$0xf]
      %v798 = vld [vmem:[%s165 + $0xd8] sm:$0xf]
      %v799 = vld [vmem:[%s165 + $0xdc] sm:$0xf]
      %v800 = vld [vmem:[%s165 + $0xe0] sm:$0xf]
      %v801 = vld [vmem:[%s165 + $0xe4] sm:$0xf]
      %v802 = vld [vmem:[%s165 + $0xe8] sm:$0xf]
      %v803 = vld [vmem:[%s165 + $0xec] sm:$0xf]
      %v804 = vld [vmem:[%s165 + $0xf0] sm:$0xf]
      %v805 = vld [vmem:[%s165 + $0xf4] sm:$0xf]
      %v806 = vld [vmem:[%s165 + $0xf8] sm:$0xf]
      %v807 = vld [vmem:[%s165 + $0xfc] sm:$0xf]
      %v808 = vld [vmem:[%s165 + $0x100] sm:$0xf]
      %v809 = vld [vmem:[%s165 + $0x104] sm:$0xf]
      %v810 = vld [vmem:[%s165 + $0x108] sm:$0xf]
      %v811 = vld [vmem:[%s165 + $0x10c] sm:$0xf]
      %v812 = vld [vmem:[%s165 + $0x110] sm:$0xf]
      %v813 = vld [vmem:[%s165 + $0x114] sm:$0xf]
      %v814 = vld [vmem:[%s165 + $0x118] sm:$0xf]
      %v815 = vld [vmem:[%s165 + $0x11c] sm:$0xf]
      %v816 = vld [vmem:[%s1] sm:$0xf]
      %v817 = vld [vmem:[%s1 + $0x4] sm:$0xf]
      %v818 = vld [vmem:[%s1 + $0x8] sm:$0xf]
      %v819 = vld [vmem:[%s1 + $0xc] sm:$0x1]
      %v820 = vld [vmem:[%s2] sm:$0x1]
      %v822 = vperm.slane %v820, 0
      %v848 = vunpack.c.l.b16 %v792
      %v849 = vunpack.c.l.b16 %v793
      %v850 = vunpack.c.l.b16 %v794
      %v851 = vunpack.c.l.b16 %v795
      %v852 = vunpack.c.l.b16 %v796
      %v853 = vunpack.c.l.b16 %v797
      %v854 = vunpack.c.l.b16 %v798
      %v855 = vunpack.c.l.b16 %v799
      %v856 = vunpack.c.l.b16 %v800
      %v857 = vunpack.c.l.b16 %v801
      %v858 = vunpack.c.l.b16 %v802
      %v859 = vunpack.c.l.b16 %v803
      %v860 = vunpack.c.l.b16 %v804
      %v861 = vunpack.c.l.b16 %v805
      %v862 = vunpack.c.l.b16 %v806
      %v863 = vunpack.c.l.b16 %v807
      %v864 = vunpack.c.l.b16 %v808
      %v865 = vunpack.c.l.b16 %v809
      %v866 = vunpack.c.l.b16 %v810
      %v867 = vunpack.c.l.b16 %v811
      %v868 = vunpack.c.l.b16 %v812
      %v869 = vunpack.c.l.b16 %v813
      %v870 = vunpack.c.l.b16 %v814
      %v871 = vunpack.c.l.b16 %v815
      %v872 = vpack.c.b16 %v849, %v848
      %v873 = vpack.c.b16 %v851, %v850
      %v874 = vpack.c.b16 %v853, %v852
      %v875 = vpack.c.b16 %v855, %v854
      %v876 = vpack.c.b16 %v857, %v856
      %v877 = vpack.c.b16 %v859, %v858
      %v878 = vpack.c.b16 %v861, %v860
      %v879 = vpack.c.b16 %v863, %v862
      %v880 = vpack.c.b16 %v865, %v864
      %v881 = vpack.c.b16 %v867, %v866
      %v882 = vpack.c.b16 %v869, %v868
      %v883 = vpack.c.b16 %v871, %v870
      %v888 = vunpack.c.l.b16 %v816
      %v889 = vunpack.c.l.b16 %v817
      %v890 = vunpack.c.l.b16 %v818
      %v891 = vunpack.c.l.b16 %v819
      %v892 = vpack.c.b16 %v889, %v888
      %v893 = vpack.c.b16 %v891, %v890
      %v896 = vsel %vm275, %v872, 0
      %v899 = vsel %vm275, %v873, 0
      %v902 = vsel %vm275, %v874, 0
      %v905 = vsel %vm275, %v875, 0
      %v908 = vsel %vm275, %v876, 0
      %v911 = vsel %vm275, %v877, 0
      %v914 = vsel %vm275, %v878, 0
      %v917 = vsel %vm275, %v879, 0
      %v920 = vsel %vm275, %v880, 0
      %v923 = vsel %vm275, %v881, 0
      %v926 = vsel %vm275, %v882, 0
      %v929 = vsel %vm275, %v883, 0
      %v932 = vand.u32 %v893, %v315
      %934 = vmatpush.bf16.msra.mxu0 0
      %935 = vmatpush.bf16.msra.mxu0 0
      %936 = vmatpush.bf16.msra.mxu0 0
      %937 = vmatpush.bf16.msra.mxu0 0
      %938 = vmatpush.bf16.msra.mxu0 0
      %939 = vmatpush.bf16.msra.mxu0 0
      %940 = vmatpush.bf16.msra.mxu0 %v932
      %941 = vmatpush.bf16.msra.mxu0 %v892
      %942 = vmatmul.bf16.gmra.mxu0 %v896
      %v943 = vpop.f32.mrf.mxu0
      %v944 = vadd.f32 %v822, %v943
      %v945 = vpop.f32.mrf.mxu0
      %v946 = vadd.f32 %v822, %v945
      %947 = vmatmul.bf16.gmra.mxu0 %v899
      %v948 = vpop.f32.mrf.mxu0
      %v949 = vadd.f32 %v822, %v948
      %v950 = vpop.f32.mrf.mxu0
      %v951 = vadd.f32 %v822, %v950
      %952 = vmatmul.bf16.gmra.mxu0 %v902
      %v953 = vpop.f32.mrf.mxu0
      %v954 = vadd.f32 %v822, %v953
      %v955 = vpop.f32.mrf.mxu0
      %v956 = vadd.f32 %v822, %v955
      %957 = vmatmul.bf16.gmra.mxu0 %v905
      %v958 = vpop.f32.mrf.mxu0
      %v959 = vadd.f32 %v822, %v958
      %v960 = vpop.f32.mrf.mxu0
      %v961 = vadd.f32 %v822, %v960
      %962 = vmatmul.bf16.gmra.mxu0 %v908
      %v963 = vpop.f32.mrf.mxu0
      %v964 = vadd.f32 %v822, %v963
      %v965 = vpop.f32.mrf.mxu0
      %v966 = vadd.f32 %v822, %v965
      %967 = vmatmul.bf16.gmra.mxu0 %v911
      %v968 = vpop.f32.mrf.mxu0
      %v969 = vadd.f32 %v822, %v968
      %v970 = vpop.f32.mrf.mxu0
      %v971 = vadd.f32 %v822, %v970
      %972 = vmatmul.bf16.gmra.mxu0 %v914
      %v973 = vpop.f32.mrf.mxu0
      %v974 = vadd.f32 %v822, %v973
      %v975 = vpop.f32.mrf.mxu0
      %v976 = vadd.f32 %v822, %v975
      %977 = vmatmul.bf16.gmra.mxu0 %v917
      %v978 = vpop.f32.mrf.mxu0
      %v979 = vadd.f32 %v822, %v978
      %v980 = vpop.f32.mrf.mxu0
      %v981 = vadd.f32 %v822, %v980
      %982 = vmatmul.bf16.gmra.mxu0 %v920
      %v983 = vpop.f32.mrf.mxu0
      %v984 = vadd.f32 %v822, %v983
      %v985 = vpop.f32.mrf.mxu0
      %v986 = vadd.f32 %v822, %v985
      %987 = vmatmul.bf16.gmra.mxu0 %v923
      %v988 = vpop.f32.mrf.mxu0
      %v989 = vadd.f32 %v822, %v988
      %v990 = vpop.f32.mrf.mxu0
      %v991 = vadd.f32 %v822, %v990
      %992 = vmatmul.bf16.gmra.mxu0 %v926
      %v993 = vpop.f32.mrf.mxu0
      %v994 = vadd.f32 %v822, %v993
      %v995 = vpop.f32.mrf.mxu0
      %v996 = vadd.f32 %v822, %v995
      %997 = vmatmul.bf16.gmra.mxu0 %v929
      %v998 = vpop.f32.mrf.mxu0
      %v999 = vadd.f32 %v822, %v998
      %v1000 = vpop.f32.mrf.mxu0
      %v1001 = vadd.f32 %v822, %v1000
      %1002 = vdwg.mxu0
      %vm1003 = vcmp.ge.f32.partialorder %v944, 0.0
      %vm1004 = vcmp.ge.f32.partialorder %v946, 0.0
      %vm1005 = vcmp.ge.f32.partialorder %v949, 0.0
      %vm1006 = vcmp.ge.f32.partialorder %v951, 0.0
      %vm1007 = vcmp.ge.f32.partialorder %v954, 0.0
      %vm1008 = vcmp.ge.f32.partialorder %v956, 0.0
      %vm1009 = vcmp.ge.f32.partialorder %v959, 0.0
      %vm1010 = vcmp.ge.f32.partialorder %v961, 0.0
      %vm1011 = vcmp.ge.f32.partialorder %v964, 0.0
      %vm1012 = vcmp.ge.f32.partialorder %v966, 0.0
      %vm1013 = vcmp.ge.f32.partialorder %v969, 0.0
      %vm1014 = vcmp.ge.f32.partialorder %v971, 0.0
      %vm1015 = vcmp.ge.f32.partialorder %v974, 0.0
      %vm1016 = vcmp.ge.f32.partialorder %v976, 0.0
      %vm1017 = vcmp.ge.f32.partialorder %v979, 0.0
      %vm1018 = vcmp.ge.f32.partialorder %v981, 0.0
      %vm1019 = vcmp.ge.f32.partialorder %v984, 0.0
      %vm1020 = vcmp.ge.f32.partialorder %v986, 0.0
      %vm1021 = vcmp.ge.f32.partialorder %v989, 0.0
      %vm1022 = vcmp.ge.f32.partialorder %v991, 0.0
      %vm1023 = vcmp.ge.f32.partialorder %v994, 0.0
      %vm1024 = vcmp.ge.f32.partialorder %v996, 0.0
      %vm1025 = vcmp.ge.f32.partialorder %v999, 0.0
      %vm1026 = vcmp.ge.f32.partialorder %v1001, 0.0
      %v1027 = vmul.f32 %v944, 0.25
      %v1028 = vmul.f32 %v946, 0.25
      %v1029 = vmul.f32 %v949, 0.25
      %v1030 = vmul.f32 %v951, 0.25
      %v1031 = vmul.f32 %v954, 0.25
      %v1032 = vmul.f32 %v956, 0.25
      %v1033 = vmul.f32 %v959, 0.25
      %v1034 = vmul.f32 %v961, 0.25
      %v1035 = vmul.f32 %v964, 0.25
      %v1036 = vmul.f32 %v966, 0.25
      %v1037 = vmul.f32 %v969, 0.25
      %v1038 = vmul.f32 %v971, 0.25
      %v1039 = vmul.f32 %v974, 0.25
      %v1040 = vmul.f32 %v976, 0.25
      %v1041 = vmul.f32 %v979, 0.25
      %v1042 = vmul.f32 %v981, 0.25
      %v1043 = vmul.f32 %v984, 0.25
      %v1044 = vmul.f32 %v986, 0.25
      %v1045 = vmul.f32 %v989, 0.25
      %v1046 = vmul.f32 %v991, 0.25
      %v1047 = vmul.f32 %v994, 0.25
      %v1048 = vmul.f32 %v996, 0.25
      %v1049 = vmul.f32 %v999, 0.25
      %v1050 = vmul.f32 %v1001, 0.25
      %v1051 = vsel %vm1003, %v944, %v1027
      %v1052 = vsel %vm1004, %v946, %v1028
      %v1053 = vsel %vm1005, %v949, %v1029
      %v1054 = vsel %vm1006, %v951, %v1030
      %v1055 = vsel %vm1007, %v954, %v1031
      %v1056 = vsel %vm1008, %v956, %v1032
      %v1057 = vsel %vm1009, %v959, %v1033
      %v1058 = vsel %vm1010, %v961, %v1034
      %v1059 = vsel %vm1011, %v964, %v1035
      %v1060 = vsel %vm1012, %v966, %v1036
      %v1061 = vsel %vm1013, %v969, %v1037
      %v1062 = vsel %vm1014, %v971, %v1038
      %v1063 = vsel %vm1015, %v974, %v1039
      %v1064 = vsel %vm1016, %v976, %v1040
      %v1065 = vsel %vm1017, %v979, %v1041
      %v1066 = vsel %vm1018, %v981, %v1042
      %v1067 = vsel %vm1019, %v984, %v1043
      %v1068 = vsel %vm1020, %v986, %v1044
      %v1069 = vsel %vm1021, %v989, %v1045
      %v1070 = vsel %vm1022, %v991, %v1046
      %v1071 = vsel %vm1023, %v994, %v1047
      %v1072 = vsel %vm1024, %v996, %v1048
      %v1073 = vsel %vm1025, %v999, %v1049
      %v1074 = vsel %vm1026, %v1001, %v1050
      %1075 = vst.msk [vmem:[#allocation2 + $0x180] sm:$0xff] %vm460, %v1051
      %1076 = vst.msk [vmem:[#allocation2 + $0x188] sm:$0xff] %vm460, %v1052
      %1077 = vst.msk [vmem:[#allocation2 + $0x190] sm:$0xff] %vm460, %v1053
      %1078 = vst.msk [vmem:[#allocation2 + $0x198] sm:$0xff] %vm460, %v1054
      %1079 = vst.msk [vmem:[#allocation2 + $0x1a0] sm:$0xff] %vm460, %v1055
      %1080 = vst.msk [vmem:[#allocation2 + $0x1a8] sm:$0xff] %vm460, %v1056
      %1081 = vst.msk [vmem:[#allocation2 + $0x1b0] sm:$0xff] %vm460, %v1057
      %1082 = vst.msk [vmem:[#allocation2 + $0x1b8] sm:$0xff] %vm460, %v1058
      %1083 = vst.msk [vmem:[#allocation2 + $0x1c0] sm:$0xff] %vm460, %v1059
      %1084 = vst.msk [vmem:[#allocation2 + $0x1c8] sm:$0xff] %vm460, %v1060
      %1085 = vst.msk [vmem:[#allocation2 + $0x1d0] sm:$0xff] %vm460, %v1061
      %1086 = vst.msk [vmem:[#allocation2 + $0x1d8] sm:$0xff] %vm460, %v1062
      %1087 = vst.msk [vmem:[#allocation2 + $0x1e0] sm:$0xff] %vm460, %v1063
      %1088 = vst.msk [vmem:[#allocation2 + $0x1e8] sm:$0xff] %vm460, %v1064
      %1089 = vst.msk [vmem:[#allocation2 + $0x1f0] sm:$0xff] %vm460, %v1065
      %1090 = vst.msk [vmem:[#allocation2 + $0x1f8] sm:$0xff] %vm460, %v1066
      %1091 = vst.msk [vmem:[#allocation2 + $0x200] sm:$0xff] %vm460, %v1067
      %1092 = vst.msk [vmem:[#allocation2 + $0x208] sm:$0xff] %vm460, %v1068
      %1093 = vst.msk [vmem:[#allocation2 + $0x210] sm:$0xff] %vm460, %v1069
      %1094 = vst.msk [vmem:[#allocation2 + $0x218] sm:$0xff] %vm460, %v1070
      %1095 = vst.msk [vmem:[#allocation2 + $0x220] sm:$0xff] %vm460, %v1071
      %1096 = vst.msk [vmem:[#allocation2 + $0x228] sm:$0xff] %vm460, %v1072
      %1097 = vst.msk [vmem:[#allocation2 + $0x230] sm:$0xff] %vm460, %v1073
      %1098 = vst.msk [vmem:[#allocation2 + $0x238] sm:$0xff] %vm460, %v1074
      %v1099 = vld [vmem:[#allocation2] ss:$2 sm:$0xff]
      %s1100 = scalar_lea.vmem [#allocation2], 16
      %v1101 = vld [vmem:[%s1100] ss:$2 sm:$0xff]
      %s1102 = scalar_lea.vmem [#allocation2], 32
      %v1103 = vld [vmem:[%s1102] ss:$2 sm:$0xff]
      %s1104 = scalar_lea.vmem [#allocation2], 48
      %v1105 = vld [vmem:[%s1104] ss:$2 sm:$0xff]
      %s1106 = scalar_lea.vmem [#allocation2], 64
      %v1107 = vld [vmem:[%s1106] ss:$2 sm:$0xff]
      %s1108 = scalar_lea.vmem [#allocation2], 80
      %v1109 = vld [vmem:[%s1108] ss:$2 sm:$0xff]
      %s1110 = scalar_lea.vmem [#allocation2], 96
      %v1111 = vld [vmem:[%s1110] ss:$2 sm:$0xff]
      %s1112 = scalar_lea.vmem [#allocation2], 112
      %v1113 = vld [vmem:[%s1112] ss:$2 sm:$0xff]
      %s1114 = scalar_lea.vmem [#allocation2], 128
      %v1115 = vld [vmem:[%s1114] ss:$2 sm:$0xff]
      %s1116 = scalar_lea.vmem [#allocation2], 144
      %v1117 = vld [vmem:[%s1116] ss:$2 sm:$0xff]
      %s1118 = scalar_lea.vmem [#allocation2], 160
      %v1119 = vld [vmem:[%s1118] ss:$2 sm:$0xff]
      %s1120 = scalar_lea.vmem [#allocation2], 176
      %v1121 = vld [vmem:[%s1120] ss:$2 sm:$0xff]
      %s1122 = scalar_lea.vmem [#allocation2], 192
      %v1123 = vld [vmem:[%s1122] ss:$2 sm:$0xff]
      %s1124 = scalar_lea.vmem [#allocation2], 208
      %v1125 = vld [vmem:[%s1124] ss:$2 sm:$0xff]
      %s1126 = scalar_lea.vmem [#allocation2], 224
      %v1127 = vld [vmem:[%s1126] ss:$2 sm:$0xff]
      %s1128 = scalar_lea.vmem [#allocation2], 240
      %v1129 = vld [vmem:[%s1128] ss:$2 sm:$0xff]
      %s1130 = scalar_lea.vmem [#allocation2], 256
      %v1131 = vld [vmem:[%s1130] ss:$2 sm:$0xff]
      %s1132 = scalar_lea.vmem [#allocation2], 272
      %v1133 = vld [vmem:[%s1132] ss:$2 sm:$0xff]
      %s1134 = scalar_lea.vmem [#allocation2], 288
      %v1135 = vld [vmem:[%s1134] ss:$2 sm:$0xff]
      %s1136 = scalar_lea.vmem [#allocation2], 304
      %v1137 = vld [vmem:[%s1136] ss:$2 sm:$0xff]
      %s1138 = scalar_lea.vmem [#allocation2], 320
      %v1139 = vld [vmem:[%s1138] ss:$2 sm:$0xff]
      %s1140 = scalar_lea.vmem [#allocation2], 336
      %v1141 = vld [vmem:[%s1140] ss:$2 sm:$0xff]
      %s1142 = scalar_lea.vmem [#allocation2], 352
      %v1143 = vld [vmem:[%s1142] ss:$2 sm:$0xff]
      %s1144 = scalar_lea.vmem [#allocation2], 368
      %v1145 = vld [vmem:[%s1144] ss:$2 sm:$0xff]
      %s1146 = scalar_lea.vmem [#allocation2], 384
      %v1147 = vld [vmem:[%s1146] ss:$2 sm:$0xff]
      %s1148 = scalar_lea.vmem [#allocation2], 400
      %v1149 = vld [vmem:[%s1148] ss:$2 sm:$0xff]
      %s1150 = scalar_lea.vmem [#allocation2], 416
      %v1151 = vld [vmem:[%s1150] ss:$2 sm:$0xff]
      %s1152 = scalar_lea.vmem [#allocation2], 432
      %v1153 = vld [vmem:[%s1152] ss:$2 sm:$0xff]
      %s1154 = scalar_lea.vmem [#allocation2], 448
      %v1155 = vld [vmem:[%s1154] ss:$2 sm:$0xff]
      %s1156 = scalar_lea.vmem [#allocation2], 464
      %v1157 = vld [vmem:[%s1156] ss:$2 sm:$0xff]
      %s1158 = scalar_lea.vmem [#allocation2], 480
      %v1159 = vld [vmem:[%s1158] ss:$2 sm:$0xff]
      %s1160 = scalar_lea.vmem [#allocation2], 496
      %v1161 = vld [vmem:[%s1160] ss:$2 sm:$0xff]
      %s1162 = scalar_lea.vmem [#allocation2], 512
      %v1163 = vld [vmem:[%s1162] ss:$2 sm:$0xff]
      %s1164 = scalar_lea.vmem [#allocation2], 528
      %v1165 = vld [vmem:[%s1164] ss:$2 sm:$0xff]
      %s1166 = scalar_lea.vmem [#allocation2], 544
      %v1167 = vld [vmem:[%s1166] ss:$2 sm:$0xff]
      %s1168 = scalar_lea.vmem [#allocation2], 560
      %v1169 = vld [vmem:[%s1168] ss:$2 sm:$0xff]
      %s1170 = scalar_lea.vmem [#allocation2], 1
      %v1171 = vld [vmem:[%s1170] ss:$2 sm:$0xff]
      %s1172 = scalar_lea.vmem [#allocation2], 17
      %v1173 = vld [vmem:[%s1172] ss:$2 sm:$0xff]
      %s1174 = scalar_lea.vmem [#allocation2], 33
      %v1175 = vld [vmem:[%s1174] ss:$2 sm:$0xff]
      %s1176 = scalar_lea.vmem [#allocation2], 49
      %v1177 = vld [vmem:[%s1176] ss:$2 sm:$0xff]
      %s1178 = scalar_lea.vmem [#allocation2], 65
      %v1179 = vld [vmem:[%s1178] ss:$2 sm:$0xff]
      %s1180 = scalar_lea.vmem [#allocation2], 81
      %v1181 = vld [vmem:[%s1180] ss:$2 sm:$0xff]
      %s1182 = scalar_lea.vmem [#allocation2], 97
      %v1183 = vld [vmem:[%s1182] ss:$2 sm:$0xff]
      %s1184 = scalar_lea.vmem [#allocation2], 113
      %v1185 = vld [vmem:[%s1184] ss:$2 sm:$0xff]
      %s1186 = scalar_lea.vmem [#allocation2], 129
      %v1187 = vld [vmem:[%s1186] ss:$2 sm:$0xff]
      %s1188 = scalar_lea.vmem [#allocation2], 145
      %v1189 = vld [vmem:[%s1188] ss:$2 sm:$0xff]
      %s1190 = scalar_lea.vmem [#allocation2], 161
      %v1191 = vld [vmem:[%s1190] ss:$2 sm:$0xff]
      %s1192 = scalar_lea.vmem [#allocation2], 177
      %v1193 = vld [vmem:[%s1192] ss:$2 sm:$0xff]
      %s1194 = scalar_lea.vmem [#allocation2], 193
      %v1195 = vld [vmem:[%s1194] ss:$2 sm:$0xff]
      %s1196 = scalar_lea.vmem [#allocation2], 209
      %v1197 = vld [vmem:[%s1196] ss:$2 sm:$0xff]
      %s1198 = scalar_lea.vmem [#allocation2], 225
      %v1199 = vld [vmem:[%s1198] ss:$2 sm:$0xff]
      %s1200 = scalar_lea.vmem [#allocation2], 241
      %v1201 = vld [vmem:[%s1200] ss:$2 sm:$0xff]
      %s1202 = scalar_lea.vmem [#allocation2], 257
      %v1203 = vld [vmem:[%s1202] ss:$2 sm:$0xff]
      %s1204 = scalar_lea.vmem [#allocation2], 273
      %v1205 = vld [vmem:[%s1204] ss:$2 sm:$0xff]
      %s1206 = scalar_lea.vmem [#allocation2], 289
      %v1207 = vld [vmem:[%s1206] ss:$2 sm:$0xff]
      %s1208 = scalar_lea.vmem [#allocation2], 305
      %v1209 = vld [vmem:[%s1208] ss:$2 sm:$0xff]
      %s1210 = scalar_lea.vmem [#allocation2], 321
      %v1211 = vld [vmem:[%s1210] ss:$2 sm:$0xff]
      %s1212 = scalar_lea.vmem [#allocation2], 337
      %v1213 = vld [vmem:[%s1212] ss:$2 sm:$0xff]
      %s1214 = scalar_lea.vmem [#allocation2], 353
      %v1215 = vld [vmem:[%s1214] ss:$2 sm:$0xff]
      %s1216 = scalar_lea.vmem [#allocation2], 369
      %v1217 = vld [vmem:[%s1216] ss:$2 sm:$0xff]
      %s1218 = scalar_lea.vmem [#allocation2], 385
      %v1219 = vld [vmem:[%s1218] ss:$2 sm:$0xff]
      %s1220 = scalar_lea.vmem [#allocation2], 401
      %v1221 = vld [vmem:[%s1220] ss:$2 sm:$0xff]
      %s1222 = scalar_lea.vmem [#allocation2], 417
      %v1223 = vld [vmem:[%s1222] ss:$2 sm:$0xff]
      %s1224 = scalar_lea.vmem [#allocation2], 433
      %v1225 = vld [vmem:[%s1224] ss:$2 sm:$0xff]
      %s1226 = scalar_lea.vmem [#allocation2], 449
      %v1227 = vld [vmem:[%s1226] ss:$2 sm:$0xff]
      %s1228 = scalar_lea.vmem [#allocation2], 465
      %v1229 = vld [vmem:[%s1228] ss:$2 sm:$0xff]
      %s1230 = scalar_lea.vmem [#allocation2], 481
      %v1231 = vld [vmem:[%s1230] ss:$2 sm:$0xff]
      %s1232 = scalar_lea.vmem [#allocation2], 497
      %v1233 = vld [vmem:[%s1232] ss:$2 sm:$0xff]
      %s1234 = scalar_lea.vmem [#allocation2], 513
      %v1235 = vld [vmem:[%s1234] ss:$2 sm:$0xff]
      %s1236 = scalar_lea.vmem [#allocation2], 529
      %v1237 = vld [vmem:[%s1236] ss:$2 sm:$0xff]
      %s1238 = scalar_lea.vmem [#allocation2], 545
      %v1239 = vld [vmem:[%s1238] ss:$2 sm:$0xff]
      %s1240 = scalar_lea.vmem [#allocation2], 561
      %v1241 = vld [vmem:[%s1240] ss:$2 sm:$0xff]
      %v1242 = vmax.f32 %v1099, %v1171
      %v1243 = vmax.f32 %v1101, %v1173
      %v1244 = vmax.f32 %v1103, %v1175
      %v1245 = vmax.f32 %v1105, %v1177
      %v1246 = vmax.f32 %v1107, %v1179
      %v1247 = vmax.f32 %v1109, %v1181
      %v1248 = vmax.f32 %v1111, %v1183
      %v1249 = vmax.f32 %v1113, %v1185
      %v1250 = vmax.f32 %v1115, %v1187
      %v1251 = vmax.f32 %v1117, %v1189
      %v1252 = vmax.f32 %v1119, %v1191
      %v1253 = vmax.f32 %v1121, %v1193
      %v1254 = vmax.f32 %v1123, %v1195
      %v1255 = vmax.f32 %v1125, %v1197
      %v1256 = vmax.f32 %v1127, %v1199
      %v1257 = vmax.f32 %v1129, %v1201
      %v1258 = vmax.f32 %v1131, %v1203
      %v1259 = vmax.f32 %v1133, %v1205
      %v1260 = vmax.f32 %v1135, %v1207
      %v1261 = vmax.f32 %v1137, %v1209
      %v1262 = vmax.f32 %v1139, %v1211
      %v1263 = vmax.f32 %v1141, %v1213
      %v1264 = vmax.f32 %v1143, %v1215
      %v1265 = vmax.f32 %v1145, %v1217
      %v1266 = vmax.f32 %v1147, %v1219
      %v1267 = vmax.f32 %v1149, %v1221
      %v1268 = vmax.f32 %v1151, %v1223
      %v1269 = vmax.f32 %v1153, %v1225
      %v1270 = vmax.f32 %v1155, %v1227
      %v1271 = vmax.f32 %v1157, %v1229
      %v1272 = vmax.f32 %v1159, %v1231
      %v1273 = vmax.f32 %v1161, %v1233
      %v1274 = vmax.f32 %v1163, %v1235
      %v1275 = vmax.f32 %v1165, %v1237
      %v1276 = vmax.f32 %v1167, %v1239
      %v1277 = vmax.f32 %v1169, %v1241
      %1278 = vst.msk [vmem:[#allocation3] sm:$0xff] %vm460, %v1242
      %1279 = vst.msk [vmem:[#allocation3 + $0x8] sm:$0xff] %vm460, %v1243
      %1280 = vst.msk [vmem:[#allocation3 + $0x10] sm:$0xff] %vm460, %v1244
      %1281 = vst.msk [vmem:[#allocation3 + $0x18] sm:$0xff] %vm460, %v1245
      %1282 = vst.msk [vmem:[#allocation3 + $0x20] sm:$0xff] %vm460, %v1246
      %1283 = vst.msk [vmem:[#allocation3 + $0x28] sm:$0xff] %vm460, %v1247
      %1284 = vst.msk [vmem:[#allocation3 + $0x30] sm:$0xff] %vm460, %v1248
      %1285 = vst.msk [vmem:[#allocation3 + $0x38] sm:$0xff] %vm460, %v1249
      %1286 = vst.msk [vmem:[#allocation3 + $0x40] sm:$0xff] %vm460, %v1250
      %1287 = vst.msk [vmem:[#allocation3 + $0x48] sm:$0xff] %vm460, %v1251
      %1288 = vst.msk [vmem:[#allocation3 + $0x50] sm:$0xff] %vm460, %v1252
      %1289 = vst.msk [vmem:[#allocation3 + $0x58] sm:$0xff] %vm460, %v1253
      %1290 = vst.msk [vmem:[#allocation3 + $0x60] sm:$0xff] %vm460, %v1254
      %1291 = vst.msk [vmem:[#allocation3 + $0x68] sm:$0xff] %vm460, %v1255
      %1292 = vst.msk [vmem:[#allocation3 + $0x70] sm:$0xff] %vm460, %v1256
      %1293 = vst.msk [vmem:[#allocation3 + $0x78] sm:$0xff] %vm460, %v1257
      %1294 = vst.msk [vmem:[#allocation3 + $0x80] sm:$0xff] %vm460, %v1258
      %1295 = vst.msk [vmem:[#allocation3 + $0x88] sm:$0xff] %vm460, %v1259
      %1296 = vst.msk [vmem:[#allocation3 + $0x90] sm:$0xff] %vm460, %v1260
      %1297 = vst.msk [vmem:[#allocation3 + $0x98] sm:$0xff] %vm460, %v1261
      %1298 = vst.msk [vmem:[#allocation3 + $0xa0] sm:$0xff] %vm460, %v1262
      %1299 = vst.msk [vmem:[#allocation3 + $0xa8] sm:$0xff] %vm460, %v1263
      %1300 = vst.msk [vmem:[#allocation3 + $0xb0] sm:$0xff] %vm460, %v1264
      %1301 = vst.msk [vmem:[#allocation3 + $0xb8] sm:$0xff] %vm460, %v1265
      %1302 = vst.msk [vmem:[#allocation3 + $0xc0] sm:$0xff] %vm460, %v1266
      %1303 = vst.msk [vmem:[#allocation3 + $0xc8] sm:$0xff] %vm460, %v1267
      %1304 = vst.msk [vmem:[#allocation3 + $0xd0] sm:$0xff] %vm460, %v1268
      %1305 = vst.msk [vmem:[#allocation3 + $0xd8] sm:$0xff] %vm460, %v1269
      %1306 = vst.msk [vmem:[#allocation3 + $0xe0] sm:$0xff] %vm460, %v1270
      %1307 = vst.msk [vmem:[#allocation3 + $0xe8] sm:$0xff] %vm460, %v1271
      %1308 = vst.msk [vmem:[#allocation3 + $0xf0] sm:$0xff] %vm460, %v1272
      %1309 = vst.msk [vmem:[#allocation3 + $0xf8] sm:$0xff] %vm460, %v1273
      %1310 = vst.msk [vmem:[#allocation3 + $0x100] sm:$0xff] %vm460, %v1274
      %1311 = vst.msk [vmem:[#allocation3 + $0x108] sm:$0xff] %vm460, %v1275
      %1312 = vst.msk [vmem:[#allocation3 + $0x110] sm:$0xff] %vm460, %v1276
      %1313 = vst.msk [vmem:[#allocation3 + $0x118] sm:$0xff] %vm460, %v1277
      %v1314 = vld [vmem:[#allocation3] sm:$0xff]
      %v1315 = vld [vmem:[#allocation3 + $0x8] sm:$0xf]
      %v1316 = vld [vmem:[#allocation3 + $0xc] sm:$0xff]
      %v1317 = vld [vmem:[#allocation3 + $0x14] sm:$0xf]
      %v1318 = vmax.f32 %v1314, %v1316
      %v1319 = vmax.f32 %v1315, %v1317
      %v1320 = vpack.c.bf16 %v1318, %v1318
      %v1321 = vpack.c.bf16 %v1319, %v1319
      %vm1322 = vcmask 257024
      %1323 = vst.msk [vmem:[%s170] sm:$0xf] %vm1322, %v1320
      %vm1324 = vcmask 254976
      %1325 = vst.msk [vmem:[%s170 + $0x4] sm:$0x3] %vm1324, %v1321
      %v1326 = vld [vmem:[#allocation3 + $0x18] sm:$0xff]
      %v1327 = vld [vmem:[#allocation3 + $0x20] sm:$0xf]
      %v1328 = vld [vmem:[#allocation3 + $0x24] sm:$0xff]
      %v1329 = vld [vmem:[#allocation3 + $0x2c] sm:$0xf]
      %v1330 = vmax.f32 %v1326, %v1328
      %v1331 = vmax.f32 %v1327, %v1329
      %v1332 = vpack.c.bf16 %v1330, %v1330
      %v1333 = vpack.c.bf16 %v1331, %v1331
      %s1334 = scalar_lea.vmem %s170, 8
      %1335 = vst.msk [vmem:[%s1334] sm:$0xf] %vm1322, %v1332
      %1336 = vst.msk [vmem:[%s1334 + $0x4] sm:$0x3] %vm1324, %v1333
      %v1337 = vld [vmem:[#allocation3 + $0x30] sm:$0xff]
      %v1338 = vld [vmem:[#allocation3 + $0x38] sm:$0xf]
      %v1339 = vld [vmem:[#allocation3 + $0x3c] sm:$0xff]
      %v1340 = vld [vmem:[#allocation3 + $0x44] sm:$0xf]
      %v1341 = vmax.f32 %v1337, %v1339
      %v1342 = vmax.f32 %v1338, %v1340
      %v1343 = vpack.c.bf16 %v1341, %v1341
      %v1344 = vpack.c.bf16 %v1342, %v1342
      %s1345 = scalar_lea.vmem %s170, 16
      %1346 = vst.msk [vmem:[%s1345] sm:$0xf] %vm1322, %v1343
      %1347 = vst.msk [vmem:[%s1345 + $0x4] sm:$0x3] %vm1324, %v1344
      %v1348 = vld [vmem:[#allocation3 + $0x48] sm:$0xff]
      %v1349 = vld [vmem:[#allocation3 + $0x50] sm:$0xf]
      %v1350 = vld [vmem:[#allocation3 + $0x54] sm:$0xff]
      %v1351 = vld [vmem:[#allocation3 + $0x5c] sm:$0xf]
      %v1352 = vmax.f32 %v1348, %v1350
      %v1353 = vmax.f32 %v1349, %v1351
      %v1354 = vpack.c.bf16 %v1352, %v1352
      %v1355 = vpack.c.bf16 %v1353, %v1353
      %s1356 = scalar_lea.vmem %s170, 24
      %1357 = vst.msk [vmem:[%s1356] sm:$0xf] %vm1322, %v1354
      %1358 = vst.msk [vmem:[%s1356 + $0x4] sm:$0x3] %vm1324, %v1355
      %v1359 = vld [vmem:[#allocation3 + $0x60] sm:$0xff]
      %v1360 = vld [vmem:[#allocation3 + $0x68] sm:$0xf]
      %v1361 = vld [vmem:[#allocation3 + $0x6c] sm:$0xff]
      %v1362 = vld [vmem:[#allocation3 + $0x74] sm:$0xf]
      %v1363 = vmax.f32 %v1359, %v1361
      %v1364 = vmax.f32 %v1360, %v1362
      %v1365 = vpack.c.bf16 %v1363, %v1363
      %v1366 = vpack.c.bf16 %v1364, %v1364
      %s1367 = scalar_lea.vmem %s170, 32
      %1368 = vst.msk [vmem:[%s1367] sm:$0xf] %vm1322, %v1365
      %1369 = vst.msk [vmem:[%s1367 + $0x4] sm:$0x3] %vm1324, %v1366
      %v1370 = vld [vmem:[#allocation3 + $0x78] sm:$0xff]
      %v1371 = vld [vmem:[#allocation3 + $0x80] sm:$0xf]
      %v1372 = vld [vmem:[#allocation3 + $0x84] sm:$0xff]
      %v1373 = vld [vmem:[#allocation3 + $0x8c] sm:$0xf]
      %v1374 = vmax.f32 %v1370, %v1372
      %v1375 = vmax.f32 %v1371, %v1373
      %v1376 = vpack.c.bf16 %v1374, %v1374
      %v1377 = vpack.c.bf16 %v1375, %v1375
      %s1378 = scalar_lea.vmem %s170, 40
      %1379 = vst.msk [vmem:[%s1378] sm:$0xf] %vm1322, %v1376
      %1380 = vst.msk [vmem:[%s1378 + $0x4] sm:$0x3] %vm1324, %v1377
      %v1381 = vld [vmem:[#allocation3 + $0x90] sm:$0xff]
      %v1382 = vld [vmem:[#allocation3 + $0x98] sm:$0xf]
      %v1383 = vld [vmem:[#allocation3 + $0x9c] sm:$0xff]
      %v1384 = vld [vmem:[#allocation3 + $0xa4] sm:$0xf]
      %v1385 = vmax.f32 %v1381, %v1383
      %v1386 = vmax.f32 %v1382, %v1384
      %v1387 = vpack.c.bf16 %v1385, %v1385
      %v1388 = vpack.c.bf16 %v1386, %v1386
      %s1389 = scalar_lea.vmem %s170, 48
      %1390 = vst.msk [vmem:[%s1389] sm:$0xf] %vm1322, %v1387
      %1391 = vst.msk [vmem:[%s1389 + $0x4] sm:$0x3] %vm1324, %v1388
      %v1392 = vld [vmem:[#allocation3 + $0xa8] sm:$0xff]
      %v1393 = vld [vmem:[#allocation3 + $0xb0] sm:$0xf]
      %v1394 = vld [vmem:[#allocation3 + $0xb4] sm:$0xff]
      %v1395 = vld [vmem:[#allocation3 + $0xbc] sm:$0xf]
      %v1396 = vmax.f32 %v1392, %v1394
      %v1397 = vmax.f32 %v1393, %v1395
      %v1398 = vpack.c.bf16 %v1396, %v1396
      %v1399 = vpack.c.bf16 %v1397, %v1397
      %s1400 = scalar_lea.vmem %s170, 56
      %1401 = vst.msk [vmem:[%s1400] sm:$0xf] %vm1322, %v1398
      %1402 = vst.msk [vmem:[%s1400 + $0x4] sm:$0x3] %vm1324, %v1399
      %v1403 = vld [vmem:[#allocation3 + $0xc0] sm:$0xff]
      %v1404 = vld [vmem:[#allocation3 + $0xc8] sm:$0xf]
      %v1405 = vld [vmem:[#allocation3 + $0xcc] sm:$0xff]
      %v1406 = vld [vmem:[#allocation3 + $0xd4] sm:$0xf]
      %v1407 = vmax.f32 %v1403, %v1405
      %v1408 = vmax.f32 %v1404, %v1406
      %v1409 = vpack.c.bf16 %v1407, %v1407
      %v1410 = vpack.c.bf16 %v1408, %v1408
      %s1411 = scalar_lea.vmem %s170, 64
      %1412 = vst.msk [vmem:[%s1411] sm:$0xf] %vm1322, %v1409
      %1413 = vst.msk [vmem:[%s1411 + $0x4] sm:$0x3] %vm1324, %v1410
      %v1414 = vld [vmem:[#allocation3 + $0xd8] sm:$0xff]
      %v1415 = vld [vmem:[#allocation3 + $0xe0] sm:$0xf]
      %v1416 = vld [vmem:[#allocation3 + $0xe4] sm:$0xff]
      %v1417 = vld [vmem:[#allocation3 + $0xec] sm:$0xf]
      %v1418 = vmax.f32 %v1414, %v1416
      %v1419 = vmax.f32 %v1415, %v1417
      %v1420 = vpack.c.bf16 %v1418, %v1418
      %v1421 = vpack.c.bf16 %v1419, %v1419
      %s1422 = scalar_lea.vmem %s170, 72
      %1423 = vst.msk [vmem:[%s1422] sm:$0xf] %vm1322, %v1420
      %1424 = vst.msk [vmem:[%s1422 + $0x4] sm:$0x3] %vm1324, %v1421
      %v1425 = vld [vmem:[#allocation3 + $0xf0] sm:$0xff]
      %v1426 = vld [vmem:[#allocation3 + $0xf8] sm:$0xf]
      %v1427 = vld [vmem:[#allocation3 + $0xfc] sm:$0xff]
      %v1428 = vld [vmem:[#allocation3 + $0x104] sm:$0xf]
      %v1429 = vmax.f32 %v1425, %v1427
      %v1430 = vmax.f32 %v1426, %v1428
      %v1431 = vpack.c.bf16 %v1429, %v1429
      %v1432 = vpack.c.bf16 %v1430, %v1430
      %s1433 = scalar_lea.vmem %s170, 80
      %1434 = vst.msk [vmem:[%s1433] sm:$0xf] %vm1322, %v1431
      %1435 = vst.msk [vmem:[%s1433 + $0x4] sm:$0x3] %vm1324, %v1432
      %v1436 = vld [vmem:[#allocation3 + $0x108] sm:$0xff]
      %v1437 = vld [vmem:[#allocation3 + $0x110] sm:$0xf]
      %v1438 = vld [vmem:[#allocation3 + $0x114] sm:$0xff]
      %v1439 = vld [vmem:[#allocation3 + $0x11c] sm:$0xf]
      %v1440 = vmax.f32 %v1436, %v1438
      %v1441 = vmax.f32 %v1437, %v1439
      %v1442 = vpack.c.bf16 %v1440, %v1440
      %v1443 = vpack.c.bf16 %v1441, %v1441
      %s1444 = scalar_lea.vmem %s170, 88
      %1445 = vst.msk [vmem:[%s1444] sm:$0xf] %vm1322, %v1442
      %1446 = vst.msk [vmem:[%s1444 + $0x4] sm:$0x3] %vm1324, %v1443
      %p1447 = scmp.lt.s32.totalorder %s14, 1
      %s1448 = scalar_select %p1447, %s14, 1
      %s1449 = smul.addr %s1448, 24
      %s1450 = smul.addr %s1449, 4
      %s1451 = scalar_lea.vmem %s3, %s1450
      // Predicated region
      $region33: #{network_forward.3} parent=31 // pred_check
        %p1452 = pneg %p100
      $region34: #{network_forward.3} parent=31 // pred_check_branch
        %1454 = sbr.rel (%p1452) target = $region36
      $region35: #{network_forward.3} parent=31 // pred_region
        _
      $region36: #{network_forward.3} parent=31 // pred_fallthru
        _
    $region32: #{network_forward.3} parent=5 // pred_fallthru
      _
    %p1455 = scmp.le.s32.totalorder 2, %s9
    // Predicated region
    $region37: #{network_forward.3} parent=5 // pred_check
      %p1456 = pneg %p1455
    $region38: #{network_forward.3} parent=5 // pred_check_branch
      %1458 = sbr.rel (%p1456) target = $region40
    $region39: #{network_forward.3} parent=5 // pred_region
      %s1459 = ssub.s32 %s9, 2
      // Predicated region
      $region41: #{network_forward.3} parent=39 // pred_check
        %p1460 = pneg %p106
      $region42: #{network_forward.3} parent=39 // pred_check_branch
        %1462 = sbr.rel (%p1460) target = $region44
      $region43: #{network_forward.3} parent=39 // pred_region
        %p1463 = scmp.lt.s32.totalorder %s15, 1
        %s1464 = scalar_select %p1463, %s15, 1
        %s1465 = smul.addr %s1464, 24
        %s1466 = smul.addr %s1465, 4
        %s1467 = scalar_lea.vmem %s3, %s1466
      $region44: #{network_forward.3} parent=39 // pred_fallthru
        _
    $region40: #{network_forward.3} parent=5 // pred_fallthru
      _
  $region6: #{network_forward.3} parent=0 // loop_footer
    %s13 = sadd.s32 1, %s9
  $region7: #{network_forward.3} parent=0 // loop_footer_branch
    %8 = sbr.rel target = $region3
  $region8: #{network_forward.3} parent=0 // loop_exit
    _

// kernel: network_forward.5
$region0: #{network_forward.5}
  #allocation0 [shape = 'u32[]', space=smem, size = 0x4, offset = 0x4, fixed_abs, tag = 'smem constant byte address 0x4 - core index']
  #allocation1 [shape = 'u32[72,128]{1,0:T(1,128)}', space=vmem, size = 0x9000, scoped, tag = 'internal scratch']
  %s0 = inlined_call_operand.vmem [shape: bf16[2,1024], index: 0, kind: input, shape index: {}]
  %s1 = inlined_call_operand.vmem [shape: bf16[1024,512], index: 1, kind: input, shape index: {}]
  %s2 = inlined_call_operand.vmem [shape: f32[1,512], index: 2, kind: input, shape index: {}]
  %s3 = inlined_call_operand.vmem [shape: bf16[512,128], index: 3, kind: input, shape index: {}]
  %s4 = inlined_call_operand.vmem [shape: f32[1,128], index: 4, kind: input, shape index: {}]
  %s5 = inlined_call_operand.hbm [shape: f32[2,128], index: 5, kind: output, shape index: {}]
  %s6 = sld [smem:[#allocation0]]
  $region30: #{network_forward.5} parent=0
    _
  %s8 = ssub.s32 1, %s6
  %s9 = scalar_select 0, %s8, %s6
  $region1: #{network_forward.5} parent=0
    #allocation2 [shape = 'u8[1024]{0}', space=vmem, size = 0x400, scoped, tag = 'output window, operand 0, single buffered']
    #allocation3 [shape = 's32[1]{0}', space=sflag, size = 0x4, scoped, tag = 'scoped memory for network_forward.5']
    %10 = vsyncpa [#allocation3], 0
    // Predicated region
    $region2: #{network_forward.5} parent=1 // pred_check
      _
    $region3: #{network_forward.5} parent=1 // pred_check_branch
      %12 = sbr.rel (0) target = $region5
    $region4: #{network_forward.5} parent=1 // pred_region
      _
    $region5: #{network_forward.5} parent=1 // pred_fallthru
      _
    // Predicated region
    $region6: #{network_forward.5} parent=1 // pred_check
      _
    $region7: #{network_forward.5} parent=1 // pred_check_branch
      %14 = sbr.rel (0) target = $region9
    $region8: #{network_forward.5} parent=1 // pred_region
      _
    $region9: #{network_forward.5} parent=1 // pred_fallthru
      _
    // Predicated region
    $region10: #{network_forward.5} parent=1 // pred_check
      _
    $region11: #{network_forward.5} parent=1 // pred_check_branch
      %16 = sbr.rel (0) target = $region13
    $region12: #{network_forward.5} parent=1 // pred_region
      _
    $region13: #{network_forward.5} parent=1 // pred_fallthru
      _
    // Predicated region
    $region14: #{network_forward.5} parent=1 // pred_check
      _
    $region15: #{network_forward.5} parent=1 // pred_check_branch
      %18 = sbr.rel (0) target = $region17
    $region16: #{network_forward.5} parent=1 // pred_region
      _
    $region17: #{network_forward.5} parent=1 // pred_fallthru
      _
    // Predicated region
    $region18: #{network_forward.5} parent=1 // pred_check
      _
    $region19: #{network_forward.5} parent=1 // pred_check_branch
      %20 = sbr.rel (0) target = $region21
    $region20: #{network_forward.5} parent=1 // pred_region
      _
    $region21: #{network_forward.5} parent=1 // pred_fallthru
      _
    %v21 = vld [vmem:[%s0] sm:$0xff]
    %v22 = vld [vmem:[%s1] sm:$0xff]
    %v23 = vld [vmem:[%s1 + $0x8] sm:$0xff]
    %v24 = vld [vmem:[%s1 + $0x10] sm:$0xff]
    %v25 = vld [vmem:[%s1 + $0x18] sm:$0xff]
    %v26 = vld [vmem:[%s1 + $0x20] sm:$0xff]
    %v27 = vld [vmem:[%s1 + $0x28] sm:$0xff]
    %v28 = vld [vmem:[%s1 + $0x30] sm:$0xff]
    %v29 = vld [vmem:[%s1 + $0x38] sm:$0xff]
    %v30 = vld [vmem:[%s1 + $0x40] sm:$0xff]
    %v31 = vld [vmem:[%s1 + $0x48] sm:$0xff]
    %v32 = vld [vmem:[%s1 + $0x50] sm:$0xff]
    %v33 = vld [vmem:[%s1 + $0x58] sm:$0xff]
    %v34 = vld [vmem:[%s1 + $0x60] sm:$0xff]
    %v35 = vld [vmem:[%s1 + $0x68] sm:$0xff]
    %v36 = vld [vmem:[%s1 + $0x70] sm:$0xff]
    %v37 = vld [vmem:[%s1 + $0x78] sm:$0xff]
    %v38 = vld [vmem:[%s1 + $0x80] sm:$0xff]
    %v39 = vld [vmem:[%s1 + $0x88] sm:$0xff]
    %v40 = vld [vmem:[%s1 + $0x90] sm:$0xff]
    %v41 = vld [vmem:[%s1 + $0x98] sm:$0xff]
    %v42 = vld [vmem:[%s1 + $0xa0] sm:$0xff]
    %v43 = vld [vmem:[%s1 + $0xa8] sm:$0xff]
    %v44 = vld [vmem:[%s1 + $0xb0] sm:$0xff]
    %v45 = vld [vmem:[%s1 + $0xb8] sm:$0xff]
    %v46 = vld [vmem:[%s1 + $0xc0] sm:$0xff]
    %v47 = vld [vmem:[%s1 + $0xc8] sm:$0xff]
    %v48 = vld [vmem:[%s1 + $0xd0] sm:$0xff]
    %v49 = vld [vmem:[%s1 + $0xd8] sm:$0xff]
    %v50 = vld [vmem:[%s1 + $0xe0] sm:$0xff]
    %v51 = vld [vmem:[%s1 + $0xe8] sm:$0xff]
    %v52 = vld [vmem:[%s1 + $0xf0] sm:$0xff]
    %v53 = vld [vmem:[%s1 + $0xf8] sm:$0xff]
    %v54 = vld [vmem:[%s1 + $0x100] sm:$0xff]
    %v55 = vld [vmem:[%s1 + $0x108] sm:$0xff]
    %v56 = vld [vmem:[%s1 + $0x110] sm:$0xff]
    %v57 = vld [vmem:[%s1 + $0x118] sm:$0xff]
    %v58 = vld [vmem:[%s1 + $0x120] sm:$0xff]
    %v59 = vld [vmem:[%s1 + $0x128] sm:$0xff]
    %v60 = vld [vmem:[%s1 + $0x130] sm:$0xff]
    %v61 = vld [vmem:[%s1 + $0x138] sm:$0xff]
    %v62 = vld [vmem:[%s1 + $0x140] sm:$0xff]
    %v63 = vld [vmem:[%s1 + $0x148] sm:$0xff]
    %v64 = vld [vmem:[%s1 + $0x150] sm:$0xff]
    %v65 = vld [vmem:[%s1 + $0x158] sm:$0xff]
    %v66 = vld [vmem:[%s1 + $0x160] sm:$0xff]
    %v67 = vld [vmem:[%s1 + $0x168] sm:$0xff]
    %v68 = vld [vmem:[%s1 + $0x170] sm:$0xff]
    %v69 = vld [vmem:[%s1 + $0x178] sm:$0xff]
    %v70 = vld [vmem:[%s1 + $0x180] sm:$0xff]
    %v71 = vld [vmem:[%s1 + $0x188] sm:$0xff]
    %v72 = vld [vmem:[%s1 + $0x190] sm:$0xff]
    %v73 = vld [vmem:[%s1 + $0x198] sm:$0xff]
    %v74 = vld [vmem:[%s1 + $0x1a0] sm:$0xff]
    %v75 = vld [vmem:[%s1 + $0x1a8] sm:$0xff]
    %v76 = vld [vmem:[%s1 + $0x1b0] sm:$0xff]
    %v77 = vld [vmem:[%s1 + $0x1b8] sm:$0xff]
    %v78 = vld [vmem:[%s1 + $0x1c0] sm:$0xff]
    %v79 = vld [vmem:[%s1 + $0x1c8] sm:$0xff]
    %v80 = vld [vmem:[%s1 + $0x1d0] sm:$0xff]
    %v81 = vld [vmem:[%s1 + $0x1d8] sm:$0xff]
    %v82 = vld [vmem:[%s1 + $0x1e0] sm:$0xff]
    %v83 = vld [vmem:[%s1 + $0x1e8] sm:$0xff]
    %v84 = vld [vmem:[%s1 + $0x1f0] sm:$0xff]
    %v85 = vld [vmem:[%s1 + $0x1f8] sm:$0xff]
    %v86 = vld [vmem:[%s1 + $0x200] sm:$0xff]
    %v87 = vld [vmem:[%s1 + $0x208] sm:$0xff]
    %v88 = vld [vmem:[%s1 + $0x210] sm:$0xff]
    %v89 = vld [vmem:[%s1 + $0x218] sm:$0xff]
    %v90 = vld [vmem:[%s1 + $0x220] sm:$0xff]
    %v91 = vld [vmem:[%s1 + $0x228] sm:$0xff]
    %v92 = vld [vmem:[%s1 + $0x230] sm:$0xff]
    %v93 = vld [vmem:[%s1 + $0x238] sm:$0xff]
    %v94 = vld [vmem:[%s1 + $0x240] sm:$0xff]
    %v95 = vld [vmem:[%s1 + $0x248] sm:$0xff]
    %v96 = vld [vmem:[%s1 + $0x250] sm:$0xff]
    %v97 = vld [vmem:[%s1 + $0x258] sm:$0xff]
    %v98 = vld [vmem:[%s1 + $0x260] sm:$0xff]
    %v99 = vld [vmem:[%s1 + $0x268] sm:$0xff]
    %v100 = vld [vmem:[%s1 + $0x270] sm:$0xff]
    %v101 = vld [vmem:[%s1 + $0x278] sm:$0xff]
    %v102 = vld [vmem:[%s1 + $0x280] sm:$0xff]
    %v103 = vld [vmem:[%s1 + $0x288] sm:$0xff]
    %v104 = vld [vmem:[%s1 + $0x290] sm:$0xff]
    %v105 = vld [vmem:[%s1 + $0x298] sm:$0xff]
    %v106 = vld [vmem:[%s1 + $0x2a0] sm:$0xff]
    %v107 = vld [vmem:[%s1 + $0x2a8] sm:$0xff]
    %v108 = vld [vmem:[%s1 + $0x2b0] sm:$0xff]
    %v109 = vld [vmem:[%s1 + $0x2b8] sm:$0xff]
    %v110 = vld [vmem:[%s1 + $0x2c0] sm:$0xff]
    %v111 = vld [vmem:[%s1 + $0x2c8] sm:$0xff]
    %v112 = vld [vmem:[%s1 + $0x2d0] sm:$0xff]
    %v113 = vld [vmem:[%s1 + $0x2d8] sm:$0xff]
    %v114 = vld [vmem:[%s1 + $0x2e0] sm:$0xff]
    %v115 = vld [vmem:[%s1 + $0x2e8] sm:$0xff]
    %v116 = vld [vmem:[%s1 + $0x2f0] sm:$0xff]
    %v117 = vld [vmem:[%s1 + $0x2f8] sm:$0xff]
    %v118 = vld [vmem:[%s1 + $0x300] sm:$0xff]
    %v119 = vld [vmem:[%s1 + $0x308] sm:$0xff]
    %v120 = vld [vmem:[%s1 + $0x310] sm:$0xff]
    %v121 = vld [vmem:[%s1 + $0x318] sm:$0xff]
    %v122 = vld [vmem:[%s1 + $0x320] sm:$0xff]
    %v123 = vld [vmem:[%s1 + $0x328] sm:$0xff]
    %v124 = vld [vmem:[%s1 + $0x330] sm:$0xff]
    %v125 = vld [vmem:[%s1 + $0x338] sm:$0xff]
    %v126 = vld [vmem:[%s1 + $0x340] sm:$0xff]
    %v127 = vld [vmem:[%s1 + $0x348] sm:$0xff]
    %v128 = vld [vmem:[%s1 + $0x350] sm:$0xff]
    %v129 = vld [vmem:[%s1 + $0x358] sm:$0xff]
    %v130 = vld [vmem:[%s1 + $0x360] sm:$0xff]
    %v131 = vld [vmem:[%s1 + $0x368] sm:$0xff]
    %v132 = vld [vmem:[%s1 + $0x370] sm:$0xff]
    %v133 = vld [vmem:[%s1 + $0x378] sm:$0xff]
    %v134 = vld [vmem:[%s1 + $0x380] sm:$0xff]
    %v135 = vld [vmem:[%s1 + $0x388] sm:$0xff]
    %v136 = vld [vmem:[%s1 + $0x390] sm:$0xff]
    %v137 = vld [vmem:[%s1 + $0x398] sm:$0xff]
    %v138 = vld [vmem:[%s1 + $0x3a0] sm:$0xff]
    %v139 = vld [vmem:[%s1 + $0x3a8] sm:$0xff]
    %v140 = vld [vmem:[%s1 + $0x3b0] sm:$0xff]
    %v141 = vld [vmem:[%s1 + $0x3b8] sm:$0xff]
    %v142 = vld [vmem:[%s1 + $0x3c0] sm:$0xff]
    %v143 = vld [vmem:[%s1 + $0x3c8] sm:$0xff]
    %v144 = vld [vmem:[%s1 + $0x3d0] sm:$0xff]
    %v145 = vld [vmem:[%s1 + $0x3d8] sm:$0xff]
    %v146 = vld [vmem:[%s1 + $0x3e0] sm:$0xff]
    %v147 = vld [vmem:[%s1 + $0x3e8] sm:$0xff]
    %v148 = vld [vmem:[%s1 + $0x3f0] sm:$0xff]
    %v149 = vld [vmem:[%s1 + $0x3f8] sm:$0xff]
    %v150 = vld [vmem:[%s1 + $0x400] sm:$0xff]
    %v151 = vld [vmem:[%s1 + $0x408] sm:$0xff]
    %v152 = vld [vmem:[%s1 + $0x410] sm:$0xff]
    %v153 = vld [vmem:[%s1 + $0x418] sm:$0xff]
    %v154 = vld [vmem:[%s1 + $0x420] sm:$0xff]
    %v155 = vld [vmem:[%s1 + $0x428] sm:$0xff]
    %v156 = vld [vmem:[%s1 + $0x430] sm:$0xff]
    %v157 = vld [vmem:[%s1 + $0x438] sm:$0xff]
    %v158 = vld [vmem:[%s1 + $0x440] sm:$0xff]
    %v159 = vld [vmem:[%s1 + $0x448] sm:$0xff]
    %v160 = vld [vmem:[%s1 + $0x450] sm:$0xff]
    %v161 = vld [vmem:[%s1 + $0x458] sm:$0xff]
    %v162 = vld [vmem:[%s1 + $0x460] sm:$0xff]
    %v163 = vld [vmem:[%s1 + $0x468] sm:$0xff]
    %v164 = vld [vmem:[%s1 + $0x470] sm:$0xff]
    %v165 = vld [vmem:[%s1 + $0x478] sm:$0xff]
    %v166 = vld [vmem:[%s1 + $0x480] sm:$0xff]
    %v167 = vld [vmem:[%s1 + $0x488] sm:$0xff]
    %v168 = vld [vmem:[%s1 + $0x490] sm:$0xff]
    %v169 = vld [vmem:[%s1 + $0x498] sm:$0xff]
    %v170 = vld [vmem:[%s1 + $0x4a0] sm:$0xff]
    %v171 = vld [vmem:[%s1 + $0x4a8] sm:$0xff]
    %v172 = vld [vmem:[%s1 + $0x4b0] sm:$0xff]
    %v173 = vld [vmem:[%s1 + $0x4b8] sm:$0xff]
    %v174 = vld [vmem:[%s1 + $0x4c0] sm:$0xff]
    %v175 = vld [vmem:[%s1 + $0x4c8] sm:$0xff]
    %v176 = vld [vmem:[%s1 + $0x4d0] sm:$0xff]
    %v177 = vld [vmem:[%s1 + $0x4d8] sm:$0xff]
    %v178 = vld [vmem:[%s1 + $0x4e0] sm:$0xff]
    %v179 = vld [vmem:[%s1 + $0x4e8] sm:$0xff]
    %v180 = vld [vmem:[%s1 + $0x4f0] sm:$0xff]
    %v181 = vld [vmem:[%s1 + $0x4f8] sm:$0xff]
    %v182 = vld [vmem:[%s1 + $0x500] sm:$0xff]
    %v183 = vld [vmem:[%s1 + $0x508] sm:$0xff]
    %v184 = vld [vmem:[%s1 + $0x510] sm:$0xff]
    %v185 = vld [vmem:[%s1 + $0x518] sm:$0xff]
    %v186 = vld [vmem:[%s1 + $0x520] sm:$0xff]
    %v187 = vld [vmem:[%s1 + $0x528] sm:$0xff]
    %v188 = vld [vmem:[%s1 + $0x530] sm:$0xff]
    %v189 = vld [vmem:[%s1 + $0x538] sm:$0xff]
    %v190 = vld [vmem:[%s1 + $0x540] sm:$0xff]
    %v191 = vld [vmem:[%s1 + $0x548] sm:$0xff]
    %v192 = vld [vmem:[%s1 + $0x550] sm:$0xff]
    %v193 = vld [vmem:[%s1 + $0x558] sm:$0xff]
    %v194 = vld [vmem:[%s1 + $0x560] sm:$0xff]
    %v195 = vld [vmem:[%s1 + $0x568] sm:$0xff]
    %v196 = vld [vmem:[%s1 + $0x570] sm:$0xff]
    %v197 = vld [vmem:[%s1 + $0x578] sm:$0xff]
    %v198 = vld [vmem:[%s1 + $0x580] sm:$0xff]
    %v199 = vld [vmem:[%s1 + $0x588] sm:$0xff]
    %v200 = vld [vmem:[%s1 + $0x590] sm:$0xff]
    %v201 = vld [vmem:[%s1 + $0x598] sm:$0xff]
    %v202 = vld [vmem:[%s1 + $0x5a0] sm:$0xff]
    %v203 = vld [vmem:[%s1 + $0x5a8] sm:$0xff]
    %v204 = vld [vmem:[%s1 + $0x5b0] sm:$0xff]
    %v205 = vld [vmem:[%s1 + $0x5b8] sm:$0xff]
    %v206 = vld [vmem:[%s1 + $0x5c0] sm:$0xff]
    %v207 = vld [vmem:[%s1 + $0x5c8] sm:$0xff]
    %v208 = vld [vmem:[%s1 + $0x5d0] sm:$0xff]
    %v209 = vld [vmem:[%s1 + $0x5d8] sm:$0xff]
    %v210 = vld [vmem:[%s1 + $0x5e0] sm:$0xff]
    %v211 = vld [vmem:[%s1 + $0x5e8] sm:$0xff]
    %v212 = vld [vmem:[%s1 + $0x5f0] sm:$0xff]
    %v213 = vld [vmem:[%s1 + $0x5f8] sm:$0xff]
    %v214 = vld [vmem:[%s1 + $0x600] sm:$0xff]
    %v215 = vld [vmem:[%s1 + $0x608] sm:$0xff]
    %v216 = vld [vmem:[%s1 + $0x610] sm:$0xff]
    %v217 = vld [vmem:[%s1 + $0x618] sm:$0xff]
    %v218 = vld [vmem:[%s1 + $0x620] sm:$0xff]
    %v219 = vld [vmem:[%s1 + $0x628] sm:$0xff]
    %v220 = vld [vmem:[%s1 + $0x630] sm:$0xff]
    %v221 = vld [vmem:[%s1 + $0x638] sm:$0xff]
    %v222 = vld [vmem:[%s1 + $0x640] sm:$0xff]
    %v223 = vld [vmem:[%s1 + $0x648] sm:$0xff]
    %v224 = vld [vmem:[%s1 + $0x650] sm:$0xff]
    %v225 = vld [vmem:[%s1 + $0x658] sm:$0xff]
    %v226 = vld [vmem:[%s1 + $0x660] sm:$0xff]
    %v227 = vld [vmem:[%s1 + $0x668] sm:$0xff]
    %v228 = vld [vmem:[%s1 + $0x670] sm:$0xff]
    %v229 = vld [vmem:[%s1 + $0x678] sm:$0xff]
    %v230 = vld [vmem:[%s1 + $0x680] sm:$0xff]
    %v231 = vld [vmem:[%s1 + $0x688] sm:$0xff]
    %v232 = vld [vmem:[%s1 + $0x690] sm:$0xff]
    %v233 = vld [vmem:[%s1 + $0x698] sm:$0xff]
    %v234 = vld [vmem:[%s1 + $0x6a0] sm:$0xff]
    %v235 = vld [vmem:[%s1 + $0x6a8] sm:$0xff]
    %v236 = vld [vmem:[%s1 + $0x6b0] sm:$0xff]
    %v237 = vld [vmem:[%s1 + $0x6b8] sm:$0xff]
    %v238 = vld [vmem:[%s1 + $0x6c0] sm:$0xff]
    %v239 = vld [vmem:[%s1 + $0x6c8] sm:$0xff]
    %v240 = vld [vmem:[%s1 + $0x6d0] sm:$0xff]
    %v241 = vld [vmem:[%s1 + $0x6d8] sm:$0xff]
    %v242 = vld [vmem:[%s1 + $0x6e0] sm:$0xff]
    %v243 = vld [vmem:[%s1 + $0x6e8] sm:$0xff]
    %v244 = vld [vmem:[%s1 + $0x6f0] sm:$0xff]
    %v245 = vld [vmem:[%s1 + $0x6f8] sm:$0xff]
    %v246 = vld [vmem:[%s1 + $0x700] sm:$0xff]
    %v247 = vld [vmem:[%s1 + $0x708] sm:$0xff]
    %v248 = vld [vmem:[%s1 + $0x710] sm:$0xff]
    %v249 = vld [vmem:[%s1 + $0x718] sm:$0xff]
    %v250 = vld [vmem:[%s1 + $0x720] sm:$0xff]
    %v251 = vld [vmem:[%s1 + $0x728] sm:$0xff]
    %v252 = vld [vmem:[%s1 + $0x730] sm:$0xff]
    %v253 = vld [vmem:[%s1 + $0x738] sm:$0xff]
    %v254 = vld [vmem:[%s1 + $0x740] sm:$0xff]
    %v255 = vld [vmem:[%s1 + $0x748] sm:$0xff]
    %v256 = vld [vmem:[%s1 + $0x750] sm:$0xff]
    %v257 = vld [vmem:[%s1 + $0x758] sm:$0xff]
    %v258 = vld [vmem:[%s1 + $0x760] sm:$0xff]
    %v259 = vld [vmem:[%s1 + $0x768] sm:$0xff]
    %v260 = vld [vmem:[%s1 + $0x770] sm:$0xff]
    %v261 = vld [vmem:[%s1 + $0x778] sm:$0xff]
    %v262 = vld [vmem:[%s1 + $0x780] sm:$0xff]
    %v263 = vld [vmem:[%s1 + $0x788] sm:$0xff]
    %v264 = vld [vmem:[%s1 + $0x790] sm:$0xff]
    %v265 = vld [vmem:[%s1 + $0x798] sm:$0xff]
    %v266 = vld [vmem:[%s1 + $0x7a0] sm:$0xff]
    %v267 = vld [vmem:[%s1 + $0x7a8] sm:$0xff]
    %v268 = vld [vmem:[%s1 + $0x7b0] sm:$0xff]
    %v269 = vld [vmem:[%s1 + $0x7b8] sm:$0xff]
    %v270 = vld [vmem:[%s1 + $0x7c0] sm:$0xff]
    %v271 = vld [vmem:[%s1 + $0x7c8] sm:$0xff]
    %v272 = vld [vmem:[%s1 + $0x7d0] sm:$0xff]
    %v273 = vld [vmem:[%s1 + $0x7d8] sm:$0xff]
    %v274 = vld [vmem:[%s1 + $0x7e0] sm:$0xff]
    %v275 = vld [vmem:[%s1 + $0x7e8] sm:$0xff]
    %v276 = vld [vmem:[%s1 + $0x7f0] sm:$0xff]
    %v277 = vld [vmem:[%s1 + $0x7f8] sm:$0xff]
    %v278 = vld [vmem:[%s2] sm:$0xf]
    %v280 = vperm.slane %v278, 0
    %v281 = vperm.slane %v278, 1
    %v282 = vperm.slane %v278, 2
    %v283 = vperm.slane %v278, 3
    %289 = vst [vmem:[#allocation1] ss:$9 sm:$0xff] %v21
    %v290 = vld [vmem:[#allocation1] sm:$0xff]
    %v291 = vld [vmem:[#allocation1 + $0x9] sm:$0xff]
    %v292 = vld [vmem:[#allocation1 + $0x12] sm:$0xff]
    %v293 = vld [vmem:[#allocation1 + $0x1b] sm:$0xff]
    %v294 = vld [vmem:[#allocation1 + $0x24] sm:$0xff]
    %v295 = vld [vmem:[#allocation1 + $0x2d] sm:$0xff]
    %v296 = vld [vmem:[#allocation1 + $0x36] sm:$0xff]
    %v297 = vld [vmem:[#allocation1 + $0x3f] sm:$0xff]
    %v562 = vunpack.c.l.b16 %v22
    %v563 = vunpack.c.h.b16 %v22
    %v564 = vunpack.c.l.b16 %v23
    %v565 = vunpack.c.h.b16 %v23
    %v566 = vunpack.c.l.b16 %v24
    %v567 = vunpack.c.h.b16 %v24
    %v568 = vunpack.c.l.b16 %v25
    %v569 = vunpack.c.h.b16 %v25
    %v570 = vunpack.c.l.b16 %v26
    %v571 = vunpack.c.h.b16 %v26
    %v572 = vunpack.c.l.b16 %v27
    %v573 = vunpack.c.h.b16 %v27
    %v574 = vunpack.c.l.b16 %v28
    %v575 = vunpack.c.h.b16 %v28
    %v576 = vunpack.c.l.b16 %v29
    %v577 = vunpack.c.h.b16 %v29
    %v578 = vunpack.c.l.b16 %v30
    %v579 = vunpack.c.h.b16 %v30
    %v580 = vunpack.c.l.b16 %v31
    %v581 = vunpack.c.h.b16 %v31
    %v582 = vunpack.c.l.b16 %v32
    %v583 = vunpack.c.h.b16 %v32
    %v584 = vunpack.c.l.b16 %v33
    %v585 = vunpack.c.h.b16 %v33
    %v586 = vunpack.c.l.b16 %v34
    %v587 = vunpack.c.h.b16 %v34
    %v588 = vunpack.c.l.b16 %v35
    %v589 = vunpack.c.h.b16 %v35
    %v590 = vunpack.c.l.b16 %v36
    %v591 = vunpack.c.h.b16 %v36
    %v592 = vunpack.c.l.b16 %v37
    %v593 = vunpack.c.h.b16 %v37
    %v594 = vunpack.c.l.b16 %v38
    %v595 = vunpack.c.h.b16 %v38
    %v596 = vunpack.c.l.b16 %v39
    %v597 = vunpack.c.h.b16 %v39
    %v598 = vunpack.c.l.b16 %v40
    %v599 = vunpack.c.h.b16 %v40
    %v600 = vunpack.c.l.b16 %v41
    %v601 = vunpack.c.h.b16 %v41
    %v602 = vunpack.c.l.b16 %v42
    %v603 = vunpack.c.h.b16 %v42
    %v604 = vunpack.c.l.b16 %v43
    %v605 = vunpack.c.h.b16 %v43
    %v606 = vunpack.c.l.b16 %v44
    %v607 = vunpack.c.h.b16 %v44
    %v608 = vunpack.c.l.b16 %v45
    %v609 = vunpack.c.h.b16 %v45
    %v610 = vunpack.c.l.b16 %v46
    %v611 = vunpack.c.h.b16 %v46
    %v612 = vunpack.c.l.b16 %v47
    %v613 = vunpack.c.h.b16 %v47
    %v614 = vunpack.c.l.b16 %v48
    %v615 = vunpack.c.h.b16 %v48
    %v616 = vunpack.c.l.b16 %v49
    %v617 = vunpack.c.h.b16 %v49
    %v618 = vunpack.c.l.b16 %v50
    %v619 = vunpack.c.h.b16 %v50
    %v620 = vunpack.c.l.b16 %v51
    %v621 = vunpack.c.h.b16 %v51
    %v622 = vunpack.c.l.b16 %v52
    %v623 = vunpack.c.h.b16 %v52
    %v624 = vunpack.c.l.b16 %v53
    %v625 = vunpack.c.h.b16 %v53
    %v626 = vunpack.c.l.b16 %v54
    %v627 = vunpack.c.h.b16 %v54
    %v628 = vunpack.c.l.b16 %v55
    %v629 = vunpack.c.h.b16 %v55
    %v630 = vunpack.c.l.b16 %v56
    %v631 = vunpack.c.h.b16 %v56
    %v632 = vunpack.c.l.b16 %v57
    %v633 = vunpack.c.h.b16 %v57
    %v634 = vunpack.c.l.b16 %v58
    %v635 = vunpack.c.h.b16 %v58
    %v636 = vunpack.c.l.b16 %v59
    %v637 = vunpack.c.h.b16 %v59
    %v638 = vunpack.c.l.b16 %v60
    %v639 = vunpack.c.h.b16 %v60
    %v640 = vunpack.c.l.b16 %v61
    %v641 = vunpack.c.h.b16 %v61
    %v642 = vunpack.c.l.b16 %v62
    %v643 = vunpack.c.h.b16 %v62
    %v644 = vunpack.c.l.b16 %v63
    %v645 = vunpack.c.h.b16 %v63
    %v646 = vunpack.c.l.b16 %v64
    %v647 = vunpack.c.h.b16 %v64
    %v648 = vunpack.c.l.b16 %v65
    %v649 = vunpack.c.h.b16 %v65
    %v650 = vunpack.c.l.b16 %v66
    %v651 = vunpack.c.h.b16 %v66
    %v652 = vunpack.c.l.b16 %v67
    %v653 = vunpack.c.h.b16 %v67
    %v654 = vunpack.c.l.b16 %v68
    %v655 = vunpack.c.h.b16 %v68
    %v656 = vunpack.c.l.b16 %v69
    %v657 = vunpack.c.h.b16 %v69
    %v658 = vunpack.c.l.b16 %v70
    %v659 = vunpack.c.h.b16 %v70
    %v660 = vunpack.c.l.b16 %v71
    %v661 = vunpack.c.h.b16 %v71
    %v662 = vunpack.c.l.b16 %v72
    %v663 = vunpack.c.h.b16 %v72
    %v664 = vunpack.c.l.b16 %v73
    %v665 = vunpack.c.h.b16 %v73
    %v666 = vunpack.c.l.b16 %v74
    %v667 = vunpack.c.h.b16 %v74
    %v668 = vunpack.c.l.b16 %v75
    %v669 = vunpack.c.h.b16 %v75
    %v670 = vunpack.c.l.b16 %v76
    %v671 = vunpack.c.h.b16 %v76
    %v672 = vunpack.c.l.b16 %v77
    %v673 = vunpack.c.h.b16 %v77
    %v674 = vunpack.c.l.b16 %v78
    %v675 = vunpack.c.h.b16 %v78
    %v676 = vunpack.c.l.b16 %v79
    %v677 = vunpack.c.h.b16 %v79
    %v678 = vunpack.c.l.b16 %v80
    %v679 = vunpack.c.h.b16 %v80
    %v680 = vunpack.c.l.b16 %v81
    %v681 = vunpack.c.h.b16 %v81
    %v682 = vunpack.c.l.b16 %v82
    %v683 = vunpack.c.h.b16 %v82
    %v684 = vunpack.c.l.b16 %v83
    %v685 = vunpack.c.h.b16 %v83
    %v686 = vunpack.c.l.b16 %v84
    %v687 = vunpack.c.h.b16 %v84
    %v688 = vunpack.c.l.b16 %v85
    %v689 = vunpack.c.h.b16 %v85
    %v690 = vunpack.c.l.b16 %v86
    %v691 = vunpack.c.h.b16 %v86
    %v692 = vunpack.c.l.b16 %v87
    %v693 = vunpack.c.h.b16 %v87
    %v694 = vunpack.c.l.b16 %v88
    %v695 = vunpack.c.h.b16 %v88
    %v696 = vunpack.c.l.b16 %v89
    %v697 = vunpack.c.h.b16 %v89
    %v698 = vunpack.c.l.b16 %v90
    %v699 = vunpack.c.h.b16 %v90
    %v700 = vunpack.c.l.b16 %v91
    %v701 = vunpack.c.h.b16 %v91
    %v702 = vunpack.c.l.b16 %v92
    %v703 = vunpack.c.h.b16 %v92
    %v704 = vunpack.c.l.b16 %v93
    %v705 = vunpack.c.h.b16 %v93
    %v706 = vunpack.c.l.b16 %v94
    %v707 = vunpack.c.h.b16 %v94
    %v708 = vunpack.c.l.b16 %v95
    %v709 = vunpack.c.h.b16 %v95
    %v710 = vunpack.c.l.b16 %v96
    %v711 = vunpack.c.h.b16 %v96
    %v712 = vunpack.c.l.b16 %v97
    %v713 = vunpack.c.h.b16 %v97
    %v714 = vunpack.c.l.b16 %v98
    %v715 = vunpack.c.h.b16 %v98
    %v716 = vunpack.c.l.b16 %v99
    %v717 = vunpack.c.h.b16 %v99
    %v718 = vunpack.c.l.b16 %v100
    %v719 = vunpack.c.h.b16 %v100
    %v720 = vunpack.c.l.b16 %v101
    %v721 = vunpack.c.h.b16 %v101
    %v722 = vunpack.c.l.b16 %v102
    %v723 = vunpack.c.h.b16 %v102
    %v724 = vunpack.c.l.b16 %v103
    %v725 = vunpack.c.h.b16 %v103
    %v726 = vunpack.c.l.b16 %v104
    %v727 = vunpack.c.h.b16 %v104
    %v728 = vunpack.c.l.b16 %v105
    %v729 = vunpack.c.h.b16 %v105
    %v730 = vunpack.c.l.b16 %v106
    %v731 = vunpack.c.h.b16 %v106
    %v732 = vunpack.c.l.b16 %v107
    %v733 = vunpack.c.h.b16 %v107
    %v734 = vunpack.c.l.b16 %v108
    %v735 = vunpack.c.h.b16 %v108
    %v736 = vunpack.c.l.b16 %v109
    %v737 = vunpack.c.h.b16 %v109
    %v738 = vunpack.c.l.b16 %v110
    %v739 = vunpack.c.h.b16 %v110
    %v740 = vunpack.c.l.b16 %v111
    %v741 = vunpack.c.h.b16 %v111
    %v742 = vunpack.c.l.b16 %v112
    %v743 = vunpack.c.h.b16 %v112
    %v744 = vunpack.c.l.b16 %v113
    %v745 = vunpack.c.h.b16 %v113
    %v746 = vunpack.c.l.b16 %v114
    %v747 = vunpack.c.h.b16 %v114
    %v748 = vunpack.c.l.b16 %v115
    %v749 = vunpack.c.h.b16 %v115
    %v750 = vunpack.c.l.b16 %v116
    %v751 = vunpack.c.h.b16 %v116
    %v752 = vunpack.c.l.b16 %v117
    %v753 = vunpack.c.h.b16 %v117
    %v754 = vunpack.c.l.b16 %v118
    %v755 = vunpack.c.h.b16 %v118
    %v756 = vunpack.c.l.b16 %v119
    %v757 = vunpack.c.h.b16 %v119
    %v758 = vunpack.c.l.b16 %v120
    %v759 = vunpack.c.h.b16 %v120
    %v760 = vunpack.c.l.b16 %v121
    %v761 = vunpack.c.h.b16 %v121
    %v762 = vunpack.c.l.b16 %v122
    %v763 = vunpack.c.h.b16 %v122
    %v764 = vunpack.c.l.b16 %v123
    %v765 = vunpack.c.h.b16 %v123
    %v766 = vunpack.c.l.b16 %v124
    %v767 = vunpack.c.h.b16 %v124
    %v768 = vunpack.c.l.b16 %v125
    %v769 = vunpack.c.h.b16 %v125
    %v770 = vunpack.c.l.b16 %v126
    %v771 = vunpack.c.h.b16 %v126
    %v772 = vunpack.c.l.b16 %v127
    %v773 = vunpack.c.h.b16 %v127
    %v774 = vunpack.c.l.b16 %v128
    %v775 = vunpack.c.h.b16 %v128
    %v776 = vunpack.c.l.b16 %v129
    %v777 = vunpack.c.h.b16 %v129
    %v778 = vunpack.c.l.b16 %v130
    %v779 = vunpack.c.h.b16 %v130
    %v780 = vunpack.c.l.b16 %v131
    %v781 = vunpack.c.h.b16 %v131
    %v782 = vunpack.c.l.b16 %v132
    %v783 = vunpack.c.h.b16 %v132
    %v784 = vunpack.c.l.b16 %v133
    %v785 = vunpack.c.h.b16 %v133
    %v786 = vunpack.c.l.b16 %v134
    %v787 = vunpack.c.h.b16 %v134
    %v788 = vunpack.c.l.b16 %v135
    %v789 = vunpack.c.h.b16 %v135
    %v790 = vunpack.c.l.b16 %v136
    %v791 = vunpack.c.h.b16 %v136
    %v792 = vunpack.c.l.b16 %v137
    %v793 = vunpack.c.h.b16 %v137
    %v794 = vunpack.c.l.b16 %v138
    %v795 = vunpack.c.h.b16 %v138
    %v796 = vunpack.c.l.b16 %v139
    %v797 = vunpack.c.h.b16 %v139
    %v798 = vunpack.c.l.b16 %v140
    %v799 = vunpack.c.h.b16 %v140
    %v800 = vunpack.c.l.b16 %v141
    %v801 = vunpack.c.h.b16 %v141
    %v802 = vunpack.c.l.b16 %v142
    %v803 = vunpack.c.h.b16 %v142
    %v804 = vunpack.c.l.b16 %v143
    %v805 = vunpack.c.h.b16 %v143
    %v806 = vunpack.c.l.b16 %v144
    %v807 = vunpack.c.h.b16 %v144
    %v808 = vunpack.c.l.b16 %v145
    %v809 = vunpack.c.h.b16 %v145
    %v810 = vunpack.c.l.b16 %v146
    %v811 = vunpack.c.h.b16 %v146
    %v812 = vunpack.c.l.b16 %v147
    %v813 = vunpack.c.h.b16 %v147
    %v814 = vunpack.c.l.b16 %v148
    %v815 = vunpack.c.h.b16 %v148
    %v816 = vunpack.c.l.b16 %v149
    %v817 = vunpack.c.h.b16 %v149
    %v818 = vunpack.c.l.b16 %v150
    %v819 = vunpack.c.h.b16 %v150
    %v820 = vunpack.c.l.b16 %v151
    %v821 = vunpack.c.h.b16 %v151
    %v822 = vunpack.c.l.b16 %v152
    %v823 = vunpack.c.h.b16 %v152
    %v824 = vunpack.c.l.b16 %v153
    %v825 = vunpack.c.h.b16 %v153
    %v826 = vunpack.c.l.b16 %v154
    %v827 = vunpack.c.h.b16 %v154
    %v828 = vunpack.c.l.b16 %v155
    %v829 = vunpack.c.h.b16 %v155
    %v830 = vunpack.c.l.b16 %v156
    %v831 = vunpack.c.h.b16 %v156
    %v832 = vunpack.c.l.b16 %v157
    %v833 = vunpack.c.h.b16 %v157
    %v834 = vunpack.c.l.b16 %v158
    %v835 = vunpack.c.h.b16 %v158
    %v836 = vunpack.c.l.b16 %v159
    %v837 = vunpack.c.h.b16 %v159
    %v838 = vunpack.c.l.b16 %v160
    %v839 = vunpack.c.h.b16 %v160
    %v840 = vunpack.c.l.b16 %v161
    %v841 = vunpack.c.h.b16 %v161
    %v842 = vunpack.c.l.b16 %v162
    %v843 = vunpack.c.h.b16 %v162
    %v844 = vunpack.c.l.b16 %v163
    %v845 = vunpack.c.h.b16 %v163
    %v846 = vunpack.c.l.b16 %v164
    %v847 = vunpack.c.h.b16 %v164
    %v848 = vunpack.c.l.b16 %v165
    %v849 = vunpack.c.h.b16 %v165
    %v850 = vunpack.c.l.b16 %v166
    %v851 = vunpack.c.h.b16 %v166
    %v852 = vunpack.c.l.b16 %v167
    %v853 = vunpack.c.h.b16 %v167
    %v854 = vunpack.c.l.b16 %v168
    %v855 = vunpack.c.h.b16 %v168
    %v856 = vunpack.c.l.b16 %v169
    %v857 = vunpack.c.h.b16 %v169
    %v858 = vunpack.c.l.b16 %v170
    %v859 = vunpack.c.h.b16 %v170
    %v860 = vunpack.c.l.b16 %v171
    %v861 = vunpack.c.h.b16 %v171
    %v862 = vunpack.c.l.b16 %v172
    %v863 = vunpack.c.h.b16 %v172
    %v864 = vunpack.c.l.b16 %v173
    %v865 = vunpack.c.h.b16 %v173
    %v866 = vunpack.c.l.b16 %v174
    %v867 = vunpack.c.h.b16 %v174
    %v868 = vunpack.c.l.b16 %v175
    %v869 = vunpack.c.h.b16 %v175
    %v870 = vunpack.c.l.b16 %v176
    %v871 = vunpack.c.h.b16 %v176
    %v872 = vunpack.c.l.b16 %v177
    %v873 = vunpack.c.h.b16 %v177
    %v874 = vunpack.c.l.b16 %v178
    %v875 = vunpack.c.h.b16 %v178
    %v876 = vunpack.c.l.b16 %v179
    %v877 = vunpack.c.h.b16 %v179
    %v878 = vunpack.c.l.b16 %v180
    %v879 = vunpack.c.h.b16 %v180
    %v880 = vunpack.c.l.b16 %v181
    %v881 = vunpack.c.h.b16 %v181
    %v882 = vunpack.c.l.b16 %v182
    %v883 = vunpack.c.h.b16 %v182
    %v884 = vunpack.c.l.b16 %v183
    %v885 = vunpack.c.h.b16 %v183
    %v886 = vunpack.c.l.b16 %v184
    %v887 = vunpack.c.h.b16 %v184
    %v888 = vunpack.c.l.b16 %v185
    %v889 = vunpack.c.h.b16 %v185
    %v890 = vunpack.c.l.b16 %v186
    %v891 = vunpack.c.h.b16 %v186
    %v892 = vunpack.c.l.b16 %v187
    %v893 = vunpack.c.h.b16 %v187
    %v894 = vunpack.c.l.b16 %v188
    %v895 = vunpack.c.h.b16 %v188
    %v896 = vunpack.c.l.b16 %v189
    %v897 = vunpack.c.h.b16 %v189
    %v898 = vunpack.c.l.b16 %v190
    %v899 = vunpack.c.h.b16 %v190
    %v900 = vunpack.c.l.b16 %v191
    %v901 = vunpack.c.h.b16 %v191
    %v902 = vunpack.c.l.b16 %v192
    %v903 = vunpack.c.h.b16 %v192
    %v904 = vunpack.c.l.b16 %v193
    %v905 = vunpack.c.h.b16 %v193
    %v906 = vunpack.c.l.b16 %v194
    %v907 = vunpack.c.h.b16 %v194
    %v908 = vunpack.c.l.b16 %v195
    %v909 = vunpack.c.h.b16 %v195
    %v910 = vunpack.c.l.b16 %v196
    %v911 = vunpack.c.h.b16 %v196
    %v912 = vunpack.c.l.b16 %v197
    %v913 = vunpack.c.h.b16 %v197
    %v914 = vunpack.c.l.b16 %v198
    %v915 = vunpack.c.h.b16 %v198
    %v916 = vunpack.c.l.b16 %v199
    %v917 = vunpack.c.h.b16 %v199
    %v918 = vunpack.c.l.b16 %v200
    %v919 = vunpack.c.h.b16 %v200
    %v920 = vunpack.c.l.b16 %v201
    %v921 = vunpack.c.h.b16 %v201
    %v922 = vunpack.c.l.b16 %v202
    %v923 = vunpack.c.h.b16 %v202
    %v924 = vunpack.c.l.b16 %v203
    %v925 = vunpack.c.h.b16 %v203
    %v926 = vunpack.c.l.b16 %v204
    %v927 = vunpack.c.h.b16 %v204
    %v928 = vunpack.c.l.b16 %v205
    %v929 = vunpack.c.h.b16 %v205
    %v930 = vunpack.c.l.b16 %v206
    %v931 = vunpack.c.h.b16 %v206
    %v932 = vunpack.c.l.b16 %v207
    %v933 = vunpack.c.h.b16 %v207
    %v934 = vunpack.c.l.b16 %v208
    %v935 = vunpack.c.h.b16 %v208
    %v936 = vunpack.c.l.b16 %v209
    %v937 = vunpack.c.h.b16 %v209
    %v938 = vunpack.c.l.b16 %v210
    %v939 = vunpack.c.h.b16 %v210
    %v940 = vunpack.c.l.b16 %v211
    %v941 = vunpack.c.h.b16 %v211
    %v942 = vunpack.c.l.b16 %v212
    %v943 = vunpack.c.h.b16 %v212
    %v944 = vunpack.c.l.b16 %v213
    %v945 = vunpack.c.h.b16 %v213
    %v946 = vunpack.c.l.b16 %v214
    %v947 = vunpack.c.h.b16 %v214
    %v948 = vunpack.c.l.b16 %v215
    %v949 = vunpack.c.h.b16 %v215
    %v950 = vunpack.c.l.b16 %v216
    %v951 = vunpack.c.h.b16 %v216
    %v952 = vunpack.c.l.b16 %v217
    %v953 = vunpack.c.h.b16 %v217
    %v954 = vunpack.c.l.b16 %v218
    %v955 = vunpack.c.h.b16 %v218
    %v956 = vunpack.c.l.b16 %v219
    %v957 = vunpack.c.h.b16 %v219
    %v958 = vunpack.c.l.b16 %v220
    %v959 = vunpack.c.h.b16 %v220
    %v960 = vunpack.c.l.b16 %v221
    %v961 = vunpack.c.h.b16 %v221
    %v962 = vunpack.c.l.b16 %v222
    %v963 = vunpack.c.h.b16 %v222
    %v964 = vunpack.c.l.b16 %v223
    %v965 = vunpack.c.h.b16 %v223
    %v966 = vunpack.c.l.b16 %v224
    %v967 = vunpack.c.h.b16 %v224
    %v968 = vunpack.c.l.b16 %v225
    %v969 = vunpack.c.h.b16 %v225
    %v970 = vunpack.c.l.b16 %v226
    %v971 = vunpack.c.h.b16 %v226
    %v972 = vunpack.c.l.b16 %v227
    %v973 = vunpack.c.h.b16 %v227
    %v974 = vunpack.c.l.b16 %v228
    %v975 = vunpack.c.h.b16 %v228
    %v976 = vunpack.c.l.b16 %v229
    %v977 = vunpack.c.h.b16 %v229
    %v978 = vunpack.c.l.b16 %v230
    %v979 = vunpack.c.h.b16 %v230
    %v980 = vunpack.c.l.b16 %v231
    %v981 = vunpack.c.h.b16 %v231
    %v982 = vunpack.c.l.b16 %v232
    %v983 = vunpack.c.h.b16 %v232
    %v984 = vunpack.c.l.b16 %v233
    %v985 = vunpack.c.h.b16 %v233
    %v986 = vunpack.c.l.b16 %v234
    %v987 = vunpack.c.h.b16 %v234
    %v988 = vunpack.c.l.b16 %v235
    %v989 = vunpack.c.h.b16 %v235
    %v990 = vunpack.c.l.b16 %v236
    %v991 = vunpack.c.h.b16 %v236
    %v992 = vunpack.c.l.b16 %v237
    %v993 = vunpack.c.h.b16 %v237
    %v994 = vunpack.c.l.b16 %v238
    %v995 = vunpack.c.h.b16 %v238
    %v996 = vunpack.c.l.b16 %v239
    %v997 = vunpack.c.h.b16 %v239
    %v998 = vunpack.c.l.b16 %v240
    %v999 = vunpack.c.h.b16 %v240
    %v1000 = vunpack.c.l.b16 %v241
    %v1001 = vunpack.c.h.b16 %v241
    %v1002 = vunpack.c.l.b16 %v242
    %v1003 = vunpack.c.h.b16 %v242
    %v1004 = vunpack.c.l.b16 %v243
    %v1005 = vunpack.c.h.b16 %v243
    %v1006 = vunpack.c.l.b16 %v244
    %v1007 = vunpack.c.h.b16 %v244
    %v1008 = vunpack.c.l.b16 %v245
    %v1009 = vunpack.c.h.b16 %v245
    %v1010 = vunpack.c.l.b16 %v246
    %v1011 = vunpack.c.h.b16 %v246
    %v1012 = vunpack.c.l.b16 %v247
    %v1013 = vunpack.c.h.b16 %v247
    %v1014 = vunpack.c.l.b16 %v248
    %v1015 = vunpack.c.h.b16 %v248
    %v1016 = vunpack.c.l.b16 %v249
    %v1017 = vunpack.c.h.b16 %v249
    %v1018 = vunpack.c.l.b16 %v250
    %v1019 = vunpack.c.h.b16 %v250
    %v1020 = vunpack.c.l.b16 %v251
    %v1021 = vunpack.c.h.b16 %v251
    %v1022 = vunpack.c.l.b16 %v252
    %v1023 = vunpack.c.h.b16 %v252
    %v1024 = vunpack.c.l.b16 %v253
    %v1025 = vunpack.c.h.b16 %v253
    %v1026 = vunpack.c.l.b16 %v254
    %v1027 = vunpack.c.h.b16 %v254
    %v1028 = vunpack.c.l.b16 %v255
    %v1029 = vunpack.c.h.b16 %v255
    %v1030 = vunpack.c.l.b16 %v256
    %v1031 = vunpack.c.h.b16 %v256
    %v1032 = vunpack.c.l.b16 %v257
    %v1033 = vunpack.c.h.b16 %v257
    %v1034 = vunpack.c.l.b16 %v258
    %v1035 = vunpack.c.h.b16 %v258
    %v1036 = vunpack.c.l.b16 %v259
    %v1037 = vunpack.c.h.b16 %v259
    %v1038 = vunpack.c.l.b16 %v260
    %v1039 = vunpack.c.h.b16 %v260
    %v1040 = vunpack.c.l.b16 %v261
    %v1041 = vunpack.c.h.b16 %v261
    %v1042 = vunpack.c.l.b16 %v262
    %v1043 = vunpack.c.h.b16 %v262
    %v1044 = vunpack.c.l.b16 %v263
    %v1045 = vunpack.c.h.b16 %v263
    %v1046 = vunpack.c.l.b16 %v264
    %v1047 = vunpack.c.h.b16 %v264
    %v1048 = vunpack.c.l.b16 %v265
    %v1049 = vunpack.c.h.b16 %v265
    %v1050 = vunpack.c.l.b16 %v266
    %v1051 = vunpack.c.h.b16 %v266
    %v1052 = vunpack.c.l.b16 %v267
    %v1053 = vunpack.c.h.b16 %v267
    %v1054 = vunpack.c.l.b16 %v268
    %v1055 = vunpack.c.h.b16 %v268
    %v1056 = vunpack.c.l.b16 %v269
    %v1057 = vunpack.c.h.b16 %v269
    %v1058 = vunpack.c.l.b16 %v270
    %v1059 = vunpack.c.h.b16 %v270
    %v1060 = vunpack.c.l.b16 %v271
    %v1061 = vunpack.c.h.b16 %v271
    %v1062 = vunpack.c.l.b16 %v272
    %v1063 = vunpack.c.h.b16 %v272
    %v1064 = vunpack.c.l.b16 %v273
    %v1065 = vunpack.c.h.b16 %v273
    %v1066 = vunpack.c.l.b16 %v274
    %v1067 = vunpack.c.h.b16 %v274
    %v1068 = vunpack.c.l.b16 %v275
    %v1069 = vunpack.c.h.b16 %v275
    %v1070 = vunpack.c.l.b16 %v276
    %v1071 = vunpack.c.h.b16 %v276
    %v1072 = vunpack.c.l.b16 %v277
    %v1073 = vunpack.c.h.b16 %v277
    %v1074 = vpack.c.b16 %v566, %v562
    %v1075 = vpack.c.b16 %v567, %v563
    %v1076 = vpack.c.b16 %v568, %v564
    %v1077 = vpack.c.b16 %v569, %v565
    %v1078 = vpack.c.b16 %v574, %v570
    %v1079 = vpack.c.b16 %v575, %v571
    %v1080 = vpack.c.b16 %v576, %v572
    %v1081 = vpack.c.b16 %v577, %v573
    %v1082 = vpack.c.b16 %v582, %v578
    %v1083 = vpack.c.b16 %v583, %v579
    %v1084 = vpack.c.b16 %v584, %v580
    %v1085 = vpack.c.b16 %v585, %v581
    %v1086 = vpack.c.b16 %v590, %v586
    %v1087 = vpack.c.b16 %v591, %v587
    %v1088 = vpack.c.b16 %v592, %v588
    %v1089 = vpack.c.b16 %v593, %v589
    %v1090 = vpack.c.b16 %v598, %v594
    %v1091 = vpack.c.b16 %v599, %v595
    %v1092 = vpack.c.b16 %v600, %v596
    %v1093 = vpack.c.b16 %v601, %v597
    %v1094 = vpack.c.b16 %v606, %v602
    %v1095 = vpack.c.b16 %v607, %v603
    %v1096 = vpack.c.b16 %v608, %v604
    %v1097 = vpack.c.b16 %v609, %v605
    %v1098 = vpack.c.b16 %v614, %v610
    %v1099 = vpack.c.b16 %v615, %v611
    %v1100 = vpack.c.b16 %v616, %v612
    %v1101 = vpack.c.b16 %v617, %v613
    %v1102 = vpack.c.b16 %v622, %v618
    %v1103 = vpack.c.b16 %v623, %v619
    %v1104 = vpack.c.b16 %v624, %v620
    %v1105 = vpack.c.b16 %v625, %v621
    %v1106 = vpack.c.b16 %v630, %v626
    %v1107 = vpack.c.b16 %v631, %v627
    %v1108 = vpack.c.b16 %v632, %v628
    %v1109 = vpack.c.b16 %v633, %v629
    %v1110 = vpack.c.b16 %v638, %v634
    %v1111 = vpack.c.b16 %v639, %v635
    %v1112 = vpack.c.b16 %v640, %v636
    %v1113 = vpack.c.b16 %v641, %v637
    %v1114 = vpack.c.b16 %v646, %v642
    %v1115 = vpack.c.b16 %v647, %v643
    %v1116 = vpack.c.b16 %v648, %v644
    %v1117 = vpack.c.b16 %v649, %v645
    %v1118 = vpack.c.b16 %v654, %v650
    %v1119 = vpack.c.b16 %v655, %v651
    %v1120 = vpack.c.b16 %v656, %v652
    %v1121 = vpack.c.b16 %v657, %v653
    %v1122 = vpack.c.b16 %v662, %v658
    %v1123 = vpack.c.b16 %v663, %v659
    %v1124 = vpack.c.b16 %v664, %v660
    %v1125 = vpack.c.b16 %v665, %v661
    %v1126 = vpack.c.b16 %v670, %v666
    %v1127 = vpack.c.b16 %v671, %v667
    %v1128 = vpack.c.b16 %v672, %v668
    %v1129 = vpack.c.b16 %v673, %v669
    %v1130 = vpack.c.b16 %v678, %v674
    %v1131 = vpack.c.b16 %v679, %v675
    %v1132 = vpack.c.b16 %v680, %v676
    %v1133 = vpack.c.b16 %v681, %v677
    %v1134 = vpack.c.b16 %v686, %v682
    %v1135 = vpack.c.b16 %v687, %v683
    %v1136 = vpack.c.b16 %v688, %v684
    %v1137 = vpack.c.b16 %v689, %v685
    %v1138 = vpack.c.b16 %v694, %v690
    %v1139 = vpack.c.b16 %v695, %v691
    %v1140 = vpack.c.b16 %v696, %v692
    %v1141 = vpack.c.b16 %v697, %v693
    %v1142 = vpack.c.b16 %v702, %v698
    %v1143 = vpack.c.b16 %v703, %v699
    %v1144 = vpack.c.b16 %v704, %v700
    %v1145 = vpack.c.b16 %v705, %v701
    %v1146 = vpack.c.b16 %v710, %v706
    %v1147 = vpack.c.b16 %v711, %v707
    %v1148 = vpack.c.b16 %v712, %v708
    %v1149 = vpack.c.b16 %v713, %v709
    %v1150 = vpack.c.b16 %v718, %v714
    %v1151 = vpack.c.b16 %v719, %v715
    %v1152 = vpack.c.b16 %v720, %v716
    %v1153 = vpack.c.b16 %v721, %v717
    %v1154 = vpack.c.b16 %v726, %v722
    %v1155 = vpack.c.b16 %v727, %v723
    %v1156 = vpack.c.b16 %v728, %v724
    %v1157 = vpack.c.b16 %v729, %v725
    %v1158 = vpack.c.b16 %v734, %v730
    %v1159 = vpack.c.b16 %v735, %v731
    %v1160 = vpack.c.b16 %v736, %v732
    %v1161 = vpack.c.b16 %v737, %v733
    %v1162 = vpack.c.b16 %v742, %v738
    %v1163 = vpack.c.b16 %v743, %v739
    %v1164 = vpack.c.b16 %v744, %v740
    %v1165 = vpack.c.b16 %v745, %v741
    %v1166 = vpack.c.b16 %v750, %v746
    %v1167 = vpack.c.b16 %v751, %v747
    %v1168 = vpack.c.b16 %v752, %v748
    %v1169 = vpack.c.b16 %v753, %v749
    %v1170 = vpack.c.b16 %v758, %v754
    %v1171 = vpack.c.b16 %v759, %v755
    %v1172 = vpack.c.b16 %v760, %v756
    %v1173 = vpack.c.b16 %v761, %v757
    %v1174 = vpack.c.b16 %v766, %v762
    %v1175 = vpack.c.b16 %v767, %v763
    %v1176 = vpack.c.b16 %v768, %v764
    %v1177 = vpack.c.b16 %v769, %v765
    %v1178 = vpack.c.b16 %v774, %v770
    %v1179 = vpack.c.b16 %v775, %v771
    %v1180 = vpack.c.b16 %v776, %v772
    %v1181 = vpack.c.b16 %v777, %v773
    %v1182 = vpack.c.b16 %v782, %v778
    %v1183 = vpack.c.b16 %v783, %v779
    %v1184 = vpack.c.b16 %v784, %v780
    %v1185 = vpack.c.b16 %v785, %v781
    %v1186 = vpack.c.b16 %v790, %v786
    %v1187 = vpack.c.b16 %v791, %v787
    %v1188 = vpack.c.b16 %v792, %v788
    %v1189 = vpack.c.b16 %v793, %v789
    %v1190 = vpack.c.b16 %v798, %v794
    %v1191 = vpack.c.b16 %v799, %v795
    %v1192 = vpack.c.b16 %v800, %v796
    %v1193 = vpack.c.b16 %v801, %v797
    %v1194 = vpack.c.b16 %v806, %v802
    %v1195 = vpack.c.b16 %v807, %v803
    %v1196 = vpack.c.b16 %v808, %v804
    %v1197 = vpack.c.b16 %v809, %v805
    %v1198 = vpack.c.b16 %v814, %v810
    %v1199 = vpack.c.b16 %v815, %v811
    %v1200 = vpack.c.b16 %v816, %v812
    %v1201 = vpack.c.b16 %v817, %v813
    %v1202 = vpack.c.b16 %v822, %v818
    %v1203 = vpack.c.b16 %v823, %v819
    %v1204 = vpack.c.b16 %v824, %v820
    %v1205 = vpack.c.b16 %v825, %v821
    %v1206 = vpack.c.b16 %v830, %v826
    %v1207 = vpack.c.b16 %v831, %v827
    %v1208 = vpack.c.b16 %v832, %v828
    %v1209 = vpack.c.b16 %v833, %v829
    %v1210 = vpack.c.b16 %v838, %v834
    %v1211 = vpack.c.b16 %v839, %v835
    %v1212 = vpack.c.b16 %v840, %v836
    %v1213 = vpack.c.b16 %v841, %v837
    %v1214 = vpack.c.b16 %v846, %v842
    %v1215 = vpack.c.b16 %v847, %v843
    %v1216 = vpack.c.b16 %v848, %v844
    %v1217 = vpack.c.b16 %v849, %v845
    %v1218 = vpack.c.b16 %v854, %v850
    %v1219 = vpack.c.b16 %v855, %v851
    %v1220 = vpack.c.b16 %v856, %v852
    %v1221 = vpack.c.b16 %v857, %v853
    %v1222 = vpack.c.b16 %v862, %v858
    %v1223 = vpack.c.b16 %v863, %v859
    %v1224 = vpack.c.b16 %v864, %v860
    %v1225 = vpack.c.b16 %v865, %v861
    %v1226 = vpack.c.b16 %v870, %v866
    %v1227 = vpack.c.b16 %v871, %v867
    %v1228 = vpack.c.b16 %v872, %v868
    %v1229 = vpack.c.b16 %v873, %v869
    %v1230 = vpack.c.b16 %v878, %v874
    %v1231 = vpack.c.b16 %v879, %v875
    %v1232 = vpack.c.b16 %v880, %v876
    %v1233 = vpack.c.b16 %v881, %v877
    %v1234 = vpack.c.b16 %v886, %v882
    %v1235 = vpack.c.b16 %v887, %v883
    %v1236 = vpack.c.b16 %v888, %v884
    %v1237 = vpack.c.b16 %v889, %v885
    %v1238 = vpack.c.b16 %v894, %v890
    %v1239 = vpack.c.b16 %v895, %v891
    %v1240 = vpack.c.b16 %v896, %v892
    %v1241 = vpack.c.b16 %v897, %v893
    %v1242 = vpack.c.b16 %v902, %v898
    %v1243 = vpack.c.b16 %v903, %v899
    %v1244 = vpack.c.b16 %v904, %v900
    %v1245 = vpack.c.b16 %v905, %v901
    %v1246 = vpack.c.b16 %v910, %v906
    %v1247 = vpack.c.b16 %v911, %v907
    %v1248 = vpack.c.b16 %v912, %v908
    %v1249 = vpack.c.b16 %v913, %v909
    %v1250 = vpack.c.b16 %v918, %v914
    %v1251 = vpack.c.b16 %v919, %v915
    %v1252 = vpack.c.b16 %v920, %v916
    %v1253 = vpack.c.b16 %v921, %v917
    %v1254 = vpack.c.b16 %v926, %v922
    %v1255 = vpack.c.b16 %v927, %v923
    %v1256 = vpack.c.b16 %v928, %v924
    %v1257 = vpack.c.b16 %v929, %v925
    %v1258 = vpack.c.b16 %v934, %v930
    %v1259 = vpack.c.b16 %v935, %v931
    %v1260 = vpack.c.b16 %v936, %v932
    %v1261 = vpack.c.b16 %v937, %v933
    %v1262 = vpack.c.b16 %v942, %v938
    %v1263 = vpack.c.b16 %v943, %v939
    %v1264 = vpack.c.b16 %v944, %v940
    %v1265 = vpack.c.b16 %v945, %v941
    %v1266 = vpack.c.b16 %v950, %v946
    %v1267 = vpack.c.b16 %v951, %v947
    %v1268 = vpack.c.b16 %v952, %v948
    %v1269 = vpack.c.b16 %v953, %v949
    %v1270 = vpack.c.b16 %v958, %v954
    %v1271 = vpack.c.b16 %v959, %v955
    %v1272 = vpack.c.b16 %v960, %v956
    %v1273 = vpack.c.b16 %v961, %v957
    %v1274 = vpack.c.b16 %v966, %v962
    %v1275 = vpack.c.b16 %v967, %v963
    %v1276 = vpack.c.b16 %v968, %v964
    %v1277 = vpack.c.b16 %v969, %v965
    %v1278 = vpack.c.b16 %v974, %v970
    %v1279 = vpack.c.b16 %v975, %v971
    %v1280 = vpack.c.b16 %v976, %v972
    %v1281 = vpack.c.b16 %v977, %v973
    %v1282 = vpack.c.b16 %v982, %v978
    %v1283 = vpack.c.b16 %v983, %v979
    %v1284 = vpack.c.b16 %v984, %v980
    %v1285 = vpack.c.b16 %v985, %v981
    %v1286 = vpack.c.b16 %v990, %v986
    %v1287 = vpack.c.b16 %v991, %v987
    %v1288 = vpack.c.b16 %v992, %v988
    %v1289 = vpack.c.b16 %v993, %v989
    %v1290 = vpack.c.b16 %v998, %v994
    %v1291 = vpack.c.b16 %v999, %v995
    %v1292 = vpack.c.b16 %v1000, %v996
    %v1293 = vpack.c.b16 %v1001, %v997
    %v1294 = vpack.c.b16 %v1006, %v1002
    %v1295 = vpack.c.b16 %v1007, %v1003
    %v1296 = vpack.c.b16 %v1008, %v1004
    %v1297 = vpack.c.b16 %v1009, %v1005
    %v1298 = vpack.c.b16 %v1014, %v1010
    %v1299 = vpack.c.b16 %v1015, %v1011
    %v1300 = vpack.c.b16 %v1016, %v1012
    %v1301 = vpack.c.b16 %v1017, %v1013
    %v1302 = vpack.c.b16 %v1022, %v1018
    %v1303 = vpack.c.b16 %v1023, %v1019
    %v1304 = vpack.c.b16 %v1024, %v1020
    %v1305 = vpack.c.b16 %v1025, %v1021
    %v1306 = vpack.c.b16 %v1030, %v1026
    %v1307 = vpack.c.b16 %v1031, %v1027
    %v1308 = vpack.c.b16 %v1032, %v1028
    %v1309 = vpack.c.b16 %v1033, %v1029
    %v1310 = vpack.c.b16 %v1038, %v1034
    %v1311 = vpack.c.b16 %v1039, %v1035
    %v1312 = vpack.c.b16 %v1040, %v1036
    %v1313 = vpack.c.b16 %v1041, %v1037
    %v1314 = vpack.c.b16 %v1046, %v1042
    %v1315 = vpack.c.b16 %v1047, %v1043
    %v1316 = vpack.c.b16 %v1048, %v1044
    %v1317 = vpack.c.b16 %v1049, %v1045
    %v1318 = vpack.c.b16 %v1054, %v1050
    %v1319 = vpack.c.b16 %v1055, %v1051
    %v1320 = vpack.c.b16 %v1056, %v1052
    %v1321 = vpack.c.b16 %v1057, %v1053
    %v1322 = vpack.c.b16 %v1062, %v1058
    %v1323 = vpack.c.b16 %v1063, %v1059
    %v1324 = vpack.c.b16 %v1064, %v1060
    %v1325 = vpack.c.b16 %v1065, %v1061
    %v1326 = vpack.c.b16 %v1070, %v1066
    %v1327 = vpack.c.b16 %v1071, %v1067
    %v1328 = vpack.c.b16 %v1072, %v1068
    %v1329 = vpack.c.b16 %v1073, %v1069
    %1586 = vmatpush.bf16.msra.mxu0 %v1102
    %1587 = vmatpush.bf16.msra.mxu0 %v1098
    %1588 = vmatpush.bf16.msra.mxu0 %v1094
    %1589 = vmatpush.bf16.msra.mxu0 %v1090
    %1590 = vmatpush.bf16.msra.mxu0 %v1086
    %1591 = vmatpush.bf16.msra.mxu0 %v1082
    %1592 = vmatpush.bf16.msra.mxu0 %v1078
    %1593 = vmatpush.bf16.msra.mxu0 %v1074
    %1594 = vmatmul.bf16.gmra.mxu0 %v290
    %v1595 = vpop.f32.mrf.mxu0
    %v1596 = vadd.f32 %v280, %v1595
    %v1597 = vpop.f32.mrf.mxu0
    %1598 = vdwg.mxu0
    %1599 = vmatpush.bf16.msra.mxu0 %v1134
    %1600 = vmatpush.bf16.msra.mxu0 %v1130
    %1601 = vmatpush.bf16.msra.mxu0 %v1126
    %1602 = vmatpush.bf16.msra.mxu0 %v1122
    %1603 = vmatpush.bf16.msra.mxu0 %v1118
    %1604 = vmatpush.bf16.msra.mxu0 %v1114
    %1605 = vmatpush.bf16.msra.mxu0 %v1110
    %1606 = vmatpush.bf16.msra.mxu0 %v1106
    %1607 = vmatmul.bf16.gmra.mxu0 %v291
    %v1608 = vpop.f32.mrf.mxu0
    %v1609 = vadd.f32 %v1596, %v1608
    %v1610 = vpop.f32.mrf.mxu0
    %1611 = vdwg.mxu0
    %1612 = vmatpush.bf16.msra.mxu0 %v1166
    %1613 = vmatpush.bf16.msra.mxu0 %v1162
    %1614 = vmatpush.bf16.msra.mxu0 %v1158
    %1615 = vmatpush.bf16.msra.mxu0 %v1154
    %1616 = vmatpush.bf16.msra.mxu0 %v1150
    %1617 = vmatpush.bf16.msra.mxu0 %v1146
    %1618 = vmatpush.bf16.msra.mxu0 %v1142
    %1619 = vmatpush.bf16.msra.mxu0 %v1138
    %1620 = vmatmul.bf16.gmra.mxu0 %v292
    %v1621 = vpop.f32.mrf.mxu0
    %v1622 = vadd.f32 %v1609, %v1621
    %v1623 = vpop.f32.mrf.mxu0
    %1624 = vdwg.mxu0
    %1625 = vmatpush.bf16.msra.mxu0 %v1198
    %1626 = vmatpush.bf16.msra.mxu0 %v1194
    %1627 = vmatpush.bf16.msra.mxu0 %v1190
    %1628 = vmatpush.bf16.msra.mxu0 %v1186
    %1629 = vmatpush.bf16.msra.mxu0 %v1182
    %1630 = vmatpush.bf16.msra.mxu0 %v1178
    %1631 = vmatpush.bf16.msra.mxu0 %v1174
    %1632 = vmatpush.bf16.msra.mxu0 %v1170
    %1633 = vmatmul.bf16.gmra.mxu0 %v293
    %v1634 = vpop.f32.mrf.mxu0
    %v1635 = vadd.f32 %v1622, %v1634
    %v1636 = vpop.f32.mrf.mxu0
    %1637 = vdwg.mxu0
    %1638 = vmatpush.bf16.msra.mxu0 %v1230
    %1639 = vmatpush.bf16.msra.mxu0 %v1226
    %1640 = vmatpush.bf16.msra.mxu0 %v1222
    %1641 = vmatpush.bf16.msra.mxu0 %v1218
    %1642 = vmatpush.bf16.msra.mxu0 %v1214
    %1643 = vmatpush.bf16.msra.mxu0 %v1210
    %1644 = vmatpush.bf16.msra.mxu0 %v1206
    %1645 = vmatpush.bf16.msra.mxu0 %v1202
    %1646 = vmatmul.bf16.gmra.mxu0 %v294
    %v1647 = vpop.f32.mrf.mxu0
    %v1648 = vadd.f32 %v1635, %v1647
    %v1649 = vpop.f32.mrf.mxu0
    %1650 = vdwg.mxu0
    %1651 = vmatpush.bf16.msra.mxu0 %v1262
    %1652 = vmatpush.bf16.msra.mxu0 %v1258
    %1653 = vmatpush.bf16.msra.mxu0 %v1254
    %1654 = vmatpush.bf16.msra.mxu0 %v1250
    %1655 = vmatpush.bf16.msra.mxu0 %v1246
    %1656 = vmatpush.bf16.msra.mxu0 %v1242
    %1657 = vmatpush.bf16.msra.mxu0 %v1238
    %1658 = vmatpush.bf16.msra.mxu0 %v1234
    %1659 = vmatmul.bf16.gmra.mxu0 %v295
    %v1660 = vpop.f32.mrf.mxu0
    %v1661 = vadd.f32 %v1648, %v1660
    %v1662 = vpop.f32.mrf.mxu0
    %1663 = vdwg.mxu0
    %1664 = vmatpush.bf16.msra.mxu0 %v1294
    %1665 = vmatpush.bf16.msra.mxu0 %v1290
    %1666 = vmatpush.bf16.msra.mxu0 %v1286
    %1667 = vmatpush.bf16.msra.mxu0 %v1282
    %1668 = vmatpush.bf16.msra.mxu0 %v1278
    %1669 = vmatpush.bf16.msra.mxu0 %v1274
    %1670 = vmatpush.bf16.msra.mxu0 %v1270
    %1671 = vmatpush.bf16.msra.mxu0 %v1266
    %1672 = vmatmul.bf16.gmra.mxu0 %v296
    %v1673 = vpop.f32.mrf.mxu0
    %v1674 = vadd.f32 %v1661, %v1673
    %v1675 = vpop.f32.mrf.mxu0
    %1676 = vdwg.mxu0
    %1677 = vmatpush.bf16.msra.mxu0 %v1326
    %1678 = vmatpush.bf16.msra.mxu0 %v1322
    %1679 = vmatpush.bf16.msra.mxu0 %v1318
    %1680 = vmatpush.bf16.msra.mxu0 %v1314
    %1681 = vmatpush.bf16.msra.mxu0 %v1310
    %1682 = vmatpush.bf16.msra.mxu0 %v1306
    %1683 = vmatpush.bf16.msra.mxu0 %v1302
    %1684 = vmatpush.bf16.msra.mxu0 %v1298
    %1685 = vmatmul.bf16.gmra.mxu0 %v297
    %v1686 = vpop.f32.mrf.mxu0
    %v1687 = vadd.f32 %v1674, %v1686
    %v1688 = vpop.f32.mrf.mxu0
    %1689 = vdwg.mxu0
    %1690 = vmatpush.bf16.msra.mxu0 %v1103
    %1691 = vmatpush.bf16.msra.mxu0 %v1099
    %1692 = vmatpush.bf16.msra.mxu0 %v1095
    %1693 = vmatpush.bf16.msra.mxu0 %v1091
    %1694 = vmatpush.bf16.msra.mxu0 %v1087
    %1695 = vmatpush.bf16.msra.mxu0 %v1083
    %1696 = vmatpush.bf16.msra.mxu0 %v1079
    %1697 = vmatpush.bf16.msra.mxu0 %v1075
    %1698 = vmatmul.bf16.gmra.mxu0 %v290
    %v1699 = vpop.f32.mrf.mxu0
    %v1700 = vadd.f32 %v281, %v1699
    %v1701 = vpop.f32.mrf.mxu0
    %1702 = vdwg.mxu0
    %1703 = vmatpush.bf16.msra.mxu0 %v1135
    %1704 = vmatpush.bf16.msra.mxu0 %v1131
    %1705 = vmatpush.bf16.msra.mxu0 %v1127
    %1706 = vmatpush.bf16.msra.mxu0 %v1123
    %1707 = vmatpush.bf16.msra.mxu0 %v1119
    %1708 = vmatpush.bf16.msra.mxu0 %v1115
    %1709 = vmatpush.bf16.msra.mxu0 %v1111
    %1710 = vmatpush.bf16.msra.mxu0 %v1107
    %1711 = vmatmul.bf16.gmra.mxu0 %v291
    %v1712 = vpop.f32.mrf.mxu0
    %v1713 = vadd.f32 %v1700, %v1712
    %v1714 = vpop.f32.mrf.mxu0
    %1715 = vdwg.mxu0
    %1716 = vmatpush.bf16.msra.mxu0 %v1167
    %1717 = vmatpush.bf16.msra.mxu0 %v1163
    %1718 = vmatpush.bf16.msra.mxu0 %v1159
    %1719 = vmatpush.bf16.msra.mxu0 %v1155
    %1720 = vmatpush.bf16.msra.mxu0 %v1151
    %1721 = vmatpush.bf16.msra.mxu0 %v1147
    %1722 = vmatpush.bf16.msra.mxu0 %v1143
    %1723 = vmatpush.bf16.msra.mxu0 %v1139
    %1724 = vmatmul.bf16.gmra.mxu0 %v292
    %v1725 = vpop.f32.mrf.mxu0
    %v1726 = vadd.f32 %v1713, %v1725
    %v1727 = vpop.f32.mrf.mxu0
    %1728 = vdwg.mxu0
    %1729 = vmatpush.bf16.msra.mxu0 %v1199
    %1730 = vmatpush.bf16.msra.mxu0 %v1195
    %1731 = vmatpush.bf16.msra.mxu0 %v1191
    %1732 = vmatpush.bf16.msra.mxu0 %v1187
    %1733 = vmatpush.bf16.msra.mxu0 %v1183
    %1734 = vmatpush.bf16.msra.mxu0 %v1179
    %1735 = vmatpush.bf16.msra.mxu0 %v1175
    %1736 = vmatpush.bf16.msra.mxu0 %v1171
    %1737 = vmatmul.bf16.gmra.mxu0 %v293
    %v1738 = vpop.f32.mrf.mxu0
    %v1739 = vadd.f32 %v1726, %v1738
    %v1740 = vpop.f32.mrf.mxu0
    %1741 = vdwg.mxu0
    %1742 = vmatpush.bf16.msra.mxu0 %v1231
    %1743 = vmatpush.bf16.msra.mxu0 %v1227
    %1744 = vmatpush.bf16.msra.mxu0 %v1223
    %1745 = vmatpush.bf16.msra.mxu0 %v1219
    %1746 = vmatpush.bf16.msra.mxu0 %v1215
    %1747 = vmatpush.bf16.msra.mxu0 %v1211
    %1748 = vmatpush.bf16.msra.mxu0 %v1207
    %1749 = vmatpush.bf16.msra.mxu0 %v1203
    %1750 = vmatmul.bf16.gmra.mxu0 %v294
    %v1751 = vpop.f32.mrf.mxu0
    %v1752 = vadd.f32 %v1739, %v1751
    %v1753 = vpop.f32.mrf.mxu0
    %1754 = vdwg.mxu0
    %1755 = vmatpush.bf16.msra.mxu0 %v1263
    %1756 = vmatpush.bf16.msra.mxu0 %v1259
    %1757 = vmatpush.bf16.msra.mxu0 %v1255
    %1758 = vmatpush.bf16.msra.mxu0 %v1251
    %1759 = vmatpush.bf16.msra.mxu0 %v1247
    %1760 = vmatpush.bf16.msra.mxu0 %v1243
    %1761 = vmatpush.bf16.msra.mxu0 %v1239
    %1762 = vmatpush.bf16.msra.mxu0 %v1235
    %1763 = vmatmul.bf16.gmra.mxu0 %v295
    %v1764 = vpop.f32.mrf.mxu0
    %v1765 = vadd.f32 %v1752, %v1764
    %v1766 = vpop.f32.mrf.mxu0
    %1767 = vdwg.mxu0
    %1768 = vmatpush.bf16.msra.mxu0 %v1295
    %1769 = vmatpush.bf16.msra.mxu0 %v1291
    %1770 = vmatpush.bf16.msra.mxu0 %v1287
    %1771 = vmatpush.bf16.msra.mxu0 %v1283
    %1772 = vmatpush.bf16.msra.mxu0 %v1279
    %1773 = vmatpush.bf16.msra.mxu0 %v1275
    %1774 = vmatpush.bf16.msra.mxu0 %v1271
    %1775 = vmatpush.bf16.msra.mxu0 %v1267
    %1776 = vmatmul.bf16.gmra.mxu0 %v296
    %v1777 = vpop.f32.mrf.mxu0
    %v1778 = vadd.f32 %v1765, %v1777
    %v1779 = vpop.f32.mrf.mxu0
    %1780 = vdwg.mxu0
    %1781 = vmatpush.bf16.msra.mxu0 %v1327
    %1782 = vmatpush.bf16.msra.mxu0 %v1323
    %1783 = vmatpush.bf16.msra.mxu0 %v1319
    %1784 = vmatpush.bf16.msra.mxu0 %v1315
    %1785 = vmatpush.bf16.msra.mxu0 %v1311
    %1786 = vmatpush.bf16.msra.mxu0 %v1307
    %1787 = vmatpush.bf16.msra.mxu0 %v1303
    %1788 = vmatpush.bf16.msra.mxu0 %v1299
    %1789 = vmatmul.bf16.gmra.mxu0 %v297
    %v1790 = vpop.f32.mrf.mxu0
    %v1791 = vadd.f32 %v1778, %v1790
    %v1792 = vpop.f32.mrf.mxu0
    %1793 = vdwg.mxu0
    %1794 = vmatpush.bf16.msra.mxu0 %v1104
    %1795 = vmatpush.bf16.msra.mxu0 %v1100
    %1796 = vmatpush.bf16.msra.mxu0 %v1096
    %1797 = vmatpush.bf16.msra.mxu0 %v1092
    %1798 = vmatpush.bf16.msra.mxu0 %v1088
    %1799 = vmatpush.bf16.msra.mxu0 %v1084
    %1800 = vmatpush.bf16.msra.mxu0 %v1080
    %1801 = vmatpush.bf16.msra.mxu0 %v1076
    %1802 = vmatmul.bf16.gmra.mxu0 %v290
    %v1803 = vpop.f32.mrf.mxu0
    %v1804 = vadd.f32 %v282, %v1803
    %v1805 = vpop.f32.mrf.mxu0
    %1806 = vdwg.mxu0
    %1807 = vmatpush.bf16.msra.mxu0 %v1136
    %1808 = vmatpush.bf16.msra.mxu0 %v1132
    %1809 = vmatpush.bf16.msra.mxu0 %v1128
    %1810 = vmatpush.bf16.msra.mxu0 %v1124
    %1811 = vmatpush.bf16.msra.mxu0 %v1120
    %1812 = vmatpush.bf16.msra.mxu0 %v1116
    %1813 = vmatpush.bf16.msra.mxu0 %v1112
    %1814 = vmatpush.bf16.msra.mxu0 %v1108
    %1815 = vmatmul.bf16.gmra.mxu0 %v291
    %v1816 = vpop.f32.mrf.mxu0
    %v1817 = vadd.f32 %v1804, %v1816
    %v1818 = vpop.f32.mrf.mxu0
    %1819 = vdwg.mxu0
    %1820 = vmatpush.bf16.msra.mxu0 %v1168
    %1821 = vmatpush.bf16.msra.mxu0 %v1164
    %1822 = vmatpush.bf16.msra.mxu0 %v1160
    %1823 = vmatpush.bf16.msra.mxu0 %v1156
    %1824 = vmatpush.bf16.msra.mxu0 %v1152
    %1825 = vmatpush.bf16.msra.mxu0 %v1148
    %1826 = vmatpush.bf16.msra.mxu0 %v1144
    %1827 = vmatpush.bf16.msra.mxu0 %v1140
    %1828 = vmatmul.bf16.gmra.mxu0 %v292
    %v1829 = vpop.f32.mrf.mxu0
    %v1830 = vadd.f32 %v1817, %v1829
    %v1831 = vpop.f32.mrf.mxu0
    %1832 = vdwg.mxu0
    %1833 = vmatpush.bf16.msra.mxu0 %v1200
    %1834 = vmatpush.bf16.msra.mxu0 %v1196
    %1835 = vmatpush.bf16.msra.mxu0 %v1192
    %1836 = vmatpush.bf16.msra.mxu0 %v1188
    %1837 = vmatpush.bf16.msra.mxu0 %v1184
    %1838 = vmatpush.bf16.msra.mxu0 %v1180
    %1839 = vmatpush.bf16.msra.mxu0 %v1176
    %1840 = vmatpush.bf16.msra.mxu0 %v1172
    %1841 = vmatmul.bf16.gmra.mxu0 %v293
    %v1842 = vpop.f32.mrf.mxu0
    %v1843 = vadd.f32 %v1830, %v1842
    %v1844 = vpop.f32.mrf.mxu0
    %1845 = vdwg.mxu0
    %1846 = vmatpush.bf16.msra.mxu0 %v1232
    %1847 = vmatpush.bf16.msra.mxu0 %v1228
    %1848 = vmatpush.bf16.msra.mxu0 %v1224
    %1849 = vmatpush.bf16.msra.mxu0 %v1220
    %1850 = vmatpush.bf16.msra.mxu0 %v1216
    %1851 = vmatpush.bf16.msra.mxu0 %v1212
    %1852 = vmatpush.bf16.msra.mxu0 %v1208
    %1853 = vmatpush.bf16.msra.mxu0 %v1204
    %1854 = vmatmul.bf16.gmra.mxu0 %v294
    %v1855 = vpop.f32.mrf.mxu0
    %v1856 = vadd.f32 %v1843, %v1855
    %v1857 = vpop.f32.mrf.mxu0
    %1858 = vdwg.mxu0
    %1859 = vmatpush.bf16.msra.mxu0 %v1264
    %1860 = vmatpush.bf16.msra.mxu0 %v1260
    %1861 = vmatpush.bf16.msra.mxu0 %v1256
    %1862 = vmatpush.bf16.msra.mxu0 %v1252
    %1863 = vmatpush.bf16.msra.mxu0 %v1248
    %1864 = vmatpush.bf16.msra.mxu0 %v1244
    %1865 = vmatpush.bf16.msra.mxu0 %v1240
    %1866 = vmatpush.bf16.msra.mxu0 %v1236
    %1867 = vmatmul.bf16.gmra.mxu0 %v295
    %v1868 = vpop.f32.mrf.mxu0
    %v1869 = vadd.f32 %v1856, %v1868
    %v1870 = vpop.f32.mrf.mxu0
    %1871 = vdwg.mxu0
    %1872 = vmatpush.bf16.msra.mxu0 %v1296
    %1873 = vmatpush.bf16.msra.mxu0 %v1292
    %1874 = vmatpush.bf16.msra.mxu0 %v1288
    %1875 = vmatpush.bf16.msra.mxu0 %v1284
    %1876 = vmatpush.bf16.msra.mxu0 %v1280
    %1877 = vmatpush.bf16.msra.mxu0 %v1276
    %1878 = vmatpush.bf16.msra.mxu0 %v1272
    %1879 = vmatpush.bf16.msra.mxu0 %v1268
    %1880 = vmatmul.bf16.gmra.mxu0 %v296
    %v1881 = vpop.f32.mrf.mxu0
    %v1882 = vadd.f32 %v1869, %v1881
    %v1883 = vpop.f32.mrf.mxu0
    %1884 = vdwg.mxu0
    %1885 = vmatpush.bf16.msra.mxu0 %v1328
    %1886 = vmatpush.bf16.msra.mxu0 %v1324
    %1887 = vmatpush.bf16.msra.mxu0 %v1320
    %1888 = vmatpush.bf16.msra.mxu0 %v1316
    %1889 = vmatpush.bf16.msra.mxu0 %v1312
    %1890 = vmatpush.bf16.msra.mxu0 %v1308
    %1891 = vmatpush.bf16.msra.mxu0 %v1304
    %1892 = vmatpush.bf16.msra.mxu0 %v1300
    %1893 = vmatmul.bf16.gmra.mxu0 %v297
    %v1894 = vpop.f32.mrf.mxu0
    %v1895 = vadd.f32 %v1882, %v1894
    %v1896 = vpop.f32.mrf.mxu0
    %1897 = vdwg.mxu0
    %1898 = vmatpush.bf16.msra.mxu0 %v1105
    %1899 = vmatpush.bf16.msra.mxu0 %v1101
    %1900 = vmatpush.bf16.msra.mxu0 %v1097
    %1901 = vmatpush.bf16.msra.mxu0 %v1093
    %1902 = vmatpush.bf16.msra.mxu0 %v1089
    %1903 = vmatpush.bf16.msra.mxu0 %v1085
    %1904 = vmatpush.bf16.msra.mxu0 %v1081
    %1905 = vmatpush.bf16.msra.mxu0 %v1077
    %1906 = vmatmul.bf16.gmra.mxu0 %v290
    %v1907 = vpop.f32.mrf.mxu0
    %v1908 = vadd.f32 %v283, %v1907
    %v1909 = vpop.f32.mrf.mxu0
    %1910 = vdwg.mxu0
    %1911 = vmatpush.bf16.msra.mxu0 %v1137
    %1912 = vmatpush.bf16.msra.mxu0 %v1133
    %1913 = vmatpush.bf16.msra.mxu0 %v1129
    %1914 = vmatpush.bf16.msra.mxu0 %v1125
    %1915 = vmatpush.bf16.msra.mxu0 %v1121
    %1916 = vmatpush.bf16.msra.mxu0 %v1117
    %1917 = vmatpush.bf16.msra.mxu0 %v1113
    %1918 = vmatpush.bf16.msra.mxu0 %v1109
    %1919 = vmatmul.bf16.gmra.mxu0 %v291
    %v1920 = vpop.f32.mrf.mxu0
    %v1921 = vadd.f32 %v1908, %v1920
    %v1922 = vpop.f32.mrf.mxu0
    %1923 = vdwg.mxu0
    %1924 = vmatpush.bf16.msra.mxu0 %v1169
    %1925 = vmatpush.bf16.msra.mxu0 %v1165
    %1926 = vmatpush.bf16.msra.mxu0 %v1161
    %1927 = vmatpush.bf16.msra.mxu0 %v1157
    %1928 = vmatpush.bf16.msra.mxu0 %v1153
    %1929 = vmatpush.bf16.msra.mxu0 %v1149
    %1930 = vmatpush.bf16.msra.mxu0 %v1145
    %1931 = vmatpush.bf16.msra.mxu0 %v1141
    %1932 = vmatmul.bf16.gmra.mxu0 %v292
    %v1933 = vpop.f32.mrf.mxu0
    %v1934 = vadd.f32 %v1921, %v1933
    %v1935 = vpop.f32.mrf.mxu0
    %1936 = vdwg.mxu0
    %1937 = vmatpush.bf16.msra.mxu0 %v1201
    %1938 = vmatpush.bf16.msra.mxu0 %v1197
    %1939 = vmatpush.bf16.msra.mxu0 %v1193
    %1940 = vmatpush.bf16.msra.mxu0 %v1189
    %1941 = vmatpush.bf16.msra.mxu0 %v1185
    %1942 = vmatpush.bf16.msra.mxu0 %v1181
    %1943 = vmatpush.bf16.msra.mxu0 %v1177
    %1944 = vmatpush.bf16.msra.mxu0 %v1173
    %1945 = vmatmul.bf16.gmra.mxu0 %v293
    %v1946 = vpop.f32.mrf.mxu0
    %v1947 = vadd.f32 %v1934, %v1946
    %v1948 = vpop.f32.mrf.mxu0
    %1949 = vdwg.mxu0
    %1950 = vmatpush.bf16.msra.mxu0 %v1233
    %1951 = vmatpush.bf16.msra.mxu0 %v1229
    %1952 = vmatpush.bf16.msra.mxu0 %v1225
    %1953 = vmatpush.bf16.msra.mxu0 %v1221
    %1954 = vmatpush.bf16.msra.mxu0 %v1217
    %1955 = vmatpush.bf16.msra.mxu0 %v1213
    %1956 = vmatpush.bf16.msra.mxu0 %v1209
    %1957 = vmatpush.bf16.msra.mxu0 %v1205
    %1958 = vmatmul.bf16.gmra.mxu0 %v294
    %v1959 = vpop.f32.mrf.mxu0
    %v1960 = vadd.f32 %v1947, %v1959
    %v1961 = vpop.f32.mrf.mxu0
    %1962 = vdwg.mxu0
    %1963 = vmatpush.bf16.msra.mxu0 %v1265
    %1964 = vmatpush.bf16.msra.mxu0 %v1261
    %1965 = vmatpush.bf16.msra.mxu0 %v1257
    %1966 = vmatpush.bf16.msra.mxu0 %v1253
    %1967 = vmatpush.bf16.msra.mxu0 %v1249
    %1968 = vmatpush.bf16.msra.mxu0 %v1245
    %1969 = vmatpush.bf16.msra.mxu0 %v1241
    %1970 = vmatpush.bf16.msra.mxu0 %v1237
    %1971 = vmatmul.bf16.gmra.mxu0 %v295
    %v1972 = vpop.f32.mrf.mxu0
    %v1973 = vadd.f32 %v1960, %v1972
    %v1974 = vpop.f32.mrf.mxu0
    %1975 = vdwg.mxu0
    %1976 = vmatpush.bf16.msra.mxu0 %v1297
    %1977 = vmatpush.bf16.msra.mxu0 %v1293
    %1978 = vmatpush.bf16.msra.mxu0 %v1289
    %1979 = vmatpush.bf16.msra.mxu0 %v1285
    %1980 = vmatpush.bf16.msra.mxu0 %v1281
    %1981 = vmatpush.bf16.msra.mxu0 %v1277
    %1982 = vmatpush.bf16.msra.mxu0 %v1273
    %1983 = vmatpush.bf16.msra.mxu0 %v1269
    %1984 = vmatmul.bf16.gmra.mxu0 %v296
    %v1985 = vpop.f32.mrf.mxu0
    %v1986 = vadd.f32 %v1973, %v1985
    %v1987 = vpop.f32.mrf.mxu0
    %1988 = vdwg.mxu0
    %1989 = vmatpush.bf16.msra.mxu0 %v1329
    %1990 = vmatpush.bf16.msra.mxu0 %v1325
    %1991 = vmatpush.bf16.msra.mxu0 %v1321
    %1992 = vmatpush.bf16.msra.mxu0 %v1317
    %1993 = vmatpush.bf16.msra.mxu0 %v1313
    %1994 = vmatpush.bf16.msra.mxu0 %v1309
    %1995 = vmatpush.bf16.msra.mxu0 %v1305
    %1996 = vmatpush.bf16.msra.mxu0 %v1301
    %1997 = vmatmul.bf16.gmra.mxu0 %v297
    %v1998 = vpop.f32.mrf.mxu0
    %v1999 = vadd.f32 %v1986, %v1998
    %v2000 = vpop.f32.mrf.mxu0
    %2001 = vdwg.mxu0
    %vm2002 = vcmp.ge.f32.partialorder %v1687, 0.0
    %vm2003 = vcmp.ge.f32.partialorder %v1791, 0.0
    %vm2004 = vcmp.ge.f32.partialorder %v1895, 0.0
    %vm2005 = vcmp.ge.f32.partialorder %v1999, 0.0
    %v2006 = vmul.f32 %v1687, 0.25
    %v2007 = vmul.f32 %v1791, 0.25
    %v2008 = vmul.f32 %v1895, 0.25
    %v2009 = vmul.f32 %v1999, 0.25
    %v2010 = vsel %vm2002, %v1687, %v2006
    %v2011 = vsel %vm2003, %v1791, %v2007
    %v2012 = vsel %vm2004, %v1895, %v2008
    %v2013 = vsel %vm2005, %v1999, %v2009
    %v2014 = vpack.c.bf16 %v2010, %v2010
    %v2015 = vpack.c.bf16 %v2011, %v2011
    %v2016 = vpack.c.bf16 %v2012, %v2012
    %v2017 = vpack.c.bf16 %v2013, %v2013
    %v2018 = vld [vmem:[%s3] sm:$0xf]
    %v2019 = vld [vmem:[%s3 + $0x4] sm:$0xf]
    %v2020 = vld [vmem:[%s3 + $0x8] sm:$0xf]
    %v2021 = vld [vmem:[%s3 + $0xc] sm:$0xf]
    %v2022 = vld [vmem:[%s3 + $0x10] sm:$0xf]
    %v2023 = vld [vmem:[%s3 + $0x14] sm:$0xf]
    %v2024 = vld [vmem:[%s3 + $0x18] sm:$0xf]
    %v2025 = vld [vmem:[%s3 + $0x1c] sm:$0xf]
    %v2026 = vld [vmem:[%s3 + $0x20] sm:$0xf]
    %v2027 = vld [vmem:[%s3 + $0x24] sm:$0xf]
    %v2028 = vld [vmem:[%s3 + $0x28] sm:$0xf]
    %v2029 = vld [vmem:[%s3 + $0x2c] sm:$0xf]
    %v2030 = vld [vmem:[%s3 + $0x30] sm:$0xf]
    %v2031 = vld [vmem:[%s3 + $0x34] sm:$0xf]
    %v2032 = vld [vmem:[%s3 + $0x38] sm:$0xf]
    %v2033 = vld [vmem:[%s3 + $0x3c] sm:$0xf]
    %v2034 = vld [vmem:[%s3 + $0x40] sm:$0xf]
    %v2035 = vld [vmem:[%s3 + $0x44] sm:$0xf]
    %v2036 = vld [vmem:[%s3 + $0x48] sm:$0xf]
    %v2037 = vld [vmem:[%s3 + $0x4c] sm:$0xf]
    %v2038 = vld [vmem:[%s3 + $0x50] sm:$0xf]
    %v2039 = vld [vmem:[%s3 + $0x54] sm:$0xf]
    %v2040 = vld [vmem:[%s3 + $0x58] sm:$0xf]
    %v2041 = vld [vmem:[%s3 + $0x5c] sm:$0xf]
    %v2042 = vld [vmem:[%s3 + $0x60] sm:$0xf]
    %v2043 = vld [vmem:[%s3 + $0x64] sm:$0xf]
    %v2044 = vld [vmem:[%s3 + $0x68] sm:$0xf]
    %v2045 = vld [vmem:[%s3 + $0x6c] sm:$0xf]
    %v2046 = vld [vmem:[%s3 + $0x70] sm:$0xf]
    %v2047 = vld [vmem:[%s3 + $0x74] sm:$0xf]
    %v2048 = vld [vmem:[%s3 + $0x78] sm:$0xf]
    %v2049 = vld [vmem:[%s3 + $0x7c] sm:$0xf]
    %v2050 = vld [vmem:[%s3 + $0x80] sm:$0xf]
    %v2051 = vld [vmem:[%s3 + $0x84] sm:$0xf]
    %v2052 = vld [vmem:[%s3 + $0x88] sm:$0xf]
    %v2053 = vld [vmem:[%s3 + $0x8c] sm:$0xf]
    %v2054 = vld [vmem:[%s3 + $0x90] sm:$0xf]
    %v2055 = vld [vmem:[%s3 + $0x94] sm:$0xf]
    %v2056 = vld [vmem:[%s3 + $0x98] sm:$0xf]
    %v2057 = vld [vmem:[%s3 + $0x9c] sm:$0xf]
    %v2058 = vld [vmem:[%s3 + $0xa0] sm:$0xf]
    %v2059 = vld [vmem:[%s3 + $0xa4] sm:$0xf]
    %v2060 = vld [vmem:[%s3 + $0xa8] sm:$0xf]
    %v2061 = vld [vmem:[%s3 + $0xac] sm:$0xf]
    %v2062 = vld [vmem:[%s3 + $0xb0] sm:$0xf]
    %v2063 = vld [vmem:[%s3 + $0xb4] sm:$0xf]
    %v2064 = vld [vmem:[%s3 + $0xb8] sm:$0xf]
    %v2065 = vld [vmem:[%s3 + $0xbc] sm:$0xf]
    %v2066 = vld [vmem:[%s3 + $0xc0] sm:$0xf]
    %v2067 = vld [vmem:[%s3 + $0xc4] sm:$0xf]
    %v2068 = vld [vmem:[%s3 + $0xc8] sm:$0xf]
    %v2069 = vld [vmem:[%s3 + $0xcc] sm:$0xf]
    %v2070 = vld [vmem:[%s3 + $0xd0] sm:$0xf]
    %v2071 = vld [vmem:[%s3 + $0xd4] sm:$0xf]
    %v2072 = vld [vmem:[%s3 + $0xd8] sm:$0xf]
    %v2073 = vld [vmem:[%s3 + $0xdc] sm:$0xf]
    %v2074 = vld [vmem:[%s3 + $0xe0] sm:$0xf]
    %v2075 = vld [vmem:[%s3 + $0xe4] sm:$0xf]
    %v2076 = vld [vmem:[%s3 + $0xe8] sm:$0xf]
    %v2077 = vld [vmem:[%s3 + $0xec] sm:$0xf]
    %v2078 = vld [vmem:[%s3 + $0xf0] sm:$0xf]
    %v2079 = vld [vmem:[%s3 + $0xf4] sm:$0xf]
    %v2080 = vld [vmem:[%s3 + $0xf8] sm:$0xf]
    %v2081 = vld [vmem:[%s3 + $0xfc] sm:$0xf]
    %v2082 = vld [vmem:[%s4] sm:$0x1]
    %v2084 = vperm.slane %v2082, 0
    %v2150 = vunpack.c.l.b16 %v2018
    %v2151 = vunpack.c.l.b16 %v2019
    %v2152 = vunpack.c.l.b16 %v2020
    %v2153 = vunpack.c.l.b16 %v2021
    %v2154 = vunpack.c.l.b16 %v2022
    %v2155 = vunpack.c.l.b16 %v2023
    %v2156 = vunpack.c.l.b16 %v2024
    %v2157 = vunpack.c.l.b16 %v2025
    %v2158 = vunpack.c.l.b16 %v2026
    %v2159 = vunpack.c.l.b16 %v2027
    %v2160 = vunpack.c.l.b16 %v2028
    %v2161 = vunpack.c.l.b16 %v2029
    %v2162 = vunpack.c.l.b16 %v2030
    %v2163 = vunpack.c.l.b16 %v2031
    %v2164 = vunpack.c.l.b16 %v2032
    %v2165 = vunpack.c.l.b16 %v2033
    %v2166 = vunpack.c.l.b16 %v2034
    %v2167 = vunpack.c.l.b16 %v2035
    %v2168 = vunpack.c.l.b16 %v2036
    %v2169 = vunpack.c.l.b16 %v2037
    %v2170 = vunpack.c.l.b16 %v2038
    %v2171 = vunpack.c.l.b16 %v2039
    %v2172 = vunpack.c.l.b16 %v2040
    %v2173 = vunpack.c.l.b16 %v2041
    %v2174 = vunpack.c.l.b16 %v2042
    %v2175 = vunpack.c.l.b16 %v2043
    %v2176 = vunpack.c.l.b16 %v2044
    %v2177 = vunpack.c.l.b16 %v2045
    %v2178 = vunpack.c.l.b16 %v2046
    %v2179 = vunpack.c.l.b16 %v2047
    %v2180 = vunpack.c.l.b16 %v2048
    %v2181 = vunpack.c.l.b16 %v2049
    %v2182 = vunpack.c.l.b16 %v2050
    %v2183 = vunpack.c.l.b16 %v2051
    %v2184 = vunpack.c.l.b16 %v2052
    %v2185 = vunpack.c.l.b16 %v2053
    %v2186 = vunpack.c.l.b16 %v2054
    %v2187 = vunpack.c.l.b16 %v2055
    %v2188 = vunpack.c.l.b16 %v2056
    %v2189 = vunpack.c.l.b16 %v2057
    %v2190 = vunpack.c.l.b16 %v2058
    %v2191 = vunpack.c.l.b16 %v2059
    %v2192 = vunpack.c.l.b16 %v2060
    %v2193 = vunpack.c.l.b16 %v2061
    %v2194 = vunpack.c.l.b16 %v2062
    %v2195 = vunpack.c.l.b16 %v2063
    %v2196 = vunpack.c.l.b16 %v2064
    %v2197 = vunpack.c.l.b16 %v2065
    %v2198 = vunpack.c.l.b16 %v2066
    %v2199 = vunpack.c.l.b16 %v2067
    %v2200 = vunpack.c.l.b16 %v2068
    %v2201 = vunpack.c.l.b16 %v2069
    %v2202 = vunpack.c.l.b16 %v2070
    %v2203 = vunpack.c.l.b16 %v2071
    %v2204 = vunpack.c.l.b16 %v2072
    %v2205 = vunpack.c.l.b16 %v2073
    %v2206 = vunpack.c.l.b16 %v2074
    %v2207 = vunpack.c.l.b16 %v2075
    %v2208 = vunpack.c.l.b16 %v2076
    %v2209 = vunpack.c.l.b16 %v2077
    %v2210 = vunpack.c.l.b16 %v2078
    %v2211 = vunpack.c.l.b16 %v2079
    %v2212 = vunpack.c.l.b16 %v2080
    %v2213 = vunpack.c.l.b16 %v2081
    %v2214 = vpack.c.b16 %v2151, %v2150
    %v2215 = vpack.c.b16 %v2153, %v2152
    %v2216 = vpack.c.b16 %v2155, %v2154
    %v2217 = vpack.c.b16 %v2157, %v2156
    %v2218 = vpack.c.b16 %v2159, %v2158
    %v2219 = vpack.c.b16 %v2161, %v2160
    %v2220 = vpack.c.b16 %v2163, %v2162
    %v2221 = vpack.c.b16 %v2165, %v2164
    %v2222 = vpack.c.b16 %v2167, %v2166
    %v2223 = vpack.c.b16 %v2169, %v2168
    %v2224 = vpack.c.b16 %v2171, %v2170
    %v2225 = vpack.c.b16 %v2173, %v2172
    %v2226 = vpack.c.b16 %v2175, %v2174
    %v2227 = vpack.c.b16 %v2177, %v2176
    %v2228 = vpack.c.b16 %v2179, %v2178
    %v2229 = vpack.c.b16 %v2181, %v2180
    %v2230 = vpack.c.b16 %v2183, %v2182
    %v2231 = vpack.c.b16 %v2185, %v2184
    %v2232 = vpack.c.b16 %v2187, %v2186
    %v2233 = vpack.c.b16 %v2189, %v2188
    %v2234 = vpack.c.b16 %v2191, %v2190
    %v2235 = vpack.c.b16 %v2193, %v2192
    %v2236 = vpack.c.b16 %v2195, %v2194
    %v2237 = vpack.c.b16 %v2197, %v2196
    %v2238 = vpack.c.b16 %v2199, %v2198
    %v2239 = vpack.c.b16 %v2201, %v2200
    %v2240 = vpack.c.b16 %v2203, %v2202
    %v2241 = vpack.c.b16 %v2205, %v2204
    %v2242 = vpack.c.b16 %v2207, %v2206
    %v2243 = vpack.c.b16 %v2209, %v2208
    %v2244 = vpack.c.b16 %v2211, %v2210
    %v2245 = vpack.c.b16 %v2213, %v2212
    %2278 = vmatpush.bf16.msra.mxu0 %v2221
    %2279 = vmatpush.bf16.msra.mxu0 %v2220
    %2280 = vmatpush.bf16.msra.mxu0 %v2219
    %2281 = vmatpush.bf16.msra.mxu0 %v2218
    %2282 = vmatpush.bf16.msra.mxu0 %v2217
    %2283 = vmatpush.bf16.msra.mxu0 %v2216
    %2284 = vmatpush.bf16.msra.mxu0 %v2215
    %2285 = vmatpush.bf16.msra.mxu0 %v2214
    %2286 = vmatmul.bf16.gmra.mxu0 %v2014
    %v2287 = vpop.f32.mrf.mxu0
    %v2288 = vadd.f32 %v2084, %v2287
    %v2289 = vpop.f32.mrf.mxu0
    %2290 = vdwg.mxu0
    %2291 = vmatpush.bf16.msra.mxu0 %v2229
    %2292 = vmatpush.bf16.msra.mxu0 %v2228
    %2293 = vmatpush.bf16.msra.mxu0 %v2227
    %2294 = vmatpush.bf16.msra.mxu0 %v2226
    %2295 = vmatpush.bf16.msra.mxu0 %v2225
    %2296 = vmatpush.bf16.msra.mxu0 %v2224
    %2297 = vmatpush.bf16.msra.mxu0 %v2223
    %2298 = vmatpush.bf16.msra.mxu0 %v2222
    %2299 = vmatmul.bf16.gmra.mxu0 %v2015
    %v2300 = vpop.f32.mrf.mxu0
    %v2301 = vadd.f32 %v2288, %v2300
    %v2302 = vpop.f32.mrf.mxu0
    %2303 = vdwg.mxu0
    %2304 = vmatpush.bf16.msra.mxu0 %v2237
    %2305 = vmatpush.bf16.msra.mxu0 %v2236
    %2306 = vmatpush.bf16.msra.mxu0 %v2235
    %2307 = vmatpush.bf16.msra.mxu0 %v2234
    %2308 = vmatpush.bf16.msra.mxu0 %v2233
    %2309 = vmatpush.bf16.msra.mxu0 %v2232
    %2310 = vmatpush.bf16.msra.mxu0 %v2231
    %2311 = vmatpush.bf16.msra.mxu0 %v2230
    %2312 = vmatmul.bf16.gmra.mxu0 %v2016
    %v2313 = vpop.f32.mrf.mxu0
    %v2314 = vadd.f32 %v2301, %v2313
    %v2315 = vpop.f32.mrf.mxu0
    %2316 = vdwg.mxu0
    %2317 = vmatpush.bf16.msra.mxu0 %v2245
    %2318 = vmatpush.bf16.msra.mxu0 %v2244
    %2319 = vmatpush.bf16.msra.mxu0 %v2243
    %2320 = vmatpush.bf16.msra.mxu0 %v2242
    %2321 = vmatpush.bf16.msra.mxu0 %v2241
    %2322 = vmatpush.bf16.msra.mxu0 %v2240
    %2323 = vmatpush.bf16.msra.mxu0 %v2239
    %2324 = vmatpush.bf16.msra.mxu0 %v2238
    %2325 = vmatmul.bf16.gmra.mxu0 %v2017
    %v2326 = vpop.f32.mrf.mxu0
    %v2327 = vadd.f32 %v2314, %v2326
    %v2328 = vpop.f32.mrf.mxu0
    %2329 = vdwg.mxu0
    %2330 = vst [vmem:[#allocation2] sm:$0x3] %v2327
    // Predicated region
    $region22: #{network_forward.5} parent=1 // pred_check
      _
    $region23: #{network_forward.5} parent=1 // pred_check_branch
      %2332 = sbr.rel (0) target = $region25
    $region24: #{network_forward.5} parent=1 // pred_region
      %2334 = vsyncadd [#allocation3], 0
      %s2336 = sshll.u32 [#allocation2], 4
      %s2337 = int_to_ptr.vmem [resolvable:$true] %s2336
      %s2338 = sshll.u32 %s5, 4
      %s2339 = int_to_ptr.hbm [resolvable:$true] %s2338
      %2341 = dma.vmem_to_hbm [thread:$0]  %s2337, 32, %s2339, [#allocation3]
    $region25: #{network_forward.5} parent=1 // pred_fallthru
      _
    // Predicated region
    $region26: #{network_forward.5} parent=1 // pred_check
      _
    $region27: #{network_forward.5} parent=1 // pred_check_branch
      %2343 = sbr.rel (0) target = $region29
    $region28: #{network_forward.5} parent=1 // pred_region
      %2345 = dma.done [#allocation3], 32
    $region29: #{network_forward.5} parent=1 // pred_fallthru
      _
    %2346 = vsyncpa [#allocation3], 1

// kernel: network_forward.4
$region0: #{network_forward.4}
  #allocation0 [shape = 'u32[]', space=smem, size = 0x4, offset = 0x4, fixed_abs, tag = 'smem constant byte address 0x4 - core index']
  #allocation1 [shape = 'u32[72,128]{1,0:T(1,128)}', space=vmem, size = 0x9000, scoped, tag = 'internal scratch']
  #allocation2 [shape = 'f32[64,64]{1,0:T(8,128)}', space=vmem, size = 0x8000, scoped, tag = 'scratch operand']
  #allocation3 [shape = 'f32[32,64]{1,0:T(8,128)}', space=vmem, size = 0x4000, scoped, tag = 'scratch operand']
  %s0 = inlined_call_operand.vmem [shape: bf16[2,12,12,32], index: 0, kind: input, shape index: {}]
  %s1 = inlined_call_operand.vmem [shape: bf16[25,32,64], index: 1, kind: input, shape index: {}]
  %s2 = inlined_call_operand.vmem [shape: f32[1,64], index: 2, kind: input, shape index: {}]
  %s3 = inlined_call_operand.vmem [shape: bf16[2,16,64], index: 3, kind: output, shape index: {}]
  %s4 = sld [smem:[#allocation0]]
  $region45: #{network_forward.4} parent=0
    _
  %s6 = ssub.s32 1, %s4
  %s7 = scalar_select 0, %s6, %s4
  loop: start=0, step=1, limit=4
  $region2: #{network_forward.4} parent=0 // loop_pre_header
    _
  $region3: #{network_forward.4} parent=0 // loop_header
    %s9 = sphi 0, %s13
    %p10 = scmp.ge.s32.totalorder %s9, 4
    %s19 = sphi 0, %s21
    %s22 = sphi 0, %s19
    %s23 = sphi 0, %s22
    %s39 = sphi 0, %s23
    %s43 = sphi 0, %s43
    %s45 = sphi 0, %s43
    %s46 = sphi 0, %s45
    %s60 = sphi 0, %s46
    %s64 = sphi 0, %s64
    %s66 = sphi 0, %s64
    %s67 = sphi 0, %s66
    %s81 = sphi 0, %s67
    %s87 = sphi 0, %s89
    %s90 = sphi 0, %s87
    %s91 = sphi 0, %s90
    %s107 = sphi 0, %s91
  $region4: #{network_forward.4} parent=0 // loop_header_branch
    %12 = sbr.rel (%p10) target = $region8
  $region5: #{network_forward.4} parent=0 // loop_body
    %s14 = ssub.s32 %s9, 1
    %s15 = ssub.s32 %s9, 2
    %s16 = sadd.s32 %s9, 1
    %s17 = ssub.s32 %s9, %s16
    %p18 = scmp.eq.s32.totalorder %s17, 0
    %s20 = sadd.s32 %s19, 1
    %s21 = scalar_select %p18, %s19, %s20
    %p24 = pneg %p18
    %p25 = scmp.eq.s32.totalorder %s9, 1
    %p26 = por %p24, %p25
    %p27 = scmp.ne.s32.totalorder %s19, %s22
    %p28 = scmp.eq.s32.totalorder %s9, 0
    %p29 = por %p27, %p28
    %p30 = scmp.ne.s32.totalorder %s19, %s22
    %p31 = scmp.eq.s32.totalorder %s14, 1
    %p32 = por %p30, %p31
    %p33 = scmp.ne.s32.totalorder %s22, %s23
    %p34 = scmp.eq.s32.totalorder %s14, 0
    %p35 = por %p33, %p34
    %p36 = scmp.ne.s32.totalorder %s22, %s23
    %p37 = scmp.eq.s32.totalorder %s15, 1
    %p38 = por %p36, %p37
    %p40 = scmp.ne.s32.totalorder %s23, %s39
    %p41 = scmp.eq.s32.totalorder %s15, 0
    %p42 = por %p40, %p41
    %s44 = sadd.s32 %s43, 1
    %p47 = scmp.eq.s32.totalorder %s9, 1
    %p48 = scmp.ne.s32.totalorder %s43, %s45
    %p49 = scmp.eq.s32.totalorder %s9, 0
    %p50 = por %p48, %p49
    %p51 = scmp.ne.s32.totalorder %s43, %s45
    %p52 = scmp.eq.s32.totalorder %s14, 1
    %p53 = por %p51, %p52
    %p54 = scmp.ne.s32.totalorder %s45, %s46
    %p55 = scmp.eq.s32.totalorder %s14, 0
    %p56 = por %p54, %p55
    %p57 = scmp.ne.s32.totalorder %s45, %s46
    %p58 = scmp.eq.s32.totalorder %s15, 1
    %p59 = por %p57, %p58
    %p61 = scmp.ne.s32.totalorder %s46, %s60
    %p62 = scmp.eq.s32.totalorder %s15, 0
    %p63 = por %p61, %p62
    %s65 = sadd.s32 %s64, 1
    %p68 = scmp.eq.s32.totalorder %s9, 1
    %p69 = scmp.ne.s32.totalorder %s64, %s66
    %p70 = scmp.eq.s32.totalorder %s9, 0
    %p71 = por %p69, %p70
    %p72 = scmp.ne.s32.totalorder %s64, %s66
    %p73 = scmp.eq.s32.totalorder %s14, 1
    %p74 = por %p72, %p73
    %p75 = scmp.ne.s32.totalorder %s66, %s67
    %p76 = scmp.eq.s32.totalorder %s14, 0
    %p77 = por %p75, %p76
    %p78 = scmp.ne.s32.totalorder %s66, %s67
    %p79 = scmp.eq.s32.totalorder %s15, 1
    %p80 = por %p78, %p79
    %p82 = scmp.ne.s32.totalorder %s67, %s81
    %p83 = scmp.eq.s32.totalorder %s15, 0
    %p84 = por %p82, %p83
    %s85 = ssub.s32 %s9, %s16
    %p86 = scmp.eq.s32.totalorder %s85, 0
    %s88 = sadd.s32 %s87, 1
    %s89 = scalar_select %p86, %s87, %s88
    %p92 = pneg %p86
    %p93 = scmp.eq.s32.totalorder %s9, 1
    %p94 = por %p92, %p93
    %p95 = scmp.ne.s32.totalorder %s87, %s90
    %p96 = scmp.eq.s32.totalorder %s9, 0
    %p97 = por %p95, %p96
    %p98 = scmp.ne.s32.totalorder %s87, %s90
    %p99 = scmp.eq.s32.totalorder %s14, 1
    %p100 = por %p98, %p99
    %p101 = scmp.ne.s32.totalorder %s90, %s91
    %p102 = scmp.eq.s32.totalorder %s14, 0
    %p103 = por %p101, %p102
    %p104 = scmp.ne.s32.totalorder %s90, %s91
    %p105 = scmp.eq.s32.totalorder %s15, 1
    %p106 = por %p104, %p105
    %p108 = scmp.ne.s32.totalorder %s91, %s107
    %p109 = scmp.eq.s32.totalorder %s15, 0
    %p110 = por %p108, %p109
    %p111 = scmp.le.s32.totalorder 1, %s9
    %p112 = scmp.lt.s32.totalorder %s9, 3
    %p113 = pnand %p111, %p112
    %p114 = pneg %p113
    // Predicated region
    $region9: #{network_forward.4} parent=5 // pred_check
      _
    $region10: #{network_forward.4} parent=5 // pred_check_branch
      %116 = sbr.rel (%p113) target = $region12
    $region11: #{network_forward.4} parent=5 // pred_region
      %s117 = ssub.s32 %s9, 1
      // Predicated region
      $region13: #{network_forward.4} parent=11 // pred_check
        %p118 = pneg %p56
      $region14: #{network_forward.4} parent=11 // pred_check_branch
        %120 = sbr.rel (%p118) target = $region16
      $region15: #{network_forward.4} parent=11 // pred_region
        _
      $region16: #{network_forward.4} parent=11 // pred_fallthru
        _
      // Predicated region
      $region17: #{network_forward.4} parent=11 // pred_check
        %p121 = pneg %p77
      $region18: #{network_forward.4} parent=11 // pred_check_branch
        %123 = sbr.rel (%p121) target = $region20
      $region19: #{network_forward.4} parent=11 // pred_region
        _
      $region20: #{network_forward.4} parent=11 // pred_fallthru
        _
    $region12: #{network_forward.4} parent=5 // pred_fallthru
      _
    %p124 = scmp.lt.s32.totalorder %s9, 2
    // Predicated region
    $region21: #{network_forward.4} parent=5 // pred_check
      %p125 = pneg %p124
    $region22: #{network_forward.4} parent=5 // pred_check_branch
      %127 = sbr.rel (%p125) target = $region24
    $region23: #{network_forward.4} parent=5 // pred_region
      // Predicated region
      $region25: #{network_forward.4} parent=23 // pred_check
        %p128 = pneg %p29
      $region26: #{network_forward.4} parent=23 // pred_check_branch
        %130 = sbr.rel (%p128) target = $region28
      $region27: #{network_forward.4} parent=23 // pred_region
        %p131 = scmp.lt.s32.totalorder %s9, 1
        %s132 = scalar_select %p131, %s9, 1
        %s133 = smul.addr %s132, 24
        %s134 = smul.addr %s133, 4
        %s135 = scalar_lea.vmem %s0, %s134
      $region28: #{network_forward.4} parent=23 // pred_fallthru
        _
    $region24: #{network_forward.4} parent=5 // pred_fallthru
      _
    %p136 = scmp.le.s32.totalorder 1, %s9
    %p137 = scmp.lt.s32.totalorder %s9, 3
    %p138 = pnand %p136, %p137
    %p139 = pneg %p138
    // Predicated region
    $region29: #{network_forward.4} parent=5 // pred_check
      _
    $region30: #{network_forward.4} parent=5 // pred_check_branch
      %141 = sbr.rel (%p138) target = $region32
    $region31: #{network_forward.4} parent=5 // pred_region
      %s142 = ssub.s32 %s9, 1
      %p143 = scmp.lt.s32.totalorder %s14, 1
      %s144 = scalar_select %p143, %s14, 1
      %s145 = smul.addr %s144, 24
      %s146 = smul.addr %s145, 4
      %s147 = scalar_lea.vmem %s0, %s146
      %p148 = pneg %p35
      %p149 = pneg %p32
      %p150 = pneg %p56
      %p151 = pneg %p53
      %p152 = pneg %p77
      %p153 = pneg %p74
      %p154 = pneg %p103
      %p155 = pneg %p100
      %p156 = scmp.lt.s32.totalorder %s14, 1
      %s157 = scalar_select %p156, %s14, 1
      %s158 = smul.addr %s157, 2
      %s159 = smul.addr %s158, 4
      %s160 = scalar_lea.vmem %s3, %s159
      %p161 = scmp.lt.s32.totalorder %s14, 1
      %s162 = scalar_select %p161, %s14, 1
      %s163 = smul.addr %s162, 24
      %s164 = smul.addr %s163, 4
      %s165 = scalar_lea.vmem %s0, %s164
      %p166 = scmp.lt.s32.totalorder %s14, 1
      %s167 = scalar_select %p166, %s14, 1
      %s168 = smul.addr %s167, 2
      %s169 = smul.addr %s168, 4
      %s170 = scalar_lea.vmem %s3, %s169
      %v172 = vld [vmem:[%s165] sm:$0xf]
      %v173 = vld [vmem:[%s165 + $0x8] sm:$0xf]
      %v174 = vld [vmem:[%s165 + $0x10] sm:$0xf]
      %v175 = vld [vmem:[%s165 + $0x18] sm:$0xf]
      %v176 = vld [vmem:[%s165 + $0x20] sm:$0xf]
      %v177 = vld [vmem:[%s165 + $0x28] sm:$0xf]
      %v178 = vld [vmem:[%s165 + $0x30] sm:$0xf]
      %v179 = vld [vmem:[%s165 + $0x38] sm:$0xf]
      %v180 = vld [vmem:[%s1] sm:$0xf]
      %v181 = vld [vmem:[%s1 + $0x4] sm:$0xf]
      %v182 = vld [vmem:[%s1 + $0x8] sm:$0xf]
      %v183 = vld [vmem:[%s1 + $0xc] sm:$0xf]
      %v184 = vld [vmem:[%s165 + $0x4] sm:$0x1]
      %v185 = vld [vmem:[%s165 + $0xc] sm:$0x1]
      %v186 = vld [vmem:[%s165 + $0x14] sm:$0x1]
      %v187 = vld [vmem:[%s165 + $0x1c] sm:$0x1]
      %v188 = vld [vmem:[%s165 + $0x24] sm:$0x1]
      %v189 = vld [vmem:[%s165 + $0x2c] sm:$0x1]
      %v190 = vld [vmem:[%s165 + $0x34] sm:$0x1]
      %v191 = vld [vmem:[%s165 + $0x3c] sm:$0x1]
      %vm192 = vsmask.f32 3328
      %vm193 = vsmask.f32 7440
      %vm194 = vmor %vm192, %vm193
      %v196 = vshrl.u32 %v172, 16
      %v198 = vrot.slane %v196, 4
      %v199 = vshll.u32 %v172, 16
      %v201 = vrot.slane %v199, 5
      %v202 = vor.u32 %v198, %v201
      %v203 = vrot.slane %v202, 4
      %v205 = vshll.u32 %v184, 16
      %v207 = vrot.slane %v205, 5
      %v208 = vsel %vm194, %v203, %v207
      %v210 = vshrl.u32 %v173, 16
      %v212 = vrot.slane %v210, 4
      %v213 = vshll.u32 %v173, 16
      %v215 = vrot.slane %v213, 5
      %v216 = vor.u32 %v212, %v215
      %v217 = vrot.slane %v216, 4
      %v219 = vshll.u32 %v185, 16
      %v221 = vrot.slane %v219, 5
      %v222 = vsel %vm194, %v217, %v221
      %v224 = vshrl.u32 %v174, 16
      %v226 = vrot.slane %v224, 4
      %v227 = vshll.u32 %v174, 16
      %v229 = vrot.slane %v227, 5
      %v230 = vor.u32 %v226, %v229
      %v231 = vrot.slane %v230, 4
      %v233 = vshll.u32 %v186, 16
      %v235 = vrot.slane %v233, 5
      %v236 = vsel %vm194, %v231, %v235
      %v238 = vshrl.u32 %v175, 16
      %v240 = vrot.slane %v238, 4
      %v241 = vshll.u32 %v175, 16
      %v243 = vrot.slane %v241, 5
      %v244 = vor.u32 %v240, %v243
      %v245 = vrot.slane %v244, 4
      %v247 = vshll.u32 %v187, 16
      %v249 = vrot.slane %v247, 5
      %v250 = vsel %vm194, %v245, %v249
      %v252 = vshrl.u32 %v176, 16
      %v254 = vrot.slane %v252, 4
      %v255 = vshll.u32 %v176, 16
      %v257 = vrot.slane %v255, 5
      %v258 = vor.u32 %v254, %v257
      %v259 = vrot.slane %v258, 4
      %v261 = vshll.u32 %v188, 16
      %v263 = vrot.slane %v261, 5
      %v264 = vsel %vm194, %v259, %v263
      %v266 = vshrl.u32 %v177, 16
      %v268 = vrot.slane %v266, 4
      %v269 = vshll.u32 %v177, 16
      %v271 = vrot.slane %v269, 5
      %v272 = vor.u32 %v268, %v271
      %v273 = vrot.slane %v272, 4
      %v275 = vshll.u32 %v189, 16
      %v277 = vrot.slane %v275, 5
      %v278 = vsel %vm194, %v273, %v277
      %v280 = vshrl.u32 %v178, 16
      %v282 = vrot.slane %v280, 4
      %v283 = vshll.u32 %v178, 16
      %v285 = vrot.slane %v283, 5
      %v286 = vor.u32 %v282, %v285
      %v287 = vrot.slane %v286, 4
      %v289 = vshll.u32 %v190, 16
      %v291 = vrot.slane %v289, 5
      %v292 = vsel %vm194, %v287, %v291
      %v294 = vshrl.u32 %v179, 16
      %v296 = vrot.slane %v294, 4
      %v297 = vshll.u32 %v179, 16
      %v299 = vrot.slane %v297, 5
      %v300 = vor.u32 %v296, %v299
      %v301 = vrot.slane %v300, 4
      %v303 = vshll.u32 %v191, 16
      %v305 = vrot.slane %v303, 5
      %v306 = vsel %vm194, %v301, %v305
      %s307 = scalar_lea.vmem %s1, 16
      %v308 = vld [vmem:[%s307] sm:$0xf]
      %v309 = vld [vmem:[%s307 + $0x4] sm:$0xf]
      %v310 = vld [vmem:[%s307 + $0x8] sm:$0xf]
      %v311 = vld [vmem:[%s307 + $0xc] sm:$0xf]
      %v312 = vunpack.c.l.b16 %v208
      %v313 = vunpack.c.l.b16 %v222
      %v314 = vunpack.c.l.b16 %v236
      %v315 = vunpack.c.l.b16 %v250
      %v316 = vunpack.c.l.b16 %v264
      %v317 = vunpack.c.l.b16 %v278
      %v318 = vunpack.c.l.b16 %v292
      %v319 = vunpack.c.l.b16 %v306
      %v320 = vpack.c.b16 %v313, %v312
      %v321 = vpack.c.b16 %v315, %v314
      %v322 = vpack.c.b16 %v317, %v316
      %v323 = vpack.c.b16 %v319, %v318
      %v328 = vunpack.c.l.b16 %v308
      %v329 = vunpack.c.l.b16 %v309
      %v330 = vunpack.c.l.b16 %v310
      %v331 = vunpack.c.l.b16 %v311
      %v332 = vpack.c.b16 %v329, %v328
      %v333 = vpack.c.b16 %v331, %v330
      %vm336 = vcmask 261120
      %v338 = vsel %vm336, %v320, 0
      %v341 = vsel %vm336, %v321, 0
      %v344 = vsel %vm336, %v322, 0
      %v347 = vsel %vm336, %v323, 0
      %349 = vmatpush.bf16.msra.mxu0 0
      %350 = vmatpush.bf16.msra.mxu0 0
      %351 = vmatpush.bf16.msra.mxu0 0
      %352 = vmatpush.bf16.msra.mxu0 0
      %353 = vmatpush.bf16.msra.mxu0 0
      %354 = vmatpush.bf16.msra.mxu0 0
      %355 = vmatpush.bf16.msra.mxu0 %v333
      %356 = vmatpush.bf16.msra.mxu0 %v332
      %357 = vmatmul.bf16.gmra.mxu0 %v338
      %v358 = vpop.f32.mrf.mxu0
      %v359 = vadd.f32 0.0, %v358
      %v360 = vpop.f32.mrf.mxu0
      %v361 = vadd.f32 0.0, %v360
      %362 = vmatmul.bf16.gmra.mxu0 %v341
      %v363 = vpop.f32.mrf.mxu0
      %v364 = vadd.f32 0.0, %v363
      %v365 = vpop.f32.mrf.mxu0
      %v366 = vadd.f32 0.0, %v365
      %367 = vmatmul.bf16.gmra.mxu0 %v344
      %v368 = vpop.f32.mrf.mxu0
      %v369 = vadd.f32 0.0, %v368
      %v370 = vpop.f32.mrf.mxu0
      %v371 = vadd.f32 0.0, %v370
      %372 = vmatmul.bf16.gmra.mxu0 %v347
      %v373 = vpop.f32.mrf.mxu0
      %v374 = vadd.f32 0.0, %v373
      %v375 = vpop.f32.mrf.mxu0
      %v376 = vadd.f32 0.0, %v375
      %377 = vdwg.mxu0
      %v386 = vunpack.c.l.b16 %v172
      %v387 = vunpack.c.l.b16 %v173
      %v388 = vunpack.c.l.b16 %v174
      %v389 = vunpack.c.l.b16 %v175
      %v390 = vunpack.c.l.b16 %v176
      %v391 = vunpack.c.l.b16 %v177
      %v392 = vunpack.c.l.b16 %v178
      %v393 = vunpack.c.l.b16 %v179
      %v394 = vpack.c.b16 %v387, %v386
      %v395 = vpack.c.b16 %v389, %v388
      %v396 = vpack.c.b16 %v391, %v390
      %v397 = vpack.c.b16 %v393, %v392
      %v402 = vunpack.c.l.b16 %v180
      %v403 = vunpack.c.l.b16 %v181
      %v404 = vunpack.c.l.b16 %v182
      %v405 = vunpack.c.l.b16 %v183
      %v406 = vpack.c.b16 %v403, %v402
      %v407 = vpack.c.b16 %v405, %v404
      %v411 = vsel %vm336, %v394, 0
      %v414 = vsel %vm336, %v395, 0
      %v417 = vsel %vm336, %v396, 0
      %v420 = vsel %vm336, %v397, 0
      %422 = vmatpush.bf16.msra.mxu0 0
      %423 = vmatpush.bf16.msra.mxu0 0
      %424 = vmatpush.bf16.msra.mxu0 0
      %425 = vmatpush.bf16.msra.mxu0 0
      %426 = vmatpush.bf16.msra.mxu0 0
      %427 = vmatpush.bf16.msra.mxu0 0
      %428 = vmatpush.bf16.msra.mxu0 %v407
      %429 = vmatpush.bf16.msra.mxu0 %v406
      %430 = vmatmul.bf16.gmra.mxu0 %v411
      %v431 = vpop.f32.mrf.mxu0
      %v432 = vadd.f32 %v359, %v431
      %v433 = vpop.f32.mrf.mxu0
      %v434 = vadd.f32 %v361, %v433
      %435 = vmatmul.bf16.gmra.mxu0 %v414
      %v436 = vpop.f32.mrf.mxu0
      %v437 = vadd.f32 %v364, %v436
      %v438 = vpop.f32.mrf.mxu0
      %v439 = vadd.f32 %v366, %v438
      %440 = vmatmul.bf16.gmra.mxu0 %v417
      %v441 = vpop.f32.mrf.mxu0
      %v442 = vadd.f32 %v369, %v441
      %v443 = vpop.f32.mrf.mxu0
      %v444 = vadd.f32 %v371, %v443
      %445 = vmatmul.bf16.gmra.mxu0 %v420
      %v446 = vpop.f32.mrf.mxu0
      %v447 = vadd.f32 %v374, %v446
      %v448 = vpop.f32.mrf.mxu0
      %v449 = vadd.f32 %v376, %v448
      %450 = vdwg.mxu0
      %v451 = vld [vmem:[%s165] sm:$0xe]
      %v452 = vld [vmem:[%s165 + $0x8] sm:$0xe]
      %v453 = vld [vmem:[%s165 + $0x10] sm:$0xe]
      %v454 = vld [vmem:[%s165 + $0x18] sm:$0xe]
      %v455 = vld [vmem:[%s165 + $0x20] sm:$0xe]
      %v456 = vld [vmem:[%s165 + $0x28] sm:$0xe]
      %v457 = vld [vmem:[%s165 + $0x30] sm:$0xe]
      %v458 = vld [vmem:[%s165 + $0x38] sm:$0xe]
      %vm475 = vcmask 1042432
      %vm476 = vcmask 1046532
      %vm477 = vmor %vm475, %vm476
      %v478 = vrot.slane %v451, 5
      %v479 = vrot.slane %v478, 4
      %v480 = vrot.slane %v184, 5
      %v481 = vsel %vm477, %v479, %v480
      %v482 = vrot.slane %v452, 5
      %v483 = vrot.slane %v482, 4
      %v484 = vrot.slane %v185, 5
      %v485 = vsel %vm477, %v483, %v484
      %v486 = vrot.slane %v453, 5
      %v487 = vrot.slane %v486, 4
      %v488 = vrot.slane %v186, 5
      %v489 = vsel %vm477, %v487, %v488
      %v490 = vrot.slane %v454, 5
      %v491 = vrot.slane %v490, 4
      %v492 = vrot.slane %v187, 5
      %v493 = vsel %vm477, %v491, %v492
      %v494 = vrot.slane %v455, 5
      %v495 = vrot.slane %v494, 4
      %v496 = vrot.slane %v188, 5
      %v497 = vsel %vm477, %v495, %v496
      %v498 = vrot.slane %v456, 5
      %v499 = vrot.slane %v498, 4
      %v500 = vrot.slane %v189, 5
      %v501 = vsel %vm477, %v499, %v500
      %v502 = vrot.slane %v457, 5
      %v503 = vrot.slane %v502, 4
      %v504 = vrot.slane %v190, 5
      %v505 = vsel %vm477, %v503, %v504
      %v506 = vrot.slane %v458, 5
      %v507 = vrot.slane %v506, 4
      %v508 = vrot.slane %v191, 5
      %v509 = vsel %vm477, %v507, %v508
      %s510 = scalar_lea.vmem %s1, 32
      %v511 = vld [vmem:[%s510] sm:$0xf]
      %v512 = vld [vmem:[%s510 + $0x4] sm:$0xf]
      %v513 = vld [vmem:[%s510 + $0x8] sm:$0xf]
      %v514 = vld [vmem:[%s510 + $0xc] sm:$0xf]
      %v515 = vunpack.c.l.b16 %v481
      %v516 = vunpack.c.l.b16 %v485
      %v517 = vunpack.c.l.b16 %v489
      %v518 = vunpack.c.l.b16 %v493
      %v519 = vunpack.c.l.b16 %v497
      %v520 = vunpack.c.l.b16 %v501
      %v521 = vunpack.c.l.b16 %v505
      %v522 = vunpack.c.l.b16 %v509
      %v523 = vpack.c.b16 %v516, %v515
      %v524 = vpack.c.b16 %v518, %v517
      %v525 = vpack.c.b16 %v520, %v519
      %v526 = vpack.c.b16 %v522, %v521
      %v531 = vunpack.c.l.b16 %v511
      %v532 = vunpack.c.l.b16 %v512
      %v533 = vunpack.c.l.b16 %v513
      %v534 = vunpack.c.l.b16 %v514
      %v535 = vpack.c.b16 %v532, %v531
      %v536 = vpack.c.b16 %v534, %v533
      %v540 = vsel %vm336, %v523, 0
      %v543 = vsel %vm336, %v524, 0
      %v546 = vsel %vm336, %v525, 0
      %v549 = vsel %vm336, %v526, 0
      %551 = vmatpush.bf16.msra.mxu0 0
      %552 = vmatpush.bf16.msra.mxu0 0
      %553 = vmatpush.bf16.msra.mxu0 0
      %554 = vmatpush.bf16.msra.mxu0 0
      %555 = vmatpush.bf16.msra.mxu0 0
      %556 = vmatpush.bf16.msra.mxu0 0
      %557 = vmatpush.bf16.msra.mxu0 %v536
      %558 = vmatpush.bf16.msra.mxu0 %v535
      %559 = vmatmul.bf16.gmra.mxu0 %v540
      %v560 = vpop.f32.mrf.mxu0
      %v561 = vadd.f32 0.0, %v560
      %v562 = vpop.f32.mrf.mxu0
      %v563 = vadd.f32 0.0, %v562
      %564 = vmatmul.bf16.gmra.mxu0 %v543
      %v565 = vpop.f32.mrf.mxu0
      %v566 = vadd.f32 0.0, %v565
      %v567 = vpop.f32.mrf.mxu0
      %v568 = vadd.f32 0.0, %v567
      %569 = vmatmul.bf16.gmra.mxu0 %v546
      %v570 = vpop.f32.mrf.mxu0
      %v571 = vadd.f32 0.0, %v570
      %v572 = vpop.f32.mrf.mxu0
      %v573 = vadd.f32 0.0, %v572
      %574 = vmatmul.bf16.gmra.mxu0 %v549
      %v575 = vpop.f32.mrf.mxu0
      %v576 = vadd.f32 0.0, %v575
      %v577 = vpop.f32.mrf.mxu0
      %v578 = vadd.f32 0.0, %v577
      %579 = vdwg.mxu0
      %v580 = vadd.f32 %v432, %v561
      %v581 = vadd.f32 %v434, %v563
      %v582 = vadd.f32 %v437, %v566
      %v583 = vadd.f32 %v439, %v568
      %v584 = vadd.f32 %v442, %v571
      %v585 = vadd.f32 %v444, %v573
      %v586 = vadd.f32 %v447, %v576
      %v587 = vadd.f32 %v449, %v578
      %v588 = vld [vmem:[%s165 + $0x4] sm:$0x3]
      %v589 = vld [vmem:[%s165 + $0xc] sm:$0x3]
      %v590 = vld [vmem:[%s165 + $0x14] sm:$0x3]
      %v591 = vld [vmem:[%s165 + $0x1c] sm:$0x3]
      %v592 = vld [vmem:[%s165 + $0x24] sm:$0x3]
      %v593 = vld [vmem:[%s165 + $0x2c] sm:$0x3]
      %v594 = vld [vmem:[%s165 + $0x34] sm:$0x3]
      %v595 = vld [vmem:[%s165 + $0x3c] sm:$0x3]
      %vm596 = vsmask.f32 2304
      %vm597 = vsmask.f32 6416
      %vm598 = vmor %vm596, %vm597
      %v600 = vshrl.u32 %v451, 16
      %v602 = vrot.slane %v600, 5
      %v603 = vshll.u32 %v451, 16
      %v605 = vrot.slane %v603, 6
      %v606 = vor.u32 %v602, %v605
      %v607 = vrot.slane %v606, 4
      %v609 = vshrl.u32 %v588, 16
      %v611 = vrot.slane %v609, 5
      %v612 = vshll.u32 %v588, 16
      %v614 = vrot.slane %v612, 6
      %v615 = vor.u32 %v611, %v614
      %v616 = vsel %vm598, %v607, %v615
      %v618 = vshrl.u32 %v452, 16
      %v620 = vrot.slane %v618, 5
      %v621 = vshll.u32 %v452, 16
      %v623 = vrot.slane %v621, 6
      %v624 = vor.u32 %v620, %v623
      %v625 = vrot.slane %v624, 4
      %v627 = vshrl.u32 %v589, 16
      %v629 = vrot.slane %v627, 5
      %v630 = vshll.u32 %v589, 16
      %v632 = vrot.slane %v630, 6
      %v633 = vor.u32 %v629, %v632
      %v634 = vsel %vm598, %v625, %v633
      %v636 = vshrl.u32 %v453, 16
      %v638 = vrot.slane %v636, 5
      %v639 = vshll.u32 %v453, 16
      %v641 = vrot.slane %v639, 6
      %v642 = vor.u32 %v638, %v641
      %v643 = vrot.slane %v642, 4
      %v645 = vshrl.u32 %v590, 16
      %v647 = vrot.slane %v645, 5
      %v648 = vshll.u32 %v590, 16
      %v650 = vrot.slane %v648, 6
      %v651 = vor.u32 %v647, %v650
      %v652 = vsel %vm598, %v643, %v651
      %v654 = vshrl.u32 %v454, 16
      %v656 = vrot.slane %v654, 5
      %v657 = vshll.u32 %v454, 16
      %v659 = vrot.slane %v657, 6
      %v660 = vor.u32 %v656, %v659
      %v661 = vrot.slane %v660, 4
      %v663 = vshrl.u32 %v591, 16
      %v665 = vrot.slane %v663, 5
      %v666 = vshll.u32 %v591, 16
      %v668 = vrot.slane %v666, 6
      %v669 = vor.u32 %v665, %v668
      %v670 = vsel %vm598, %v661, %v669
      %v672 = vshrl.u32 %v455, 16
      %v674 = vrot.slane %v672, 5
      %v675 = vshll.u32 %v455, 16
      %v677 = vrot.slane %v675, 6
      %v678 = vor.u32 %v674, %v677
      %v679 = vrot.slane %v678, 4
      %v681 = vshrl.u32 %v592, 16
      %v683 = vrot.slane %v681, 5
      %v684 = vshll.u32 %v592, 16
      %v686 = vrot.slane %v684, 6
      %v687 = vor.u32 %v683, %v686
      %v688 = vsel %vm598, %v679, %v687
      %v690 = vshrl.u32 %v456, 16
      %v692 = vrot.slane %v690, 5
      %v693 = vshll.u32 %v456, 16
      %v695 = vrot.slane %v693, 6
      %v696 = vor.u32 %v692, %v695
      %v697 = vrot.slane %v696, 4
      %v699 = vshrl.u32 %v593, 16
      %v701 = vrot.slane %v699, 5
      %v702 = vshll.u32 %v593, 16
      %v704 = vrot.slane %v702, 6
      %v705 = vor.u32 %v701, %v704
      %v706 = vsel %vm598, %v697, %v705
      %v708 = vshrl.u32 %v457, 16
      %v710 = vrot.slane %v708, 5
      %v711 = vshll.u32 %v457, 16
      %v713 = vrot.slane %v711, 6
      %v714 = vor.u32 %v710, %v713
      %v715 = vrot.slane %v714, 4
      %v717 = vshrl.u32 %v594, 16
      %v719 = vrot.slane %v717, 5
      %v720 = vshll.u32 %v594, 16
      %v722 = vrot.slane %v720, 6
      %v723 = vor.u32 %v719, %v722
      %v724 = vsel %vm598, %v715, %v723
      %v726 = vshrl.u32 %v458, 16
      %v728 = vrot.slane %v726, 5
      %v729 = vshll.u32 %v458, 16
      %v731 = vrot.slane %v729, 6
      %v732 = vor.u32 %v728, %v731
      %v733 = vrot.slane %v732, 4
      %v735 = vshrl.u32 %v595, 16
      %v737 = vrot.slane %v735, 5
      %v738 = vshll.u32 %v595, 16
      %v740 = vrot.slane %v738, 6
      %v741 = vor.u32 %v737, %v740
      %v742 = vsel %vm598, %v733, %v741
      %s743 = scalar_lea.vmem %s1, 48
      %v744 = vld [vmem:[%s743] sm:$0xf]
      %v745 = vld [vmem:[%s743 + $0x4] sm:$0xf]
      %v746 = vld [vmem:[%s743 + $0x8] sm:$0xf]
      %v747 = vld [vmem:[%s743 + $0xc] sm:$0xf]
      %v748 = vunpack.c.l.b16 %v616
      %v749 = vunpack.c.l.b16 %v634
      %v750 = vunpack.c.l.b16 %v652
      %v751 = vunpack.c.l.b16 %v670
      %v752 = vunpack.c.l.b16 %v688
      %v753 = vunpack.c.l.b16 %v706
      %v754 = vunpack.c.l.b16 %v724
      %v755 = vunpack.c.l.b16 %v742
      %v756 = vpack.c.b16 %v749, %v748
      %v757 = vpack.c.b16 %v751, %v750
      %v758 = vpack.c.b16 %v753, %v752
      %v759 = vpack.c.b16 %v755, %v754
      %v764 = vunpack.c.l.b16 %v744
      %v765 = vunpack.c.l.b16 %v745
      %v766 = vunpack.c.l.b16 %v746
      %v767 = vunpack.c.l.b16 %v747
      %v768 = vpack.c.b16 %v765, %v764
      %v769 = vpack.c.b16 %v767, %v766
      %v773 = vsel %vm336, %v756, 0
      %v776 = vsel %vm336, %v757, 0
      %v779 = vsel %vm336, %v758, 0
      %v782 = vsel %vm336, %v759, 0
      %784 = vmatpush.bf16.msra.mxu0 0
      %785 = vmatpush.bf16.msra.mxu0 0
      %786 = vmatpush.bf16.msra.mxu0 0
      %787 = vmatpush.bf16.msra.mxu0 0
      %788 = vmatpush.bf16.msra.mxu0 0
      %789 = vmatpush.bf16.msra.mxu0 0
      %790 = vmatpush.bf16.msra.mxu0 %v769
      %791 = vmatpush.bf16.msra.mxu0 %v768
      %792 = vmatmul.bf16.gmra.mxu0 %v773
      %v793 = vpop.f32.mrf.mxu0
      %v794 = vadd.f32 0.0, %v793
      %v795 = vpop.f32.mrf.mxu0
      %v796 = vadd.f32 0.0, %v795
      %797 = vmatmul.bf16.gmra.mxu0 %v776
      %v798 = vpop.f32.mrf.mxu0
      %v799 = vadd.f32 0.0, %v798
      %v800 = vpop.f32.mrf.mxu0
      %v801 = vadd.f32 0.0, %v800
      %802 = vmatmul.bf16.gmra.mxu0 %v779
      %v803 = vpop.f32.mrf.mxu0
      %v804 = vadd.f32 0.0, %v803
      %v805 = vpop.f32.mrf.mxu0
      %v806 = vadd.f32 0.0, %v805
      %807 = vmatmul.bf16.gmra.mxu0 %v782
      %v808 = vpop.f32.mrf.mxu0
      %v809 = vadd.f32 0.0, %v808
      %v810 = vpop.f32.mrf.mxu0
      %v811 = vadd.f32 0.0, %v810
      %812 = vdwg.mxu0
      %v813 = vadd.f32 %v580, %v794
      %v814 = vadd.f32 %v581, %v796
      %v815 = vadd.f32 %v582, %v799
      %v816 = vadd.f32 %v583, %v801
      %v817 = vadd.f32 %v584, %v804
      %v818 = vadd.f32 %v585, %v806
      %v819 = vadd.f32 %v586, %v809
      %v820 = vadd.f32 %v587, %v811
      %v821 = vld [vmem:[%s165] sm:$0xc]
      %v822 = vld [vmem:[%s165 + $0x8] sm:$0xc]
      %v823 = vld [vmem:[%s165 + $0x10] sm:$0xc]
      %v824 = vld [vmem:[%s165 + $0x18] sm:$0xc]
      %v825 = vld [vmem:[%s165 + $0x20] sm:$0xc]
      %v826 = vld [vmem:[%s165 + $0x28] sm:$0xc]
      %v827 = vld [vmem:[%s165 + $0x30] sm:$0xc]
      %v828 = vld [vmem:[%s165 + $0x38] sm:$0xc]
      %vm845 = vcmask 1041408
      %vm846 = vcmask 1045508
      %vm847 = vmor %vm845, %vm846
      %v848 = vrot.slane %v821, 6
      %v849 = vrot.slane %v848, 4
      %v850 = vrot.slane %v588, 6
      %v851 = vsel %vm847, %v849, %v850
      %v852 = vrot.slane %v822, 6
      %v853 = vrot.slane %v852, 4
      %v854 = vrot.slane %v589, 6
      %v855 = vsel %vm847, %v853, %v854
      %v856 = vrot.slane %v823, 6
      %v857 = vrot.slane %v856, 4
      %v858 = vrot.slane %v590, 6
      %v859 = vsel %vm847, %v857, %v858
      %v860 = vrot.slane %v824, 6
      %v861 = vrot.slane %v860, 4
      %v862 = vrot.slane %v591, 6
      %v863 = vsel %vm847, %v861, %v862
      %v864 = vrot.slane %v825, 6
      %v865 = vrot.slane %v864, 4
      %v866 = vrot.slane %v592, 6
      %v867 = vsel %vm847, %v865, %v866
      %v868 = vrot.slane %v826, 6
      %v869 = vrot.slane %v868, 4
      %v870 = vrot.slane %v593, 6
      %v871 = vsel %vm847, %v869, %v870
      %v872 = vrot.slane %v827, 6
      %v873 = vrot.slane %v872, 4
      %v874 = vrot.slane %v594, 6
      %v875 = vsel %vm847, %v873, %v874
      %v876 = vrot.slane %v828, 6
      %v877 = vrot.slane %v876, 4
      %v878 = vrot.slane %v595, 6
      %v879 = vsel %vm847, %v877, %v878
      %s880 = scalar_lea.vmem %s1, 64
      %v881 = vld [vmem:[%s880] sm:$0xf]
      %v882 = vld [vmem:[%s880 + $0x4] sm:$0xf]
      %v883 = vld [vmem:[%s880 + $0x8] sm:$0xf]
      %v884 = vld [vmem:[%s880 + $0xc] sm:$0xf]
      %v885 = vunpack.c.l.b16 %v851
      %v886 = vunpack.c.l.b16 %v855
      %v887 = vunpack.c.l.b16 %v859
      %v888 = vunpack.c.l.b16 %v863
      %v889 = vunpack.c.l.b16 %v867
      %v890 = vunpack.c.l.b16 %v871
      %v891 = vunpack.c.l.b16 %v875
      %v892 = vunpack.c.l.b16 %v879
      %v893 = vpack.c.b16 %v886, %v885
      %v894 = vpack.c.b16 %v888, %v887
      %v895 = vpack.c.b16 %v890, %v889
      %v896 = vpack.c.b16 %v892, %v891
      %v901 = vunpack.c.l.b16 %v881
      %v902 = vunpack.c.l.b16 %v882
      %v903 = vunpack.c.l.b16 %v883
      %v904 = vunpack.c.l.b16 %v884
      %v905 = vpack.c.b16 %v902, %v901
      %v906 = vpack.c.b16 %v904, %v903
      %v910 = vsel %vm336, %v893, 0
      %v913 = vsel %vm336, %v894, 0
      %v916 = vsel %vm336, %v895, 0
      %v919 = vsel %vm336, %v896, 0
      %921 = vmatpush.bf16.msra.mxu0 0
      %922 = vmatpush.bf16.msra.mxu0 0
      %923 = vmatpush.bf16.msra.mxu0 0
      %924 = vmatpush.bf16.msra.mxu0 0
      %925 = vmatpush.bf16.msra.mxu0 0
      %926 = vmatpush.bf16.msra.mxu0 0
      %927 = vmatpush.bf16.msra.mxu0 %v906
      %928 = vmatpush.bf16.msra.mxu0 %v905
      %929 = vmatmul.bf16.gmra.mxu0 %v910
      %v930 = vpop.f32.mrf.mxu0
      %v931 = vadd.f32 0.0, %v930
      %v932 = vpop.f32.mrf.mxu0
      %v933 = vadd.f32 0.0, %v932
      %934 = vmatmul.bf16.gmra.mxu0 %v913
      %v935 = vpop.f32.mrf.mxu0
      %v936 = vadd.f32 0.0, %v935
      %v937 = vpop.f32.mrf.mxu0
      %v938 = vadd.f32 0.0, %v937
      %939 = vmatmul.bf16.gmra.mxu0 %v916
      %v940 = vpop.f32.mrf.mxu0
      %v941 = vadd.f32 0.0, %v940
      %v942 = vpop.f32.mrf.mxu0
      %v943 = vadd.f32 0.0, %v942
      %944 = vmatmul.bf16.gmra.mxu0 %v919
      %v945 = vpop.f32.mrf.mxu0
      %v946 = vadd.f32 0.0, %v945
      %v947 = vpop.f32.mrf.mxu0
      %v948 = vadd.f32 0.0, %v947
      %949 = vdwg.mxu0
      %v950 = vadd.f32 %v813, %v931
      %v951 = vadd.f32 %v814, %v933
      %v952 = vadd.f32 %v815, %v936
      %v953 = vadd.f32 %v816, %v938
      %v954 = vadd.f32 %v817, %v941
      %v955 = vadd.f32 %v818, %v943
      %v956 = vadd.f32 %v819, %v946
      %v957 = vadd.f32 %v820, %v948
      %s958 = scalar_lea.vmem %s165, 8
      %v959 = vld [vmem:[%s958] sm:$0xf]
      %v960 = vld [vmem:[%s958 + $0x8] sm:$0xf]
      %v961 = vld [vmem:[%s958 + $0x10] sm:$0xf]
      %v962 = vld [vmem:[%s958 + $0x18] sm:$0xf]
      %v963 = vld [vmem:[%s958 + $0x20] sm:$0xf]
      %v964 = vld [vmem:[%s958 + $0x28] sm:$0xf]
      %v965 = vld [vmem:[%s958 + $0x30] sm:$0xf]
      %v966 = vld [vmem:[%s958 + $0x38] sm:$0xf]
      %s967 = scalar_lea.vmem %s1, 80
      %v968 = vld [vmem:[%s967] sm:$0xf]
      %v969 = vld [vmem:[%s967 + $0x4] sm:$0xf]
      %v970 = vld [vmem:[%s967 + $0x8] sm:$0xf]
      %v971 = vld [vmem:[%s967 + $0xc] sm:$0xf]
      %v980 = vunpack.c.l.b16 %v959
      %v981 = vunpack.c.l.b16 %v960
      %v982 = vunpack.c.l.b16 %v961
      %v983 = vunpack.c.l.b16 %v962
      %v984 = vunpack.c.l.b16 %v963
      %v985 = vunpack.c.l.b16 %v964
      %v986 = vunpack.c.l.b16 %v965
      %v987 = vunpack.c.l.b16 %v966
      %v988 = vpack.c.b16 %v981, %v980
      %v989 = vpack.c.b16 %v983, %v982
      %v990 = vpack.c.b16 %v985, %v984
      %v991 = vpack.c.b16 %v987, %v986
      %v996 = vunpack.c.l.b16 %v968
      %v997 = vunpack.c.l.b16 %v969
      %v998 = vunpack.c.l.b16 %v970
      %v999 = vunpack.c.l.b16 %v971
      %v1000 = vpack.c.b16 %v997, %v996
      %v1001 = vpack.c.b16 %v999, %v998
      %v1005 = vsel %vm336, %v988, 0
      %v1008 = vsel %vm336, %v989, 0
      %v1011 = vsel %vm336, %v990, 0
      %v1014 = vsel %vm336, %v991, 0
      %1016 = vmatpush.bf16.msra.mxu0 0
      %1017 = vmatpush.bf16.msra.mxu0 0
      %1018 = vmatpush.bf16.msra.mxu0 0
      %1019 = vmatpush.bf16.msra.mxu0 0
      %1020 = vmatpush.bf16.msra.mxu0 0
      %1021 = vmatpush.bf16.msra.mxu0 0
      %1022 = vmatpush.bf16.msra.mxu0 %v1001
      %1023 = vmatpush.bf16.msra.mxu0 %v1000
      %1024 = vmatmul.bf16.gmra.mxu0 %v1005
      %v1025 = vpop.f32.mrf.mxu0
      %v1026 = vadd.f32 0.0, %v1025
      %v1027 = vpop.f32.mrf.mxu0
      %v1028 = vadd.f32 0.0, %v1027
      %1029 = vmatmul.bf16.gmra.mxu0 %v1008
      %v1030 = vpop.f32.mrf.mxu0
      %v1031 = vadd.f32 0.0, %v1030
      %v1032 = vpop.f32.mrf.mxu0
      %v1033 = vadd.f32 0.0, %v1032
      %1034 = vmatmul.bf16.gmra.mxu0 %v1011
      %v1035 = vpop.f32.mrf.mxu0
      %v1036 = vadd.f32 0.0, %v1035
      %v1037 = vpop.f32.mrf.mxu0
      %v1038 = vadd.f32 0.0, %v1037
      %1039 = vmatmul.bf16.gmra.mxu0 %v1014
      %v1040 = vpop.f32.mrf.mxu0
      %v1041 = vadd.f32 0.0, %v1040
      %v1042 = vpop.f32.mrf.mxu0
      %v1043 = vadd.f32 0.0, %v1042
      %1044 = vdwg.mxu0
      %v1045 = vadd.f32 %v950, %v1026
      %v1046 = vadd.f32 %v951, %v1028
      %v1047 = vadd.f32 %v952, %v1031
      %v1048 = vadd.f32 %v953, %v1033
      %v1049 = vadd.f32 %v954, %v1036
      %v1050 = vadd.f32 %v955, %v1038
      %v1051 = vadd.f32 %v956, %v1041
      %v1052 = vadd.f32 %v957, %v1043
      %v1053 = vld [vmem:[%s958] sm:$0xf]
      %v1054 = vld [vmem:[%s958 + $0x4] sm:$0x1]
      %v1055 = vld [vmem:[%s958 + $0x8] sm:$0xf]
      %v1056 = vld [vmem:[%s958 + $0xc] sm:$0x1]
      %v1057 = vld [vmem:[%s958 + $0x10] sm:$0xf]
      %v1058 = vld [vmem:[%s958 + $0x14] sm:$0x1]
      %v1059 = vld [vmem:[%s958 + $0x18] sm:$0xf]
      %v1060 = vld [vmem:[%s958 + $0x1c] sm:$0x1]
      %v1061 = vld [vmem:[%s958 + $0x20] sm:$0xf]
      %v1062 = vld [vmem:[%s958 + $0x24] sm:$0x1]
      %v1063 = vld [vmem:[%s958 + $0x28] sm:$0xf]
      %v1064 = vld [vmem:[%s958 + $0x2c] sm:$0x1]
      %v1065 = vld [vmem:[%s958 + $0x30] sm:$0xf]
      %v1066 = vld [vmem:[%s958 + $0x34] sm:$0x1]
      %v1067 = vld [vmem:[%s958 + $0x38] sm:$0xf]
      %v1068 = vld [vmem:[%s958 + $0x3c] sm:$0x1]
      %v1070 = vshrl.u32 %v1053, 16
      %v1072 = vrot.slane %v1070, 4
      %v1073 = vshll.u32 %v1053, 16
      %v1075 = vrot.slane %v1073, 5
      %v1076 = vor.u32 %v1072, %v1075
      %v1077 = vrot.slane %v1076, 4
      %v1079 = vshll.u32 %v1054, 16
      %v1081 = vrot.slane %v1079, 5
      %v1082 = vsel %vm194, %v1077, %v1081
      %v1084 = vshrl.u32 %v1055, 16
      %v1086 = vrot.slane %v1084, 4
      %v1087 = vshll.u32 %v1055, 16
      %v1089 = vrot.slane %v1087, 5
      %v1090 = vor.u32 %v1086, %v1089
      %v1091 = vrot.slane %v1090, 4
      %v1093 = vshll.u32 %v1056, 16
      %v1095 = vrot.slane %v1093, 5
      %v1096 = vsel %vm194, %v1091, %v1095
      %v1098 = vshrl.u32 %v1057, 16
      %v1100 = vrot.slane %v1098, 4
      %v1101 = vshll.u32 %v1057, 16
      %v1103 = vrot.slane %v1101, 5
      %v1104 = vor.u32 %v1100, %v1103
      %v1105 = vrot.slane %v1104, 4
      %v1107 = vshll.u32 %v1058, 16
      %v1109 = vrot.slane %v1107, 5
      %v1110 = vsel %vm194, %v1105, %v1109
      %v1112 = vshrl.u32 %v1059, 16
      %v1114 = vrot.slane %v1112, 4
      %v1115 = vshll.u32 %v1059, 16
      %v1117 = vrot.slane %v1115, 5
      %v1118 = vor.u32 %v1114, %v1117
      %v1119 = vrot.slane %v1118, 4
      %v1121 = vshll.u32 %v1060, 16
      %v1123 = vrot.slane %v1121, 5
      %v1124 = vsel %vm194, %v1119, %v1123
      %v1126 = vshrl.u32 %v1061, 16
      %v1128 = vrot.slane %v1126, 4
      %v1129 = vshll.u32 %v1061, 16
      %v1131 = vrot.slane %v1129, 5
      %v1132 = vor.u32 %v1128, %v1131
      %v1133 = vrot.slane %v1132, 4
      %v1135 = vshll.u32 %v1062, 16
      %v1137 = vrot.slane %v1135, 5
      %v1138 = vsel %vm194, %v1133, %v1137
      %v1140 = vshrl.u32 %v1063, 16
      %v1142 = vrot.slane %v1140, 4
      %v1143 = vshll.u32 %v1063, 16
      %v1145 = vrot.slane %v1143, 5
      %v1146 = vor.u32 %v1142, %v1145
      %v1147 = vrot.slane %v1146, 4
      %v1149 = vshll.u32 %v1064, 16
      %v1151 = vrot.slane %v1149, 5
      %v1152 = vsel %vm194, %v1147, %v1151
      %v1154 = vshrl.u32 %v1065, 16
      %v1156 = vrot.slane %v1154, 4
      %v1157 = vshll.u32 %v1065, 16
      %v1159 = vrot.slane %v1157, 5
      %v1160 = vor.u32 %v1156, %v1159
      %v1161 = vrot.slane %v1160, 4
      %v1163 = vshll.u32 %v1066, 16
      %v1165 = vrot.slane %v1163, 5
      %v1166 = vsel %vm194, %v1161, %v1165
      %v1168 = vshrl.u32 %v1067, 16
      %v1170 = vrot.slane %v1168, 4
      %v1171 = vshll.u32 %v1067, 16
      %v1173 = vrot.slane %v1171, 5
      %v1174 = vor.u32 %v1170, %v1173
      %v1175 = vrot.slane %v1174, 4
      %v1177 = vshll.u32 %v1068, 16
      %v1179 = vrot.slane %v1177, 5
      %v1180 = vsel %vm194, %v1175, %v1179
      %s1181 = scalar_lea.vmem %s1, 96
      %v1182 = vld [vmem:[%s1181] sm:$0xf]
      %v1183 = vld [vmem:[%s1181 + $0x4] sm:$0xf]
      %v1184 = vld [vmem:[%s1181 + $0x8] sm:$0xf]
      %v1185 = vld [vmem:[%s1181 + $0xc] sm:$0xf]
      %v1186 = vunpack.c.l.b16 %v1082
      %v1187 = vunpack.c.l.b16 %v1096
      %v1188 = vunpack.c.l.b16 %v1110
      %v1189 = vunpack.c.l.b16 %v1124
      %v1190 = vunpack.c.l.b16 %v1138
      %v1191 = vunpack.c.l.b16 %v1152
      %v1192 = vunpack.c.l.b16 %v1166
      %v1193 = vunpack.c.l.b16 %v1180
      %v1194 = vpack.c.b16 %v1187, %v1186
      %v1195 = vpack.c.b16 %v1189, %v1188
      %v1196 = vpack.c.b16 %v1191, %v1190
      %v1197 = vpack.c.b16 %v1193, %v1192
      %v1202 = vunpack.c.l.b16 %v1182
      %v1203 = vunpack.c.l.b16 %v1183
      %v1204 = vunpack.c.l.b16 %v1184
      %v1205 = vunpack.c.l.b16 %v1185
      %v1206 = vpack.c.b16 %v1203, %v1202
      %v1207 = vpack.c.b16 %v1205, %v1204
      %v1211 = vsel %vm336, %v1194, 0
      %v1214 = vsel %vm336, %v1195, 0
      %v1217 = vsel %vm336, %v1196, 0
      %v1220 = vsel %vm336, %v1197, 0
      %1222 = vmatpush.bf16.msra.mxu0 0
      %1223 = vmatpush.bf16.msra.mxu0 0
      %1224 = vmatpush.bf16.msra.mxu0 0
      %1225 = vmatpush.bf16.msra.mxu0 0
      %1226 = vmatpush.bf16.msra.mxu0 0
      %1227 = vmatpush.bf16.msra.mxu0 0
      %1228 = vmatpush.bf16.msra.mxu0 %v1207
      %1229 = vmatpush.bf16.msra.mxu0 %v1206
      %1230 = vmatmul.bf16.gmra.mxu0 %v1211
      %v1231 = vpop.f32.mrf.mxu0
      %v1232 = vadd.f32 0.0, %v1231
      %v1233 = vpop.f32.mrf.mxu0
      %v1234 = vadd.f32 0.0, %v1233
      %1235 = vmatmul.bf16.gmra.mxu0 %v1214
      %v1236 = vpop.f32.mrf.mxu0
      %v1237 = vadd.f32 0.0, %v1236
      %v1238 = vpop.f32.mrf.mxu0
      %v1239 = vadd.f32 0.0, %v1238
      %1240 = vmatmul.bf16.gmra.mxu0 %v1217
      %v1241 = vpop.f32.mrf.mxu0
      %v1242 = vadd.f32 0.0, %v1241
      %v1243 = vpop.f32.mrf.mxu0
      %v1244 = vadd.f32 0.0, %v1243
      %1245 = vmatmul.bf16.gmra.mxu0 %v1220
      %v1246 = vpop.f32.mrf.mxu0
      %v1247 = vadd.f32 0.0, %v1246
      %v1248 = vpop.f32.mrf.mxu0
      %v1249 = vadd.f32 0.0, %v1248
      %1250 = vdwg.mxu0
      %v1251 = vadd.f32 %v1045, %v1232
      %v1252 = vadd.f32 %v1046, %v1234
      %v1253 = vadd.f32 %v1047, %v1237
      %v1254 = vadd.f32 %v1048, %v1239
      %v1255 = vadd.f32 %v1049, %v1242
      %v1256 = vadd.f32 %v1050, %v1244
      %v1257 = vadd.f32 %v1051, %v1247
      %v1258 = vadd.f32 %v1052, %v1249
      %v1259 = vld [vmem:[%s958] sm:$0xe]
      %v1260 = vld [vmem:[%s958 + $0x8] sm:$0xe]
      %v1261 = vld [vmem:[%s958 + $0x10] sm:$0xe]
      %v1262 = vld [vmem:[%s958 + $0x18] sm:$0xe]
      %v1263 = vld [vmem:[%s958 + $0x20] sm:$0xe]
      %v1264 = vld [vmem:[%s958 + $0x28] sm:$0xe]
      %v1265 = vld [vmem:[%s958 + $0x30] sm:$0xe]
      %v1266 = vld [vmem:[%s958 + $0x38] sm:$0xe]
      %v1283 = vrot.slane %v1259, 5
      %v1284 = vrot.slane %v1283, 4
      %v1285 = vrot.slane %v1054, 5
      %v1286 = vsel %vm477, %v1284, %v1285
      %v1287 = vrot.slane %v1260, 5
      %v1288 = vrot.slane %v1287, 4
      %v1289 = vrot.slane %v1056, 5
      %v1290 = vsel %vm477, %v1288, %v1289
      %v1291 = vrot.slane %v1261, 5
      %v1292 = vrot.slane %v1291, 4
      %v1293 = vrot.slane %v1058, 5
      %v1294 = vsel %vm477, %v1292, %v1293
      %v1295 = vrot.slane %v1262, 5
      %v1296 = vrot.slane %v1295, 4
      %v1297 = vrot.slane %v1060, 5
      %v1298 = vsel %vm477, %v1296, %v1297
      %v1299 = vrot.slane %v1263, 5
      %v1300 = vrot.slane %v1299, 4
      %v1301 = vrot.slane %v1062, 5
      %v1302 = vsel %vm477, %v1300, %v1301
      %v1303 = vrot.slane %v1264, 5
      %v1304 = vrot.slane %v1303, 4
      %v1305 = vrot.slane %v1064, 5
      %v1306 = vsel %vm477, %v1304, %v1305
      %v1307 = vrot.slane %v1265, 5
      %v1308 = vrot.slane %v1307, 4
      %v1309 = vrot.slane %v1066, 5
      %v1310 = vsel %vm477, %v1308, %v1309
      %v1311 = vrot.slane %v1266, 5
      %v1312 = vrot.slane %v1311, 4
      %v1313 = vrot.slane %v1068, 5
      %v1314 = vsel %vm477, %v1312, %v1313
      %s1315 = scalar_lea.vmem %s1, 112
      %v1316 = vld [vmem:[%s1315] sm:$0xf]
      %v1317 = vld [vmem:[%s1315 + $0x4] sm:$0xf]
      %v1318 = vld [vmem:[%s1315 + $0x8] sm:$0xf]
      %v1319 = vld [vmem:[%s1315 + $0xc] sm:$0xf]
      %v1320 = vunpack.c.l.b16 %v1286
      %v1321 = vunpack.c.l.b16 %v1290
      %v1322 = vunpack.c.l.b16 %v1294
      %v1323 = vunpack.c.l.b16 %v1298
      %v1324 = vunpack.c.l.b16 %v1302
      %v1325 = vunpack.c.l.b16 %v1306
      %v1326 = vunpack.c.l.b16 %v1310
      %v1327 = vunpack.c.l.b16 %v1314
      %v1328 = vpack.c.b16 %v1321, %v1320
      %v1329 = vpack.c.b16 %v1323, %v1322
      %v1330 = vpack.c.b16 %v1325, %v1324
      %v1331 = vpack.c.b16 %v1327, %v1326
      %v1336 = vunpack.c.l.b16 %v1316
      %v1337 = vunpack.c.l.b16 %v1317
      %v1338 = vunpack.c.l.b16 %v1318
      %v1339 = vunpack.c.l.b16 %v1319
      %v1340 = vpack.c.b16 %v1337, %v1336
      %v1341 = vpack.c.b16 %v1339, %v1338
      %v1345 = vsel %vm336, %v1328, 0
      %v1348 = vsel %vm336, %v1329, 0
      %v1351 = vsel %vm336, %v1330, 0
      %v1354 = vsel %vm336, %v1331, 0
      %1356 = vmatpush.bf16.msra.mxu0 0
      %1357 = vmatpush.bf16.msra.mxu0 0
      %1358 = vmatpush.bf16.msra.mxu0 0
      %1359 = vmatpush.bf16.msra.mxu0 0
      %1360 = vmatpush.bf16.msra.mxu0 0
      %1361 = vmatpush.bf16.msra.mxu0 0
      %1362 = vmatpush.bf16.msra.mxu0 %v1341
      %1363 = vmatpush.bf16.msra.mxu0 %v1340
      %1364 = vmatmul.bf16.gmra.mxu0 %v1345
      %v1365 = vpop.f32.mrf.mxu0
      %v1366 = vadd.f32 0.0, %v1365
      %v1367 = vpop.f32.mrf.mxu0
      %v1368 = vadd.f32 0.0, %v1367
      %1369 = vmatmul.bf16.gmra.mxu0 %v1348
      %v1370 = vpop.f32.mrf.mxu0
      %v1371 = vadd.f32 0.0, %v1370
      %v1372 = vpop.f32.mrf.mxu0
      %v1373 = vadd.f32 0.0, %v1372
      %1374 = vmatmul.bf16.gmra.mxu0 %v1351
      %v1375 = vpop.f32.mrf.mxu0
      %v1376 = vadd.f32 0.0, %v1375
      %v1377 = vpop.f32.mrf.mxu0
      %v1378 = vadd.f32 0.0, %v1377
      %1379 = vmatmul.bf16.gmra.mxu0 %v1354
      %v1380 = vpop.f32.mrf.mxu0
      %v1381 = vadd.f32 0.0, %v1380
      %v1382 = vpop.f32.mrf.mxu0
      %v1383 = vadd.f32 0.0, %v1382
      %1384 = vdwg.mxu0
      %v1385 = vadd.f32 %v1251, %v1366
      %v1386 = vadd.f32 %v1252, %v1368
      %v1387 = vadd.f32 %v1253, %v1371
      %v1388 = vadd.f32 %v1254, %v1373
      %v1389 = vadd.f32 %v1255, %v1376
      %v1390 = vadd.f32 %v1256, %v1378
      %v1391 = vadd.f32 %v1257, %v1381
      %v1392 = vadd.f32 %v1258, %v1383
      %v1393 = vld [vmem:[%s958 + $0x4] sm:$0x3]
      %v1394 = vld [vmem:[%s958 + $0xc] sm:$0x3]
      %v1395 = vld [vmem:[%s958 + $0x14] sm:$0x3]
      %v1396 = vld [vmem:[%s958 + $0x1c] sm:$0x3]
      %v1397 = vld [vmem:[%s958 + $0x24] sm:$0x3]
      %v1398 = vld [vmem:[%s958 + $0x2c] sm:$0x3]
      %v1399 = vld [vmem:[%s958 + $0x34] sm:$0x3]
      %v1400 = vld [vmem:[%s958 + $0x3c] sm:$0x3]
      %v1402 = vshrl.u32 %v1259, 16
      %v1404 = vrot.slane %v1402, 5
      %v1405 = vshll.u32 %v1259, 16
      %v1407 = vrot.slane %v1405, 6
      %v1408 = vor.u32 %v1404, %v1407
      %v1409 = vrot.slane %v1408, 4
      %v1411 = vshrl.u32 %v1393, 16
      %v1413 = vrot.slane %v1411, 5
      %v1414 = vshll.u32 %v1393, 16
      %v1416 = vrot.slane %v1414, 6
      %v1417 = vor.u32 %v1413, %v1416
      %v1418 = vsel %vm598, %v1409, %v1417
      %v1420 = vshrl.u32 %v1260, 16
      %v1422 = vrot.slane %v1420, 5
      %v1423 = vshll.u32 %v1260, 16
      %v1425 = vrot.slane %v1423, 6
      %v1426 = vor.u32 %v1422, %v1425
      %v1427 = vrot.slane %v1426, 4
      %v1429 = vshrl.u32 %v1394, 16
      %v1431 = vrot.slane %v1429, 5
      %v1432 = vshll.u32 %v1394, 16
      %v1434 = vrot.slane %v1432, 6
      %v1435 = vor.u32 %v1431, %v1434
      %v1436 = vsel %vm598, %v1427, %v1435
      %v1438 = vshrl.u32 %v1261, 16
      %v1440 = vrot.slane %v1438, 5
      %v1441 = vshll.u32 %v1261, 16
      %v1443 = vrot.slane %v1441, 6
      %v1444 = vor.u32 %v1440, %v1443
      %v1445 = vrot.slane %v1444, 4
      %v1447 = vshrl.u32 %v1395, 16
      %v1449 = vrot.slane %v1447, 5
      %v1450 = vshll.u32 %v1395, 16
      %v1452 = vrot.slane %v1450, 6
      %v1453 = vor.u32 %v1449, %v1452
      %v1454 = vsel %vm598, %v1445, %v1453
      %v1456 = vshrl.u32 %v1262, 16
      %v1458 = vrot.slane %v1456, 5
      %v1459 = vshll.u32 %v1262, 16
      %v1461 = vrot.slane %v1459, 6
      %v1462 = vor.u32 %v1458, %v1461
      %v1463 = vrot.slane %v1462, 4
      %v1465 = vshrl.u32 %v1396, 16
      %v1467 = vrot.slane %v1465, 5
      %v1468 = vshll.u32 %v1396, 16
      %v1470 = vrot.slane %v1468, 6
      %v1471 = vor.u32 %v1467, %v1470
      %v1472 = vsel %vm598, %v1463, %v1471
      %v1474 = vshrl.u32 %v1263, 16
      %v1476 = vrot.slane %v1474, 5
      %v1477 = vshll.u32 %v1263, 16
      %v1479 = vrot.slane %v1477, 6
      %v1480 = vor.u32 %v1476, %v1479
      %v1481 = vrot.slane %v1480, 4
      %v1483 = vshrl.u32 %v1397, 16
      %v1485 = vrot.slane %v1483, 5
      %v1486 = vshll.u32 %v1397, 16
      %v1488 = vrot.slane %v1486, 6
      %v1489 = vor.u32 %v1485, %v1488
      %v1490 = vsel %vm598, %v1481, %v1489
      %v1492 = vshrl.u32 %v1264, 16
      %v1494 = vrot.slane %v1492, 5
      %v1495 = vshll.u32 %v1264, 16
      %v1497 = vrot.slane %v1495, 6
      %v1498 = vor.u32 %v1494, %v1497
      %v1499 = vrot.slane %v1498, 4
      %v1501 = vshrl.u32 %v1398, 16
      %v1503 = vrot.slane %v1501, 5
      %v1504 = vshll.u32 %v1398, 16
      %v1506 = vrot.slane %v1504, 6
      %v1507 = vor.u32 %v1503, %v1506
      %v1508 = vsel %vm598, %v1499, %v1507
      %v1510 = vshrl.u32 %v1265, 16
      %v1512 = vrot.slane %v1510, 5
      %v1513 = vshll.u32 %v1265, 16
      %v1515 = vrot.slane %v1513, 6
      %v1516 = vor.u32 %v1512, %v1515
      %v1517 = vrot.slane %v1516, 4
      %v1519 = vshrl.u32 %v1399, 16
      %v1521 = vrot.slane %v1519, 5
      %v1522 = vshll.u32 %v1399, 16
      %v1524 = vrot.slane %v1522, 6
      %v1525 = vor.u32 %v1521, %v1524
      %v1526 = vsel %vm598, %v1517, %v1525
      %v1528 = vshrl.u32 %v1266, 16
      %v1530 = vrot.slane %v1528, 5
      %v1531 = vshll.u32 %v1266, 16
      %v1533 = vrot.slane %v1531, 6
      %v1534 = vor.u32 %v1530, %v1533
      %v1535 = vrot.slane %v1534, 4
      %v1537 = vshrl.u32 %v1400, 16
      %v1539 = vrot.slane %v1537, 5
      %v1540 = vshll.u32 %v1400, 16
      %v1542 = vrot.slane %v1540, 6
      %v1543 = vor.u32 %v1539, %v1542
      %v1544 = vsel %vm598, %v1535, %v1543
      %s1545 = scalar_lea.vmem %s1, 128
      %v1546 = vld [vmem:[%s1545] sm:$0xf]
      %v1547 = vld [vmem:[%s1545 + $0x4] sm:$0xf]
      %v1548 = vld [vmem:[%s1545 + $0x8] sm:$0xf]
      %v1549 = vld [vmem:[%s1545 + $0xc] sm:$0xf]
      %v1550 = vunpack.c.l.b16 %v1418
      %v1551 = vunpack.c.l.b16 %v1436
      %v1552 = vunpack.c.l.b16 %v1454
      %v1553 = vunpack.c.l.b16 %v1472
      %v1554 = vunpack.c.l.b16 %v1490
      %v1555 = vunpack.c.l.b16 %v1508
      %v1556 = vunpack.c.l.b16 %v1526
      %v1557 = vunpack.c.l.b16 %v1544
      %v1558 = vpack.c.b16 %v1551, %v1550
      %v1559 = vpack.c.b16 %v1553, %v1552
      %v1560 = vpack.c.b16 %v1555, %v1554
      %v1561 = vpack.c.b16 %v1557, %v1556
      %v1566 = vunpack.c.l.b16 %v1546
      %v1567 = vunpack.c.l.b16 %v1547
      %v1568 = vunpack.c.l.b16 %v1548
      %v1569 = vunpack.c.l.b16 %v1549
      %v1570 = vpack.c.b16 %v1567, %v1566
      %v1571 = vpack.c.b16 %v1569, %v1568
      %v1575 = vsel %vm336, %v1558, 0
      %v1578 = vsel %vm336, %v1559, 0
      %v1581 = vsel %vm336, %v1560, 0
      %v1584 = vsel %vm336, %v1561, 0
      %1586 = vmatpush.bf16.msra.mxu0 0
      %1587 = vmatpush.bf16.msra.mxu0 0
      %1588 = vmatpush.bf16.msra.mxu0 0
      %1589 = vmatpush.bf16.msra.mxu0 0
      %1590 = vmatpush.bf16.msra.mxu0 0
      %1591 = vmatpush.bf16.msra.mxu0 0
      %1592 = vmatpush.bf16.msra.mxu0 %v1571
      %1593 = vmatpush.bf16.msra.mxu0 %v1570
      %1594 = vmatmul.bf16.gmra.mxu0 %v1575
      %v1595 = vpop.f32.mrf.mxu0
      %v1596 = vadd.f32 0.0, %v1595
      %v1597 = vpop.f32.mrf.mxu0
      %v1598 = vadd.f32 0.0, %v1597
      %1599 = vmatmul.bf16.gmra.mxu0 %v1578
      %v1600 = vpop.f32.mrf.mxu0
      %v1601 = vadd.f32 0.0, %v1600
      %v1602 = vpop.f32.mrf.mxu0
      %v1603 = vadd.f32 0.0, %v1602
      %1604 = vmatmul.bf16.gmra.mxu0 %v1581
      %v1605 = vpop.f32.mrf.mxu0
      %v1606 = vadd.f32 0.0, %v1605
      %v1607 = vpop.f32.mrf.mxu0
      %v1608 = vadd.f32 0.0, %v1607
      %1609 = vmatmul.bf16.gmra.mxu0 %v1584
      %v1610 = vpop.f32.mrf.mxu0
      %v1611 = vadd.f32 0.0, %v1610
      %v1612 = vpop.f32.mrf.mxu0
      %v1613 = vadd.f32 0.0, %v1612
      %1614 = vdwg.mxu0
      %v1615 = vadd.f32 %v1385, %v1596
      %v1616 = vadd.f32 %v1386, %v1598
      %v1617 = vadd.f32 %v1387, %v1601
      %v1618 = vadd.f32 %v1388, %v1603
      %v1619 = vadd.f32 %v1389, %v1606
      %v1620 = vadd.f32 %v1390, %v1608
      %v1621 = vadd.f32 %v1391, %v1611
      %v1622 = vadd.f32 %v1392, %v1613
      %v1623 = vld [vmem:[%s958] sm:$0xc]
      %v1624 = vld [vmem:[%s958 + $0x8] sm:$0xc]
      %v1625 = vld [vmem:[%s958 + $0x10] sm:$0xc]
      %v1626 = vld [vmem:[%s958 + $0x18] sm:$0xc]
      %v1627 = vld [vmem:[%s958 + $0x20] sm:$0xc]
      %v1628 = vld [vmem:[%s958 + $0x28] sm:$0xc]
      %v1629 = vld [vmem:[%s958 + $0x30] sm:$0xc]
      %v1630 = vld [vmem:[%s958 + $0x38] sm:$0xc]
      %v1647 = vrot.slane %v1623, 6
      %v1648 = vrot.slane %v1647, 4
      %v1649 = vrot.slane %v1393, 6
      %v1650 = vsel %vm847, %v1648, %v1649
      %v1651 = vrot.slane %v1624, 6
      %v1652 = vrot.slane %v1651, 4
      %v1653 = vrot.slane %v1394, 6
      %v1654 = vsel %vm847, %v1652, %v1653
      %v1655 = vrot.slane %v1625, 6
      %v1656 = vrot.slane %v1655, 4
      %v1657 = vrot.slane %v1395, 6
      %v1658 = vsel %vm847, %v1656, %v1657
      %v1659 = vrot.slane %v1626, 6
      %v1660 = vrot.slane %v1659, 4
      %v1661 = vrot.slane %v1396, 6
      %v1662 = vsel %vm847, %v1660, %v1661
      %v1663 = vrot.slane %v1627, 6
      %v1664 = vrot.slane %v1663, 4
      %v1665 = vrot.slane %v1397, 6
      %v1666 = vsel %vm847, %v1664, %v1665
      %v1667 = vrot.slane %v1628, 6
      %v1668 = vrot.slane %v1667, 4
      %v1669 = vrot.slane %v1398, 6
      %v1670 = vsel %vm847, %v1668, %v1669
      %v1671 = vrot.slane %v1629, 6
      %v1672 = vrot.slane %v1671, 4
      %v1673 = vrot.slane %v1399, 6
      %v1674 = vsel %vm847, %v1672, %v1673
      %v1675 = vrot.slane %v1630, 6
      %v1676 = vrot.slane %v1675, 4
      %v1677 = vrot.slane %v1400, 6
      %v1678 = vsel %vm847, %v1676, %v1677
      %s1679 = scalar_lea.vmem %s1, 144
      %v1680 = vld [vmem:[%s1679] sm:$0xf]
      %v1681 = vld [vmem:[%s1679 + $0x4] sm:$0xf]
      %v1682 = vld [vmem:[%s1679 + $0x8] sm:$0xf]
      %v1683 = vld [vmem:[%s1679 + $0xc] sm:$0xf]
      %v1684 = vunpack.c.l.b16 %v1650
      %v1685 = vunpack.c.l.b16 %v1654
      %v1686 = vunpack.c.l.b16 %v1658
      %v1687 = vunpack.c.l.b16 %v1662
      %v1688 = vunpack.c.l.b16 %v1666
      %v1689 = vunpack.c.l.b16 %v1670
      %v1690 = vunpack.c.l.b16 %v1674
      %v1691 = vunpack.c.l.b16 %v1678
      %v1692 = vpack.c.b16 %v1685, %v1684
      %v1693 = vpack.c.b16 %v1687, %v1686
      %v1694 = vpack.c.b16 %v1689, %v1688
      %v1695 = vpack.c.b16 %v1691, %v1690
      %v1700 = vunpack.c.l.b16 %v1680
      %v1701 = vunpack.c.l.b16 %v1681
      %v1702 = vunpack.c.l.b16 %v1682
      %v1703 = vunpack.c.l.b16 %v1683
      %v1704 = vpack.c.b16 %v1701, %v1700
      %v1705 = vpack.c.b16 %v1703, %v1702
      %v1709 = vsel %vm336, %v1692, 0
      %v1712 = vsel %vm336, %v1693, 0
      %v1715 = vsel %vm336, %v1694, 0
      %v1718 = vsel %vm336, %v1695, 0
      %1720 = vmatpush.bf16.msra.mxu0 0
      %1721 = vmatpush.bf16.msra.mxu0 0
      %1722 = vmatpush.bf16.msra.mxu0 0
      %1723 = vmatpush.bf16.msra.mxu0 0
      %1724 = vmatpush.bf16.msra.mxu0 0
      %1725 = vmatpush.bf16.msra.mxu0 0
      %1726 = vmatpush.bf16.msra.mxu0 %v1705
      %1727 = vmatpush.bf16.msra.mxu0 %v1704
      %1728 = vmatmul.bf16.gmra.mxu0 %v1709
      %v1729 = vpop.f32.mrf.mxu0
      %v1730 = vadd.f32 0.0, %v1729
      %v1731 = vpop.f32.mrf.mxu0
      %v1732 = vadd.f32 0.0, %v1731
      %1733 = vmatmul.bf16.gmra.mxu0 %v1712
      %v1734 = vpop.f32.mrf.mxu0
      %v1735 = vadd.f32 0.0, %v1734
      %v1736 = vpop.f32.mrf.mxu0
      %v1737 = vadd.f32 0.0, %v1736
      %1738 = vmatmul.bf16.gmra.mxu0 %v1715
      %v1739 = vpop.f32.mrf.mxu0
      %v1740 = vadd.f32 0.0, %v1739
      %v1741 = vpop.f32.mrf.mxu0
      %v1742 = vadd.f32 0.0, %v1741
      %1743 = vmatmul.bf16.gmra.mxu0 %v1718
      %v1744 = vpop.f32.mrf.mxu0
      %v1745 = vadd.f32 0.0, %v1744
      %v1746 = vpop.f32.mrf.mxu0
      %v1747 = vadd.f32 0.0, %v1746
      %1748 = vdwg.mxu0
      %v1749 = vadd.f32 %v1615, %v1730
      %v1750 = vadd.f32 %v1616, %v1732
      %v1751 = vadd.f32 %v1617, %v1735
      %v1752 = vadd.f32 %v1618, %v1737
      %v1753 = vadd.f32 %v1619, %v1740
      %v1754 = vadd.f32 %v1620, %v1742
      %v1755 = vadd.f32 %v1621, %v1745
      %v1756 = vadd.f32 %v1622, %v1747
      %s1757 = scalar_lea.vmem %s165, 16
      %v1758 = vld [vmem:[%s1757] sm:$0xf]
      %v1759 = vld [vmem:[%s1757 + $0x8] sm:$0xf]
      %v1760 = vld [vmem:[%s1757 + $0x10] sm:$0xf]
      %v1761 = vld [vmem:[%s1757 + $0x18] sm:$0xf]
      %v1762 = vld [vmem:[%s1757 + $0x20] sm:$0xf]
      %v1763 = vld [vmem:[%s1757 + $0x28] sm:$0xf]
      %v1764 = vld [vmem:[%s1757 + $0x30] sm:$0xf]
      %v1765 = vld [vmem:[%s1757 + $0x38] sm:$0xf]
      %s1766 = scalar_lea.vmem %s1, 160
      %v1767 = vld [vmem:[%s1766] sm:$0xf]
      %v1768 = vld [vmem:[%s1766 + $0x4] sm:$0xf]
      %v1769 = vld [vmem:[%s1766 + $0x8] sm:$0xf]
      %v1770 = vld [vmem:[%s1766 + $0xc] sm:$0xf]
      %v1779 = vunpack.c.l.b16 %v1758
      %v1780 = vunpack.c.l.b16 %v1759
      %v1781 = vunpack.c.l.b16 %v1760
      %v1782 = vunpack.c.l.b16 %v1761
      %v1783 = vunpack.c.l.b16 %v1762
      %v1784 = vunpack.c.l.b16 %v1763
      %v1785 = vunpack.c.l.b16 %v1764
      %v1786 = vunpack.c.l.b16 %v1765
      %v1787 = vpack.c.b16 %v1780, %v1779
      %v1788 = vpack.c.b16 %v1782, %v1781
      %v1789 = vpack.c.b16 %v1784, %v1783
      %v1790 = vpack.c.b16 %v1786, %v1785
      %v1795 = vunpack.c.l.b16 %v1767
      %v1796 = vunpack.c.l.b16 %v1768
      %v1797 = vunpack.c.l.b16 %v1769
      %v1798 = vunpack.c.l.b16 %v1770
      %v1799 = vpack.c.b16 %v1796, %v1795
      %v1800 = vpack.c.b16 %v1798, %v1797
      %v1804 = vsel %vm336, %v1787, 0
      %v1807 = vsel %vm336, %v1788, 0
      %v1810 = vsel %vm336, %v1789, 0
      %v1813 = vsel %vm336, %v1790, 0
      %1815 = vmatpush.bf16.msra.mxu0 0
      %1816 = vmatpush.bf16.msra.mxu0 0
      %1817 = vmatpush.bf16.msra.mxu0 0
      %1818 = vmatpush.bf16.msra.mxu0 0
      %1819 = vmatpush.bf16.msra.mxu0 0
      %1820 = vmatpush.bf16.msra.mxu0 0
      %1821 = vmatpush.bf16.msra.mxu0 %v1800
      %1822 = vmatpush.bf16.msra.mxu0 %v1799
      %1823 = vmatmul.bf16.gmra.mxu0 %v1804
      %v1824 = vpop.f32.mrf.mxu0
      %v1825 = vadd.f32 0.0, %v1824
      %v1826 = vpop.f32.mrf.mxu0
      %v1827 = vadd.f32 0.0, %v1826
      %1828 = vmatmul.bf16.gmra.mxu0 %v1807
      %v1829 = vpop.f32.mrf.mxu0
      %v1830 = vadd.f32 0.0, %v1829
      %v1831 = vpop.f32.mrf.mxu0
      %v1832 = vadd.f32 0.0, %v1831
      %1833 = vmatmul.bf16.gmra.mxu0 %v1810
      %v1834 = vpop.f32.mrf.mxu0
      %v1835 = vadd.f32 0.0, %v1834
      %v1836 = vpop.f32.mrf.mxu0
      %v1837 = vadd.f32 0.0, %v1836
      %1838 = vmatmul.bf16.gmra.mxu0 %v1813
      %v1839 = vpop.f32.mrf.mxu0
      %v1840 = vadd.f32 0.0, %v1839
      %v1841 = vpop.f32.mrf.mxu0
      %v1842 = vadd.f32 0.0, %v1841
      %1843 = vdwg.mxu0
      %v1844 = vadd.f32 %v1749, %v1825
      %v1845 = vadd.f32 %v1750, %v1827
      %v1846 = vadd.f32 %v1751, %v1830
      %v1847 = vadd.f32 %v1752, %v1832
      %v1848 = vadd.f32 %v1753, %v1835
      %v1849 = vadd.f32 %v1754, %v1837
      %v1850 = vadd.f32 %v1755, %v1840
      %v1851 = vadd.f32 %v1756, %v1842
      %v1852 = vld [vmem:[%s1757] sm:$0xf]
      %v1853 = vld [vmem:[%s1757 + $0x4] sm:$0x1]
      %v1854 = vld [vmem:[%s1757 + $0x8] sm:$0xf]
      %v1855 = vld [vmem:[%s1757 + $0xc] sm:$0x1]
      %v1856 = vld [vmem:[%s1757 + $0x10] sm:$0xf]
      %v1857 = vld [vmem:[%s1757 + $0x14] sm:$0x1]
      %v1858 = vld [vmem:[%s1757 + $0x18] sm:$0xf]
      %v1859 = vld [vmem:[%s1757 + $0x1c] sm:$0x1]
      %v1860 = vld [vmem:[%s1757 + $0x20] sm:$0xf]
      %v1861 = vld [vmem:[%s1757 + $0x24] sm:$0x1]
      %v1862 = vld [vmem:[%s1757 + $0x28] sm:$0xf]
      %v1863 = vld [vmem:[%s1757 + $0x2c] sm:$0x1]
      %v1864 = vld [vmem:[%s1757 + $0x30] sm:$0xf]
      %v1865 = vld [vmem:[%s1757 + $0x34] sm:$0x1]
      %v1866 = vld [vmem:[%s1757 + $0x38] sm:$0xf]
      %v1867 = vld [vmem:[%s1757 + $0x3c] sm:$0x1]
      %v1869 = vshrl.u32 %v1852, 16
      %v1871 = vrot.slane %v1869, 4
      %v1872 = vshll.u32 %v1852, 16
      %v1874 = vrot.slane %v1872, 5
      %v1875 = vor.u32 %v1871, %v1874
      %v1876 = vrot.slane %v1875, 4
      %v1878 = vshll.u32 %v1853, 16
      %v1880 = vrot.slane %v1878, 5
      %v1881 = vsel %vm194, %v1876, %v1880
      %v1883 = vshrl.u32 %v1854, 16
      %v1885 = vrot.slane %v1883, 4
      %v1886 = vshll.u32 %v1854, 16
      %v1888 = vrot.slane %v1886, 5
      %v1889 = vor.u32 %v1885, %v1888
      %v1890 = vrot.slane %v1889, 4
      %v1892 = vshll.u32 %v1855, 16
      %v1894 = vrot.slane %v1892, 5
      %v1895 = vsel %vm194, %v1890, %v1894
      %v1897 = vshrl.u32 %v1856, 16
      %v1899 = vrot.slane %v1897, 4
      %v1900 = vshll.u32 %v1856, 16
      %v1902 = vrot.slane %v1900, 5
      %v1903 = vor.u32 %v1899, %v1902
      %v1904 = vrot.slane %v1903, 4
      %v1906 = vshll.u32 %v1857, 16
      %v1908 = vrot.slane %v1906, 5
      %v1909 = vsel %vm194, %v1904, %v1908
      %v1911 = vshrl.u32 %v1858, 16
      %v1913 = vrot.slane %v1911, 4
      %v1914 = vshll.u32 %v1858, 16
      %v1916 = vrot.slane %v1914, 5
      %v1917 = vor.u32 %v1913, %v1916
      %v1918 = vrot.slane %v1917, 4
      %v1920 = vshll.u32 %v1859, 16
      %v1922 = vrot.slane %v1920, 5
      %v1923 = vsel %vm194, %v1918, %v1922
      %v1925 = vshrl.u32 %v1860, 16
      %v1927 = vrot.slane %v1925, 4
      %v1928 = vshll.u32 %v1860, 16
      %v1930 = vrot.slane %v1928, 5
      %v1931 = vor.u32 %v1927, %v1930
      %v1932 = vrot.slane %v1931, 4
      %v1934 = vshll.u32 %v1861, 16
      %v1936 = vrot.slane %v1934, 5
      %v1937 = vsel %vm194, %v1932, %v1936
      %v1939 = vshrl.u32 %v1862, 16
      %v1941 = vrot.slane %v1939, 4
      %v1942 = vshll.u32 %v1862, 16
      %v1944 = vrot.slane %v1942, 5
      %v1945 = vor.u32 %v1941, %v1944
      %v1946 = vrot.slane %v1945, 4
      %v1948 = vshll.u32 %v1863, 16
      %v1950 = vrot.slane %v1948, 5
      %v1951 = vsel %vm194, %v1946, %v1950
      %v1953 = vshrl.u32 %v1864, 16
      %v1955 = vrot.slane %v1953, 4
      %v1956 = vshll.u32 %v1864, 16
      %v1958 = vrot.slane %v1956, 5
      %v1959 = vor.u32 %v1955, %v1958
      %v1960 = vrot.slane %v1959, 4
      %v1962 = vshll.u32 %v1865, 16
      %v1964 = vrot.slane %v1962, 5
      %v1965 = vsel %vm194, %v1960, %v1964
      %v1967 = vshrl.u32 %v1866, 16
      %v1969 = vrot.slane %v1967, 4
      %v1970 = vshll.u32 %v1866, 16
      %v1972 = vrot.slane %v1970, 5
      %v1973 = vor.u32 %v1969, %v1972
      %v1974 = vrot.slane %v1973, 4
      %v1976 = vshll.u32 %v1867, 16
      %v1978 = vrot.slane %v1976, 5
      %v1979 = vsel %vm194, %v1974, %v1978
      %s1980 = scalar_lea.vmem %s1, 176
      %v1981 = vld [vmem:[%s1980] sm:$0xf]
      %v1982 = vld [vmem:[%s1980 + $0x4] sm:$0xf]
      %v1983 = vld [vmem:[%s1980 + $0x8] sm:$0xf]
      %v1984 = vld [vmem:[%s1980 + $0xc] sm:$0xf]
      %v1985 = vunpack.c.l.b16 %v1881
      %v1986 = vunpack.c.l.b16 %v1895
      %v1987 = vunpack.c.l.b16 %v1909
      %v1988 = vunpack.c.l.b16 %v1923
      %v1989 = vunpack.c.l.b16 %v1937
      %v1990 = vunpack.c.l.b16 %v1951
      %v1991 = vunpack.c.l.b16 %v1965
      %v1992 = vunpack.c.l.b16 %v1979
      %v1993 = vpack.c.b16 %v1986, %v1985
      %v1994 = vpack.c.b16 %v1988, %v1987
      %v1995 = vpack.c.b16 %v1990, %v1989
      %v1996 = vpack.c.b16 %v1992, %v1991
      %v2001 = vunpack.c.l.b16 %v1981
      %v2002 = vunpack.c.l.b16 %v1982
      %v2003 = vunpack.c.l.b16 %v1983
      %v2004 = vunpack.c.l.b16 %v1984
      %v2005 = vpack.c.b16 %v2002, %v2001
      %v2006 = vpack.c.b16 %v2004, %v2003
      %v2010 = vsel %vm336, %v1993, 0
      %v2013 = vsel %vm336, %v1994, 0
      %v2016 = vsel %vm336, %v1995, 0
      %v2019 = vsel %vm336, %v1996, 0
      %2021 = vmatpush.bf16.msra.mxu0 0
      %2022 = vmatpush.bf16.msra.mxu0 0
      %2023 = vmatpush.bf16.msra.mxu0 0
      %2024 = vmatpush.bf16.msra.mxu0 0
      %2025 = vmatpush.bf16.msra.mxu0 0
      %2026 = vmatpush.bf16.msra.mxu0 0
      %2027 = vmatpush.bf16.msra.mxu0 %v2006
      %2028 = vmatpush.bf16.msra.mxu0 %v2005
      %2029 = vmatmul.bf16.gmra.mxu0 %v2010
      %v2030 = vpop.f32.mrf.mxu0
      %v2031 = vadd.f32 0.0, %v2030
      %v2032 = vpop.f32.mrf.mxu0
      %v2033 = vadd.f32 0.0, %v2032
      %2034 = vmatmul.bf16.gmra.mxu0 %v2013
      %v2035 = vpop.f32.mrf.mxu0
      %v2036 = vadd.f32 0.0, %v2035
      %v2037 = vpop.f32.mrf.mxu0
      %v2038 = vadd.f32 0.0, %v2037
      %2039 = vmatmul.bf16.gmra.mxu0 %v2016
      %v2040 = vpop.f32.mrf.mxu0
      %v2041 = vadd.f32 0.0, %v2040
      %v2042 = vpop.f32.mrf.mxu0
      %v2043 = vadd.f32 0.0, %v2042
      %2044 = vmatmul.bf16.gmra.mxu0 %v2019
      %v2045 = vpop.f32.mrf.mxu0
      %v2046 = vadd.f32 0.0, %v2045
      %v2047 = vpop.f32.mrf.mxu0
      %v2048 = vadd.f32 0.0, %v2047
      %2049 = vdwg.mxu0
      %v2050 = vadd.f32 %v1844, %v2031
      %v2051 = vadd.f32 %v1845, %v2033
      %v2052 = vadd.f32 %v1846, %v2036
      %v2053 = vadd.f32 %v1847, %v2038
      %v2054 = vadd.f32 %v1848, %v2041
      %v2055 = vadd.f32 %v1849, %v2043
      %v2056 = vadd.f32 %v1850, %v2046
      %v2057 = vadd.f32 %v1851, %v2048
      %v2058 = vld [vmem:[%s1757] sm:$0xe]
      %v2059 = vld [vmem:[%s1757 + $0x8] sm:$0xe]
      %v2060 = vld [vmem:[%s1757 + $0x10] sm:$0xe]
      %v2061 = vld [vmem:[%s1757 + $0x18] sm:$0xe]
      %v2062 = vld [vmem:[%s1757 + $0x20] sm:$0xe]
      %v2063 = vld [vmem:[%s1757 + $0x28] sm:$0xe]
      %v2064 = vld [vmem:[%s1757 + $0x30] sm:$0xe]
      %v2065 = vld [vmem:[%s1757 + $0x38] sm:$0xe]
      %v2082 = vrot.slane %v2058, 5
      %v2083 = vrot.slane %v2082, 4
      %v2084 = vrot.slane %v1853, 5
      %v2085 = vsel %vm477, %v2083, %v2084
      %v2086 = vrot.slane %v2059, 5
      %v2087 = vrot.slane %v2086, 4
      %v2088 = vrot.slane %v1855, 5
      %v2089 = vsel %vm477, %v2087, %v2088
      %v2090 = vrot.slane %v2060, 5
      %v2091 = vrot.slane %v2090, 4
      %v2092 = vrot.slane %v1857, 5
      %v2093 = vsel %vm477, %v2091, %v2092
      %v2094 = vrot.slane %v2061, 5
      %v2095 = vrot.slane %v2094, 4
      %v2096 = vrot.slane %v1859, 5
      %v2097 = vsel %vm477, %v2095, %v2096
      %v2098 = vrot.slane %v2062, 5
      %v2099 = vrot.slane %v2098, 4
      %v2100 = vrot.slane %v1861, 5
      %v2101 = vsel %vm477, %v2099, %v2100
      %v2102 = vrot.slane %v2063, 5
      %v2103 = vrot.slane %v2102, 4
      %v2104 = vrot.slane %v1863, 5
      %v2105 = vsel %vm477, %v2103, %v2104
      %v2106 = vrot.slane %v2064, 5
      %v2107 = vrot.slane %v2106, 4
      %v2108 = vrot.slane %v1865, 5
      %v2109 = vsel %vm477, %v2107, %v2108
      %v2110 = vrot.slane %v2065, 5
      %v2111 = vrot.slane %v2110, 4
      %v2112 = vrot.slane %v1867, 5
      %v2113 = vsel %vm477, %v2111, %v2112
      %s2114 = scalar_lea.vmem %s1, 192
      %v2115 = vld [vmem:[%s2114] sm:$0xf]
      %v2116 = vld [vmem:[%s2114 + $0x4] sm:$0xf]
      %v2117 = vld [vmem:[%s2114 + $0x8] sm:$0xf]
      %v2118 = vld [vmem:[%s2114 + $0xc] sm:$0xf]
      %v2119 = vunpack.c.l.b16 %v2085
      %v2120 = vunpack.c.l.b16 %v2089
      %v2121 = vunpack.c.l.b16 %v2093
      %v2122 = vunpack.c.l.b16 %v2097
      %v2123 = vunpack.c.l.b16 %v2101
      %v2124 = vunpack.c.l.b16 %v2105
      %v2125 = vunpack.c.l.b16 %v2109
      %v2126 = vunpack.c.l.b16 %v2113
      %v2127 = vpack.c.b16 %v2120, %v2119
      %v2128 = vpack.c.b16 %v2122, %v2121
      %v2129 = vpack.c.b16 %v2124, %v2123
      %v2130 = vpack.c.b16 %v2126, %v2125
      %v2135 = vunpack.c.l.b16 %v2115
      %v2136 = vunpack.c.l.b16 %v2116
      %v2137 = vunpack.c.l.b16 %v2117
      %v2138 = vunpack.c.l.b16 %v2118
      %v2139 = vpack.c.b16 %v2136, %v2135
      %v2140 = vpack.c.b16 %v2138, %v2137
      %v2144 = vsel %vm336, %v2127, 0
      %v2147 = vsel %vm336, %v2128, 0
      %v2150 = vsel %vm336, %v2129, 0
      %v2153 = vsel %vm336, %v2130, 0
      %2155 = vmatpush.bf16.msra.mxu0 0
      %2156 = vmatpush.bf16.msra.mxu0 0
      %2157 = vmatpush.bf16.msra.mxu0 0
      %2158 = vmatpush.bf16.msra.mxu0 0
      %2159 = vmatpush.bf16.msra.mxu0 0
      %2160 = vmatpush.bf16.msra.mxu0 0
      %2161 = vmatpush.bf16.msra.mxu0 %v2140
      %2162 = vmatpush.bf16.msra.mxu0 %v2139
      %2163 = vmatmul.bf16.gmra.mxu0 %v2144
      %v2164 = vpop.f32.mrf.mxu0
      %v2165 = vadd.f32 0.0, %v2164
      %v2166 = vpop.f32.mrf.mxu0
      %v2167 = vadd.f32 0.0, %v2166
      %2168 = vmatmul.bf16.gmra.mxu0 %v2147
      %v2169 = vpop.f32.mrf.mxu0
      %v2170 = vadd.f32 0.0, %v2169
      %v2171 = vpop.f32.mrf.mxu0
      %v2172 = vadd.f32 0.0, %v2171
      %2173 = vmatmul.bf16.gmra.mxu0 %v2150
      %v2174 = vpop.f32.mrf.mxu0
      %v2175 = vadd.f32 0.0, %v2174
      %v2176 = vpop.f32.mrf.mxu0
      %v2177 = vadd.f32 0.0, %v2176
      %2178 = vmatmul.bf16.gmra.mxu0 %v2153
      %v2179 = vpop.f32.mrf.mxu0
      %v2180 = vadd.f32 0.0, %v2179
      %v2181 = vpop.f32.mrf.mxu0
      %v2182 = vadd.f32 0.0, %v2181
      %2183 = vdwg.mxu0
      %v2184 = vadd.f32 %v2050, %v2165
      %v2185 = vadd.f32 %v2051, %v2167
      %v2186 = vadd.f32 %v2052, %v2170
      %v2187 = vadd.f32 %v2053, %v2172
      %v2188 = vadd.f32 %v2054, %v2175
      %v2189 = vadd.f32 %v2055, %v2177
      %v2190 = vadd.f32 %v2056, %v2180
      %v2191 = vadd.f32 %v2057, %v2182
      %v2192 = vld [vmem:[%s1757 + $0x4] sm:$0x3]
      %v2193 = vld [vmem:[%s1757 + $0xc] sm:$0x3]
      %v2194 = vld [vmem:[%s1757 + $0x14] sm:$0x3]
      %v2195 = vld [vmem:[%s1757 + $0x1c] sm:$0x3]
      %v2196 = vld [vmem:[%s1757 + $0x24] sm:$0x3]
      %v2197 = vld [vmem:[%s1757 + $0x2c] sm:$0x3]
      %v2198 = vld [vmem:[%s1757 + $0x34] sm:$0x3]
      %v2199 = vld [vmem:[%s1757 + $0x3c] sm:$0x3]
      %v2201 = vshrl.u32 %v2058, 16
      %v2203 = vrot.slane %v2201, 5
      %v2204 = vshll.u32 %v2058, 16
      %v2206 = vrot.slane %v2204, 6
      %v2207 = vor.u32 %v2203, %v2206
      %v2208 = vrot.slane %v2207, 4
      %v2210 = vshrl.u32 %v2192, 16
      %v2212 = vrot.slane %v2210, 5
      %v2213 = vshll.u32 %v2192, 16
      %v2215 = vrot.slane %v2213, 6
      %v2216 = vor.u32 %v2212, %v2215
      %v2217 = vsel %vm598, %v2208, %v2216
      %v2219 = vshrl.u32 %v2059, 16
      %v2221 = vrot.slane %v2219, 5
      %v2222 = vshll.u32 %v2059, 16
      %v2224 = vrot.slane %v2222, 6
      %v2225 = vor.u32 %v2221, %v2224
      %v2226 = vrot.slane %v2225, 4
      %v2228 = vshrl.u32 %v2193, 16
      %v2230 = vrot.slane %v2228, 5
      %v2231 = vshll.u32 %v2193, 16
      %v2233 = vrot.slane %v2231, 6
      %v2234 = vor.u32 %v2230, %v2233
      %v2235 = vsel %vm598, %v2226, %v2234
      %v2237 = vshrl.u32 %v2060, 16
      %v2239 = vrot.slane %v2237, 5
      %v2240 = vshll.u32 %v2060, 16
      %v2242 = vrot.slane %v2240, 6
      %v2243 = vor.u32 %v2239, %v2242
      %v2244 = vrot.slane %v2243, 4
      %v2246 = vshrl.u32 %v2194, 16
      %v2248 = vrot.slane %v2246, 5
      %v2249 = vshll.u32 %v2194, 16
      %v2251 = vrot.slane %v2249, 6
      %v2252 = vor.u32 %v2248, %v2251
      %v2253 = vsel %vm598, %v2244, %v2252
      %v2255 = vshrl.u32 %v2061, 16
      %v2257 = vrot.slane %v2255, 5
      %v2258 = vshll.u32 %v2061, 16
      %v2260 = vrot.slane %v2258, 6
      %v2261 = vor.u32 %v2257, %v2260
      %v2262 = vrot.slane %v2261, 4
      %v2264 = vshrl.u32 %v2195, 16
      %v2266 = vrot.slane %v2264, 5
      %v2267 = vshll.u32 %v2195, 16
      %v2269 = vrot.slane %v2267, 6
      %v2270 = vor.u32 %v2266, %v2269
      %v2271 = vsel %vm598, %v2262, %v2270
      %v2273 = vshrl.u32 %v2062, 16
      %v2275 = vrot.slane %v2273, 5
      %v2276 = vshll.u32 %v2062, 16
      %v2278 = vrot.slane %v2276, 6
      %v2279 = vor.u32 %v2275, %v2278
      %v2280 = vrot.slane %v2279, 4
      %v2282 = vshrl.u32 %v2196, 16
      %v2284 = vrot.slane %v2282, 5
      %v2285 = vshll.u32 %v2196, 16
      %v2287 = vrot.slane %v2285, 6
      %v2288 = vor.u32 %v2284, %v2287
      %v2289 = vsel %vm598, %v2280, %v2288
      %v2291 = vshrl.u32 %v2063, 16
      %v2293 = vrot.slane %v2291, 5
      %v2294 = vshll.u32 %v2063, 16
      %v2296 = vrot.slane %v2294, 6
      %v2297 = vor.u32 %v2293, %v2296
      %v2298 = vrot.slane %v2297, 4
      %v2300 = vshrl.u32 %v2197, 16
      %v2302 = vrot.slane %v2300, 5
      %v2303 = vshll.u32 %v2197, 16
      %v2305 = vrot.slane %v2303, 6
      %v2306 = vor.u32 %v2302, %v2305
      %v2307 = vsel %vm598, %v2298, %v2306
      %v2309 = vshrl.u32 %v2064, 16
      %v2311 = vrot.slane %v2309, 5
      %v2312 = vshll.u32 %v2064, 16
      %v2314 = vrot.slane %v2312, 6
      %v2315 = vor.u32 %v2311, %v2314
      %v2316 = vrot.slane %v2315, 4
      %v2318 = vshrl.u32 %v2198, 16
      %v2320 = vrot.slane %v2318, 5
      %v2321 = vshll.u32 %v2198, 16
      %v2323 = vrot.slane %v2321, 6
      %v2324 = vor.u32 %v2320, %v2323
      %v2325 = vsel %vm598, %v2316, %v2324
      %v2327 = vshrl.u32 %v2065, 16
      %v2329 = vrot.slane %v2327, 5
      %v2330 = vshll.u32 %v2065, 16
      %v2332 = vrot.slane %v2330, 6
      %v2333 = vor.u32 %v2329, %v2332
      %v2334 = vrot.slane %v2333, 4
      %v2336 = vshrl.u32 %v2199, 16
      %v2338 = vrot.slane %v2336, 5
      %v2339 = vshll.u32 %v2199, 16
      %v2341 = vrot.slane %v2339, 6
      %v2342 = vor.u32 %v2338, %v2341
      %v2343 = vsel %vm598, %v2334, %v2342
      %s2344 = scalar_lea.vmem %s1, 208
      %v2345 = vld [vmem:[%s2344] sm:$0xf]
      %v2346 = vld [vmem:[%s2344 + $0x4] sm:$0xf]
      %v2347 = vld [vmem:[%s2344 + $0x8] sm:$0xf]
      %v2348 = vld [vmem:[%s2344 + $0xc] sm:$0xf]
      %v2349 = vunpack.c.l.b16 %v2217
      %v2350 = vunpack.c.l.b16 %v2235
      %v2351 = vunpack.c.l.b16 %v2253
      %v2352 = vunpack.c.l.b16 %v2271
      %v2353 = vunpack.c.l.b16 %v2289
      %v2354 = vunpack.c.l.b16 %v2307
      %v2355 = vunpack.c.l.b16 %v2325
      %v2356 = vunpack.c.l.b16 %v2343
      %v2357 = vpack.c.b16 %v2350, %v2349
      %v2358 = vpack.c.b16 %v2352, %v2351
      %v2359 = vpack.c.b16 %v2354, %v2353
      %v2360 = vpack.c.b16 %v2356, %v2355
      %v2365 = vunpack.c.l.b16 %v2345
      %v2366 = vunpack.c.l.b16 %v2346
      %v2367 = vunpack.c.l.b16 %v2347
      %v2368 = vunpack.c.l.b16 %v2348
      %v2369 = vpack.c.b16 %v2366, %v2365
      %v2370 = vpack.c.b16 %v2368, %v2367
      %v2374 = vsel %vm336, %v2357, 0
      %v2377 = vsel %vm336, %v2358, 0
      %v2380 = vsel %vm336, %v2359, 0
      %v2383 = vsel %vm336, %v2360, 0
      %2385 = vmatpush.bf16.msra.mxu0 0
      %2386 = vmatpush.bf16.msra.mxu0 0
      %2387 = vmatpush.bf16.msra.mxu0 0
      %2388 = vmatpush.bf16.msra.mxu0 0
      %2389 = vmatpush.bf16.msra.mxu0 0
      %2390 = vmatpush.bf16.msra.mxu0 0
      %2391 = vmatpush.bf16.msra.mxu0 %v2370
      %2392 = vmatpush.bf16.msra.mxu0 %v2369
      %2393 = vmatmul.bf16.gmra.mxu0 %v2374
      %v2394 = vpop.f32.mrf.mxu0
      %v2395 = vadd.f32 0.0, %v2394
      %v2396 = vpop.f32.mrf.mxu0
      %v2397 = vadd.f32 0.0, %v2396
      %2398 = vmatmul.bf16.gmra.mxu0 %v2377
      %v2399 = vpop.f32.mrf.mxu0
      %v2400 = vadd.f32 0.0, %v2399
      %v2401 = vpop.f32.mrf.mxu0
      %v2402 = vadd.f32 0.0, %v2401
      %2403 = vmatmul.bf16.gmra.mxu0 %v2380
      %v2404 = vpop.f32.mrf.mxu0
      %v2405 = vadd.f32 0.0, %v2404
      %v2406 = vpop.f32.mrf.mxu0
      %v2407 = vadd.f32 0.0, %v2406
      %2408 = vmatmul.bf16.gmra.mxu0 %v2383
      %v2409 = vpop.f32.mrf.mxu0
      %v2410 = vadd.f32 0.0, %v2409
      %v2411 = vpop.f32.mrf.mxu0
      %v2412 = vadd.f32 0.0, %v2411
      %2413 = vdwg.mxu0
      %v2414 = vadd.f32 %v2184, %v2395
      %v2415 = vadd.f32 %v2185, %v2397
      %v2416 = vadd.f32 %v2186, %v2400
      %v2417 = vadd.f32 %v2187, %v2402
      %v2418 = vadd.f32 %v2188, %v2405
      %v2419 = vadd.f32 %v2189, %v2407
      %v2420 = vadd.f32 %v2190, %v2410
      %v2421 = vadd.f32 %v2191, %v2412
      %v2422 = vld [vmem:[%s1757] sm:$0xc]
      %v2423 = vld [vmem:[%s1757 + $0x8] sm:$0xc]
      %v2424 = vld [vmem:[%s1757 + $0x10] sm:$0xc]
      %v2425 = vld [vmem:[%s1757 + $0x18] sm:$0xc]
      %v2426 = vld [vmem:[%s1757 + $0x20] sm:$0xc]
      %v2427 = vld [vmem:[%s1757 + $0x28] sm:$0xc]
      %v2428 = vld [vmem:[%s1757 + $0x30] sm:$0xc]
      %v2429 = vld [vmem:[%s1757 + $0x38] sm:$0xc]
      %v2446 = vrot.slane %v2422, 6
      %v2447 = vrot.slane %v2446, 4
      %v2448 = vrot.slane %v2192, 6
      %v2449 = vsel %vm847, %v2447, %v2448
      %v2450 = vrot.slane %v2423, 6
      %v2451 = vrot.slane %v2450, 4
      %v2452 = vrot.slane %v2193, 6
      %v2453 = vsel %vm847, %v2451, %v2452
      %v2454 = vrot.slane %v2424, 6
      %v2455 = vrot.slane %v2454, 4
      %v2456 = vrot.slane %v2194, 6
      %v2457 = vsel %vm847, %v2455, %v2456
      %v2458 = vrot.slane %v2425, 6
      %v2459 = vrot.slane %v2458, 4
      %v2460 = vrot.slane %v2195, 6
      %v2461 = vsel %vm847, %v2459, %v2460
      %v2462 = vrot.slane %v2426, 6
      %v2463 = vrot.slane %v2462, 4
      %v2464 = vrot.slane %v2196, 6
      %v2465 = vsel %vm847, %v2463, %v2464
      %v2466 = vrot.slane %v2427, 6
      %v2467 = vrot.slane %v2466, 4
      %v2468 = vrot.slane %v2197, 6
      %v2469 = vsel %vm847, %v2467, %v2468
      %v2470 = vrot.slane %v2428, 6
      %v2471 = vrot.slane %v2470, 4
      %v2472 = vrot.slane %v2198, 6
      %v2473 = vsel %vm847, %v2471, %v2472
      %v2474 = vrot.slane %v2429, 6
      %v2475 = vrot.slane %v2474, 4
      %v2476 = vrot.slane %v2199, 6
      %v2477 = vsel %vm847, %v2475, %v2476
      %s2478 = scalar_lea.vmem %s1, 224
      %v2479 = vld [vmem:[%s2478] sm:$0xf]
      %v2480 = vld [vmem:[%s2478 + $0x4] sm:$0xf]
      %v2481 = vld [vmem:[%s2478 + $0x8] sm:$0xf]
      %v2482 = vld [vmem:[%s2478 + $0xc] sm:$0xf]
      %v2483 = vunpack.c.l.b16 %v2449
      %v2484 = vunpack.c.l.b16 %v2453
      %v2485 = vunpack.c.l.b16 %v2457
      %v2486 = vunpack.c.l.b16 %v2461
      %v2487 = vunpack.c.l.b16 %v2465
      %v2488 = vunpack.c.l.b16 %v2469
      %v2489 = vunpack.c.l.b16 %v2473
      %v2490 = vunpack.c.l.b16 %v2477
      %v2491 = vpack.c.b16 %v2484, %v2483
      %v2492 = vpack.c.b16 %v2486, %v2485
      %v2493 = vpack.c.b16 %v2488, %v2487
      %v2494 = vpack.c.b16 %v2490, %v2489
      %v2499 = vunpack.c.l.b16 %v2479
      %v2500 = vunpack.c.l.b16 %v2480
      %v2501 = vunpack.c.l.b16 %v2481
      %v2502 = vunpack.c.l.b16 %v2482
      %v2503 = vpack.c.b16 %v2500, %v2499
      %v2504 = vpack.c.b16 %v2502, %v2501
      %v2508 = vsel %vm336, %v2491, 0
      %v2511 = vsel %vm336, %v2492, 0
      %v2514 = vsel %vm336, %v2493, 0
      %v2517 = vsel %vm336, %v2494, 0
      %2519 = vmatpush.bf16.msra.mxu0 0
      %2520 = vmatpush.bf16.msra.mxu0 0
      %2521 = vmatpush.bf16.msra.mxu0 0
      %2522 = vmatpush.bf16.msra.mxu0 0
      %2523 = vmatpush.bf16.msra.mxu0 0
      %2524 = vmatpush.bf16.msra.mxu0 0
      %2525 = vmatpush.bf16.msra.mxu0 %v2504
      %2526 = vmatpush.bf16.msra.mxu0 %v2503
      %2527 = vmatmul.bf16.gmra.mxu0 %v2508
      %v2528 = vpop.f32.mrf.mxu0
      %v2529 = vadd.f32 0.0, %v2528
      %v2530 = vpop.f32.mrf.mxu0
      %v2531 = vadd.f32 0.0, %v2530
      %2532 = vmatmul.bf16.gmra.mxu0 %v2511
      %v2533 = vpop.f32.mrf.mxu0
      %v2534 = vadd.f32 0.0, %v2533
      %v2535 = vpop.f32.mrf.mxu0
      %v2536 = vadd.f32 0.0, %v2535
      %2537 = vmatmul.bf16.gmra.mxu0 %v2514
      %v2538 = vpop.f32.mrf.mxu0
      %v2539 = vadd.f32 0.0, %v2538
      %v2540 = vpop.f32.mrf.mxu0
      %v2541 = vadd.f32 0.0, %v2540
      %2542 = vmatmul.bf16.gmra.mxu0 %v2517
      %v2543 = vpop.f32.mrf.mxu0
      %v2544 = vadd.f32 0.0, %v2543
      %v2545 = vpop.f32.mrf.mxu0
      %v2546 = vadd.f32 0.0, %v2545
      %2547 = vdwg.mxu0
      %v2548 = vadd.f32 %v2414, %v2529
      %v2549 = vadd.f32 %v2415, %v2531
      %v2550 = vadd.f32 %v2416, %v2534
      %v2551 = vadd.f32 %v2417, %v2536
      %v2552 = vadd.f32 %v2418, %v2539
      %v2553 = vadd.f32 %v2419, %v2541
      %v2554 = vadd.f32 %v2420, %v2544
      %v2555 = vadd.f32 %v2421, %v2546
      %s2556 = scalar_lea.vmem %s165, 24
      %v2557 = vld [vmem:[%s2556] sm:$0xf]
      %v2558 = vld [vmem:[%s2556 + $0x8] sm:$0xf]
      %v2559 = vld [vmem:[%s2556 + $0x10] sm:$0xf]
      %v2560 = vld [vmem:[%s2556 + $0x18] sm:$0xf]
      %v2561 = vld [vmem:[%s2556 + $0x20] sm:$0xf]
      %v2562 = vld [vmem:[%s2556 + $0x28] sm:$0xf]
      %v2563 = vld [vmem:[%s2556 + $0x30] sm:$0xf]
      %v2564 = vld [vmem:[%s2556 + $0x38] sm:$0xf]
      %s2565 = scalar_lea.vmem %s1, 240
      %v2566 = vld [vmem:[%s2565] sm:$0xf]
      %v2567 = vld [vmem:[%s2565 + $0x4] sm:$0xf]
      %v2568 = vld [vmem:[%s2565 + $0x8] sm:$0xf]
      %v2569 = vld [vmem:[%s2565 + $0xc] sm:$0xf]
      %v2578 = vunpack.c.l.b16 %v2557
      %v2579 = vunpack.c.l.b16 %v2558
      %v2580 = vunpack.c.l.b16 %v2559
      %v2581 = vunpack.c.l.b16 %v2560
      %v2582 = vunpack.c.l.b16 %v2561
      %v2583 = vunpack.c.l.b16 %v2562
      %v2584 = vunpack.c.l.b16 %v2563
      %v2585 = vunpack.c.l.b16 %v2564
      %v2586 = vpack.c.b16 %v2579, %v2578
      %v2587 = vpack.c.b16 %v2581, %v2580
      %v2588 = vpack.c.b16 %v2583, %v2582
      %v2589 = vpack.c.b16 %v2585, %v2584
      %v2594 = vunpack.c.l.b16 %v2566
      %v2595 = vunpack.c.l.b16 %v2567
      %v2596 = vunpack.c.l.b16 %v2568
      %v2597 = vunpack.c.l.b16 %v2569
      %v2598 = vpack.c.b16 %v2595, %v2594
      %v2599 = vpack.c.b16 %v2597, %v2596
      %v2603 = vsel %vm336, %v2586, 0
      %v2606 = vsel %vm336, %v2587, 0
      %v2609 = vsel %vm336, %v2588, 0
      %v2612 = vsel %vm336, %v2589, 0
      %2614 = vmatpush.bf16.msra.mxu0 0
      %2615 = vmatpush.bf16.msra.mxu0 0
      %2616 = vmatpush.bf16.msra.mxu0 0
      %2617 = vmatpush.bf16.msra.mxu0 0
      %2618 = vmatpush.bf16.msra.mxu0 0
      %2619 = vmatpush.bf16.msra.mxu0 0
      %2620 = vmatpush.bf16.msra.mxu0 %v2599
      %2621 = vmatpush.bf16.msra.mxu0 %v2598
      %2622 = vmatmul.bf16.gmra.mxu0 %v2603
      %v2623 = vpop.f32.mrf.mxu0
      %v2624 = vadd.f32 0.0, %v2623
      %v2625 = vpop.f32.mrf.mxu0
      %v2626 = vadd.f32 0.0, %v2625
      %2627 = vmatmul.bf16.gmra.mxu0 %v2606
      %v2628 = vpop.f32.mrf.mxu0
      %v2629 = vadd.f32 0.0, %v2628
      %v2630 = vpop.f32.mrf.mxu0
      %v2631 = vadd.f32 0.0, %v2630
      %2632 = vmatmul.bf16.gmra.mxu0 %v2609
      %v2633 = vpop.f32.mrf.mxu0
      %v2634 = vadd.f32 0.0, %v2633
      %v2635 = vpop.f32.mrf.mxu0
      %v2636 = vadd.f32 0.0, %v2635
      %2637 = vmatmul.bf16.gmra.mxu0 %v2612
      %v2638 = vpop.f32.mrf.mxu0
      %v2639 = vadd.f32 0.0, %v2638
      %v2640 = vpop.f32.mrf.mxu0
      %v2641 = vadd.f32 0.0, %v2640
      %2642 = vdwg.mxu0
      %v2643 = vadd.f32 %v2548, %v2624
      %v2644 = vadd.f32 %v2549, %v2626
      %v2645 = vadd.f32 %v2550, %v2629
      %v2646 = vadd.f32 %v2551, %v2631
      %v2647 = vadd.f32 %v2552, %v2634
      %v2648 = vadd.f32 %v2553, %v2636
      %v2649 = vadd.f32 %v2554, %v2639
      %v2650 = vadd.f32 %v2555, %v2641
      %v2651 = vld [vmem:[%s2556] sm:$0xf]
      %v2652 = vld [vmem:[%s2556 + $0x4] sm:$0x1]
      %v2653 = vld [vmem:[%s2556 + $0x8] sm:$0xf]
      %v2654 = vld [vmem:[%s2556 + $0xc] sm:$0x1]
      %v2655 = vld [vmem:[%s2556 + $0x10] sm:$0xf]
      %v2656 = vld [vmem:[%s2556 + $0x14] sm:$0x1]
      %v2657 = vld [vmem:[%s2556 + $0x18] sm:$0xf]
      %v2658 = vld [vmem:[%s2556 + $0x1c] sm:$0x1]
      %v2659 = vld [vmem:[%s2556 + $0x20] sm:$0xf]
      %v2660 = vld [vmem:[%s2556 + $0x24] sm:$0x1]
      %v2661 = vld [vmem:[%s2556 + $0x28] sm:$0xf]
      %v2662 = vld [vmem:[%s2556 + $0x2c] sm:$0x1]
      %v2663 = vld [vmem:[%s2556 + $0x30] sm:$0xf]
      %v2664 = vld [vmem:[%s2556 + $0x34] sm:$0x1]
      %v2665 = vld [vmem:[%s2556 + $0x38] sm:$0xf]
      %v2666 = vld [vmem:[%s2556 + $0x3c] sm:$0x1]
      %v2668 = vshrl.u32 %v2651, 16
      %v2670 = vrot.slane %v2668, 4
      %v2671 = vshll.u32 %v2651, 16
      %v2673 = vrot.slane %v2671, 5
      %v2674 = vor.u32 %v2670, %v2673
      %v2675 = vrot.slane %v2674, 4
      %v2677 = vshll.u32 %v2652, 16
      %v2679 = vrot.slane %v2677, 5
      %v2680 = vsel %vm194, %v2675, %v2679
      %v2682 = vshrl.u32 %v2653, 16
      %v2684 = vrot.slane %v2682, 4
      %v2685 = vshll.u32 %v2653, 16
      %v2687 = vrot.slane %v2685, 5
      %v2688 = vor.u32 %v2684, %v2687
      %v2689 = vrot.slane %v2688, 4
      %v2691 = vshll.u32 %v2654, 16
      %v2693 = vrot.slane %v2691, 5
      %v2694 = vsel %vm194, %v2689, %v2693
      %v2696 = vshrl.u32 %v2655, 16
      %v2698 = vrot.slane %v2696, 4
      %v2699 = vshll.u32 %v2655, 16
      %v2701 = vrot.slane %v2699, 5
      %v2702 = vor.u32 %v2698, %v2701
      %v2703 = vrot.slane %v2702, 4
      %v2705 = vshll.u32 %v2656, 16
      %v2707 = vrot.slane %v2705, 5
      %v2708 = vsel %vm194, %v2703, %v2707
      %v2710 = vshrl.u32 %v2657, 16
      %v2712 = vrot.slane %v2710, 4
      %v2713 = vshll.u32 %v2657, 16
      %v2715 = vrot.slane %v2713, 5
      %v2716 = vor.u32 %v2712, %v2715
      %v2717 = vrot.slane %v2716, 4
      %v2719 = vshll.u32 %v2658, 16
      %v2721 = vrot.slane %v2719, 5
      %v2722 = vsel %vm194, %v2717, %v2721
      %v2724 = vshrl.u32 %v2659, 16
      %v2726 = vrot.slane %v2724, 4
      %v2727 = vshll.u32 %v2659, 16
      %v2729 = vrot.slane %v2727, 5
      %v2730 = vor.u32 %v2726, %v2729
      %v2731 = vrot.slane %v2730, 4
      %v2733 = vshll.u32 %v2660, 16
      %v2735 = vrot.slane %v2733, 5
      %v2736 = vsel %vm194, %v2731, %v2735
      %v2738 = vshrl.u32 %v2661, 16
      %v2740 = vrot.slane %v2738, 4
      %v2741 = vshll.u32 %v2661, 16
      %v2743 = vrot.slane %v2741, 5
      %v2744 = vor.u32 %v2740, %v2743
      %v2745 = vrot.slane %v2744, 4
      %v2747 = vshll.u32 %v2662, 16
      %v2749 = vrot.slane %v2747, 5
      %v2750 = vsel %vm194, %v2745, %v2749
      %v2752 = vshrl.u32 %v2663, 16
      %v2754 = vrot.slane %v2752, 4
      %v2755 = vshll.u32 %v2663, 16
      %v2757 = vrot.slane %v2755, 5
      %v2758 = vor.u32 %v2754, %v2757
      %v2759 = vrot.slane %v2758, 4
      %v2761 = vshll.u32 %v2664, 16
      %v2763 = vrot.slane %v2761, 5
      %v2764 = vsel %vm194, %v2759, %v2763
      %v2766 = vshrl.u32 %v2665, 16
      %v2768 = vrot.slane %v2766, 4
      %v2769 = vshll.u32 %v2665, 16
      %v2771 = vrot.slane %v2769, 5
      %v2772 = vor.u32 %v2768, %v2771
      %v2773 = vrot.slane %v2772, 4
      %v2775 = vshll.u32 %v2666, 16
      %v2777 = vrot.slane %v2775, 5
      %v2778 = vsel %vm194, %v2773, %v2777
      %s2779 = scalar_lea.vmem %s1, 256
      %v2780 = vld [vmem:[%s2779] sm:$0xf]
      %v2781 = vld [vmem:[%s2779 + $0x4] sm:$0xf]
      %v2782 = vld [vmem:[%s2779 + $0x8] sm:$0xf]
      %v2783 = vld [vmem:[%s2779 + $0xc] sm:$0xf]
      %v2784 = vunpack.c.l.b16 %v2680
      %v2785 = vunpack.c.l.b16 %v2694
      %v2786 = vunpack.c.l.b16 %v2708
      %v2787 = vunpack.c.l.b16 %v2722
      %v2788 = vunpack.c.l.b16 %v2736
      %v2789 = vunpack.c.l.b16 %v2750
      %v2790 = vunpack.c.l.b16 %v2764
      %v2791 = vunpack.c.l.b16 %v2778
      %v2792 = vpack.c.b16 %v2785, %v2784
      %v2793 = vpack.c.b16 %v2787, %v2786
      %v2794 = vpack.c.b16 %v2789, %v2788
      %v2795 = vpack.c.b16 %v2791, %v2790
      %v2800 = vunpack.c.l.b16 %v2780
      %v2801 = vunpack.c.l.b16 %v2781
      %v2802 = vunpack.c.l.b16 %v2782
      %v2803 = vunpack.c.l.b16 %v2783
      %v2804 = vpack.c.b16 %v2801, %v2800
      %v2805 = vpack.c.b16 %v2803, %v2802
      %v2809 = vsel %vm336, %v2792, 0
      %v2812 = vsel %vm336, %v2793, 0
      %v2815 = vsel %vm336, %v2794, 0
      %v2818 = vsel %vm336, %v2795, 0
      %2820 = vmatpush.bf16.msra.mxu0 0
      %2821 = vmatpush.bf16.msra.mxu0 0
      %2822 = vmatpush.bf16.msra.mxu0 0
      %2823 = vmatpush.bf16.msra.mxu0 0
      %2824 = vmatpush.bf16.msra.mxu0 0
      %2825 = vmatpush.bf16.msra.mxu0 0
      %2826 = vmatpush.bf16.msra.mxu0 %v2805
      %2827 = vmatpush.bf16.msra.mxu0 %v2804
      %2828 = vmatmul.bf16.gmra.mxu0 %v2809
      %v2829 = vpop.f32.mrf.mxu0
      %v2830 = vadd.f32 0.0, %v2829
      %v2831 = vpop.f32.mrf.mxu0
      %v2832 = vadd.f32 0.0, %v2831
      %2833 = vmatmul.bf16.gmra.mxu0 %v2812
      %v2834 = vpop.f32.mrf.mxu0
      %v2835 = vadd.f32 0.0, %v2834
      %v2836 = vpop.f32.mrf.mxu0
      %v2837 = vadd.f32 0.0, %v2836
      %2838 = vmatmul.bf16.gmra.mxu0 %v2815
      %v2839 = vpop.f32.mrf.mxu0
      %v2840 = vadd.f32 0.0, %v2839
      %v2841 = vpop.f32.mrf.mxu0
      %v2842 = vadd.f32 0.0, %v2841
      %2843 = vmatmul.bf16.gmra.mxu0 %v2818
      %v2844 = vpop.f32.mrf.mxu0
      %v2845 = vadd.f32 0.0, %v2844
      %v2846 = vpop.f32.mrf.mxu0
      %v2847 = vadd.f32 0.0, %v2846
      %2848 = vdwg.mxu0
      %v2849 = vadd.f32 %v2643, %v2830
      %v2850 = vadd.f32 %v2644, %v2832
      %v2851 = vadd.f32 %v2645, %v2835
      %v2852 = vadd.f32 %v2646, %v2837
      %v2853 = vadd.f32 %v2647, %v2840
      %v2854 = vadd.f32 %v2648, %v2842
      %v2855 = vadd.f32 %v2649, %v2845
      %v2856 = vadd.f32 %v2650, %v2847
      %v2857 = vld [vmem:[%s2556] sm:$0xe]
      %v2858 = vld [vmem:[%s2556 + $0x8] sm:$0xe]
      %v2859 = vld [vmem:[%s2556 + $0x10] sm:$0xe]
      %v2860 = vld [vmem:[%s2556 + $0x18] sm:$0xe]
      %v2861 = vld [vmem:[%s2556 + $0x20] sm:$0xe]
      %v2862 = vld [vmem:[%s2556 + $0x28] sm:$0xe]
      %v2863 = vld [vmem:[%s2556 + $0x30] sm:$0xe]
      %v2864 = vld [vmem:[%s2556 + $0x38] sm:$0xe]
      %v2881 = vrot.slane %v2857, 5
      %v2882 = vrot.slane %v2881, 4
      %v2883 = vrot.slane %v2652, 5
      %v2884 = vsel %vm477, %v2882, %v2883
      %v2885 = vrot.slane %v2858, 5
      %v2886 = vrot.slane %v2885, 4
      %v2887 = vrot.slane %v2654, 5
      %v2888 = vsel %vm477, %v2886, %v2887
      %v2889 = vrot.slane %v2859, 5
      %v2890 = vrot.slane %v2889, 4
      %v2891 = vrot.slane %v2656, 5
      %v2892 = vsel %vm477, %v2890, %v2891
      %v2893 = vrot.slane %v2860, 5
      %v2894 = vrot.slane %v2893, 4
      %v2895 = vrot.slane %v2658, 5
      %v2896 = vsel %vm477, %v2894, %v2895
      %v2897 = vrot.slane %v2861, 5
      %v2898 = vrot.slane %v2897, 4
      %v2899 = vrot.slane %v2660, 5
      %v2900 = vsel %vm477, %v2898, %v2899
      %v2901 = vrot.slane %v2862, 5
      %v2902 = vrot.slane %v2901, 4
      %v2903 = vrot.slane %v2662, 5
      %v2904 = vsel %vm477, %v2902, %v2903
      %v2905 = vrot.slane %v2863, 5
      %v2906 = vrot.slane %v2905, 4
      %v2907 = vrot.slane %v2664, 5
      %v2908 = vsel %vm477, %v2906, %v2907
      %v2909 = vrot.slane %v2864, 5
      %v2910 = vrot.slane %v2909, 4
      %v2911 = vrot.slane %v2666, 5
      %v2912 = vsel %vm477, %v2910, %v2911
      %s2913 = scalar_lea.vmem %s1, 272
      %v2914 = vld [vmem:[%s2913] sm:$0xf]
      %v2915 = vld [vmem:[%s2913 + $0x4] sm:$0xf]
      %v2916 = vld [vmem:[%s2913 + $0x8] sm:$0xf]
      %v2917 = vld [vmem:[%s2913 + $0xc] sm:$0xf]
      %v2918 = vunpack.c.l.b16 %v2884
      %v2919 = vunpack.c.l.b16 %v2888
      %v2920 = vunpack.c.l.b16 %v2892
      %v2921 = vunpack.c.l.b16 %v2896
      %v2922 = vunpack.c.l.b16 %v2900
      %v2923 = vunpack.c.l.b16 %v2904
      %v2924 = vunpack.c.l.b16 %v2908
      %v2925 = vunpack.c.l.b16 %v2912
      %v2926 = vpack.c.b16 %v2919, %v2918
      %v2927 = vpack.c.b16 %v2921, %v2920
      %v2928 = vpack.c.b16 %v2923, %v2922
      %v2929 = vpack.c.b16 %v2925, %v2924
      %v2934 = vunpack.c.l.b16 %v2914
      %v2935 = vunpack.c.l.b16 %v2915
      %v2936 = vunpack.c.l.b16 %v2916
      %v2937 = vunpack.c.l.b16 %v2917
      %v2938 = vpack.c.b16 %v2935, %v2934
      %v2939 = vpack.c.b16 %v2937, %v2936
      %v2943 = vsel %vm336, %v2926, 0
      %v2946 = vsel %vm336, %v2927, 0
      %v2949 = vsel %vm336, %v2928, 0
      %v2952 = vsel %vm336, %v2929, 0
      %2954 = vmatpush.bf16.msra.mxu0 0
      %2955 = vmatpush.bf16.msra.mxu0 0
      %2956 = vmatpush.bf16.msra.mxu0 0
      %2957 = vmatpush.bf16.msra.mxu0 0
      %2958 = vmatpush.bf16.msra.mxu0 0
      %2959 = vmatpush.bf16.msra.mxu0 0
      %2960 = vmatpush.bf16.msra.mxu0 %v2939
      %2961 = vmatpush.bf16.msra.mxu0 %v2938
      %2962 = vmatmul.bf16.gmra.mxu0 %v2943
      %v2963 = vpop.f32.mrf.mxu0
      %v2964 = vadd.f32 0.0, %v2963
      %v2965 = vpop.f32.mrf.mxu0
      %v2966 = vadd.f32 0.0, %v2965
      %2967 = vmatmul.bf16.gmra.mxu0 %v2946
      %v2968 = vpop.f32.mrf.mxu0
      %v2969 = vadd.f32 0.0, %v2968
      %v2970 = vpop.f32.mrf.mxu0
      %v2971 = vadd.f32 0.0, %v2970
      %2972 = vmatmul.bf16.gmra.mxu0 %v2949
      %v2973 = vpop.f32.mrf.mxu0
      %v2974 = vadd.f32 0.0, %v2973
      %v2975 = vpop.f32.mrf.mxu0
      %v2976 = vadd.f32 0.0, %v2975
      %2977 = vmatmul.bf16.gmra.mxu0 %v2952
      %v2978 = vpop.f32.mrf.mxu0
      %v2979 = vadd.f32 0.0, %v2978
      %v2980 = vpop.f32.mrf.mxu0
      %v2981 = vadd.f32 0.0, %v2980
      %2982 = vdwg.mxu0
      %v2983 = vadd.f32 %v2849, %v2964
      %v2984 = vadd.f32 %v2850, %v2966
      %v2985 = vadd.f32 %v2851, %v2969
      %v2986 = vadd.f32 %v2852, %v2971
      %v2987 = vadd.f32 %v2853, %v2974
      %v2988 = vadd.f32 %v2854, %v2976
      %v2989 = vadd.f32 %v2855, %v2979
      %v2990 = vadd.f32 %v2856, %v2981
      %v2991 = vld [vmem:[%s2556 + $0x4] sm:$0x3]
      %v2992 = vld [vmem:[%s2556 + $0xc] sm:$0x3]
      %v2993 = vld [vmem:[%s2556 + $0x14] sm:$0x3]
      %v2994 = vld [vmem:[%s2556 + $0x1c] sm:$0x3]
      %v2995 = vld [vmem:[%s2556 + $0x24] sm:$0x3]
      %v2996 = vld [vmem:[%s2556 + $0x2c] sm:$0x3]
      %v2997 = vld [vmem:[%s2556 + $0x34] sm:$0x3]
      %v2998 = vld [vmem:[%s2556 + $0x3c] sm:$0x3]
      %v3000 = vshrl.u32 %v2857, 16
      %v3002 = vrot.slane %v3000, 5
      %v3003 = vshll.u32 %v2857, 16
      %v3005 = vrot.slane %v3003, 6
      %v3006 = vor.u32 %v3002, %v3005
      %v3007 = vrot.slane %v3006, 4
      %v3009 = vshrl.u32 %v2991, 16
      %v3011 = vrot.slane %v3009, 5
      %v3012 = vshll.u32 %v2991, 16
      %v3014 = vrot.slane %v3012, 6
      %v3015 = vor.u32 %v3011, %v3014
      %v3016 = vsel %vm598, %v3007, %v3015
      %v3018 = vshrl.u32 %v2858, 16
      %v3020 = vrot.slane %v3018, 5
      %v3021 = vshll.u32 %v2858, 16
      %v3023 = vrot.slane %v3021, 6
      %v3024 = vor.u32 %v3020, %v3023
      %v3025 = vrot.slane %v3024, 4
      %v3027 = vshrl.u32 %v2992, 16
      %v3029 = vrot.slane %v3027, 5
      %v3030 = vshll.u32 %v2992, 16
      %v3032 = vrot.slane %v3030, 6
      %v3033 = vor.u32 %v3029, %v3032
      %v3034 = vsel %vm598, %v3025, %v3033
      %v3036 = vshrl.u32 %v2859, 16
      %v3038 = vrot.slane %v3036, 5
      %v3039 = vshll.u32 %v2859, 16
      %v3041 = vrot.slane %v3039, 6
      %v3042 = vor.u32 %v3038, %v3041
      %v3043 = vrot.slane %v3042, 4
      %v3045 = vshrl.u32 %v2993, 16
      %v3047 = vrot.slane %v3045, 5
      %v3048 = vshll.u32 %v2993, 16
      %v3050 = vrot.slane %v3048, 6
      %v3051 = vor.u32 %v3047, %v3050
      %v3052 = vsel %vm598, %v3043, %v3051
      %v3054 = vshrl.u32 %v2860, 16
      %v3056 = vrot.slane %v3054, 5
      %v3057 = vshll.u32 %v2860, 16
      %v3059 = vrot.slane %v3057, 6
      %v3060 = vor.u32 %v3056, %v3059
      %v3061 = vrot.slane %v3060, 4
      %v3063 = vshrl.u32 %v2994, 16
      %v3065 = vrot.slane %v3063, 5
      %v3066 = vshll.u32 %v2994, 16
      %v3068 = vrot.slane %v3066, 6
      %v3069 = vor.u32 %v3065, %v3068
      %v3070 = vsel %vm598, %v3061, %v3069
      %v3072 = vshrl.u32 %v2861, 16
      %v3074 = vrot.slane %v3072, 5
      %v3075 = vshll.u32 %v2861, 16
      %v3077 = vrot.slane %v3075, 6
      %v3078 = vor.u32 %v3074, %v3077
      %v3079 = vrot.slane %v3078, 4
      %v3081 = vshrl.u32 %v2995, 16
      %v3083 = vrot.slane %v3081, 5
      %v3084 = vshll.u32 %v2995, 16
      %v3086 = vrot.slane %v3084, 6
      %v3087 = vor.u32 %v3083, %v3086
      %v3088 = vsel %vm598, %v3079, %v3087
      %v3090 = vshrl.u32 %v2862, 16
      %v3092 = vrot.slane %v3090, 5
      %v3093 = vshll.u32 %v2862, 16
      %v3095 = vrot.slane %v3093, 6
      %v3096 = vor.u32 %v3092, %v3095
      %v3097 = vrot.slane %v3096, 4
      %v3099 = vshrl.u32 %v2996, 16
      %v3101 = vrot.slane %v3099, 5
      %v3102 = vshll.u32 %v2996, 16
      %v3104 = vrot.slane %v3102, 6
      %v3105 = vor.u32 %v3101, %v3104
      %v3106 = vsel %vm598, %v3097, %v3105
      %v3108 = vshrl.u32 %v2863, 16
      %v3110 = vrot.slane %v3108, 5
      %v3111 = vshll.u32 %v2863, 16
      %v3113 = vrot.slane %v3111, 6
      %v3114 = vor.u32 %v3110, %v3113
      %v3115 = vrot.slane %v3114, 4
      %v3117 = vshrl.u32 %v2997, 16
      %v3119 = vrot.slane %v3117, 5
      %v3120 = vshll.u32 %v2997, 16
      %v3122 = vrot.slane %v3120, 6
      %v3123 = vor.u32 %v3119, %v3122
      %v3124 = vsel %vm598, %v3115, %v3123
      %v3126 = vshrl.u32 %v2864, 16
      %v3128 = vrot.slane %v3126, 5
      %v3129 = vshll.u32 %v2864, 16
      %v3131 = vrot.slane %v3129, 6
      %v3132 = vor.u32 %v3128, %v3131
      %v3133 = vrot.slane %v3132, 4
      %v3135 = vshrl.u32 %v2998, 16
      %v3137 = vrot.slane %v3135, 5
      %v3138 = vshll.u32 %v2998, 16
      %v3140 = vrot.slane %v3138, 6
      %v3141 = vor.u32 %v3137, %v3140
      %v3142 = vsel %vm598, %v3133, %v3141
      %s3143 = scalar_lea.vmem %s1, 288
      %v3144 = vld [vmem:[%s3143] sm:$0xf]
      %v3145 = vld [vmem:[%s3143 + $0x4] sm:$0xf]
      %v3146 = vld [vmem:[%s3143 + $0x8] sm:$0xf]
      %v3147 = vld [vmem:[%s3143 + $0xc] sm:$0xf]
      %v3148 = vunpack.c.l.b16 %v3016
      %v3149 = vunpack.c.l.b16 %v3034
      %v3150 = vunpack.c.l.b16 %v3052
      %v3151 = vunpack.c.l.b16 %v3070
      %v3152 = vunpack.c.l.b16 %v3088
      %v3153 = vunpack.c.l.b16 %v3106
      %v3154 = vunpack.c.l.b16 %v3124
      %v3155 = vunpack.c.l.b16 %v3142
      %v3156 = vpack.c.b16 %v3149, %v3148
      %v3157 = vpack.c.b16 %v3151, %v3150
      %v3158 = vpack.c.b16 %v3153, %v3152
      %v3159 = vpack.c.b16 %v3155, %v3154
      %v3164 = vunpack.c.l.b16 %v3144
      %v3165 = vunpack.c.l.b16 %v3145
      %v3166 = vunpack.c.l.b16 %v3146
      %v3167 = vunpack.c.l.b16 %v3147
      %v3168 = vpack.c.b16 %v3165, %v3164
      %v3169 = vpack.c.b16 %v3167, %v3166
      %v3173 = vsel %vm336, %v3156, 0
      %v3176 = vsel %vm336, %v3157, 0
      %v3179 = vsel %vm336, %v3158, 0
      %v3182 = vsel %vm336, %v3159, 0
      %3184 = vmatpush.bf16.msra.mxu0 0
      %3185 = vmatpush.bf16.msra.mxu0 0
      %3186 = vmatpush.bf16.msra.mxu0 0
      %3187 = vmatpush.bf16.msra.mxu0 0
      %3188 = vmatpush.bf16.msra.mxu0 0
      %3189 = vmatpush.bf16.msra.mxu0 0
      %3190 = vmatpush.bf16.msra.mxu0 %v3169
      %3191 = vmatpush.bf16.msra.mxu0 %v3168
      %3192 = vmatmul.bf16.gmra.mxu0 %v3173
      %v3193 = vpop.f32.mrf.mxu0
      %v3194 = vadd.f32 0.0, %v3193
      %v3195 = vpop.f32.mrf.mxu0
      %v3196 = vadd.f32 0.0, %v3195
      %3197 = vmatmul.bf16.gmra.mxu0 %v3176
      %v3198 = vpop.f32.mrf.mxu0
      %v3199 = vadd.f32 0.0, %v3198
      %v3200 = vpop.f32.mrf.mxu0
      %v3201 = vadd.f32 0.0, %v3200
      %3202 = vmatmul.bf16.gmra.mxu0 %v3179
      %v3203 = vpop.f32.mrf.mxu0
      %v3204 = vadd.f32 0.0, %v3203
      %v3205 = vpop.f32.mrf.mxu0
      %v3206 = vadd.f32 0.0, %v3205
      %3207 = vmatmul.bf16.gmra.mxu0 %v3182
      %v3208 = vpop.f32.mrf.mxu0
      %v3209 = vadd.f32 0.0, %v3208
      %v3210 = vpop.f32.mrf.mxu0
      %v3211 = vadd.f32 0.0, %v3210
      %3212 = vdwg.mxu0
      %v3213 = vadd.f32 %v2983, %v3194
      %v3214 = vadd.f32 %v2984, %v3196
      %v3215 = vadd.f32 %v2985, %v3199
      %v3216 = vadd.f32 %v2986, %v3201
      %v3217 = vadd.f32 %v2987, %v3204
      %v3218 = vadd.f32 %v2988, %v3206
      %v3219 = vadd.f32 %v2989, %v3209
      %v3220 = vadd.f32 %v2990, %v3211
      %v3221 = vld [vmem:[%s2556] sm:$0xc]
      %v3222 = vld [vmem:[%s2556 + $0x8] sm:$0xc]
      %v3223 = vld [vmem:[%s2556 + $0x10] sm:$0xc]
      %v3224 = vld [vmem:[%s2556 + $0x18] sm:$0xc]
      %v3225 = vld [vmem:[%s2556 + $0x20] sm:$0xc]
      %v3226 = vld [vmem:[%s2556 + $0x28] sm:$0xc]
      %v3227 = vld [vmem:[%s2556 + $0x30] sm:$0xc]
      %v3228 = vld [vmem:[%s2556 + $0x38] sm:$0xc]
      %v3245 = vrot.slane %v3221, 6
      %v3246 = vrot.slane %v3245, 4
      %v3247 = vrot.slane %v2991, 6
      %v3248 = vsel %vm847, %v3246, %v3247
      %v3249 = vrot.slane %v3222, 6
      %v3250 = vrot.slane %v3249, 4
      %v3251 = vrot.slane %v2992, 6
      %v3252 = vsel %vm847, %v3250, %v3251
      %v3253 = vrot.slane %v3223, 6
      %v3254 = vrot.slane %v3253, 4
      %v3255 = vrot.slane %v2993, 6
      %v3256 = vsel %vm847, %v3254, %v3255
      %v3257 = vrot.slane %v3224, 6
      %v3258 = vrot.slane %v3257, 4
      %v3259 = vrot.slane %v2994, 6
      %v3260 = vsel %vm847, %v3258, %v3259
      %v3261 = vrot.slane %v3225, 6
      %v3262 = vrot.slane %v3261, 4
      %v3263 = vrot.slane %v2995, 6
      %v3264 = vsel %vm847, %v3262, %v3263
      %v3265 = vrot.slane %v3226, 6
      %v3266 = vrot.slane %v3265, 4
      %v3267 = vrot.slane %v2996, 6
      %v3268 = vsel %vm847, %v3266, %v3267
      %v3269 = vrot.slane %v3227, 6
      %v3270 = vrot.slane %v3269, 4
      %v3271 = vrot.slane %v2997, 6
      %v3272 = vsel %vm847, %v3270, %v3271
      %v3273 = vrot.slane %v3228, 6
      %v3274 = vrot.slane %v3273, 4
      %v3275 = vrot.slane %v2998, 6
      %v3276 = vsel %vm847, %v3274, %v3275
      %s3277 = scalar_lea.vmem %s1, 304
      %v3278 = vld [vmem:[%s3277] sm:$0xf]
      %v3279 = vld [vmem:[%s3277 + $0x4] sm:$0xf]
      %v3280 = vld [vmem:[%s3277 + $0x8] sm:$0xf]
      %v3281 = vld [vmem:[%s3277 + $0xc] sm:$0xf]
      %v3282 = vunpack.c.l.b16 %v3248
      %v3283 = vunpack.c.l.b16 %v3252
      %v3284 = vunpack.c.l.b16 %v3256
      %v3285 = vunpack.c.l.b16 %v3260
      %v3286 = vunpack.c.l.b16 %v3264
      %v3287 = vunpack.c.l.b16 %v3268
      %v3288 = vunpack.c.l.b16 %v3272
      %v3289 = vunpack.c.l.b16 %v3276
      %v3290 = vpack.c.b16 %v3283, %v3282
      %v3291 = vpack.c.b16 %v3285, %v3284
      %v3292 = vpack.c.b16 %v3287, %v3286
      %v3293 = vpack.c.b16 %v3289, %v3288
      %v3298 = vunpack.c.l.b16 %v3278
      %v3299 = vunpack.c.l.b16 %v3279
      %v3300 = vunpack.c.l.b16 %v3280
      %v3301 = vunpack.c.l.b16 %v3281
      %v3302 = vpack.c.b16 %v3299, %v3298
      %v3303 = vpack.c.b16 %v3301, %v3300
      %v3307 = vsel %vm336, %v3290, 0
      %v3310 = vsel %vm336, %v3291, 0
      %v3313 = vsel %vm336, %v3292, 0
      %v3316 = vsel %vm336, %v3293, 0
      %3318 = vmatpush.bf16.msra.mxu0 0
      %3319 = vmatpush.bf16.msra.mxu0 0
      %3320 = vmatpush.bf16.msra.mxu0 0
      %3321 = vmatpush.bf16.msra.mxu0 0
      %3322 = vmatpush.bf16.msra.mxu0 0
      %3323 = vmatpush.bf16.msra.mxu0 0
      %3324 = vmatpush.bf16.msra.mxu0 %v3303
      %3325 = vmatpush.bf16.msra.mxu0 %v3302
      %3326 = vmatmul.bf16.gmra.mxu0 %v3307
      %v3327 = vpop.f32.mrf.mxu0
      %v3328 = vadd.f32 0.0, %v3327
      %v3329 = vpop.f32.mrf.mxu0
      %v3330 = vadd.f32 0.0, %v3329
      %3331 = vmatmul.bf16.gmra.mxu0 %v3310
      %v3332 = vpop.f32.mrf.mxu0
      %v3333 = vadd.f32 0.0, %v3332
      %v3334 = vpop.f32.mrf.mxu0
      %v3335 = vadd.f32 0.0, %v3334
      %3336 = vmatmul.bf16.gmra.mxu0 %v3313
      %v3337 = vpop.f32.mrf.mxu0
      %v3338 = vadd.f32 0.0, %v3337
      %v3339 = vpop.f32.mrf.mxu0
      %v3340 = vadd.f32 0.0, %v3339
      %3341 = vmatmul.bf16.gmra.mxu0 %v3316
      %v3342 = vpop.f32.mrf.mxu0
      %v3343 = vadd.f32 0.0, %v3342
      %v3344 = vpop.f32.mrf.mxu0
      %v3345 = vadd.f32 0.0, %v3344
      %3346 = vdwg.mxu0
      %v3347 = vadd.f32 %v3213, %v3328
      %v3348 = vadd.f32 %v3214, %v3330
      %v3349 = vadd.f32 %v3215, %v3333
      %v3350 = vadd.f32 %v3216, %v3335
      %v3351 = vadd.f32 %v3217, %v3338
      %v3352 = vadd.f32 %v3218, %v3340
      %v3353 = vadd.f32 %v3219, %v3343
      %v3354 = vadd.f32 %v3220, %v3345
      %s3355 = scalar_lea.vmem %s165, 32
      %v3356 = vld [vmem:[%s3355] sm:$0xf]
      %v3357 = vld [vmem:[%s3355 + $0x8] sm:$0xf]
      %v3358 = vld [vmem:[%s3355 + $0x10] sm:$0xf]
      %v3359 = vld [vmem:[%s3355 + $0x18] sm:$0xf]
      %v3360 = vld [vmem:[%s3355 + $0x20] sm:$0xf]
      %v3361 = vld [vmem:[%s3355 + $0x28] sm:$0xf]
      %v3362 = vld [vmem:[%s3355 + $0x30] sm:$0xf]
      %v3363 = vld [vmem:[%s3355 + $0x38] sm:$0xf]
      %s3364 = scalar_lea.vmem %s1, 320
      %v3365 = vld [vmem:[%s3364] sm:$0xf]
      %v3366 = vld [vmem:[%s3364 + $0x4] sm:$0xf]
      %v3367 = vld [vmem:[%s3364 + $0x8] sm:$0xf]
      %v3368 = vld [vmem:[%s3364 + $0xc] sm:$0xf]
      %v3377 = vunpack.c.l.b16 %v3356
      %v3378 = vunpack.c.l.b16 %v3357
      %v3379 = vunpack.c.l.b16 %v3358
      %v3380 = vunpack.c.l.b16 %v3359
      %v3381 = vunpack.c.l.b16 %v3360
      %v3382 = vunpack.c.l.b16 %v3361
      %v3383 = vunpack.c.l.b16 %v3362
      %v3384 = vunpack.c.l.b16 %v3363
      %v3385 = vpack.c.b16 %v3378, %v3377
      %v3386 = vpack.c.b16 %v3380, %v3379
      %v3387 = vpack.c.b16 %v3382, %v3381
      %v3388 = vpack.c.b16 %v3384, %v3383
      %v3393 = vunpack.c.l.b16 %v3365
      %v3394 = vunpack.c.l.b16 %v3366
      %v3395 = vunpack.c.l.b16 %v3367
      %v3396 = vunpack.c.l.b16 %v3368
      %v3397 = vpack.c.b16 %v3394, %v3393
      %v3398 = vpack.c.b16 %v3396, %v3395
      %v3402 = vsel %vm336, %v3385, 0
      %v3405 = vsel %vm336, %v3386, 0
      %v3408 = vsel %vm336, %v3387, 0
      %v3411 = vsel %vm336, %v3388, 0
      %3413 = vmatpush.bf16.msra.mxu0 0
      %3414 = vmatpush.bf16.msra.mxu0 0
      %3415 = vmatpush.bf16.msra.mxu0 0
      %3416 = vmatpush.bf16.msra.mxu0 0
      %3417 = vmatpush.bf16.msra.mxu0 0
      %3418 = vmatpush.bf16.msra.mxu0 0
      %3419 = vmatpush.bf16.msra.mxu0 %v3398
      %3420 = vmatpush.bf16.msra.mxu0 %v3397
      %3421 = vmatmul.bf16.gmra.mxu0 %v3402
      %v3422 = vpop.f32.mrf.mxu0
      %v3423 = vadd.f32 0.0, %v3422
      %v3424 = vpop.f32.mrf.mxu0
      %v3425 = vadd.f32 0.0, %v3424
      %3426 = vmatmul.bf16.gmra.mxu0 %v3405
      %v3427 = vpop.f32.mrf.mxu0
      %v3428 = vadd.f32 0.0, %v3427
      %v3429 = vpop.f32.mrf.mxu0
      %v3430 = vadd.f32 0.0, %v3429
      %3431 = vmatmul.bf16.gmra.mxu0 %v3408
      %v3432 = vpop.f32.mrf.mxu0
      %v3433 = vadd.f32 0.0, %v3432
      %v3434 = vpop.f32.mrf.mxu0
      %v3435 = vadd.f32 0.0, %v3434
      %3436 = vmatmul.bf16.gmra.mxu0 %v3411
      %v3437 = vpop.f32.mrf.mxu0
      %v3438 = vadd.f32 0.0, %v3437
      %v3439 = vpop.f32.mrf.mxu0
      %v3440 = vadd.f32 0.0, %v3439
      %3441 = vdwg.mxu0
      %v3442 = vadd.f32 %v3347, %v3423
      %v3443 = vadd.f32 %v3348, %v3425
      %v3444 = vadd.f32 %v3349, %v3428
      %v3445 = vadd.f32 %v3350, %v3430
      %v3446 = vadd.f32 %v3351, %v3433
      %v3447 = vadd.f32 %v3352, %v3435
      %v3448 = vadd.f32 %v3353, %v3438
      %v3449 = vadd.f32 %v3354, %v3440
      %v3450 = vld [vmem:[%s3355] sm:$0xf]
      %v3451 = vld [vmem:[%s3355 + $0x4] sm:$0x1]
      %v3452 = vld [vmem:[%s3355 + $0x8] sm:$0xf]
      %v3453 = vld [vmem:[%s3355 + $0xc] sm:$0x1]
      %v3454 = vld [vmem:[%s3355 + $0x10] sm:$0xf]
      %v3455 = vld [vmem:[%s3355 + $0x14] sm:$0x1]
      %v3456 = vld [vmem:[%s3355 + $0x18] sm:$0xf]
      %v3457 = vld [vmem:[%s3355 + $0x1c] sm:$0x1]
      %v3458 = vld [vmem:[%s3355 + $0x20] sm:$0xf]
      %v3459 = vld [vmem:[%s3355 + $0x24] sm:$0x1]
      %v3460 = vld [vmem:[%s3355 + $0x28] sm:$0xf]
      %v3461 = vld [vmem:[%s3355 + $0x2c] sm:$0x1]
      %v3462 = vld [vmem:[%s3355 + $0x30] sm:$0xf]
      %v3463 = vld [vmem:[%s3355 + $0x34] sm:$0x1]
      %v3464 = vld [vmem:[%s3355 + $0x38] sm:$0xf]
      %v3465 = vld [vmem:[%s3355 + $0x3c] sm:$0x1]
      %v3467 = vshrl.u32 %v3450, 16
      %v3469 = vrot.slane %v3467, 4
      %v3470 = vshll.u32 %v3450, 16
      %v3472 = vrot.slane %v3470, 5
      %v3473 = vor.u32 %v3469, %v3472
      %v3474 = vrot.slane %v3473, 4
      %v3476 = vshll.u32 %v3451, 16
      %v3478 = vrot.slane %v3476, 5
      %v3479 = vsel %vm194, %v3474, %v3478
      %v3481 = vshrl.u32 %v3452, 16
      %v3483 = vrot.slane %v3481, 4
      %v3484 = vshll.u32 %v3452, 16
      %v3486 = vrot.slane %v3484, 5
      %v3487 = vor.u32 %v3483, %v3486
      %v3488 = vrot.slane %v3487, 4
      %v3490 = vshll.u32 %v3453, 16
      %v3492 = vrot.slane %v3490, 5
      %v3493 = vsel %vm194, %v3488, %v3492
      %v3495 = vshrl.u32 %v3454, 16
      %v3497 = vrot.slane %v3495, 4
      %v3498 = vshll.u32 %v3454, 16
      %v3500 = vrot.slane %v3498, 5
      %v3501 = vor.u32 %v3497, %v3500
      %v3502 = vrot.slane %v3501, 4
      %v3504 = vshll.u32 %v3455, 16
      %v3506 = vrot.slane %v3504, 5
      %v3507 = vsel %vm194, %v3502, %v3506
      %v3509 = vshrl.u32 %v3456, 16
      %v3511 = vrot.slane %v3509, 4
      %v3512 = vshll.u32 %v3456, 16
      %v3514 = vrot.slane %v3512, 5
      %v3515 = vor.u32 %v3511, %v3514
      %v3516 = vrot.slane %v3515, 4
      %v3518 = vshll.u32 %v3457, 16
      %v3520 = vrot.slane %v3518, 5
      %v3521 = vsel %vm194, %v3516, %v3520
      %v3523 = vshrl.u32 %v3458, 16
      %v3525 = vrot.slane %v3523, 4
      %v3526 = vshll.u32 %v3458, 16
      %v3528 = vrot.slane %v3526, 5
      %v3529 = vor.u32 %v3525, %v3528
      %v3530 = vrot.slane %v3529, 4
      %v3532 = vshll.u32 %v3459, 16
      %v3534 = vrot.slane %v3532, 5
      %v3535 = vsel %vm194, %v3530, %v3534
      %v3537 = vshrl.u32 %v3460, 16
      %v3539 = vrot.slane %v3537, 4
      %v3540 = vshll.u32 %v3460, 16
      %v3542 = vrot.slane %v3540, 5
      %v3543 = vor.u32 %v3539, %v3542
      %v3544 = vrot.slane %v3543, 4
      %v3546 = vshll.u32 %v3461, 16
      %v3548 = vrot.slane %v3546, 5
      %v3549 = vsel %vm194, %v3544, %v3548
      %v3551 = vshrl.u32 %v3462, 16
      %v3553 = vrot.slane %v3551, 4
      %v3554 = vshll.u32 %v3462, 16
      %v3556 = vrot.slane %v3554, 5
      %v3557 = vor.u32 %v3553, %v3556
      %v3558 = vrot.slane %v3557, 4
      %v3560 = vshll.u32 %v3463, 16
      %v3562 = vrot.slane %v3560, 5
      %v3563 = vsel %vm194, %v3558, %v3562
      %v3565 = vshrl.u32 %v3464, 16
      %v3567 = vrot.slane %v3565, 4
      %v3568 = vshll.u32 %v3464, 16
      %v3570 = vrot.slane %v3568, 5
      %v3571 = vor.u32 %v3567, %v3570
      %v3572 = vrot.slane %v3571, 4
      %v3574 = vshll.u32 %v3465, 16
      %v3576 = vrot.slane %v3574, 5
      %v3577 = vsel %vm194, %v3572, %v3576
      %s3578 = scalar_lea.vmem %s1, 336
      %v3579 = vld [vmem:[%s3578] sm:$0xf]
      %v3580 = vld [vmem:[%s3578 + $0x4] sm:$0xf]
      %v3581 = vld [vmem:[%s3578 + $0x8] sm:$0xf]
      %v3582 = vld [vmem:[%s3578 + $0xc] sm:$0xf]
      %v3583 = vunpack.c.l.b16 %v3479
      %v3584 = vunpack.c.l.b16 %v3493
      %v3585 = vunpack.c.l.b16 %v3507
      %v3586 = vunpack.c.l.b16 %v3521
      %v3587 = vunpack.c.l.b16 %v3535
      %v3588 = vunpack.c.l.b16 %v3549
      %v3589 = vunpack.c.l.b16 %v3563
      %v3590 = vunpack.c.l.b16 %v3577
      %v3591 = vpack.c.b16 %v3584, %v3583
      %v3592 = vpack.c.b16 %v3586, %v3585
      %v3593 = vpack.c.b16 %v3588, %v3587
      %v3594 = vpack.c.b16 %v3590, %v3589
      %v3599 = vunpack.c.l.b16 %v3579
      %v3600 = vunpack.c.l.b16 %v3580
      %v3601 = vunpack.c.l.b16 %v3581
      %v3602 = vunpack.c.l.b16 %v3582
      %v3603 = vpack.c.b16 %v3600, %v3599
      %v3604 = vpack.c.b16 %v3602, %v3601
      %v3608 = vsel %vm336, %v3591, 0
      %v3611 = vsel %vm336, %v3592, 0
      %v3614 = vsel %vm336, %v3593, 0
      %v3617 = vsel %vm336, %v3594, 0
      %3619 = vmatpush.bf16.msra.mxu0 0
      %3620 = vmatpush.bf16.msra.mxu0 0
      %3621 = vmatpush.bf16.msra.mxu0 0
      %3622 = vmatpush.bf16.msra.mxu0 0
      %3623 = vmatpush.bf16.msra.mxu0 0
      %3624 = vmatpush.bf16.msra.mxu0 0
      %3625 = vmatpush.bf16.msra.mxu0 %v3604
      %3626 = vmatpush.bf16.msra.mxu0 %v3603
      %3627 = vmatmul.bf16.gmra.mxu0 %v3608
      %v3628 = vpop.f32.mrf.mxu0
      %v3629 = vadd.f32 0.0, %v3628
      %v3630 = vpop.f32.mrf.mxu0
      %v3631 = vadd.f32 0.0, %v3630
      %3632 = vmatmul.bf16.gmra.mxu0 %v3611
      %v3633 = vpop.f32.mrf.mxu0
      %v3634 = vadd.f32 0.0, %v3633
      %v3635 = vpop.f32.mrf.mxu0
      %v3636 = vadd.f32 0.0, %v3635
      %3637 = vmatmul.bf16.gmra.mxu0 %v3614
      %v3638 = vpop.f32.mrf.mxu0
      %v3639 = vadd.f32 0.0, %v3638
      %v3640 = vpop.f32.mrf.mxu0
      %v3641 = vadd.f32 0.0, %v3640
      %3642 = vmatmul.bf16.gmra.mxu0 %v3617
      %v3643 = vpop.f32.mrf.mxu0
      %v3644 = vadd.f32 0.0, %v3643
      %v3645 = vpop.f32.mrf.mxu0
      %v3646 = vadd.f32 0.0, %v3645
      %3647 = vdwg.mxu0
      %v3648 = vadd.f32 %v3442, %v3629
      %v3649 = vadd.f32 %v3443, %v3631
      %v3650 = vadd.f32 %v3444, %v3634
      %v3651 = vadd.f32 %v3445, %v3636
      %v3652 = vadd.f32 %v3446, %v3639
      %v3653 = vadd.f32 %v3447, %v3641
      %v3654 = vadd.f32 %v3448, %v3644
      %v3655 = vadd.f32 %v3449, %v3646
      %v3656 = vld [vmem:[%s3355] sm:$0xe]
      %v3657 = vld [vmem:[%s3355 + $0x8] sm:$0xe]
      %v3658 = vld [vmem:[%s3355 + $0x10] sm:$0xe]
      %v3659 = vld [vmem:[%s3355 + $0x18] sm:$0xe]
      %v3660 = vld [vmem:[%s3355 + $0x20] sm:$0xe]
      %v3661 = vld [vmem:[%s3355 + $0x28] sm:$0xe]
      %v3662 = vld [vmem:[%s3355 + $0x30] sm:$0xe]
      %v3663 = vld [vmem:[%s3355 + $0x38] sm:$0xe]
      %v3680 = vrot.slane %v3656, 5
      %v3681 = vrot.slane %v3680, 4
      %v3682 = vrot.slane %v3451, 5
      %v3683 = vsel %vm477, %v3681, %v3682
      %v3684 = vrot.slane %v3657, 5
      %v3685 = vrot.slane %v3684, 4
      %v3686 = vrot.slane %v3453, 5
      %v3687 = vsel %vm477, %v3685, %v3686
      %v3688 = vrot.slane %v3658, 5
      %v3689 = vrot.slane %v3688, 4
      %v3690 = vrot.slane %v3455, 5
      %v3691 = vsel %vm477, %v3689, %v3690
      %v3692 = vrot.slane %v3659, 5
      %v3693 = vrot.slane %v3692, 4
      %v3694 = vrot.slane %v3457, 5
      %v3695 = vsel %vm477, %v3693, %v3694
      %v3696 = vrot.slane %v3660, 5
      %v3697 = vrot.slane %v3696, 4
      %v3698 = vrot.slane %v3459, 5
      %v3699 = vsel %vm477, %v3697, %v3698
      %v3700 = vrot.slane %v3661, 5
      %v3701 = vrot.slane %v3700, 4
      %v3702 = vrot.slane %v3461, 5
      %v3703 = vsel %vm477, %v3701, %v3702
      %v3704 = vrot.slane %v3662, 5
      %v3705 = vrot.slane %v3704, 4
      %v3706 = vrot.slane %v3463, 5
      %v3707 = vsel %vm477, %v3705, %v3706
      %v3708 = vrot.slane %v3663, 5
      %v3709 = vrot.slane %v3708, 4
      %v3710 = vrot.slane %v3465, 5
      %v3711 = vsel %vm477, %v3709, %v3710
      %s3712 = scalar_lea.vmem %s1, 352
      %v3713 = vld [vmem:[%s3712] sm:$0xf]
      %v3714 = vld [vmem:[%s3712 + $0x4] sm:$0xf]
      %v3715 = vld [vmem:[%s3712 + $0x8] sm:$0xf]
      %v3716 = vld [vmem:[%s3712 + $0xc] sm:$0xf]
      %v3717 = vunpack.c.l.b16 %v3683
      %v3718 = vunpack.c.l.b16 %v3687
      %v3719 = vunpack.c.l.b16 %v3691
      %v3720 = vunpack.c.l.b16 %v3695
      %v3721 = vunpack.c.l.b16 %v3699
      %v3722 = vunpack.c.l.b16 %v3703
      %v3723 = vunpack.c.l.b16 %v3707
      %v3724 = vunpack.c.l.b16 %v3711
      %v3725 = vpack.c.b16 %v3718, %v3717
      %v3726 = vpack.c.b16 %v3720, %v3719
      %v3727 = vpack.c.b16 %v3722, %v3721
      %v3728 = vpack.c.b16 %v3724, %v3723
      %v3733 = vunpack.c.l.b16 %v3713
      %v3734 = vunpack.c.l.b16 %v3714
      %v3735 = vunpack.c.l.b16 %v3715
      %v3736 = vunpack.c.l.b16 %v3716
      %v3737 = vpack.c.b16 %v3734, %v3733
      %v3738 = vpack.c.b16 %v3736, %v3735
      %v3742 = vsel %vm336, %v3725, 0
      %v3745 = vsel %vm336, %v3726, 0
      %v3748 = vsel %vm336, %v3727, 0
      %v3751 = vsel %vm336, %v3728, 0
      %3753 = vmatpush.bf16.msra.mxu0 0
      %3754 = vmatpush.bf16.msra.mxu0 0
      %3755 = vmatpush.bf16.msra.mxu0 0
      %3756 = vmatpush.bf16.msra.mxu0 0
      %3757 = vmatpush.bf16.msra.mxu0 0
      %3758 = vmatpush.bf16.msra.mxu0 0
      %3759 = vmatpush.bf16.msra.mxu0 %v3738
      %3760 = vmatpush.bf16.msra.mxu0 %v3737
      %3761 = vmatmul.bf16.gmra.mxu0 %v3742
      %v3762 = vpop.f32.mrf.mxu0
      %v3763 = vadd.f32 0.0, %v3762
      %v3764 = vpop.f32.mrf.mxu0
      %v3765 = vadd.f32 0.0, %v3764
      %3766 = vmatmul.bf16.gmra.mxu0 %v3745
      %v3767 = vpop.f32.mrf.mxu0
      %v3768 = vadd.f32 0.0, %v3767
      %v3769 = vpop.f32.mrf.mxu0
      %v3770 = vadd.f32 0.0, %v3769
      %3771 = vmatmul.bf16.gmra.mxu0 %v3748
      %v3772 = vpop.f32.mrf.mxu0
      %v3773 = vadd.f32 0.0, %v3772
      %v3774 = vpop.f32.mrf.mxu0
      %v3775 = vadd.f32 0.0, %v3774
      %3776 = vmatmul.bf16.gmra.mxu0 %v3751
      %v3777 = vpop.f32.mrf.mxu0
      %v3778 = vadd.f32 0.0, %v3777
      %v3779 = vpop.f32.mrf.mxu0
      %v3780 = vadd.f32 0.0, %v3779
      %3781 = vdwg.mxu0
      %v3782 = vadd.f32 %v3648, %v3763
      %v3783 = vadd.f32 %v3649, %v3765
      %v3784 = vadd.f32 %v3650, %v3768
      %v3785 = vadd.f32 %v3651, %v3770
      %v3786 = vadd.f32 %v3652, %v3773
      %v3787 = vadd.f32 %v3653, %v3775
      %v3788 = vadd.f32 %v3654, %v3778
      %v3789 = vadd.f32 %v3655, %v3780
      %v3790 = vld [vmem:[%s3355 + $0x4] sm:$0x3]
      %v3791 = vld [vmem:[%s3355 + $0xc] sm:$0x3]
      %v3792 = vld [vmem:[%s3355 + $0x14] sm:$0x3]
      %v3793 = vld [vmem:[%s3355 + $0x1c] sm:$0x3]
      %v3794 = vld [vmem:[%s3355 + $0x24] sm:$0x3]
      %v3795 = vld [vmem:[%s3355 + $0x2c] sm:$0x3]
      %v3796 = vld [vmem:[%s3355 + $0x34] sm:$0x3]
      %v3797 = vld [vmem:[%s3355 + $0x3c] sm:$0x3]
      %v3799 = vshrl.u32 %v3656, 16
      %v3801 = vrot.slane %v3799, 5
      %v3802 = vshll.u32 %v3656, 16
      %v3804 = vrot.slane %v3802, 6
      %v3805 = vor.u32 %v3801, %v3804
      %v3806 = vrot.slane %v3805, 4
      %v3808 = vshrl.u32 %v3790, 16
      %v3810 = vrot.slane %v3808, 5
      %v3811 = vshll.u32 %v3790, 16
      %v3813 = vrot.slane %v3811, 6
      %v3814 = vor.u32 %v3810, %v3813
      %v3815 = vsel %vm598, %v3806, %v3814
      %v3817 = vshrl.u32 %v3657, 16
      %v3819 = vrot.slane %v3817, 5
      %v3820 = vshll.u32 %v3657, 16
      %v3822 = vrot.slane %v3820, 6
      %v3823 = vor.u32 %v3819, %v3822
      %v3824 = vrot.slane %v3823, 4
      %v3826 = vshrl.u32 %v3791, 16
      %v3828 = vrot.slane %v3826, 5
      %v3829 = vshll.u32 %v3791, 16
      %v3831 = vrot.slane %v3829, 6
      %v3832 = vor.u32 %v3828, %v3831
      %v3833 = vsel %vm598, %v3824, %v3832
      %v3835 = vshrl.u32 %v3658, 16
      %v3837 = vrot.slane %v3835, 5
      %v3838 = vshll.u32 %v3658, 16
      %v3840 = vrot.slane %v3838, 6
      %v3841 = vor.u32 %v3837, %v3840
      %v3842 = vrot.slane %v3841, 4
      %v3844 = vshrl.u32 %v3792, 16
      %v3846 = vrot.slane %v3844, 5
      %v3847 = vshll.u32 %v3792, 16
      %v3849 = vrot.slane %v3847, 6
      %v3850 = vor.u32 %v3846, %v3849
      %v3851 = vsel %vm598, %v3842, %v3850
      %v3853 = vshrl.u32 %v3659, 16
      %v3855 = vrot.slane %v3853, 5
      %v3856 = vshll.u32 %v3659, 16
      %v3858 = vrot.slane %v3856, 6
      %v3859 = vor.u32 %v3855, %v3858
      %v3860 = vrot.slane %v3859, 4
      %v3862 = vshrl.u32 %v3793, 16
      %v3864 = vrot.slane %v3862, 5
      %v3865 = vshll.u32 %v3793, 16
      %v3867 = vrot.slane %v3865, 6
      %v3868 = vor.u32 %v3864, %v3867
      %v3869 = vsel %vm598, %v3860, %v3868
      %v3871 = vshrl.u32 %v3660, 16
      %v3873 = vrot.slane %v3871, 5
      %v3874 = vshll.u32 %v3660, 16
      %v3876 = vrot.slane %v3874, 6
      %v3877 = vor.u32 %v3873, %v3876
      %v3878 = vrot.slane %v3877, 4
      %v3880 = vshrl.u32 %v3794, 16
      %v3882 = vrot.slane %v3880, 5
      %v3883 = vshll.u32 %v3794, 16
      %v3885 = vrot.slane %v3883, 6
      %v3886 = vor.u32 %v3882, %v3885
      %v3887 = vsel %vm598, %v3878, %v3886
      %v3889 = vshrl.u32 %v3661, 16
      %v3891 = vrot.slane %v3889, 5
      %v3892 = vshll.u32 %v3661, 16
      %v3894 = vrot.slane %v3892, 6
      %v3895 = vor.u32 %v3891, %v3894
      %v3896 = vrot.slane %v3895, 4
      %v3898 = vshrl.u32 %v3795, 16
      %v3900 = vrot.slane %v3898, 5
      %v3901 = vshll.u32 %v3795, 16
      %v3903 = vrot.slane %v3901, 6
      %v3904 = vor.u32 %v3900, %v3903
      %v3905 = vsel %vm598, %v3896, %v3904
      %v3907 = vshrl.u32 %v3662, 16
      %v3909 = vrot.slane %v3907, 5
      %v3910 = vshll.u32 %v3662, 16
      %v3912 = vrot.slane %v3910, 6
      %v3913 = vor.u32 %v3909, %v3912
      %v3914 = vrot.slane %v3913, 4
      %v3916 = vshrl.u32 %v3796, 16
      %v3918 = vrot.slane %v3916, 5
      %v3919 = vshll.u32 %v3796, 16
      %v3921 = vrot.slane %v3919, 6
      %v3922 = vor.u32 %v3918, %v3921
      %v3923 = vsel %vm598, %v3914, %v3922
      %v3925 = vshrl.u32 %v3663, 16
      %v3927 = vrot.slane %v3925, 5
      %v3928 = vshll.u32 %v3663, 16
      %v3930 = vrot.slane %v3928, 6
      %v3931 = vor.u32 %v3927, %v3930
      %v3932 = vrot.slane %v3931, 4
      %v3934 = vshrl.u32 %v3797, 16
      %v3936 = vrot.slane %v3934, 5
      %v3937 = vshll.u32 %v3797, 16
      %v3939 = vrot.slane %v3937, 6
      %v3940 = vor.u32 %v3936, %v3939
      %v3941 = vsel %vm598, %v3932, %v3940
      %s3942 = scalar_lea.vmem %s1, 368
      %v3943 = vld [vmem:[%s3942] sm:$0xf]
      %v3944 = vld [vmem:[%s3942 + $0x4] sm:$0xf]
      %v3945 = vld [vmem:[%s3942 + $0x8] sm:$0xf]
      %v3946 = vld [vmem:[%s3942 + $0xc] sm:$0xf]
      %v3947 = vunpack.c.l.b16 %v3815
      %v3948 = vunpack.c.l.b16 %v3833
      %v3949 = vunpack.c.l.b16 %v3851
      %v3950 = vunpack.c.l.b16 %v3869
      %v3951 = vunpack.c.l.b16 %v3887
      %v3952 = vunpack.c.l.b16 %v3905
      %v3953 = vunpack.c.l.b16 %v3923
      %v3954 = vunpack.c.l.b16 %v3941
      %v3955 = vpack.c.b16 %v3948, %v3947
      %v3956 = vpack.c.b16 %v3950, %v3949
      %v3957 = vpack.c.b16 %v3952, %v3951
      %v3958 = vpack.c.b16 %v3954, %v3953
      %v3963 = vunpack.c.l.b16 %v3943
      %v3964 = vunpack.c.l.b16 %v3944
      %v3965 = vunpack.c.l.b16 %v3945
      %v3966 = vunpack.c.l.b16 %v3946
      %v3967 = vpack.c.b16 %v3964, %v3963
      %v3968 = vpack.c.b16 %v3966, %v3965
      %v3972 = vsel %vm336, %v3955, 0
      %v3975 = vsel %vm336, %v3956, 0
      %v3978 = vsel %vm336, %v3957, 0
      %v3981 = vsel %vm336, %v3958, 0
      %3983 = vmatpush.bf16.msra.mxu0 0
      %3984 = vmatpush.bf16.msra.mxu0 0
      %3985 = vmatpush.bf16.msra.mxu0 0
      %3986 = vmatpush.bf16.msra.mxu0 0
      %3987 = vmatpush.bf16.msra.mxu0 0
      %3988 = vmatpush.bf16.msra.mxu0 0
      %3989 = vmatpush.bf16.msra.mxu0 %v3968
      %3990 = vmatpush.bf16.msra.mxu0 %v3967
      %3991 = vmatmul.bf16.gmra.mxu0 %v3972
      %v3992 = vpop.f32.mrf.mxu0
      %v3993 = vadd.f32 0.0, %v3992
      %v3994 = vpop.f32.mrf.mxu0
      %v3995 = vadd.f32 0.0, %v3994
      %3996 = vmatmul.bf16.gmra.mxu0 %v3975
      %v3997 = vpop.f32.mrf.mxu0
      %v3998 = vadd.f32 0.0, %v3997
      %v3999 = vpop.f32.mrf.mxu0
      %v4000 = vadd.f32 0.0, %v3999
      %4001 = vmatmul.bf16.gmra.mxu0 %v3978
      %v4002 = vpop.f32.mrf.mxu0
      %v4003 = vadd.f32 0.0, %v4002
      %v4004 = vpop.f32.mrf.mxu0
      %v4005 = vadd.f32 0.0, %v4004
      %4006 = vmatmul.bf16.gmra.mxu0 %v3981
      %v4007 = vpop.f32.mrf.mxu0
      %v4008 = vadd.f32 0.0, %v4007
      %v4009 = vpop.f32.mrf.mxu0
      %v4010 = vadd.f32 0.0, %v4009
      %4011 = vdwg.mxu0
      %v4012 = vadd.f32 %v3782, %v3993
      %v4013 = vadd.f32 %v3783, %v3995
      %v4014 = vadd.f32 %v3784, %v3998
      %v4015 = vadd.f32 %v3785, %v4000
      %v4016 = vadd.f32 %v3786, %v4003
      %v4017 = vadd.f32 %v3787, %v4005
      %v4018 = vadd.f32 %v3788, %v4008
      %v4019 = vadd.f32 %v3789, %v4010
      %v4020 = vld [vmem:[%s3355] sm:$0xc]
      %v4021 = vld [vmem:[%s3355 + $0x8] sm:$0xc]
      %v4022 = vld [vmem:[%s3355 + $0x10] sm:$0xc]
      %v4023 = vld [vmem:[%s3355 + $0x18] sm:$0xc]
      %v4024 = vld [vmem:[%s3355 + $0x20] sm:$0xc]
      %v4025 = vld [vmem:[%s3355 + $0x28] sm:$0xc]
      %v4026 = vld [vmem:[%s3355 + $0x30] sm:$0xc]
      %v4027 = vld [vmem:[%s3355 + $0x38] sm:$0xc]
      %v4044 = vrot.slane %v4020, 6
      %v4045 = vrot.slane %v4044, 4
      %v4046 = vrot.slane %v3790, 6
      %v4047 = vsel %vm847, %v4045, %v4046
      %v4048 = vrot.slane %v4021, 6
      %v4049 = vrot.slane %v4048, 4
      %v4050 = vrot.slane %v3791, 6
      %v4051 = vsel %vm847, %v4049, %v4050
      %v4052 = vrot.slane %v4022, 6
      %v4053 = vrot.slane %v4052, 4
      %v4054 = vrot.slane %v3792, 6
      %v4055 = vsel %vm847, %v4053, %v4054
      %v4056 = vrot.slane %v4023, 6
      %v4057 = vrot.slane %v4056, 4
      %v4058 = vrot.slane %v3793, 6
      %v4059 = vsel %vm847, %v4057, %v4058
      %v4060 = vrot.slane %v4024, 6
      %v4061 = vrot.slane %v4060, 4
      %v4062 = vrot.slane %v3794, 6
      %v4063 = vsel %vm847, %v4061, %v4062
      %v4064 = vrot.slane %v4025, 6
      %v4065 = vrot.slane %v4064, 4
      %v4066 = vrot.slane %v3795, 6
      %v4067 = vsel %vm847, %v4065, %v4066
      %v4068 = vrot.slane %v4026, 6
      %v4069 = vrot.slane %v4068, 4
      %v4070 = vrot.slane %v3796, 6
      %v4071 = vsel %vm847, %v4069, %v4070
      %v4072 = vrot.slane %v4027, 6
      %v4073 = vrot.slane %v4072, 4
      %v4074 = vrot.slane %v3797, 6
      %v4075 = vsel %vm847, %v4073, %v4074
      %s4076 = scalar_lea.vmem %s1, 384
      %v4077 = vld [vmem:[%s4076] sm:$0xf]
      %v4078 = vld [vmem:[%s4076 + $0x4] sm:$0xf]
      %v4079 = vld [vmem:[%s4076 + $0x8] sm:$0xf]
      %v4080 = vld [vmem:[%s4076 + $0xc] sm:$0xf]
      %v4081 = vunpack.c.l.b16 %v4047
      %v4082 = vunpack.c.l.b16 %v4051
      %v4083 = vunpack.c.l.b16 %v4055
      %v4084 = vunpack.c.l.b16 %v4059
      %v4085 = vunpack.c.l.b16 %v4063
      %v4086 = vunpack.c.l.b16 %v4067
      %v4087 = vunpack.c.l.b16 %v4071
      %v4088 = vunpack.c.l.b16 %v4075
      %v4089 = vpack.c.b16 %v4082, %v4081
      %v4090 = vpack.c.b16 %v4084, %v4083
      %v4091 = vpack.c.b16 %v4086, %v4085
      %v4092 = vpack.c.b16 %v4088, %v4087
      %v4097 = vunpack.c.l.b16 %v4077
      %v4098 = vunpack.c.l.b16 %v4078
      %v4099 = vunpack.c.l.b16 %v4079
      %v4100 = vunpack.c.l.b16 %v4080
      %v4101 = vpack.c.b16 %v4098, %v4097
      %v4102 = vpack.c.b16 %v4100, %v4099
      %v4106 = vsel %vm336, %v4089, 0
      %v4109 = vsel %vm336, %v4090, 0
      %v4112 = vsel %vm336, %v4091, 0
      %v4115 = vsel %vm336, %v4092, 0
      %4117 = vmatpush.bf16.msra.mxu0 0
      %4118 = vmatpush.bf16.msra.mxu0 0
      %4119 = vmatpush.bf16.msra.mxu0 0
      %4120 = vmatpush.bf16.msra.mxu0 0
      %4121 = vmatpush.bf16.msra.mxu0 0
      %4122 = vmatpush.bf16.msra.mxu0 0
      %4123 = vmatpush.bf16.msra.mxu0 %v4102
      %4124 = vmatpush.bf16.msra.mxu0 %v4101
      %4125 = vmatmul.bf16.gmra.mxu0 %v4106
      %v4126 = vpop.f32.mrf.mxu0
      %v4127 = vadd.f32 0.0, %v4126
      %v4128 = vpop.f32.mrf.mxu0
      %v4129 = vadd.f32 0.0, %v4128
      %4130 = vmatmul.bf16.gmra.mxu0 %v4109
      %v4131 = vpop.f32.mrf.mxu0
      %v4132 = vadd.f32 0.0, %v4131
      %v4133 = vpop.f32.mrf.mxu0
      %v4134 = vadd.f32 0.0, %v4133
      %4135 = vmatmul.bf16.gmra.mxu0 %v4112
      %v4136 = vpop.f32.mrf.mxu0
      %v4137 = vadd.f32 0.0, %v4136
      %v4138 = vpop.f32.mrf.mxu0
      %v4139 = vadd.f32 0.0, %v4138
      %4140 = vmatmul.bf16.gmra.mxu0 %v4115
      %v4141 = vpop.f32.mrf.mxu0
      %v4142 = vadd.f32 0.0, %v4141
      %v4143 = vpop.f32.mrf.mxu0
      %v4144 = vadd.f32 0.0, %v4143
      %4145 = vdwg.mxu0
      %v4146 = vadd.f32 %v4012, %v4127
      %v4147 = vadd.f32 %v4013, %v4129
      %v4148 = vadd.f32 %v4014, %v4132
      %v4149 = vadd.f32 %v4015, %v4134
      %v4150 = vadd.f32 %v4016, %v4137
      %v4151 = vadd.f32 %v4017, %v4139
      %v4152 = vadd.f32 %v4018, %v4142
      %v4153 = vadd.f32 %v4019, %v4144
      %v4154 = vld [vmem:[%s2] sm:$0x1]
      %v4156 = vperm.slane %v4154, 0
      %v4158 = vadd.f32 %v4146, %v4156
      %v4159 = vadd.f32 %v4147, %v4156
      %v4160 = vadd.f32 %v4148, %v4156
      %v4161 = vadd.f32 %v4149, %v4156
      %v4162 = vadd.f32 %v4150, %v4156
      %v4163 = vadd.f32 %v4151, %v4156
      %v4164 = vadd.f32 %v4152, %v4156
      %v4165 = vadd.f32 %v4153, %v4156
      %vm4166 = vcmp.ge.f32.partialorder %v4158, 0.0
      %vm4167 = vcmp.ge.f32.partialorder %v4159, 0.0
      %vm4168 = vcmp.ge.f32.partialorder %v4160, 0.0
      %vm4169 = vcmp.ge.f32.partialorder %v4161, 0.0
      %vm4170 = vcmp.ge.f32.partialorder %v4162, 0.0
      %vm4171 = vcmp.ge.f32.partialorder %v4163, 0.0
      %vm4172 = vcmp.ge.f32.partialorder %v4164, 0.0
      %vm4173 = vcmp.ge.f32.partialorder %v4165, 0.0
      %v4174 = vmul.f32 %v4158, 0.25
      %v4175 = vmul.f32 %v4159, 0.25
      %v4176 = vmul.f32 %v4160, 0.25
      %v4177 = vmul.f32 %v4161, 0.25
      %v4178 = vmul.f32 %v4162, 0.25
      %v4179 = vmul.f32 %v4163, 0.25
      %v4180 = vmul.f32 %v4164, 0.25
      %v4181 = vmul.f32 %v4165, 0.25
      %v4182 = vsel %vm4166, %v4158, %v4174
      %v4183 = vsel %vm4167, %v4159, %v4175
      %v4184 = vsel %vm4168, %v4160, %v4176
      %v4185 = vsel %vm4169, %v4161, %v4177
      %v4186 = vsel %vm4170, %v4162, %v4178
      %v4187 = vsel %vm4171, %v4163, %v4179
      %v4188 = vsel %vm4172, %v4164, %v4180
      %v4189 = vsel %vm4173, %v4165, %v4181
      %vm4190 = vcmask 523264
      %4191 = vst.msk [vmem:[#allocation2] sm:$0xff] %vm4190, %v4182
      %4192 = vst.msk [vmem:[#allocation2 + $0x8] sm:$0xff] %vm4190, %v4183
      %4193 = vst.msk [vmem:[#allocation2 + $0x10] sm:$0xff] %vm4190, %v4184
      %4194 = vst.msk [vmem:[#allocation2 + $0x18] sm:$0xff] %vm4190, %v4185
      %4195 = vst.msk [vmem:[#allocation2 + $0x20] sm:$0xff] %vm4190, %v4186
      %4196 = vst.msk [vmem:[#allocation2 + $0x28] sm:$0xff] %vm4190, %v4187
      %4197 = vst.msk [vmem:[#allocation2 + $0x30] sm:$0xff] %vm4190, %v4188
      %4198 = vst.msk [vmem:[#allocation2 + $0x38] sm:$0xff] %vm4190, %v4189
      %v4199 = vld [vmem:[#allocation2] ss:$2 sm:$0xff]
      %s4200 = scalar_lea.vmem [#allocation2], 16
      %v4201 = vld [vmem:[%s4200] ss:$2 sm:$0xff]
      %s4202 = scalar_lea.vmem [#allocation2], 32
      %v4203 = vld [vmem:[%s4202] ss:$2 sm:$0xff]
      %s4204 = scalar_lea.vmem [#allocation2], 48
      %v4205 = vld [vmem:[%s4204] ss:$2 sm:$0xff]
      %s4206 = scalar_lea.vmem [#allocation2], 1
      %v4207 = vld [vmem:[%s4206] ss:$2 sm:$0xff]
      %s4208 = scalar_lea.vmem [#allocation2], 17
      %v4209 = vld [vmem:[%s4208] ss:$2 sm:$0xff]
      %s4210 = scalar_lea.vmem [#allocation2], 33
      %v4211 = vld [vmem:[%s4210] ss:$2 sm:$0xff]
      %s4212 = scalar_lea.vmem [#allocation2], 49
      %v4213 = vld [vmem:[%s4212] ss:$2 sm:$0xff]
      %v4214 = vmax.f32 %v4199, %v4207
      %v4215 = vmax.f32 %v4201, %v4209
      %v4216 = vmax.f32 %v4203, %v4211
      %v4217 = vmax.f32 %v4205, %v4213
      %4218 = vst.msk [vmem:[#allocation3] sm:$0xff] %vm4190, %v4214
      %4219 = vst.msk [vmem:[#allocation3 + $0x8] sm:$0xff] %vm4190, %v4215
      %4220 = vst.msk [vmem:[#allocation3 + $0x10] sm:$0xff] %vm4190, %v4216
      %4221 = vst.msk [vmem:[#allocation3 + $0x18] sm:$0xff] %vm4190, %v4217
      %v4222 = vld [vmem:[#allocation3] sm:$0xf]
      %v4223 = vld [vmem:[#allocation3 + $0x4] sm:$0xf]
      %v4224 = vmax.f32 %v4222, %v4223
      %v4225 = vpack.c.bf16 %v4224, %v4224
      %vm4226 = vcmask 517120
      %4227 = vst.msk [vmem:[%s170] sm:$0x3] %vm4226, %v4225
      %v4228 = vld [vmem:[#allocation3 + $0x8] sm:$0xf]
      %v4229 = vld [vmem:[#allocation3 + $0xc] sm:$0xf]
      %v4230 = vmax.f32 %v4228, %v4229
      %v4231 = vpack.c.bf16 %v4230, %v4230
      %v4233 = vrot.slane %v4231, 6
      %vm4235 = vcmask 519170
      %4236 = vst.msk [vmem:[%s170] sm:$0xc] %vm4235, %v4233
      %v4237 = vld [vmem:[#allocation3 + $0x10] sm:$0xf]
      %v4238 = vld [vmem:[#allocation3 + $0x14] sm:$0xf]
      %v4239 = vmax.f32 %v4237, %v4238
      %v4240 = vpack.c.bf16 %v4239, %v4239
      %4241 = vst.msk [vmem:[%s170 + $0x4] sm:$0x3] %vm4226, %v4240
      %v4242 = vld [vmem:[#allocation3 + $0x18] sm:$0xf]
      %v4243 = vld [vmem:[#allocation3 + $0x1c] sm:$0xf]
      %v4244 = vmax.f32 %v4242, %v4243
      %v4245 = vpack.c.bf16 %v4244, %v4244
      %v4247 = vrot.slane %v4245, 6
      %4249 = vst.msk [vmem:[%s170 + $0x4] sm:$0xc] %vm4235, %v4247
      %p4250 = scmp.lt.s32.totalorder %s14, 1
      %s4251 = scalar_select %p4250, %s14, 1
      %s4252 = smul.addr %s4251, 2
      %s4253 = smul.addr %s4252, 4
      %s4254 = scalar_lea.vmem %s3, %s4253
      // Predicated region
      $region33: #{network_forward.4} parent=31 // pred_check
        %p4255 = pneg %p100
      $region34: #{network_forward.4} parent=31 // pred_check_branch
        %4257 = sbr.rel (%p4255) target = $region36
      $region35: #{network_forward.4} parent=31 // pred_region
        _
      $region36: #{network_forward.4} parent=31 // pred_fallthru
        _
    $region32: #{network_forward.4} parent=5 // pred_fallthru
      _
    %p4258 = scmp.le.s32.totalorder 2, %s9
    // Predicated region
    $region37: #{network_forward.4} parent=5 // pred_check
      %p4259 = pneg %p4258
    $region38: #{network_forward.4} parent=5 // pred_check_branch
      %4261 = sbr.rel (%p4259) target = $region40
    $region39: #{network_forward.4} parent=5 // pred_region
      %s4262 = ssub.s32 %s9, 2
      // Predicated region
      $region41: #{network_forward.4} parent=39 // pred_check
        %p4263 = pneg %p106
      $region42: #{network_forward.4} parent=39 // pred_check_branch
        %4265 = sbr.rel (%p4263) target = $region44
      $region43: #{network_forward.4} parent=39 // pred_region
        %p4266 = scmp.lt.s32.totalorder %s15, 1
        %s4267 = scalar_select %p4266, %s15, 1
        %s4268 = smul.addr %s4267, 2
        %s4269 = smul.addr %s4268, 4
        %s4270 = scalar_lea.vmem %s3, %s4269
      $region44: #{network_forward.4} parent=39 // pred_fallthru
        _
    $region40: #{network_forward.4} parent=5 // pred_fallthru
      _
  $region6: #{network_forward.4} parent=0 // loop_footer
    %s13 = sadd.s32 1, %s9
  $region7: #{network_forward.4} parent=0 // loop_footer_branch
    %8 = sbr.rel target = $region3
  $region8: #{network_forward.4} parent=0 // loop_exit
    _

</llo_original>
